<compile_context>
chip_gen: v7x
topology: tpu7x:2x2x1
jax: 0.10.0
libtpu: 0.0.40
codegen_flags: <defaults>
</compile_context>

<pallas_src>
import jax
import jax.numpy as jnp
from jax.experimental import pallas as pl
from jax.experimental.pallas import tpu as pltpu

EPS = 1e-5  # nn.BatchNorm2d default eps


# ------------------------------------------------------------------- kernel --

def block_kernel(x_ref, t_ref, mlp_w_ref, mlp_b_ref,
                 w1_ref, b1_ref, g1_ref, be1_ref,
                 w2_ref, b2_ref, g2_ref, be2_ref,
                 wt_ref, bt_ref,
                 out_ref,
                 xpad_s, hpad_s):
    N, H, W, Cin = x_ref.shape
    Cout = w1_ref.shape[1]
    M = N * H * W
    Ho, Wo = H // 2, W // 2
    Mo = N * Ho * Wo
    inv_m = 1.0 / M

    # ---- time embedding: relu(t @ W^T + b) -> (N, Cout)
    temb = jnp.maximum(
        jnp.dot(t_ref[...], mlp_w_ref[...], preferred_element_type=jnp.float32)
        + mlp_b_ref[...],
        0.0,
    )

    def conv3x3_relu_bn(pad_ref, value, cin, w_ref, b_ref, g_ref, be_ref):
        # Zero-pad `value` (N,H,W,cin) into the VMEM scratch, build the im2col
        # patch (one dot per conv), relu, then training-mode BatchNorm with
        # single-pass batch statistics.  Returns (M, Cout).
        pad_ref[...] = jnp.zeros(pad_ref.shape, jnp.float32)
        pad_ref[:, 1:H + 1, 1:W + 1, :] = value
        xp = pad_ref[...]
        taps = [xp[:, ky:ky + H, kx:kx + W, :].reshape(M, cin)
                for ky in range(3) for kx in range(3)]
        patch = jnp.concatenate(taps, axis=1)                       # (M, 9*cin)
        r = jnp.maximum(
            jnp.dot(patch, w_ref[...], preferred_element_type=jnp.float32)
            + b_ref[...],
            0.0,
        )                                                           # (M, Cout)
        s = jnp.sum(r, axis=0, keepdims=True)                       # (1, Cout)
        q = jnp.sum(r * r, axis=0, keepdims=True)
        mean = s * inv_m
        var = q * inv_m - mean * mean                               # biased var
        return (r - mean) * jax.lax.rsqrt(var + EPS) * g_ref[...] + be_ref[...]

    # ---- h = BN1(relu(conv1(x))) + temb
    h = conv3x3_relu_bn(xpad_s, x_ref[...], Cin, w1_ref, b1_ref, g1_ref, be1_ref)
    h = (h.reshape(N, H * W, Cout) + temb[:, None, :]).reshape(N, H, W, Cout)

    # ---- h2 = BN2(relu(conv2(h)))
    h2 = conv3x3_relu_bn(hpad_s, h, Cout, w2_ref, b2_ref, g2_ref, be2_ref)

    # ---- transform: Conv2d(Cout, Cout, 4, stride=2, padding=1)
    # Reuse hpad_s (its border is still zero).  Strided pl.ds reads pick the
    # stride-2 taps directly from VMEM, so no phase-split relayout is needed.
    hpad_s[:, 1:H + 1, 1:W + 1, :] = h2.reshape(N, H, W, Cout)
    taps = [
        hpad_s[:, pl.ds(ky, Ho, stride=2), pl.ds(kx, Wo, stride=2), :]
        .reshape(Mo, Cout)
        for ky in range(4) for kx in range(4)
    ]
    patch = jnp.concatenate(taps, axis=1)                           # (Mo, 16*Cout)
    out = (jnp.dot(patch, wt_ref[...], preferred_element_type=jnp.float32)
           + bt_ref[...])
    out_ref[...] = out.reshape(N, Ho, Wo, Cout)


# ------------------------------------------------------------------ wrapper --

@jax.jit
def block_forward(x_nchw, t, p):
    """Block.forward(x, t) for the up=False configuration."""
    N, Cin, H, W = x_nchw.shape
    Cout = p["conv1_w"].shape[0]
    Ho, Wo = H // 2, W // 2

    # tiny edge-only layout glue (input 8 KiB, output 4 KiB)
    x_nhwc = jnp.transpose(x_nchw, (0, 2, 3, 1)).astype(jnp.float32)

    # weight relayouts (OIHW -> im2col 2-D with rows ordered (ky, kx, ci)), done
    # once outside the kernel.
    w1 = jnp.transpose(p["conv1_w"], (2, 3, 1, 0)).reshape(9 * Cin, Cout)
    w2 = jnp.transpose(p["conv2_w"], (2, 3, 1, 0)).reshape(9 * Cout, Cout)
    wt = jnp.transpose(p["tr_w"], (2, 3, 1, 0)).reshape(16 * Cout, Cout)

    args = (
        x_nhwc, t.astype(jnp.float32),
        p["mlp_w"].T, p["mlp_b"][None, :],
        w1, p["conv1_b"][None, :], p["bn1_g"][None, :], p["bn1_b"][None, :],
        w2, p["conv2_b"][None, :], p["bn2_g"][None, :], p["bn2_b"][None, :],
        wt, p["tr_b"][None, :],
    )

    vmem = pl.BlockSpec(memory_space=pltpu.MemorySpace.VMEM)
    out_nhwc = pl.pallas_call(
        block_kernel,
        out_shape=jax.ShapeDtypeStruct((N, Ho, Wo, Cout), jnp.float32),
        in_specs=[vmem] * len(args),
        out_specs=vmem,
        scratch_shapes=[
            pltpu.VMEM((N, H + 2, W + 2, Cin), jnp.float32),   # padded x
            pltpu.VMEM((N, H + 2, W + 2, Cout), jnp.float32),  # padded h / h2
        ],
    )(*args)

    return jnp.transpose(out_nhwc, (0, 3, 1, 2))  # back to NCHW


# ---------------------------------------------------------------- reference --

def reference_forward(x, t, p):
    def conv(x, w, b, stride, pad):
        y = jax.lax.conv_general_dilated(
            x, w, (stride, stride), [(pad, pad), (pad, pad)],
            dimension_numbers=("NCHW", "OIHW", "NCHW"))
        return y + b[None, :, None, None]

    def bn(x, g, be):
        m = x.mean(axis=(0, 2, 3), keepdims=True)
        v = jnp.mean(jnp.square(x - m), axis=(0, 2, 3), keepdims=True)
        return (x - m) * jax.lax.rsqrt(v + EPS) * g[None, :, None, None] + be[None, :, None, None]

    h = bn(jax.nn.relu(conv(x, p["conv1_w"], p["conv1_b"], 1, 1)), p["bn1_g"], p["bn1_b"])
    temb = jax.nn.relu(t @ p["mlp_w"].T + p["mlp_b"])
    h = h + temb[:, :, None, None]
    h = bn(jax.nn.relu(conv(h, p["conv2_w"], p["conv2_b"], 1, 1)), p["bn2_g"], p["bn2_b"])
    return conv(h, p["tr_w"], p["tr_b"], 2, 1)


# --------------------------------------------------------------------- main --

if __name__ == "__main__":
    # Shapes consistent with Block(in_ch=4, out_ch=8, time_emb_dim=32, up=False)
    N, IN_CH, OUT_CH, H, W, TDIM = 2, 4, 8, 16, 16, 32

    key = jax.random.PRNGKey(0)
    ks = jax.random.split(key, 12)
    params = {
        "mlp_w":   0.1 * jax.random.normal(ks[0], (OUT_CH, TDIM), jnp.float32),
        "mlp_b":   0.1 * jax.random.normal(ks[1], (OUT_CH,), jnp.float32),
        "conv1_w": 0.1 * jax.random.normal(ks[2], (OUT_CH, IN_CH, 3, 3), jnp.float32),
        "conv1_b": 0.1 * jax.random.normal(ks[3], (OUT_CH,), jnp.float32),
        "conv2_w": 0.1 * jax.random.normal(ks[4], (OUT_CH, OUT_CH, 3, 3), jnp.float32),
        "conv2_b": 0.1 * jax.random.normal(ks[5], (OUT_CH,), jnp.float32),
        "tr_w":    0.1 * jax.random.normal(ks[6], (OUT_CH, OUT_CH, 4, 4), jnp.float32),
        "tr_b":    0.1 * jax.random.normal(ks[7], (OUT_CH,), jnp.float32),
        "bn1_g":   1.0 + 0.1 * jax.random.normal(ks[8], (OUT_CH,), jnp.float32),
        "bn1_b":   0.1 * jax.random.normal(ks[9], (OUT_CH,), jnp.float32),
        "bn2_g":   1.0 + 0.1 * jax.random.normal(ks[10], (OUT_CH,), jnp.float32),
        "bn2_b":   0.1 * jax.random.normal(ks[11], (OUT_CH,), jnp.float32),
    }

    kx, kt = jax.random.split(jax.random.PRNGKey(0), 2)
    x = jax.random.normal(kx, (N, IN_CH, H, W), jnp.float32)   # NCHW, like PyTorch
    t = jax.random.normal(kt, (N, TDIM), jnp.float32)

    out = jax.block_until_ready(block_forward(x, t, params))
    ref = jax.block_until_ready(reference_forward(x, t, params))

    assert out.shape == (N, OUT_CH, H // 2, W // 2), out.shape
    assert jnp.allclose(out, ref, atol=2e-3, rtol=2e-3), float(jnp.max(jnp.abs(out - ref)))

    print("KERNEL_OK")
</pallas_src>

<mosaic_0001>
module attributes {stable_mosaic.version = 11 : i64} {
  func.func @block_kernel(%arg0: memref<2x16x16x4xf32, #tpu.memory_space<vmem>>, %arg1: memref<2x32xf32, #tpu.memory_space<vmem>>, %arg2: memref<32x8xf32, #tpu.memory_space<vmem>>, %arg3: memref<1x8xf32, #tpu.memory_space<vmem>>, %arg4: memref<36x8xf32, #tpu.memory_space<vmem>>, %arg5: memref<1x8xf32, #tpu.memory_space<vmem>>, %arg6: memref<1x8xf32, #tpu.memory_space<vmem>>, %arg7: memref<1x8xf32, #tpu.memory_space<vmem>>, %arg8: memref<72x8xf32, #tpu.memory_space<vmem>>, %arg9: memref<1x8xf32, #tpu.memory_space<vmem>>, %arg10: memref<1x8xf32, #tpu.memory_space<vmem>>, %arg11: memref<1x8xf32, #tpu.memory_space<vmem>>, %arg12: memref<128x8xf32, #tpu.memory_space<vmem>>, %arg13: memref<1x8xf32, #tpu.memory_space<vmem>>, %arg14: memref<2x8x8x8xf32, #tpu.memory_space<vmem>>, %arg15: memref<2x18x18x4xf32, #tpu.memory_space<vmem>>, %arg16: memref<2x18x18x8xf32, #tpu.memory_space<vmem>>) attributes {dimension_semantics = [], scalar_prefetch = 0 : i64, scratch_operands = 2 : i64, tpu.core_type = #tpu.core_type<tc>} {
    %c0 = arith.constant 0 : index
    %c0_0 = arith.constant 0 : index
    %0 = vector.load %arg1[%c0, %c0_0] : memref<2x32xf32, #tpu.memory_space<vmem>>, vector<2x32xf32>
    %c0_1 = arith.constant 0 : index
    %c0_2 = arith.constant 0 : index
    %1 = vector.load %arg2[%c0_1, %c0_2] : memref<32x8xf32, #tpu.memory_space<vmem>>, vector<32x8xf32>
    %cst = arith.constant dense<0.000000e+00> : vector<2x8xf32>
    %2 = tpu.matmul %0, %1, %cst {dimension_numbers = #tpu.dot_dimension_numbers<[1], [0], [0], [1], [0, 0, 1, 1], [], []>} : vector<2x32xf32>, vector<32x8xf32>, vector<2x8xf32> -> vector<2x8xf32>
    %c0_3 = arith.constant 0 : index
    %c0_4 = arith.constant 0 : index
    %3 = vector.load %arg3[%c0_3, %c0_4] : memref<1x8xf32, #tpu.memory_space<vmem>>, vector<1x8xf32>
    %4 = vector.broadcast %3 : vector<1x8xf32> to vector<2x8xf32>
    %5 = arith.addf %2, %4 : vector<2x8xf32>
    %cst_5 = arith.constant 0.000000e+00 : f32
    %6 = vector.broadcast %cst_5 : f32 to vector<2x8xf32>
    %7 = arith.maximumf %5, %6 : vector<2x8xf32>
    %c0_6 = arith.constant 0 : index
    %c0_7 = arith.constant 0 : index
    %c0_8 = arith.constant 0 : index
    %c0_9 = arith.constant 0 : index
    %8 = vector.load %arg0[%c0_6, %c0_7, %c0_8, %c0_9] : memref<2x16x16x4xf32, #tpu.memory_space<vmem>>, vector<2x16x16x4xf32>
    %cst_10 = arith.constant 0.000000e+00 : f32
    %9 = vector.broadcast %cst_10 : f32 to vector<2x18x18x4xf32>
    %c0_11 = arith.constant 0 : index
    %c0_12 = arith.constant 0 : index
    %c0_13 = arith.constant 0 : index
    %c0_14 = arith.constant 0 : index
    %10 = vector.load %arg15[%c0_11, %c0_12, %c0_13, %c0_14] : memref<2x18x18x4xf32, #tpu.memory_space<vmem>>, vector<2x18x18x4xf32>
    tpu.vector_store %arg15[%c0_11, %c0_12, %c0_13, %c0_14], %9 {strides = array<i32>} : memref<2x18x18x4xf32, #tpu.memory_space<vmem>>, vector<2x18x18x4xf32>,
    %c0_15 = arith.constant 0 : index
    %c1 = arith.constant 1 : index
    %c1_16 = arith.constant 1 : index
    %c0_17 = arith.constant 0 : index
    %11 = vector.load %arg15[%c0_15, %c1, %c1_16, %c0_17] : memref<2x18x18x4xf32, #tpu.memory_space<vmem>>, vector<2x16x16x4xf32>
    tpu.vector_store %arg15[%c0_15, %c1, %c1_16, %c0_17], %8 {strides = array<i32>} : memref<2x18x18x4xf32, #tpu.memory_space<vmem>>, vector<2x16x16x4xf32>,
    %c0_18 = arith.constant 0 : index
    %c0_19 = arith.constant 0 : index
    %c0_20 = arith.constant 0 : index
    %c0_21 = arith.constant 0 : index
    %12 = vector.load %arg15[%c0_18, %c0_19, %c0_20, %c0_21] : memref<2x18x18x4xf32, #tpu.memory_space<vmem>>, vector<2x18x18x4xf32>
    %13 = vector.extract_strided_slice %12 {offsets = [0, 0, 0, 0], sizes = [2, 16, 16, 4], strides = [1, 1, 1, 1]} : vector<2x18x18x4xf32> to vector<2x16x16x4xf32>
    %14 = vector.shape_cast %13 : vector<2x16x16x4xf32> to vector<512x4xf32>
    %15 = vector.extract_strided_slice %12 {offsets = [0, 0, 1, 0], sizes = [2, 16, 16, 4], strides = [1, 1, 1, 1]} : vector<2x18x18x4xf32> to vector<2x16x16x4xf32>
    %16 = vector.shape_cast %15 : vector<2x16x16x4xf32> to vector<512x4xf32>
    %17 = vector.extract_strided_slice %12 {offsets = [0, 0, 2, 0], sizes = [2, 16, 16, 4], strides = [1, 1, 1, 1]} : vector<2x18x18x4xf32> to vector<2x16x16x4xf32>
    %18 = vector.shape_cast %17 : vector<2x16x16x4xf32> to vector<512x4xf32>
    %19 = vector.extract_strided_slice %12 {offsets = [0, 1, 0, 0], sizes = [2, 16, 16, 4], strides = [1, 1, 1, 1]} : vector<2x18x18x4xf32> to vector<2x16x16x4xf32>
    %20 = vector.shape_cast %19 : vector<2x16x16x4xf32> to vector<512x4xf32>
    %21 = vector.extract_strided_slice %12 {offsets = [0, 1, 1, 0], sizes = [2, 16, 16, 4], strides = [1, 1, 1, 1]} : vector<2x18x18x4xf32> to vector<2x16x16x4xf32>
    %22 = vector.shape_cast %21 : vector<2x16x16x4xf32> to vector<512x4xf32>
    %23 = vector.extract_strided_slice %12 {offsets = [0, 1, 2, 0], sizes = [2, 16, 16, 4], strides = [1, 1, 1, 1]} : vector<2x18x18x4xf32> to vector<2x16x16x4xf32>
    %24 = vector.shape_cast %23 : vector<2x16x16x4xf32> to vector<512x4xf32>
    %25 = vector.extract_strided_slice %12 {offsets = [0, 2, 0, 0], sizes = [2, 16, 16, 4], strides = [1, 1, 1, 1]} : vector<2x18x18x4xf32> to vector<2x16x16x4xf32>
    %26 = vector.shape_cast %25 : vector<2x16x16x4xf32> to vector<512x4xf32>
    %27 = vector.extract_strided_slice %12 {offsets = [0, 2, 1, 0], sizes = [2, 16, 16, 4], strides = [1, 1, 1, 1]} : vector<2x18x18x4xf32> to vector<2x16x16x4xf32>
    %28 = vector.shape_cast %27 : vector<2x16x16x4xf32> to vector<512x4xf32>
    %29 = vector.extract_strided_slice %12 {offsets = [0, 2, 2, 0], sizes = [2, 16, 16, 4], strides = [1, 1, 1, 1]} : vector<2x18x18x4xf32> to vector<2x16x16x4xf32>
    %30 = vector.shape_cast %29 : vector<2x16x16x4xf32> to vector<512x4xf32>
    %31 = tpu.concatenate %14, %16, %18, %20, %22, %24, %26, %28, %30 in 1 : vector<512x4xf32>, vector<512x4xf32>, vector<512x4xf32>, vector<512x4xf32>, vector<512x4xf32>, vector<512x4xf32>, vector<512x4xf32>, vector<512x4xf32>, vector<512x4xf32> -> vector<512x36xf32>
    %c0_22 = arith.constant 0 : index
    %c0_23 = arith.constant 0 : index
    %32 = vector.load %arg4[%c0_22, %c0_23] : memref<36x8xf32, #tpu.memory_space<vmem>>, vector<36x8xf32>
    %cst_24 = arith.constant dense<0.000000e+00> : vector<512x8xf32>
    %33 = tpu.matmul %31, %32, %cst_24 {dimension_numbers = #tpu.dot_dimension_numbers<[1], [0], [0], [1], [0, 0, 1, 1], [], []>} : vector<512x36xf32>, vector<36x8xf32>, vector<512x8xf32> -> vector<512x8xf32>
    %c0_25 = arith.constant 0 : index
    %c0_26 = arith.constant 0 : index
    %34 = vector.load %arg5[%c0_25, %c0_26] : memref<1x8xf32, #tpu.memory_space<vmem>>, vector<1x8xf32>
    %35 = vector.broadcast %34 : vector<1x8xf32> to vector<512x8xf32>
    %36 = arith.addf %33, %35 : vector<512x8xf32>
    %cst_27 = arith.constant 0.000000e+00 : f32
    %37 = vector.broadcast %cst_27 : f32 to vector<512x8xf32>
    %38 = arith.maximumf %36, %37 : vector<512x8xf32>
    %cst_28 = arith.constant dense<0.000000e+00> : vector<8xf32>
    %39 = vector.multi_reduction <add>, %38, %cst_28 [0] : vector<512x8xf32> to vector<8xf32>
    %40 = vector.shape_cast %39 : vector<8xf32> to vector<1x8xf32>
    %41 = arith.mulf %38, %38 : vector<512x8xf32>
    %cst_29 = arith.constant dense<0.000000e+00> : vector<8xf32>
    %42 = vector.multi_reduction <add>, %41, %cst_29 [0] : vector<512x8xf32> to vector<8xf32>
    %43 = vector.shape_cast %42 : vector<8xf32> to vector<1x8xf32>
    %cst_30 = arith.constant 0.001953125 : f32
    %44 = vector.broadcast %cst_30 : f32 to vector<1x8xf32>
    %45 = arith.mulf %40, %44 : vector<1x8xf32>
    %cst_31 = arith.constant 0.001953125 : f32
    %46 = vector.broadcast %cst_31 : f32 to vector<1x8xf32>
    %47 = arith.mulf %43, %46 : vector<1x8xf32>
    %48 = arith.mulf %45, %45 : vector<1x8xf32>
    %49 = arith.subf %47, %48 : vector<1x8xf32>
    %50 = vector.broadcast %45 : vector<1x8xf32> to vector<512x8xf32>
    %51 = arith.subf %38, %50 : vector<512x8xf32>
    %cst_32 = arith.constant 9.99999974E-6 : f32
    %52 = vector.broadcast %cst_32 : f32 to vector<1x8xf32>
    %53 = arith.addf %49, %52 : vector<1x8xf32>
    %54 = math.rsqrt %53 : vector<1x8xf32>
    %55 = vector.broadcast %54 : vector<1x8xf32> to vector<512x8xf32>
    %56 = arith.mulf %51, %55 : vector<512x8xf32>
    %c0_33 = arith.constant 0 : index
    %c0_34 = arith.constant 0 : index
    %57 = vector.load %arg6[%c0_33, %c0_34] : memref<1x8xf32, #tpu.memory_space<vmem>>, vector<1x8xf32>
    %58 = vector.broadcast %57 : vector<1x8xf32> to vector<512x8xf32>
    %59 = arith.mulf %56, %58 : vector<512x8xf32>
    %c0_35 = arith.constant 0 : index
    %c0_36 = arith.constant 0 : index
    %60 = vector.load %arg7[%c0_35, %c0_36] : memref<1x8xf32, #tpu.memory_space<vmem>>, vector<1x8xf32>
    %61 = vector.broadcast %60 : vector<1x8xf32> to vector<512x8xf32>
    %62 = arith.addf %59, %61 : vector<512x8xf32>
    %63 = vector.shape_cast %62 : vector<512x8xf32> to vector<2x256x8xf32>
    %64 = vector.shape_cast %7 : vector<2x8xf32> to vector<2x1x8xf32>
    %65 = vector.broadcast %64 : vector<2x1x8xf32> to vector<2x256x8xf32>
    %66 = arith.addf %63, %65 : vector<2x256x8xf32>
    %67 = vector.shape_cast %66 : vector<2x256x8xf32> to vector<2x16x16x8xf32>
    %cst_37 = arith.constant 0.000000e+00 : f32
    %68 = vector.broadcast %cst_37 : f32 to vector<2x18x18x8xf32>
    %c0_38 = arith.constant 0 : index
    %c0_39 = arith.constant 0 : index
    %c0_40 = arith.constant 0 : index
    %c0_41 = arith.constant 0 : index
    %69 = vector.load %arg16[%c0_38, %c0_39, %c0_40, %c0_41] : memref<2x18x18x8xf32, #tpu.memory_space<vmem>>, vector<2x18x18x8xf32>
    tpu.vector_store %arg16[%c0_38, %c0_39, %c0_40, %c0_41], %68 {strides = array<i32>} : memref<2x18x18x8xf32, #tpu.memory_space<vmem>>, vector<2x18x18x8xf32>,
    %c0_42 = arith.constant 0 : index
    %c1_43 = arith.constant 1 : index
    %c1_44 = arith.constant 1 : index
    %c0_45 = arith.constant 0 : index
    %70 = vector.load %arg16[%c0_42, %c1_43, %c1_44, %c0_45] : memref<2x18x18x8xf32, #tpu.memory_space<vmem>>, vector<2x16x16x8xf32>
    tpu.vector_store %arg16[%c0_42, %c1_43, %c1_44, %c0_45], %67 {strides = array<i32>} : memref<2x18x18x8xf32, #tpu.memory_space<vmem>>, vector<2x16x16x8xf32>,
    %c0_46 = arith.constant 0 : index
    %c0_47 = arith.constant 0 : index
    %c0_48 = arith.constant 0 : index
    %c0_49 = arith.constant 0 : index
    %71 = vector.load %arg16[%c0_46, %c0_47, %c0_48, %c0_49] : memref<2x18x18x8xf32, #tpu.memory_space<vmem>>, vector<2x18x18x8xf32>
    %72 = vector.extract_strided_slice %71 {offsets = [0, 0, 0, 0], sizes = [2, 16, 16, 8], strides = [1, 1, 1, 1]} : vector<2x18x18x8xf32> to vector<2x16x16x8xf32>
    %73 = vector.shape_cast %72 : vector<2x16x16x8xf32> to vector<512x8xf32>
    %74 = vector.extract_strided_slice %71 {offsets = [0, 0, 1, 0], sizes = [2, 16, 16, 8], strides = [1, 1, 1, 1]} : vector<2x18x18x8xf32> to vector<2x16x16x8xf32>
    %75 = vector.shape_cast %74 : vector<2x16x16x8xf32> to vector<512x8xf32>
    %76 = vector.extract_strided_slice %71 {offsets = [0, 0, 2, 0], sizes = [2, 16, 16, 8], strides = [1, 1, 1, 1]} : vector<2x18x18x8xf32> to vector<2x16x16x8xf32>
    %77 = vector.shape_cast %76 : vector<2x16x16x8xf32> to vector<512x8xf32>
    %78 = vector.extract_strided_slice %71 {offsets = [0, 1, 0, 0], sizes = [2, 16, 16, 8], strides = [1, 1, 1, 1]} : vector<2x18x18x8xf32> to vector<2x16x16x8xf32>
    %79 = vector.shape_cast %78 : vector<2x16x16x8xf32> to vector<512x8xf32>
    %80 = vector.extract_strided_slice %71 {offsets = [0, 1, 1, 0], sizes = [2, 16, 16, 8], strides = [1, 1, 1, 1]} : vector<2x18x18x8xf32> to vector<2x16x16x8xf32>
    %81 = vector.shape_cast %80 : vector<2x16x16x8xf32> to vector<512x8xf32>
    %82 = vector.extract_strided_slice %71 {offsets = [0, 1, 2, 0], sizes = [2, 16, 16, 8], strides = [1, 1, 1, 1]} : vector<2x18x18x8xf32> to vector<2x16x16x8xf32>
    %83 = vector.shape_cast %82 : vector<2x16x16x8xf32> to vector<512x8xf32>
    %84 = vector.extract_strided_slice %71 {offsets = [0, 2, 0, 0], sizes = [2, 16, 16, 8], strides = [1, 1, 1, 1]} : vector<2x18x18x8xf32> to vector<2x16x16x8xf32>
    %85 = vector.shape_cast %84 : vector<2x16x16x8xf32> to vector<512x8xf32>
    %86 = vector.extract_strided_slice %71 {offsets = [0, 2, 1, 0], sizes = [2, 16, 16, 8], strides = [1, 1, 1, 1]} : vector<2x18x18x8xf32> to vector<2x16x16x8xf32>
    %87 = vector.shape_cast %86 : vector<2x16x16x8xf32> to vector<512x8xf32>
    %88 = vector.extract_strided_slice %71 {offsets = [0, 2, 2, 0], sizes = [2, 16, 16, 8], strides = [1, 1, 1, 1]} : vector<2x18x18x8xf32> to vector<2x16x16x8xf32>
    %89 = vector.shape_cast %88 : vector<2x16x16x8xf32> to vector<512x8xf32>
    %90 = tpu.concatenate %73, %75, %77, %79, %81, %83, %85, %87, %89 in 1 : vector<512x8xf32>, vector<512x8xf32>, vector<512x8xf32>, vector<512x8xf32>, vector<512x8xf32>, vector<512x8xf32>, vector<512x8xf32>, vector<512x8xf32>, vector<512x8xf32> -> vector<512x72xf32>
    %c0_50 = arith.constant 0 : index
    %c0_51 = arith.constant 0 : index
    %91 = vector.load %arg8[%c0_50, %c0_51] : memref<72x8xf32, #tpu.memory_space<vmem>>, vector<72x8xf32>
    %cst_52 = arith.constant dense<0.000000e+00> : vector<512x8xf32>
    %92 = tpu.matmul %90, %91, %cst_52 {dimension_numbers = #tpu.dot_dimension_numbers<[1], [0], [0], [1], [0, 0, 1, 1], [], []>} : vector<512x72xf32>, vector<72x8xf32>, vector<512x8xf32> -> vector<512x8xf32>
    %c0_53 = arith.constant 0 : index
    %c0_54 = arith.constant 0 : index
    %93 = vector.load %arg9[%c0_53, %c0_54] : memref<1x8xf32, #tpu.memory_space<vmem>>, vector<1x8xf32>
    %94 = vector.broadcast %93 : vector<1x8xf32> to vector<512x8xf32>
    %95 = arith.addf %92, %94 : vector<512x8xf32>
    %cst_55 = arith.constant 0.000000e+00 : f32
    %96 = vector.broadcast %cst_55 : f32 to vector<512x8xf32>
    %97 = arith.maximumf %95, %96 : vector<512x8xf32>
    %cst_56 = arith.constant dense<0.000000e+00> : vector<8xf32>
    %98 = vector.multi_reduction <add>, %97, %cst_56 [0] : vector<512x8xf32> to vector<8xf32>
    %99 = vector.shape_cast %98 : vector<8xf32> to vector<1x8xf32>
    %100 = arith.mulf %97, %97 : vector<512x8xf32>
    %cst_57 = arith.constant dense<0.000000e+00> : vector<8xf32>
    %101 = vector.multi_reduction <add>, %100, %cst_57 [0] : vector<512x8xf32> to vector<8xf32>
    %102 = vector.shape_cast %101 : vector<8xf32> to vector<1x8xf32>
    %cst_58 = arith.constant 0.001953125 : f32
    %103 = vector.broadcast %cst_58 : f32 to vector<1x8xf32>
    %104 = arith.mulf %99, %103 : vector<1x8xf32>
    %cst_59 = arith.constant 0.001953125 : f32
    %105 = vector.broadcast %cst_59 : f32 to vector<1x8xf32>
    %106 = arith.mulf %102, %105 : vector<1x8xf32>
    %107 = arith.mulf %104, %104 : vector<1x8xf32>
    %108 = arith.subf %106, %107 : vector<1x8xf32>
    %109 = vector.broadcast %104 : vector<1x8xf32> to vector<512x8xf32>
    %110 = arith.subf %97, %109 : vector<512x8xf32>
    %cst_60 = arith.constant 9.99999974E-6 : f32
    %111 = vector.broadcast %cst_60 : f32 to vector<1x8xf32>
    %112 = arith.addf %108, %111 : vector<1x8xf32>
    %113 = math.rsqrt %112 : vector<1x8xf32>
    %114 = vector.broadcast %113 : vector<1x8xf32> to vector<512x8xf32>
    %115 = arith.mulf %110, %114 : vector<512x8xf32>
    %c0_61 = arith.constant 0 : index
    %c0_62 = arith.constant 0 : index
    %116 = vector.load %arg10[%c0_61, %c0_62] : memref<1x8xf32, #tpu.memory_space<vmem>>, vector<1x8xf32>
    %117 = vector.broadcast %116 : vector<1x8xf32> to vector<512x8xf32>
    %118 = arith.mulf %115, %117 : vector<512x8xf32>
    %c0_63 = arith.constant 0 : index
    %c0_64 = arith.constant 0 : index
    %119 = vector.load %arg11[%c0_63, %c0_64] : memref<1x8xf32, #tpu.memory_space<vmem>>, vector<1x8xf32>
    %120 = vector.broadcast %119 : vector<1x8xf32> to vector<512x8xf32>
    %121 = arith.addf %118, %120 : vector<512x8xf32>
    %122 = vector.shape_cast %121 : vector<512x8xf32> to vector<2x16x16x8xf32>
    %c0_65 = arith.constant 0 : index
    %c1_66 = arith.constant 1 : index
    %c1_67 = arith.constant 1 : index
    %c0_68 = arith.constant 0 : index
    %123 = vector.load %arg16[%c0_65, %c1_66, %c1_67, %c0_68] : memref<2x18x18x8xf32, #tpu.memory_space<vmem>>, vector<2x16x16x8xf32>
    tpu.vector_store %arg16[%c0_65, %c1_66, %c1_67, %c0_68], %122 {strides = array<i32>} : memref<2x18x18x8xf32, #tpu.memory_space<vmem>>, vector<2x16x16x8xf32>,
    %c0_69 = arith.constant 0 : index
    %c0_70 = arith.constant 0 : index
    %c0_71 = arith.constant 0 : index
    %c0_72 = arith.constant 0 : index
    %124 = tpu.strided_load %arg16[%c0_69, %c0_70, %c0_71, %c0_72] {strides = array<i32: 1, 2, 2, 1>} : memref<2x18x18x8xf32, #tpu.memory_space<vmem>>, vector<2x8x8x8xf32>
    %125 = vector.shape_cast %124 : vector<2x8x8x8xf32> to vector<128x8xf32>
    %c0_73 = arith.constant 0 : index
    %c0_74 = arith.constant 0 : index
    %c1_75 = arith.constant 1 : index
    %c0_76 = arith.constant 0 : index
    %126 = tpu.strided_load %arg16[%c0_73, %c0_74, %c1_75, %c0_76] {strides = array<i32: 1, 2, 2, 1>} : memref<2x18x18x8xf32, #tpu.memory_space<vmem>>, vector<2x8x8x8xf32>
    %127 = vector.shape_cast %126 : vector<2x8x8x8xf32> to vector<128x8xf32>
    %c0_77 = arith.constant 0 : index
    %c0_78 = arith.constant 0 : index
    %c2 = arith.constant 2 : index
    %c0_79 = arith.constant 0 : index
    %128 = tpu.strided_load %arg16[%c0_77, %c0_78, %c2, %c0_79] {strides = array<i32: 1, 2, 2, 1>} : memref<2x18x18x8xf32, #tpu.memory_space<vmem>>, vector<2x8x8x8xf32>
    %129 = vector.shape_cast %128 : vector<2x8x8x8xf32> to vector<128x8xf32>
    %c0_80 = arith.constant 0 : index
    %c0_81 = arith.constant 0 : index
    %c3 = arith.constant 3 : index
    %c0_82 = arith.constant 0 : index
    %130 = tpu.strided_load %arg16[%c0_80, %c0_81, %c3, %c0_82] {strides = array<i32: 1, 2, 2, 1>} : memref<2x18x18x8xf32, #tpu.memory_space<vmem>>, vector<2x8x8x8xf32>
    %131 = vector.shape_cast %130 : vector<2x8x8x8xf32> to vector<128x8xf32>
    %c0_83 = arith.constant 0 : index
    %c1_84 = arith.constant 1 : index
    %c0_85 = arith.constant 0 : index
    %c0_86 = arith.constant 0 : index
    %132 = tpu.strided_load %arg16[%c0_83, %c1_84, %c0_85, %c0_86] {strides = array<i32: 1, 2, 2, 1>} : memref<2x18x18x8xf32, #tpu.memory_space<vmem>>, vector<2x8x8x8xf32>
    %133 = vector.shape_cast %132 : vector<2x8x8x8xf32> to vector<128x8xf32>
    %c0_87 = arith.constant 0 : index
    %c1_88 = arith.constant 1 : index
    %c1_89 = arith.constant 1 : index
    %c0_90 = arith.constant 0 : index
    %134 = tpu.strided_load %arg16[%c0_87, %c1_88, %c1_89, %c0_90] {strides = array<i32: 1, 2, 2, 1>} : memref<2x18x18x8xf32, #tpu.memory_space<vmem>>, vector<2x8x8x8xf32>
    %135 = vector.shape_cast %134 : vector<2x8x8x8xf32> to vector<128x8xf32>
    %c0_91 = arith.constant 0 : index
    %c1_92 = arith.constant 1 : index
    %c2_93 = arith.constant 2 : index
    %c0_94 = arith.constant 0 : index
    %136 = tpu.strided_load %arg16[%c0_91, %c1_92, %c2_93, %c0_94] {strides = array<i32: 1, 2, 2, 1>} : memref<2x18x18x8xf32, #tpu.memory_space<vmem>>, vector<2x8x8x8xf32>
    %137 = vector.shape_cast %136 : vector<2x8x8x8xf32> to vector<128x8xf32>
    %c0_95 = arith.constant 0 : index
    %c1_96 = arith.constant 1 : index
    %c3_97 = arith.constant 3 : index
    %c0_98 = arith.constant 0 : index
    %138 = tpu.strided_load %arg16[%c0_95, %c1_96, %c3_97, %c0_98] {strides = array<i32: 1, 2, 2, 1>} : memref<2x18x18x8xf32, #tpu.memory_space<vmem>>, vector<2x8x8x8xf32>
    %139 = vector.shape_cast %138 : vector<2x8x8x8xf32> to vector<128x8xf32>
    %c0_99 = arith.constant 0 : index
    %c2_100 = arith.constant 2 : index
    %c0_101 = arith.constant 0 : index
    %c0_102 = arith.constant 0 : index
    %140 = tpu.strided_load %arg16[%c0_99, %c2_100, %c0_101, %c0_102] {strides = array<i32: 1, 2, 2, 1>} : memref<2x18x18x8xf32, #tpu.memory_space<vmem>>, vector<2x8x8x8xf32>
    %141 = vector.shape_cast %140 : vector<2x8x8x8xf32> to vector<128x8xf32>
    %c0_103 = arith.constant 0 : index
    %c2_104 = arith.constant 2 : index
    %c1_105 = arith.constant 1 : index
    %c0_106 = arith.constant 0 : index
    %142 = tpu.strided_load %arg16[%c0_103, %c2_104, %c1_105, %c0_106] {strides = array<i32: 1, 2, 2, 1>} : memref<2x18x18x8xf32, #tpu.memory_space<vmem>>, vector<2x8x8x8xf32>
    %143 = vector.shape_cast %142 : vector<2x8x8x8xf32> to vector<128x8xf32>
    %c0_107 = arith.constant 0 : index
    %c2_108 = arith.constant 2 : index
    %c2_109 = arith.constant 2 : index
    %c0_110 = arith.constant 0 : index
    %144 = tpu.strided_load %arg16[%c0_107, %c2_108, %c2_109, %c0_110] {strides = array<i32: 1, 2, 2, 1>} : memref<2x18x18x8xf32, #tpu.memory_space<vmem>>, vector<2x8x8x8xf32>
    %145 = vector.shape_cast %144 : vector<2x8x8x8xf32> to vector<128x8xf32>
    %c0_111 = arith.constant 0 : index
    %c2_112 = arith.constant 2 : index
    %c3_113 = arith.constant 3 : index
    %c0_114 = arith.constant 0 : index
    %146 = tpu.strided_load %arg16[%c0_111, %c2_112, %c3_113, %c0_114] {strides = array<i32: 1, 2, 2, 1>} : memref<2x18x18x8xf32, #tpu.memory_space<vmem>>, vector<2x8x8x8xf32>
    %147 = vector.shape_cast %146 : vector<2x8x8x8xf32> to vector<128x8xf32>
    %c0_115 = arith.constant 0 : index
    %c3_116 = arith.constant 3 : index
    %c0_117 = arith.constant 0 : index
    %c0_118 = arith.constant 0 : index
    %148 = tpu.strided_load %arg16[%c0_115, %c3_116, %c0_117, %c0_118] {strides = array<i32: 1, 2, 2, 1>} : memref<2x18x18x8xf32, #tpu.memory_space<vmem>>, vector<2x8x8x8xf32>
    %149 = vector.shape_cast %148 : vector<2x8x8x8xf32> to vector<128x8xf32>
    %c0_119 = arith.constant 0 : index
    %c3_120 = arith.constant 3 : index
    %c1_121 = arith.constant 1 : index
    %c0_122 = arith.constant 0 : index
    %150 = tpu.strided_load %arg16[%c0_119, %c3_120, %c1_121, %c0_122] {strides = array<i32: 1, 2, 2, 1>} : memref<2x18x18x8xf32, #tpu.memory_space<vmem>>, vector<2x8x8x8xf32>
    %151 = vector.shape_cast %150 : vector<2x8x8x8xf32> to vector<128x8xf32>
    %c0_123 = arith.constant 0 : index
    %c3_124 = arith.constant 3 : index
    %c2_125 = arith.constant 2 : index
    %c0_126 = arith.constant 0 : index
    %152 = tpu.strided_load %arg16[%c0_123, %c3_124, %c2_125, %c0_126] {strides = array<i32: 1, 2, 2, 1>} : memref<2x18x18x8xf32, #tpu.memory_space<vmem>>, vector<2x8x8x8xf32>
    %153 = vector.shape_cast %152 : vector<2x8x8x8xf32> to vector<128x8xf32>
    %c0_127 = arith.constant 0 : index
    %c3_128 = arith.constant 3 : index
    %c3_129 = arith.constant 3 : index
    %c0_130 = arith.constant 0 : index
    %154 = tpu.strided_load %arg16[%c0_127, %c3_128, %c3_129, %c0_130] {strides = array<i32: 1, 2, 2, 1>} : memref<2x18x18x8xf32, #tpu.memory_space<vmem>>, vector<2x8x8x8xf32>
    %155 = vector.shape_cast %154 : vector<2x8x8x8xf32> to vector<128x8xf32>
    %156 = tpu.concatenate %125, %127, %129, %131, %133, %135, %137, %139, %141, %143, %145, %147, %149, %151, %153, %155 in 1 : vector<128x8xf32>, vector<128x8xf32>, vector<128x8xf32>, vector<128x8xf32>, vector<128x8xf32>, vector<128x8xf32>, vector<128x8xf32>, vector<128x8xf32>, vector<128x8xf32>, vector<128x8xf32>, vector<128x8xf32>, vector<128x8xf32>, vector<128x8xf32>, vector<128x8xf32>, vector<128x8xf32>, vector<128x8xf32> -> vector<128x128xf32>
    %c0_131 = arith.constant 0 : index
    %c0_132 = arith.constant 0 : index
    %157 = vector.load %arg12[%c0_131, %c0_132] : memref<128x8xf32, #tpu.memory_space<vmem>>, vector<128x8xf32>
    %cst_133 = arith.constant dense<0.000000e+00> : vector<128x8xf32>
    %158 = tpu.matmul %156, %157, %cst_133 {dimension_numbers = #tpu.dot_dimension_numbers<[1], [0], [0], [1], [0, 0, 1, 1], [], []>} : vector<128x128xf32>, vector<128x8xf32>, vector<128x8xf32> -> vector<128x8xf32>
    %c0_134 = arith.constant 0 : index
    %c0_135 = arith.constant 0 : index
    %159 = vector.load %arg13[%c0_134, %c0_135] : memref<1x8xf32, #tpu.memory_space<vmem>>, vector<1x8xf32>
    %160 = vector.broadcast %159 : vector<1x8xf32> to vector<128x8xf32>
    %161 = arith.addf %158, %160 : vector<128x8xf32>
    %162 = vector.shape_cast %161 : vector<128x8xf32> to vector<2x8x8x8xf32>
    %c0_136 = arith.constant 0 : index
    %c0_137 = arith.constant 0 : index
    %c0_138 = arith.constant 0 : index
    %c0_139 = arith.constant 0 : index
    %163 = vector.load %arg14[%c0_136, %c0_137, %c0_138, %c0_139] : memref<2x8x8x8xf32, #tpu.memory_space<vmem>>, vector<2x8x8x8xf32>
    tpu.vector_store %arg14[%c0_136, %c0_137, %c0_138, %c0_139], %162 {strides = array<i32>} : memref<2x8x8x8xf32, #tpu.memory_space<vmem>>, vector<2x8x8x8xf32>,
    return
  }
}

</mosaic_0001>

<llo_original>
// kernel: block_forward.1
$region0: #{block_forward.1}
  #allocation0 [shape = 'u32[]', space=smem, size = 0x4, offset = 0x4, fixed_abs, tag = 'smem constant byte address 0x4 - core index']
  #allocation1 [shape = 'u32[144,128]{1,0:T(1,128)}', space=vmem, size = 0x12000, scoped, tag = 'internal scratch']
  #allocation2 [shape = 'f32[2,18,18,4]{3,2,1,0:T(8,128)}', space=vmem, size = 0x6c000, scoped, tag = 'scratch operand']
  #allocation3 [shape = 'f32[2,18,18,8]{3,2,1,0:T(8,128)}', space=vmem, size = 0x6c000, scoped, tag = 'scratch operand']
  %s0 = inlined_call_operand.vmem [shape: f32[2,16,16,4], index: 0, kind: input, shape index: {}]
  %s1 = inlined_call_operand.vmem [shape: f32[2,32], index: 1, kind: input, shape index: {}]
  %s2 = inlined_call_operand.vmem [shape: f32[32,8], index: 2, kind: input, shape index: {}]
  %s3 = inlined_call_operand.vmem [shape: f32[1,8], index: 3, kind: input, shape index: {}]
  %s4 = inlined_call_operand.vmem [shape: f32[36,8], index: 4, kind: input, shape index: {}]
  %s5 = inlined_call_operand.vmem [shape: f32[1,8], index: 5, kind: input, shape index: {}]
  %s6 = inlined_call_operand.vmem [shape: f32[1,8], index: 6, kind: input, shape index: {}]
  %s7 = inlined_call_operand.vmem [shape: f32[1,8], index: 7, kind: input, shape index: {}]
  %s8 = inlined_call_operand.vmem [shape: f32[72,8], index: 8, kind: input, shape index: {}]
  %s9 = inlined_call_operand.vmem [shape: f32[1,8], index: 9, kind: input, shape index: {}]
  %s10 = inlined_call_operand.vmem [shape: f32[1,8], index: 10, kind: input, shape index: {}]
  %s11 = inlined_call_operand.vmem [shape: f32[1,8], index: 11, kind: input, shape index: {}]
  %s12 = inlined_call_operand.vmem [shape: f32[128,8], index: 12, kind: input, shape index: {}]
  %s13 = inlined_call_operand.vmem [shape: f32[1,8], index: 13, kind: input, shape index: {}]
  %s14 = inlined_call_operand.vmem [shape: f32[2,8,8,8], index: 14, kind: output, shape index: {}]
  %s15 = sld [smem:[#allocation0]]
  $region66: #{block_forward.1} parent=0
    _
  %s17 = ssub.s32 1, %s15
  %s18 = scalar_select 0, %s17, %s15
  // Predicated region
  $region2: #{block_forward.1} parent=0 // pred_check
    _
  $region3: #{block_forward.1} parent=0 // pred_check_branch
    %20 = sbr.rel (0) target = $region5
  $region4: #{block_forward.1} parent=0 // pred_region
    _
  $region5: #{block_forward.1} parent=0 // pred_fallthru
    _
  // Predicated region
  $region6: #{block_forward.1} parent=0 // pred_check
    _
  $region7: #{block_forward.1} parent=0 // pred_check_branch
    %22 = sbr.rel (0) target = $region9
  $region8: #{block_forward.1} parent=0 // pred_region
    _
  $region9: #{block_forward.1} parent=0 // pred_fallthru
    _
  // Predicated region
  $region10: #{block_forward.1} parent=0 // pred_check
    _
  $region11: #{block_forward.1} parent=0 // pred_check_branch
    %24 = sbr.rel (0) target = $region13
  $region12: #{block_forward.1} parent=0 // pred_region
    _
  $region13: #{block_forward.1} parent=0 // pred_fallthru
    _
  // Predicated region
  $region14: #{block_forward.1} parent=0 // pred_check
    _
  $region15: #{block_forward.1} parent=0 // pred_check_branch
    %26 = sbr.rel (0) target = $region17
  $region16: #{block_forward.1} parent=0 // pred_region
    _
  $region17: #{block_forward.1} parent=0 // pred_fallthru
    _
  // Predicated region
  $region18: #{block_forward.1} parent=0 // pred_check
    _
  $region19: #{block_forward.1} parent=0 // pred_check_branch
    %28 = sbr.rel (0) target = $region21
  $region20: #{block_forward.1} parent=0 // pred_region
    _
  $region21: #{block_forward.1} parent=0 // pred_fallthru
    _
  // Predicated region
  $region22: #{block_forward.1} parent=0 // pred_check
    _
  $region23: #{block_forward.1} parent=0 // pred_check_branch
    %30 = sbr.rel (0) target = $region25
  $region24: #{block_forward.1} parent=0 // pred_region
    _
  $region25: #{block_forward.1} parent=0 // pred_fallthru
    _
  // Predicated region
  $region26: #{block_forward.1} parent=0 // pred_check
    _
  $region27: #{block_forward.1} parent=0 // pred_check_branch
    %32 = sbr.rel (0) target = $region29
  $region28: #{block_forward.1} parent=0 // pred_region
    _
  $region29: #{block_forward.1} parent=0 // pred_fallthru
    _
  // Predicated region
  $region30: #{block_forward.1} parent=0 // pred_check
    _
  $region31: #{block_forward.1} parent=0 // pred_check_branch
    %34 = sbr.rel (0) target = $region33
  $region32: #{block_forward.1} parent=0 // pred_region
    _
  $region33: #{block_forward.1} parent=0 // pred_fallthru
    _
  // Predicated region
  $region34: #{block_forward.1} parent=0 // pred_check
    _
  $region35: #{block_forward.1} parent=0 // pred_check_branch
    %36 = sbr.rel (0) target = $region37
  $region36: #{block_forward.1} parent=0 // pred_region
    _
  $region37: #{block_forward.1} parent=0 // pred_fallthru
    _
  // Predicated region
  $region38: #{block_forward.1} parent=0 // pred_check
    _
  $region39: #{block_forward.1} parent=0 // pred_check_branch
    %38 = sbr.rel (0) target = $region41
  $region40: #{block_forward.1} parent=0 // pred_region
    _
  $region41: #{block_forward.1} parent=0 // pred_fallthru
    _
  // Predicated region
  $region42: #{block_forward.1} parent=0 // pred_check
    _
  $region43: #{block_forward.1} parent=0 // pred_check_branch
    %40 = sbr.rel (0) target = $region45
  $region44: #{block_forward.1} parent=0 // pred_region
    _
  $region45: #{block_forward.1} parent=0 // pred_fallthru
    _
  // Predicated region
  $region46: #{block_forward.1} parent=0 // pred_check
    _
  $region47: #{block_forward.1} parent=0 // pred_check_branch
    %42 = sbr.rel (0) target = $region49
  $region48: #{block_forward.1} parent=0 // pred_region
    _
  $region49: #{block_forward.1} parent=0 // pred_fallthru
    _
  // Predicated region
  $region50: #{block_forward.1} parent=0 // pred_check
    _
  $region51: #{block_forward.1} parent=0 // pred_check_branch
    %44 = sbr.rel (0) target = $region53
  $region52: #{block_forward.1} parent=0 // pred_region
    _
  $region53: #{block_forward.1} parent=0 // pred_fallthru
    _
  // Predicated region
  $region54: #{block_forward.1} parent=0 // pred_check
    _
  $region55: #{block_forward.1} parent=0 // pred_check_branch
    %46 = sbr.rel (0) target = $region57
  $region56: #{block_forward.1} parent=0 // pred_region
    _
  $region57: #{block_forward.1} parent=0 // pred_fallthru
    _
  %v47 = vld [vmem:[%s1] sm:$0x3]
  %v48 = vld [vmem:[%s2] sm:$0xff]
  %v49 = vld [vmem:[%s2 + $0x8] sm:$0xff]
  %v50 = vld [vmem:[%s2 + $0x10] sm:$0xff]
  %v51 = vld [vmem:[%s2 + $0x18] sm:$0xff]
  %v52 = vld [vmem:[%s3] sm:$0x1]
  %v54 = vlaneseq
  %v55 = vshrl.u32 %v54, 7
  %v56 = vsub.s32 0, %v55
  %v57 = vrot.slane %v52, %v56
  %vm59 = vcmask 261120
  %v61 = vsel %vm59, %v47, 0
  %63 = vmatprep.subr.mxu0 0.0
  %64 = vmatpush1.msra.mxu0 %v48
  %65 = vmatprep.subr.mxu0 0.0
  %66 = vmatpush1.msra.mxu0 %v49
  %67 = vmatprep.subr.mxu0 0.0
  %68 = vmatpush1.msra.mxu0 %v50
  %69 = vmatprep.subr.mxu0 0.0
  %70 = vmatpush1.msra.mxu0 %v51
  %71 = vmatprep.subr.mxu0 0.0
  %72 = vmatpush1.msra.mxu0 0.0
  %73 = vmatprep.subr.mxu0 0.0
  %74 = vmatpush1.msra.mxu0 0.0
  %75 = vmatprep.subr.mxu0 0.0
  %76 = vmatpush1.msra.mxu0 0.0
  %77 = vmatprep.subr.mxu0 0.0
  %78 = vmatpush1.msra.mxu0 0.0
  %79 = vmatprep.subr.mxu0 0.0
  %80 = vmatpush1.msra.mxu0 0.0
  %81 = vmatprep.subr.mxu0 0.0
  %82 = vmatpush1.msra.mxu0 0.0
  %83 = vmatprep.subr.mxu0 0.0
  %84 = vmatpush1.msra.mxu0 0.0
  %85 = vmatprep.subr.mxu0 0.0
  %86 = vmatpush1.msra.mxu0 0.0
  %87 = vmatprep.subr.mxu0 0.0
  %88 = vmatpush1.msra.mxu0 0.0
  %89 = vmatprep.subr.mxu0 0.0
  %90 = vmatpush1.msra.mxu0 0.0
  %91 = vmatprep.subr.mxu0 0.0
  %92 = vmatpush1.msra.mxu0 0.0
  %93 = vmatprep.subr.mxu0 0.0
  %94 = vmatpush1.msra.mxu0 0.0
  %95 = vmatprep.subr.mxu0 0.0
  %96 = vmatpush1.msra.mxu0 0.0
  %97 = vmatprep.subr.mxu0 0.0
  %98 = vmatpush1.msra.mxu0 0.0
  %99 = vmatprep.subr.mxu0 0.0
  %100 = vmatpush1.msra.mxu0 0.0
  %101 = vmatprep.subr.mxu0 0.0
  %102 = vmatpush1.msra.mxu0 0.0
  %103 = vmatprep.subr.mxu0 0.0
  %104 = vmatpush1.msra.mxu0 0.0
  %105 = vmatprep.subr.mxu0 0.0
  %106 = vmatpush1.msra.mxu0 0.0
  %107 = vmatprep.subr.mxu0 0.0
  %108 = vmatpush1.msra.mxu0 0.0
  %109 = vmatprep.subr.mxu0 0.0
  %110 = vmatpush1.msra.mxu0 0.0
  %111 = vmatprep.subr.mxu0 0.0
  %112 = vmatpush1.msra.mxu0 0.0
  %113 = vmatprep.subr.mxu0 0.0
  %114 = vmatpush1.msra.mxu0 0.0
  %115 = vmatprep.subr.mxu0 0.0
  %116 = vmatpush1.msra.mxu0 0.0
  %117 = vmatprep.subr.mxu0 0.0
  %118 = vmatpush1.msra.mxu0 0.0
  %119 = vmatprep.subr.mxu0 0.0
  %120 = vmatpush1.msra.mxu0 0.0
  %121 = vmatprep.subr.mxu0 0.0
  %122 = vmatpush1.msra.mxu0 0.0
  %123 = vmatprep.subr.mxu0 0.0
  %124 = vmatpush1.msra.mxu0 0.0
  %125 = vmatprep.subr.mxu0 0.0
  %126 = vmatpush1.msra.mxu0 0.0
  %127 = vmatprep.mubr.f32.mxu0 0.0
  %128 = vmatmul.mubr.f32.gmra.mrb[0].mxu0 %v61
  %v129 = vpop.f32.mrb[0].mxu0
  %v130 = vadd.f32 %v57, %v129
  %v131 = vpop.f32.mrb[0].mxu0
  %132 = vdwg.mxu0
  %v133 = vmax.f32 %v130, 0.0
  %v134 = vld [vmem:[%s0] sm:$0xff]
  %v135 = vld [vmem:[%s0 + $0x8] sm:$0xff]
  %v136 = vld [vmem:[%s0 + $0x10] sm:$0xff]
  %v137 = vld [vmem:[%s0 + $0x18] sm:$0xff]
  %v138 = vld [vmem:[%s0 + $0x20] sm:$0xff]
  %v139 = vld [vmem:[%s0 + $0x28] sm:$0xff]
  %v140 = vld [vmem:[%s0 + $0x30] sm:$0xff]
  %v141 = vld [vmem:[%s0 + $0x38] sm:$0xff]
  %v142 = vld [vmem:[%s0 + $0x40] sm:$0xff]
  %v143 = vld [vmem:[%s0 + $0x48] sm:$0xff]
  %v144 = vld [vmem:[%s0 + $0x50] sm:$0xff]
  %v145 = vld [vmem:[%s0 + $0x58] sm:$0xff]
  %v146 = vld [vmem:[%s0 + $0x60] sm:$0xff]
  %v147 = vld [vmem:[%s0 + $0x68] sm:$0xff]
  %v148 = vld [vmem:[%s0 + $0x70] sm:$0xff]
  %v149 = vld [vmem:[%s0 + $0x78] sm:$0xff]
  %v150 = vld [vmem:[%s0 + $0x80] sm:$0xff]
  %v151 = vld [vmem:[%s0 + $0x88] sm:$0xff]
  %v152 = vld [vmem:[%s0 + $0x90] sm:$0xff]
  %v153 = vld [vmem:[%s0 + $0x98] sm:$0xff]
  %v154 = vld [vmem:[%s0 + $0xa0] sm:$0xff]
  %v155 = vld [vmem:[%s0 + $0xa8] sm:$0xff]
  %v156 = vld [vmem:[%s0 + $0xb0] sm:$0xff]
  %v157 = vld [vmem:[%s0 + $0xb8] sm:$0xff]
  %v158 = vld [vmem:[%s0 + $0xc0] sm:$0xff]
  %v159 = vld [vmem:[%s0 + $0xc8] sm:$0xff]
  %v160 = vld [vmem:[%s0 + $0xd0] sm:$0xff]
  %v161 = vld [vmem:[%s0 + $0xd8] sm:$0xff]
  %v162 = vld [vmem:[%s0 + $0xe0] sm:$0xff]
  %v163 = vld [vmem:[%s0 + $0xe8] sm:$0xff]
  %v164 = vld [vmem:[%s0 + $0xf0] sm:$0xff]
  %v165 = vld [vmem:[%s0 + $0xf8] sm:$0xff]
  %v166 = vld [vmem:[%s0 + $0x100] sm:$0xff]
  %v167 = vld [vmem:[%s0 + $0x108] sm:$0xff]
  %v168 = vld [vmem:[%s0 + $0x110] sm:$0xff]
  %v169 = vld [vmem:[%s0 + $0x118] sm:$0xff]
  %v170 = vld [vmem:[%s0 + $0x120] sm:$0xff]
  %v171 = vld [vmem:[%s0 + $0x128] sm:$0xff]
  %v172 = vld [vmem:[%s0 + $0x130] sm:$0xff]
  %v173 = vld [vmem:[%s0 + $0x138] sm:$0xff]
  %v174 = vld [vmem:[%s0 + $0x140] sm:$0xff]
  %v175 = vld [vmem:[%s0 + $0x148] sm:$0xff]
  %v176 = vld [vmem:[%s0 + $0x150] sm:$0xff]
  %v177 = vld [vmem:[%s0 + $0x158] sm:$0xff]
  %v178 = vld [vmem:[%s0 + $0x160] sm:$0xff]
  %v179 = vld [vmem:[%s0 + $0x168] sm:$0xff]
  %v180 = vld [vmem:[%s0 + $0x170] sm:$0xff]
  %v181 = vld [vmem:[%s0 + $0x178] sm:$0xff]
  %v182 = vld [vmem:[%s0 + $0x180] sm:$0xff]
  %v183 = vld [vmem:[%s0 + $0x188] sm:$0xff]
  %v184 = vld [vmem:[%s0 + $0x190] sm:$0xff]
  %v185 = vld [vmem:[%s0 + $0x198] sm:$0xff]
  %v186 = vld [vmem:[%s0 + $0x1a0] sm:$0xff]
  %v187 = vld [vmem:[%s0 + $0x1a8] sm:$0xff]
  %v188 = vld [vmem:[%s0 + $0x1b0] sm:$0xff]
  %v189 = vld [vmem:[%s0 + $0x1b8] sm:$0xff]
  %v190 = vld [vmem:[%s0 + $0x1c0] sm:$0xff]
  %v191 = vld [vmem:[%s0 + $0x1c8] sm:$0xff]
  %v192 = vld [vmem:[%s0 + $0x1d0] sm:$0xff]
  %v193 = vld [vmem:[%s0 + $0x1d8] sm:$0xff]
  %v194 = vld [vmem:[%s0 + $0x1e0] sm:$0xff]
  %v195 = vld [vmem:[%s0 + $0x1e8] sm:$0xff]
  %v196 = vld [vmem:[%s0 + $0x1f0] sm:$0xff]
  %v197 = vld [vmem:[%s0 + $0x1f8] sm:$0xff]
  %vm198 = vcmask 31744
  %199 = vst.msk [vmem:[#allocation2] sm:$0xff] %vm198, 0.0
  %200 = vst.msk [vmem:[#allocation2 + $0x8] sm:$0xff] %vm198, 0.0
  %vm201 = vcmask 25600
  %202 = vst.msk [vmem:[#allocation2 + $0x10] sm:$0x3] %vm201, 0.0
  %203 = vst.msk [vmem:[#allocation2 + $0x18] sm:$0xff] %vm198, 0.0
  %204 = vst.msk [vmem:[#allocation2 + $0x20] sm:$0xff] %vm198, 0.0
  %205 = vst.msk [vmem:[#allocation2 + $0x28] sm:$0x3] %vm201, 0.0
  %206 = vst.msk [vmem:[#allocation2 + $0x30] sm:$0xff] %vm198, 0.0
  %207 = vst.msk [vmem:[#allocation2 + $0x38] sm:$0xff] %vm198, 0.0
  %208 = vst.msk [vmem:[#allocation2 + $0x40] sm:$0x3] %vm201, 0.0
  %209 = vst.msk [vmem:[#allocation2 + $0x48] sm:$0xff] %vm198, 0.0
  %210 = vst.msk [vmem:[#allocation2 + $0x50] sm:$0xff] %vm198, 0.0
  %211 = vst.msk [vmem:[#allocation2 + $0x58] sm:$0x3] %vm201, 0.0
  %212 = vst.msk [vmem:[#allocation2 + $0x60] sm:$0xff] %vm198, 0.0
  %213 = vst.msk [vmem:[#allocation2 + $0x68] sm:$0xff] %vm198, 0.0
  %214 = vst.msk [vmem:[#allocation2 + $0x70] sm:$0x3] %vm201, 0.0
  %215 = vst.msk [vmem:[#allocation2 + $0x78] sm:$0xff] %vm198, 0.0
  %216 = vst.msk [vmem:[#allocation2 + $0x80] sm:$0xff] %vm198, 0.0
  %217 = vst.msk [vmem:[#allocation2 + $0x88] sm:$0x3] %vm201, 0.0
  %218 = vst.msk [vmem:[#allocation2 + $0x90] sm:$0xff] %vm198, 0.0
  %219 = vst.msk [vmem:[#allocation2 + $0x98] sm:$0xff] %vm198, 0.0
  %220 = vst.msk [vmem:[#allocation2 + $0xa0] sm:$0x3] %vm201, 0.0
  %221 = vst.msk [vmem:[#allocation2 + $0xa8] sm:$0xff] %vm198, 0.0
  %222 = vst.msk [vmem:[#allocation2 + $0xb0] sm:$0xff] %vm198, 0.0
  %223 = vst.msk [vmem:[#allocation2 + $0xb8] sm:$0x3] %vm201, 0.0
  %224 = vst.msk [vmem:[#allocation2 + $0xc0] sm:$0xff] %vm198, 0.0
  %225 = vst.msk [vmem:[#allocation2 + $0xc8] sm:$0xff] %vm198, 0.0
  %226 = vst.msk [vmem:[#allocation2 + $0xd0] sm:$0x3] %vm201, 0.0
  %227 = vst.msk [vmem:[#allocation2 + $0xd8] sm:$0xff] %vm198, 0.0
  %228 = vst.msk [vmem:[#allocation2 + $0xe0] sm:$0xff] %vm198, 0.0
  %229 = vst.msk [vmem:[#allocation2 + $0xe8] sm:$0x3] %vm201, 0.0
  %230 = vst.msk [vmem:[#allocation2 + $0xf0] sm:$0xff] %vm198, 0.0
  %231 = vst.msk [vmem:[#allocation2 + $0xf8] sm:$0xff] %vm198, 0.0
  %232 = vst.msk [vmem:[#allocation2 + $0x100] sm:$0x3] %vm201, 0.0
  %233 = vst.msk [vmem:[#allocation2 + $0x108] sm:$0xff] %vm198, 0.0
  %234 = vst.msk [vmem:[#allocation2 + $0x110] sm:$0xff] %vm198, 0.0
  %235 = vst.msk [vmem:[#allocation2 + $0x118] sm:$0x3] %vm201, 0.0
  %236 = vst.msk [vmem:[#allocation2 + $0x120] sm:$0xff] %vm198, 0.0
  %237 = vst.msk [vmem:[#allocation2 + $0x128] sm:$0xff] %vm198, 0.0
  %238 = vst.msk [vmem:[#allocation2 + $0x130] sm:$0x3] %vm201, 0.0
  %239 = vst.msk [vmem:[#allocation2 + $0x138] sm:$0xff] %vm198, 0.0
  %240 = vst.msk [vmem:[#allocation2 + $0x140] sm:$0xff] %vm198, 0.0
  %241 = vst.msk [vmem:[#allocation2 + $0x148] sm:$0x3] %vm201, 0.0
  %242 = vst.msk [vmem:[#allocation2 + $0x150] sm:$0xff] %vm198, 0.0
  %243 = vst.msk [vmem:[#allocation2 + $0x158] sm:$0xff] %vm198, 0.0
  %244 = vst.msk [vmem:[#allocation2 + $0x160] sm:$0x3] %vm201, 0.0
  %245 = vst.msk [vmem:[#allocation2 + $0x168] sm:$0xff] %vm198, 0.0
  %246 = vst.msk [vmem:[#allocation2 + $0x170] sm:$0xff] %vm198, 0.0
  %247 = vst.msk [vmem:[#allocation2 + $0x178] sm:$0x3] %vm201, 0.0
  %248 = vst.msk [vmem:[#allocation2 + $0x180] sm:$0xff] %vm198, 0.0
  %249 = vst.msk [vmem:[#allocation2 + $0x188] sm:$0xff] %vm198, 0.0
  %250 = vst.msk [vmem:[#allocation2 + $0x190] sm:$0x3] %vm201, 0.0
  %251 = vst.msk [vmem:[#allocation2 + $0x198] sm:$0xff] %vm198, 0.0
  %252 = vst.msk [vmem:[#allocation2 + $0x1a0] sm:$0xff] %vm198, 0.0
  %253 = vst.msk [vmem:[#allocation2 + $0x1a8] sm:$0x3] %vm201, 0.0
  %254 = vst.msk [vmem:[#allocation2 + $0x1b0] sm:$0xff] %vm198, 0.0
  %255 = vst.msk [vmem:[#allocation2 + $0x1b8] sm:$0xff] %vm198, 0.0
  %256 = vst.msk [vmem:[#allocation2 + $0x1c0] sm:$0x3] %vm201, 0.0
  %257 = vst.msk [vmem:[#allocation2 + $0x1c8] sm:$0xff] %vm198, 0.0
  %258 = vst.msk [vmem:[#allocation2 + $0x1d0] sm:$0xff] %vm198, 0.0
  %259 = vst.msk [vmem:[#allocation2 + $0x1d8] sm:$0x3] %vm201, 0.0
  %260 = vst.msk [vmem:[#allocation2 + $0x1e0] sm:$0xff] %vm198, 0.0
  %261 = vst.msk [vmem:[#allocation2 + $0x1e8] sm:$0xff] %vm198, 0.0
  %262 = vst.msk [vmem:[#allocation2 + $0x1f0] sm:$0x3] %vm201, 0.0
  %263 = vst.msk [vmem:[#allocation2 + $0x1f8] sm:$0xff] %vm198, 0.0
  %264 = vst.msk [vmem:[#allocation2 + $0x200] sm:$0xff] %vm198, 0.0
  %265 = vst.msk [vmem:[#allocation2 + $0x208] sm:$0x3] %vm201, 0.0
  %266 = vst.msk [vmem:[#allocation2 + $0x210] sm:$0xff] %vm198, 0.0
  %267 = vst.msk [vmem:[#allocation2 + $0x218] sm:$0xff] %vm198, 0.0
  %268 = vst.msk [vmem:[#allocation2 + $0x220] sm:$0x3] %vm201, 0.0
  %269 = vst.msk [vmem:[#allocation2 + $0x228] sm:$0xff] %vm198, 0.0
  %270 = vst.msk [vmem:[#allocation2 + $0x230] sm:$0xff] %vm198, 0.0
  %271 = vst.msk [vmem:[#allocation2 + $0x238] sm:$0x3] %vm201, 0.0
  %272 = vst.msk [vmem:[#allocation2 + $0x240] sm:$0xff] %vm198, 0.0
  %273 = vst.msk [vmem:[#allocation2 + $0x248] sm:$0xff] %vm198, 0.0
  %274 = vst.msk [vmem:[#allocation2 + $0x250] sm:$0x3] %vm201, 0.0
  %275 = vst.msk [vmem:[#allocation2 + $0x258] sm:$0xff] %vm198, 0.0
  %276 = vst.msk [vmem:[#allocation2 + $0x260] sm:$0xff] %vm198, 0.0
  %277 = vst.msk [vmem:[#allocation2 + $0x268] sm:$0x3] %vm201, 0.0
  %278 = vst.msk [vmem:[#allocation2 + $0x270] sm:$0xff] %vm198, 0.0
  %279 = vst.msk [vmem:[#allocation2 + $0x278] sm:$0xff] %vm198, 0.0
  %280 = vst.msk [vmem:[#allocation2 + $0x280] sm:$0x3] %vm201, 0.0
  %281 = vst.msk [vmem:[#allocation2 + $0x288] sm:$0xff] %vm198, 0.0
  %282 = vst.msk [vmem:[#allocation2 + $0x290] sm:$0xff] %vm198, 0.0
  %283 = vst.msk [vmem:[#allocation2 + $0x298] sm:$0x3] %vm201, 0.0
  %284 = vst.msk [vmem:[#allocation2 + $0x2a0] sm:$0xff] %vm198, 0.0
  %285 = vst.msk [vmem:[#allocation2 + $0x2a8] sm:$0xff] %vm198, 0.0
  %286 = vst.msk [vmem:[#allocation2 + $0x2b0] sm:$0x3] %vm201, 0.0
  %287 = vst.msk [vmem:[#allocation2 + $0x2b8] sm:$0xff] %vm198, 0.0
  %288 = vst.msk [vmem:[#allocation2 + $0x2c0] sm:$0xff] %vm198, 0.0
  %289 = vst.msk [vmem:[#allocation2 + $0x2c8] sm:$0x3] %vm201, 0.0
  %290 = vst.msk [vmem:[#allocation2 + $0x2d0] sm:$0xff] %vm198, 0.0
  %291 = vst.msk [vmem:[#allocation2 + $0x2d8] sm:$0xff] %vm198, 0.0
  %292 = vst.msk [vmem:[#allocation2 + $0x2e0] sm:$0x3] %vm201, 0.0
  %293 = vst.msk [vmem:[#allocation2 + $0x2e8] sm:$0xff] %vm198, 0.0
  %294 = vst.msk [vmem:[#allocation2 + $0x2f0] sm:$0xff] %vm198, 0.0
  %295 = vst.msk [vmem:[#allocation2 + $0x2f8] sm:$0x3] %vm201, 0.0
  %296 = vst.msk [vmem:[#allocation2 + $0x300] sm:$0xff] %vm198, 0.0
  %297 = vst.msk [vmem:[#allocation2 + $0x308] sm:$0xff] %vm198, 0.0
  %298 = vst.msk [vmem:[#allocation2 + $0x310] sm:$0x3] %vm201, 0.0
  %299 = vst.msk [vmem:[#allocation2 + $0x318] sm:$0xff] %vm198, 0.0
  %300 = vst.msk [vmem:[#allocation2 + $0x320] sm:$0xff] %vm198, 0.0
  %301 = vst.msk [vmem:[#allocation2 + $0x328] sm:$0x3] %vm201, 0.0
  %302 = vst.msk [vmem:[#allocation2 + $0x330] sm:$0xff] %vm198, 0.0
  %303 = vst.msk [vmem:[#allocation2 + $0x338] sm:$0xff] %vm198, 0.0
  %304 = vst.msk [vmem:[#allocation2 + $0x340] sm:$0x3] %vm201, 0.0
  %305 = vst.msk [vmem:[#allocation2 + $0x348] sm:$0xff] %vm198, 0.0
  %306 = vst.msk [vmem:[#allocation2 + $0x350] sm:$0xff] %vm198, 0.0
  %307 = vst.msk [vmem:[#allocation2 + $0x358] sm:$0x3] %vm201, 0.0
  %s308 = scalar_lea.vmem [#allocation2], 24
  %309 = vst.msk [vmem:[%s308 + $0x1] sm:$0xff] %vm198, %v134
  %310 = vst.msk [vmem:[%s308 + $0x9] sm:$0xff] %vm198, %v135
  %311 = vst.msk [vmem:[%s308 + $0x19] sm:$0xff] %vm198, %v136
  %312 = vst.msk [vmem:[%s308 + $0x21] sm:$0xff] %vm198, %v137
  %313 = vst.msk [vmem:[%s308 + $0x31] sm:$0xff] %vm198, %v138
  %314 = vst.msk [vmem:[%s308 + $0x39] sm:$0xff] %vm198, %v139
  %315 = vst.msk [vmem:[%s308 + $0x49] sm:$0xff] %vm198, %v140
  %316 = vst.msk [vmem:[%s308 + $0x51] sm:$0xff] %vm198, %v141
  %317 = vst.msk [vmem:[%s308 + $0x61] sm:$0xff] %vm198, %v142
  %318 = vst.msk [vmem:[%s308 + $0x69] sm:$0xff] %vm198, %v143
  %319 = vst.msk [vmem:[%s308 + $0x79] sm:$0xff] %vm198, %v144
  %320 = vst.msk [vmem:[%s308 + $0x81] sm:$0xff] %vm198, %v145
  %321 = vst.msk [vmem:[%s308 + $0x91] sm:$0xff] %vm198, %v146
  %322 = vst.msk [vmem:[%s308 + $0x99] sm:$0xff] %vm198, %v147
  %323 = vst.msk [vmem:[%s308 + $0xa9] sm:$0xff] %vm198, %v148
  %324 = vst.msk [vmem:[%s308 + $0xb1] sm:$0xff] %vm198, %v149
  %325 = vst.msk [vmem:[%s308 + $0xc1] sm:$0xff] %vm198, %v150
  %326 = vst.msk [vmem:[%s308 + $0xc9] sm:$0xff] %vm198, %v151
  %327 = vst.msk [vmem:[%s308 + $0xd9] sm:$0xff] %vm198, %v152
  %328 = vst.msk [vmem:[%s308 + $0xe1] sm:$0xff] %vm198, %v153
  %329 = vst.msk [vmem:[%s308 + $0xf1] sm:$0xff] %vm198, %v154
  %330 = vst.msk [vmem:[%s308 + $0xf9] sm:$0xff] %vm198, %v155
  %331 = vst.msk [vmem:[%s308 + $0x109] sm:$0xff] %vm198, %v156
  %332 = vst.msk [vmem:[%s308 + $0x111] sm:$0xff] %vm198, %v157
  %333 = vst.msk [vmem:[%s308 + $0x121] sm:$0xff] %vm198, %v158
  %334 = vst.msk [vmem:[%s308 + $0x129] sm:$0xff] %vm198, %v159
  %335 = vst.msk [vmem:[%s308 + $0x139] sm:$0xff] %vm198, %v160
  %336 = vst.msk [vmem:[%s308 + $0x141] sm:$0xff] %vm198, %v161
  %337 = vst.msk [vmem:[%s308 + $0x151] sm:$0xff] %vm198, %v162
  %338 = vst.msk [vmem:[%s308 + $0x159] sm:$0xff] %vm198, %v163
  %339 = vst.msk [vmem:[%s308 + $0x169] sm:$0xff] %vm198, %v164
  %340 = vst.msk [vmem:[%s308 + $0x171] sm:$0xff] %vm198, %v165
  %341 = vst.msk [vmem:[%s308 + $0x1b1] sm:$0xff] %vm198, %v166
  %342 = vst.msk [vmem:[%s308 + $0x1b9] sm:$0xff] %vm198, %v167
  %343 = vst.msk [vmem:[%s308 + $0x1c9] sm:$0xff] %vm198, %v168
  %344 = vst.msk [vmem:[%s308 + $0x1d1] sm:$0xff] %vm198, %v169
  %345 = vst.msk [vmem:[%s308 + $0x1e1] sm:$0xff] %vm198, %v170
  %346 = vst.msk [vmem:[%s308 + $0x1e9] sm:$0xff] %vm198, %v171
  %347 = vst.msk [vmem:[%s308 + $0x1f9] sm:$0xff] %vm198, %v172
  %348 = vst.msk [vmem:[%s308 + $0x201] sm:$0xff] %vm198, %v173
  %349 = vst.msk [vmem:[%s308 + $0x211] sm:$0xff] %vm198, %v174
  %350 = vst.msk [vmem:[%s308 + $0x219] sm:$0xff] %vm198, %v175
  %351 = vst.msk [vmem:[%s308 + $0x229] sm:$0xff] %vm198, %v176
  %352 = vst.msk [vmem:[%s308 + $0x231] sm:$0xff] %vm198, %v177
  %353 = vst.msk [vmem:[%s308 + $0x241] sm:$0xff] %vm198, %v178
  %354 = vst.msk [vmem:[%s308 + $0x249] sm:$0xff] %vm198, %v179
  %355 = vst.msk [vmem:[%s308 + $0x259] sm:$0xff] %vm198, %v180
  %356 = vst.msk [vmem:[%s308 + $0x261] sm:$0xff] %vm198, %v181
  %357 = vst.msk [vmem:[%s308 + $0x271] sm:$0xff] %vm198, %v182
  %358 = vst.msk [vmem:[%s308 + $0x279] sm:$0xff] %vm198, %v183
  %359 = vst.msk [vmem:[%s308 + $0x289] sm:$0xff] %vm198, %v184
  %360 = vst.msk [vmem:[%s308 + $0x291] sm:$0xff] %vm198, %v185
  %361 = vst.msk [vmem:[%s308 + $0x2a1] sm:$0xff] %vm198, %v186
  %362 = vst.msk [vmem:[%s308 + $0x2a9] sm:$0xff] %vm198, %v187
  %363 = vst.msk [vmem:[%s308 + $0x2b9] sm:$0xff] %vm198, %v188
  %364 = vst.msk [vmem:[%s308 + $0x2c1] sm:$0xff] %vm198, %v189
  %365 = vst.msk [vmem:[%s308 + $0x2d1] sm:$0xff] %vm198, %v190
  %366 = vst.msk [vmem:[%s308 + $0x2d9] sm:$0xff] %vm198, %v191
  %367 = vst.msk [vmem:[%s308 + $0x2e9] sm:$0xff] %vm198, %v192
  %368 = vst.msk [vmem:[%s308 + $0x2f1] sm:$0xff] %vm198, %v193
  %369 = vst.msk [vmem:[%s308 + $0x301] sm:$0xff] %vm198, %v194
  %370 = vst.msk [vmem:[%s308 + $0x309] sm:$0xff] %vm198, %v195
  %371 = vst.msk [vmem:[%s308 + $0x319] sm:$0xff] %vm198, %v196
  %372 = vst.msk [vmem:[%s308 + $0x321] sm:$0xff] %vm198, %v197
  %v373 = vld [vmem:[#allocation2] sm:$0xff]
  %v374 = vld [vmem:[#allocation2 + $0x8] sm:$0xff]
  %v375 = vld [vmem:[#allocation2 + $0x10] sm:$0x3]
  %v376 = vld [vmem:[#allocation2 + $0x18] sm:$0xff]
  %v377 = vld [vmem:[#allocation2 + $0x20] sm:$0xff]
  %v378 = vld [vmem:[#allocation2 + $0x28] sm:$0x3]
  %v379 = vld [vmem:[#allocation2 + $0x30] sm:$0xff]
  %v380 = vld [vmem:[#allocation2 + $0x38] sm:$0xff]
  %v381 = vld [vmem:[#allocation2 + $0x40] sm:$0x3]
  %v382 = vld [vmem:[#allocation2 + $0x48] sm:$0xff]
  %v383 = vld [vmem:[#allocation2 + $0x50] sm:$0xff]
  %v384 = vld [vmem:[#allocation2 + $0x58] sm:$0x3]
  %v385 = vld [vmem:[#allocation2 + $0x60] sm:$0xff]
  %v386 = vld [vmem:[#allocation2 + $0x68] sm:$0xff]
  %v387 = vld [vmem:[#allocation2 + $0x70] sm:$0x3]
  %v388 = vld [vmem:[#allocation2 + $0x78] sm:$0xff]
  %v389 = vld [vmem:[#allocation2 + $0x80] sm:$0xff]
  %v390 = vld [vmem:[#allocation2 + $0x88] sm:$0x3]
  %v391 = vld [vmem:[#allocation2 + $0x90] sm:$0xff]
  %v392 = vld [vmem:[#allocation2 + $0x98] sm:$0xff]
  %v393 = vld [vmem:[#allocation2 + $0xa0] sm:$0x3]
  %v394 = vld [vmem:[#allocation2 + $0xa8] sm:$0xff]
  %v395 = vld [vmem:[#allocation2 + $0xb0] sm:$0xff]
  %v396 = vld [vmem:[#allocation2 + $0xb8] sm:$0x3]
  %v397 = vld [vmem:[#allocation2 + $0xc0] sm:$0xff]
  %v398 = vld [vmem:[#allocation2 + $0xc8] sm:$0xff]
  %v399 = vld [vmem:[#allocation2 + $0xd0] sm:$0x3]
  %v400 = vld [vmem:[#allocation2 + $0xd8] sm:$0xff]
  %v401 = vld [vmem:[#allocation2 + $0xe0] sm:$0xff]
  %v402 = vld [vmem:[#allocation2 + $0xe8] sm:$0x3]
  %v403 = vld [vmem:[#allocation2 + $0xf0] sm:$0xff]
  %v404 = vld [vmem:[#allocation2 + $0xf8] sm:$0xff]
  %v405 = vld [vmem:[#allocation2 + $0x100] sm:$0x3]
  %v406 = vld [vmem:[#allocation2 + $0x108] sm:$0xff]
  %v407 = vld [vmem:[#allocation2 + $0x110] sm:$0xff]
  %v408 = vld [vmem:[#allocation2 + $0x118] sm:$0x3]
  %v409 = vld [vmem:[#allocation2 + $0x120] sm:$0xff]
  %v410 = vld [vmem:[#allocation2 + $0x128] sm:$0xff]
  %v411 = vld [vmem:[#allocation2 + $0x130] sm:$0x3]
  %v412 = vld [vmem:[#allocation2 + $0x138] sm:$0xff]
  %v413 = vld [vmem:[#allocation2 + $0x140] sm:$0xff]
  %v414 = vld [vmem:[#allocation2 + $0x148] sm:$0x3]
  %v415 = vld [vmem:[#allocation2 + $0x150] sm:$0xff]
  %v416 = vld [vmem:[#allocation2 + $0x158] sm:$0xff]
  %v417 = vld [vmem:[#allocation2 + $0x160] sm:$0x3]
  %v418 = vld [vmem:[#allocation2 + $0x168] sm:$0xff]
  %v419 = vld [vmem:[#allocation2 + $0x170] sm:$0xff]
  %v420 = vld [vmem:[#allocation2 + $0x178] sm:$0x3]
  %v421 = vld [vmem:[#allocation2 + $0x180] sm:$0xff]
  %v422 = vld [vmem:[#allocation2 + $0x188] sm:$0xff]
  %v423 = vld [vmem:[#allocation2 + $0x190] sm:$0x3]
  %v424 = vld [vmem:[#allocation2 + $0x198] sm:$0xff]
  %v425 = vld [vmem:[#allocation2 + $0x1a0] sm:$0xff]
  %v426 = vld [vmem:[#allocation2 + $0x1a8] sm:$0x3]
  %v427 = vld [vmem:[#allocation2 + $0x1b0] sm:$0xff]
  %v428 = vld [vmem:[#allocation2 + $0x1b8] sm:$0xff]
  %v429 = vld [vmem:[#allocation2 + $0x1c0] sm:$0x3]
  %v430 = vld [vmem:[#allocation2 + $0x1c8] sm:$0xff]
  %v431 = vld [vmem:[#allocation2 + $0x1d0] sm:$0xff]
  %v432 = vld [vmem:[#allocation2 + $0x1d8] sm:$0x3]
  %v433 = vld [vmem:[#allocation2 + $0x1e0] sm:$0xff]
  %v434 = vld [vmem:[#allocation2 + $0x1e8] sm:$0xff]
  %v435 = vld [vmem:[#allocation2 + $0x1f0] sm:$0x3]
  %v436 = vld [vmem:[#allocation2 + $0x1f8] sm:$0xff]
  %v437 = vld [vmem:[#allocation2 + $0x200] sm:$0xff]
  %v438 = vld [vmem:[#allocation2 + $0x208] sm:$0x3]
  %v439 = vld [vmem:[#allocation2 + $0x210] sm:$0xff]
  %v440 = vld [vmem:[#allocation2 + $0x218] sm:$0xff]
  %v441 = vld [vmem:[#allocation2 + $0x220] sm:$0x3]
  %v442 = vld [vmem:[#allocation2 + $0x228] sm:$0xff]
  %v443 = vld [vmem:[#allocation2 + $0x230] sm:$0xff]
  %v444 = vld [vmem:[#allocation2 + $0x238] sm:$0x3]
  %v445 = vld [vmem:[#allocation2 + $0x240] sm:$0xff]
  %v446 = vld [vmem:[#allocation2 + $0x248] sm:$0xff]
  %v447 = vld [vmem:[#allocation2 + $0x250] sm:$0x3]
  %v448 = vld [vmem:[#allocation2 + $0x258] sm:$0xff]
  %v449 = vld [vmem:[#allocation2 + $0x260] sm:$0xff]
  %v450 = vld [vmem:[#allocation2 + $0x268] sm:$0x3]
  %v451 = vld [vmem:[#allocation2 + $0x270] sm:$0xff]
  %v452 = vld [vmem:[#allocation2 + $0x278] sm:$0xff]
  %v453 = vld [vmem:[#allocation2 + $0x280] sm:$0x3]
  %v454 = vld [vmem:[#allocation2 + $0x288] sm:$0xff]
  %v455 = vld [vmem:[#allocation2 + $0x290] sm:$0xff]
  %v456 = vld [vmem:[#allocation2 + $0x298] sm:$0x3]
  %v457 = vld [vmem:[#allocation2 + $0x2a0] sm:$0xff]
  %v458 = vld [vmem:[#allocation2 + $0x2a8] sm:$0xff]
  %v459 = vld [vmem:[#allocation2 + $0x2b0] sm:$0x3]
  %v460 = vld [vmem:[#allocation2 + $0x2b8] sm:$0xff]
  %v461 = vld [vmem:[#allocation2 + $0x2c0] sm:$0xff]
  %v462 = vld [vmem:[#allocation2 + $0x2c8] sm:$0x3]
  %v463 = vld [vmem:[#allocation2 + $0x2d0] sm:$0xff]
  %v464 = vld [vmem:[#allocation2 + $0x2d8] sm:$0xff]
  %v465 = vld [vmem:[#allocation2 + $0x2e0] sm:$0x3]
  %v466 = vld [vmem:[#allocation2 + $0x2e8] sm:$0xff]
  %v467 = vld [vmem:[#allocation2 + $0x2f0] sm:$0xff]
  %v468 = vld [vmem:[#allocation2 + $0x2f8] sm:$0x3]
  %v469 = vld [vmem:[#allocation2 + $0x300] sm:$0xff]
  %v470 = vld [vmem:[#allocation2 + $0x308] sm:$0xff]
  %v471 = vld [vmem:[#allocation2 + $0x310] sm:$0x3]
  %v472 = vld [vmem:[#allocation2 + $0x318] sm:$0xff]
  %v473 = vld [vmem:[#allocation2 + $0x320] sm:$0xff]
  %v474 = vld [vmem:[#allocation2 + $0x328] sm:$0x3]
  %v475 = vld [vmem:[#allocation2 + $0x330] sm:$0xff]
  %v476 = vld [vmem:[#allocation2 + $0x338] sm:$0xff]
  %v477 = vld [vmem:[#allocation2 + $0x340] sm:$0x3]
  %v478 = vld [vmem:[#allocation2 + $0x348] sm:$0xff]
  %v479 = vld [vmem:[#allocation2 + $0x350] sm:$0xff]
  %v480 = vld [vmem:[#allocation2 + $0x358] sm:$0x3]
  %vm577 = vcmask 1046528
  %v578 = vrot.slane %v373, 1
  %v579 = vrot.slane %v374, 1
  %v580 = vsel %vm577, %v578, %v579
  %v581 = vrot.slane %v375, 1
  %v582 = vsel %vm577, %v579, %v581
  %v583 = vrot.slane %v376, 1
  %v584 = vrot.slane %v377, 1
  %v585 = vsel %vm577, %v583, %v584
  %v586 = vrot.slane %v378, 1
  %v587 = vsel %vm577, %v584, %v586
  %v588 = vrot.slane %v379, 1
  %v589 = vrot.slane %v380, 1
  %v590 = vsel %vm577, %v588, %v589
  %v591 = vrot.slane %v381, 1
  %v592 = vsel %vm577, %v589, %v591
  %v593 = vrot.slane %v382, 1
  %v594 = vrot.slane %v383, 1
  %v595 = vsel %vm577, %v593, %v594
  %v596 = vrot.slane %v384, 1
  %v597 = vsel %vm577, %v594, %v596
  %v598 = vrot.slane %v385, 1
  %v599 = vrot.slane %v386, 1
  %v600 = vsel %vm577, %v598, %v599
  %v601 = vrot.slane %v387, 1
  %v602 = vsel %vm577, %v599, %v601
  %v603 = vrot.slane %v388, 1
  %v604 = vrot.slane %v389, 1
  %v605 = vsel %vm577, %v603, %v604
  %v606 = vrot.slane %v390, 1
  %v607 = vsel %vm577, %v604, %v606
  %v608 = vrot.slane %v391, 1
  %v609 = vrot.slane %v392, 1
  %v610 = vsel %vm577, %v608, %v609
  %v611 = vrot.slane %v393, 1
  %v612 = vsel %vm577, %v609, %v611
  %v613 = vrot.slane %v394, 1
  %v614 = vrot.slane %v395, 1
  %v615 = vsel %vm577, %v613, %v614
  %v616 = vrot.slane %v396, 1
  %v617 = vsel %vm577, %v614, %v616
  %v618 = vrot.slane %v397, 1
  %v619 = vrot.slane %v398, 1
  %v620 = vsel %vm577, %v618, %v619
  %v621 = vrot.slane %v399, 1
  %v622 = vsel %vm577, %v619, %v621
  %v623 = vrot.slane %v400, 1
  %v624 = vrot.slane %v401, 1
  %v625 = vsel %vm577, %v623, %v624
  %v626 = vrot.slane %v402, 1
  %v627 = vsel %vm577, %v624, %v626
  %v628 = vrot.slane %v403, 1
  %v629 = vrot.slane %v404, 1
  %v630 = vsel %vm577, %v628, %v629
  %v631 = vrot.slane %v405, 1
  %v632 = vsel %vm577, %v629, %v631
  %v633 = vrot.slane %v406, 1
  %v634 = vrot.slane %v407, 1
  %v635 = vsel %vm577, %v633, %v634
  %v636 = vrot.slane %v408, 1
  %v637 = vsel %vm577, %v634, %v636
  %v638 = vrot.slane %v409, 1
  %v639 = vrot.slane %v410, 1
  %v640 = vsel %vm577, %v638, %v639
  %v641 = vrot.slane %v411, 1
  %v642 = vsel %vm577, %v639, %v641
  %v643 = vrot.slane %v412, 1
  %v644 = vrot.slane %v413, 1
  %v645 = vsel %vm577, %v643, %v644
  %v646 = vrot.slane %v414, 1
  %v647 = vsel %vm577, %v644, %v646
  %v648 = vrot.slane %v415, 1
  %v649 = vrot.slane %v416, 1
  %v650 = vsel %vm577, %v648, %v649
  %v651 = vrot.slane %v417, 1
  %v652 = vsel %vm577, %v649, %v651
  %v653 = vrot.slane %v418, 1
  %v654 = vrot.slane %v419, 1
  %v655 = vsel %vm577, %v653, %v654
  %v656 = vrot.slane %v420, 1
  %v657 = vsel %vm577, %v654, %v656
  %v658 = vrot.slane %v427, 1
  %v659 = vrot.slane %v428, 1
  %v660 = vsel %vm577, %v658, %v659
  %v661 = vrot.slane %v429, 1
  %v662 = vsel %vm577, %v659, %v661
  %v663 = vrot.slane %v430, 1
  %v664 = vrot.slane %v431, 1
  %v665 = vsel %vm577, %v663, %v664
  %v666 = vrot.slane %v432, 1
  %v667 = vsel %vm577, %v664, %v666
  %v668 = vrot.slane %v433, 1
  %v669 = vrot.slane %v434, 1
  %v670 = vsel %vm577, %v668, %v669
  %v671 = vrot.slane %v435, 1
  %v672 = vsel %vm577, %v669, %v671
  %v673 = vrot.slane %v436, 1
  %v674 = vrot.slane %v437, 1
  %v675 = vsel %vm577, %v673, %v674
  %v676 = vrot.slane %v438, 1
  %v677 = vsel %vm577, %v674, %v676
  %v678 = vrot.slane %v439, 1
  %v679 = vrot.slane %v440, 1
  %v680 = vsel %vm577, %v678, %v679
  %v681 = vrot.slane %v441, 1
  %v682 = vsel %vm577, %v679, %v681
  %v683 = vrot.slane %v442, 1
  %v684 = vrot.slane %v443, 1
  %v685 = vsel %vm577, %v683, %v684
  %v686 = vrot.slane %v444, 1
  %v687 = vsel %vm577, %v684, %v686
  %v688 = vrot.slane %v445, 1
  %v689 = vrot.slane %v446, 1
  %v690 = vsel %vm577, %v688, %v689
  %v691 = vrot.slane %v447, 1
  %v692 = vsel %vm577, %v689, %v691
  %v693 = vrot.slane %v448, 1
  %v694 = vrot.slane %v449, 1
  %v695 = vsel %vm577, %v693, %v694
  %v696 = vrot.slane %v450, 1
  %v697 = vsel %vm577, %v694, %v696
  %v698 = vrot.slane %v451, 1
  %v699 = vrot.slane %v452, 1
  %v700 = vsel %vm577, %v698, %v699
  %v701 = vrot.slane %v453, 1
  %v702 = vsel %vm577, %v699, %v701
  %v703 = vrot.slane %v454, 1
  %v704 = vrot.slane %v455, 1
  %v705 = vsel %vm577, %v703, %v704
  %v706 = vrot.slane %v456, 1
  %v707 = vsel %vm577, %v704, %v706
  %v708 = vrot.slane %v457, 1
  %v709 = vrot.slane %v458, 1
  %v710 = vsel %vm577, %v708, %v709
  %v711 = vrot.slane %v459, 1
  %v712 = vsel %vm577, %v709, %v711
  %v713 = vrot.slane %v460, 1
  %v714 = vrot.slane %v461, 1
  %v715 = vsel %vm577, %v713, %v714
  %v716 = vrot.slane %v462, 1
  %v717 = vsel %vm577, %v714, %v716
  %v718 = vrot.slane %v463, 1
  %v719 = vrot.slane %v464, 1
  %v720 = vsel %vm577, %v718, %v719
  %v721 = vrot.slane %v465, 1
  %v722 = vsel %vm577, %v719, %v721
  %v723 = vrot.slane %v466, 1
  %v724 = vrot.slane %v467, 1
  %v725 = vsel %vm577, %v723, %v724
  %v726 = vrot.slane %v468, 1
  %v727 = vsel %vm577, %v724, %v726
  %v728 = vrot.slane %v469, 1
  %v729 = vrot.slane %v470, 1
  %v730 = vsel %vm577, %v728, %v729
  %v731 = vrot.slane %v471, 1
  %v732 = vsel %vm577, %v729, %v731
  %v733 = vrot.slane %v472, 1
  %v734 = vrot.slane %v473, 1
  %v735 = vsel %vm577, %v733, %v734
  %v736 = vrot.slane %v474, 1
  %v737 = vsel %vm577, %v734, %v736
  %vm738 = vcmask 1045504
  %v739 = vrot.slane %v373, 2
  %v740 = vrot.slane %v374, 2
  %v741 = vsel %vm738, %v739, %v740
  %v742 = vrot.slane %v375, 2
  %v743 = vsel %vm738, %v740, %v742
  %v744 = vrot.slane %v376, 2
  %v745 = vrot.slane %v377, 2
  %v746 = vsel %vm738, %v744, %v745
  %v747 = vrot.slane %v378, 2
  %v748 = vsel %vm738, %v745, %v747
  %v749 = vrot.slane %v379, 2
  %v750 = vrot.slane %v380, 2
  %v751 = vsel %vm738, %v749, %v750
  %v752 = vrot.slane %v381, 2
  %v753 = vsel %vm738, %v750, %v752
  %v754 = vrot.slane %v382, 2
  %v755 = vrot.slane %v383, 2
  %v756 = vsel %vm738, %v754, %v755
  %v757 = vrot.slane %v384, 2
  %v758 = vsel %vm738, %v755, %v757
  %v759 = vrot.slane %v385, 2
  %v760 = vrot.slane %v386, 2
  %v761 = vsel %vm738, %v759, %v760
  %v762 = vrot.slane %v387, 2
  %v763 = vsel %vm738, %v760, %v762
  %v764 = vrot.slane %v388, 2
  %v765 = vrot.slane %v389, 2
  %v766 = vsel %vm738, %v764, %v765
  %v767 = vrot.slane %v390, 2
  %v768 = vsel %vm738, %v765, %v767
  %v769 = vrot.slane %v391, 2
  %v770 = vrot.slane %v392, 2
  %v771 = vsel %vm738, %v769, %v770
  %v772 = vrot.slane %v393, 2
  %v773 = vsel %vm738, %v770, %v772
  %v774 = vrot.slane %v394, 2
  %v775 = vrot.slane %v395, 2
  %v776 = vsel %vm738, %v774, %v775
  %v777 = vrot.slane %v396, 2
  %v778 = vsel %vm738, %v775, %v777
  %v779 = vrot.slane %v397, 2
  %v780 = vrot.slane %v398, 2
  %v781 = vsel %vm738, %v779, %v780
  %v782 = vrot.slane %v399, 2
  %v783 = vsel %vm738, %v780, %v782
  %v784 = vrot.slane %v400, 2
  %v785 = vrot.slane %v401, 2
  %v786 = vsel %vm738, %v784, %v785
  %v787 = vrot.slane %v402, 2
  %v788 = vsel %vm738, %v785, %v787
  %v789 = vrot.slane %v403, 2
  %v790 = vrot.slane %v404, 2
  %v791 = vsel %vm738, %v789, %v790
  %v792 = vrot.slane %v405, 2
  %v793 = vsel %vm738, %v790, %v792
  %v794 = vrot.slane %v406, 2
  %v795 = vrot.slane %v407, 2
  %v796 = vsel %vm738, %v794, %v795
  %v797 = vrot.slane %v408, 2
  %v798 = vsel %vm738, %v795, %v797
  %v799 = vrot.slane %v409, 2
  %v800 = vrot.slane %v410, 2
  %v801 = vsel %vm738, %v799, %v800
  %v802 = vrot.slane %v411, 2
  %v803 = vsel %vm738, %v800, %v802
  %v804 = vrot.slane %v412, 2
  %v805 = vrot.slane %v413, 2
  %v806 = vsel %vm738, %v804, %v805
  %v807 = vrot.slane %v414, 2
  %v808 = vsel %vm738, %v805, %v807
  %v809 = vrot.slane %v415, 2
  %v810 = vrot.slane %v416, 2
  %v811 = vsel %vm738, %v809, %v810
  %v812 = vrot.slane %v417, 2
  %v813 = vsel %vm738, %v810, %v812
  %v814 = vrot.slane %v418, 2
  %v815 = vrot.slane %v419, 2
  %v816 = vsel %vm738, %v814, %v815
  %v817 = vrot.slane %v420, 2
  %v818 = vsel %vm738, %v815, %v817
  %v819 = vrot.slane %v427, 2
  %v820 = vrot.slane %v428, 2
  %v821 = vsel %vm738, %v819, %v820
  %v822 = vrot.slane %v429, 2
  %v823 = vsel %vm738, %v820, %v822
  %v824 = vrot.slane %v430, 2
  %v825 = vrot.slane %v431, 2
  %v826 = vsel %vm738, %v824, %v825
  %v827 = vrot.slane %v432, 2
  %v828 = vsel %vm738, %v825, %v827
  %v829 = vrot.slane %v433, 2
  %v830 = vrot.slane %v434, 2
  %v831 = vsel %vm738, %v829, %v830
  %v832 = vrot.slane %v435, 2
  %v833 = vsel %vm738, %v830, %v832
  %v834 = vrot.slane %v436, 2
  %v835 = vrot.slane %v437, 2
  %v836 = vsel %vm738, %v834, %v835
  %v837 = vrot.slane %v438, 2
  %v838 = vsel %vm738, %v835, %v837
  %v839 = vrot.slane %v439, 2
  %v840 = vrot.slane %v440, 2
  %v841 = vsel %vm738, %v839, %v840
  %v842 = vrot.slane %v441, 2
  %v843 = vsel %vm738, %v840, %v842
  %v844 = vrot.slane %v442, 2
  %v845 = vrot.slane %v443, 2
  %v846 = vsel %vm738, %v844, %v845
  %v847 = vrot.slane %v444, 2
  %v848 = vsel %vm738, %v845, %v847
  %v849 = vrot.slane %v445, 2
  %v850 = vrot.slane %v446, 2
  %v851 = vsel %vm738, %v849, %v850
  %v852 = vrot.slane %v447, 2
  %v853 = vsel %vm738, %v850, %v852
  %v854 = vrot.slane %v448, 2
  %v855 = vrot.slane %v449, 2
  %v856 = vsel %vm738, %v854, %v855
  %v857 = vrot.slane %v450, 2
  %v858 = vsel %vm738, %v855, %v857
  %v859 = vrot.slane %v451, 2
  %v860 = vrot.slane %v452, 2
  %v861 = vsel %vm738, %v859, %v860
  %v862 = vrot.slane %v453, 2
  %v863 = vsel %vm738, %v860, %v862
  %v864 = vrot.slane %v454, 2
  %v865 = vrot.slane %v455, 2
  %v866 = vsel %vm738, %v864, %v865
  %v867 = vrot.slane %v456, 2
  %v868 = vsel %vm738, %v865, %v867
  %v869 = vrot.slane %v457, 2
  %v870 = vrot.slane %v458, 2
  %v871 = vsel %vm738, %v869, %v870
  %v872 = vrot.slane %v459, 2
  %v873 = vsel %vm738, %v870, %v872
  %v874 = vrot.slane %v460, 2
  %v875 = vrot.slane %v461, 2
  %v876 = vsel %vm738, %v874, %v875
  %v877 = vrot.slane %v462, 2
  %v878 = vsel %vm738, %v875, %v877
  %v879 = vrot.slane %v463, 2
  %v880 = vrot.slane %v464, 2
  %v881 = vsel %vm738, %v879, %v880
  %v882 = vrot.slane %v465, 2
  %v883 = vsel %vm738, %v880, %v882
  %v884 = vrot.slane %v466, 2
  %v885 = vrot.slane %v467, 2
  %v886 = vsel %vm738, %v884, %v885
  %v887 = vrot.slane %v468, 2
  %v888 = vsel %vm738, %v885, %v887
  %v889 = vrot.slane %v469, 2
  %v890 = vrot.slane %v470, 2
  %v891 = vsel %vm738, %v889, %v890
  %v892 = vrot.slane %v471, 2
  %v893 = vsel %vm738, %v890, %v892
  %v894 = vrot.slane %v472, 2
  %v895 = vrot.slane %v473, 2
  %v896 = vsel %vm738, %v894, %v895
  %v897 = vrot.slane %v474, 2
  %v898 = vsel %vm738, %v895, %v897
  %v905 = vrot.slane %v421, 1
  %v906 = vrot.slane %v422, 1
  %v907 = vsel %vm577, %v905, %v906
  %v908 = vrot.slane %v423, 1
  %v909 = vsel %vm577, %v906, %v908
  %v910 = vrot.slane %v475, 1
  %v911 = vrot.slane %v476, 1
  %v912 = vsel %vm577, %v910, %v911
  %v913 = vrot.slane %v477, 1
  %v914 = vsel %vm577, %v911, %v913
  %v915 = vrot.slane %v421, 2
  %v916 = vrot.slane %v422, 2
  %v917 = vsel %vm738, %v915, %v916
  %v918 = vrot.slane %v423, 2
  %v919 = vsel %vm738, %v916, %v918
  %v920 = vrot.slane %v475, 2
  %v921 = vrot.slane %v476, 2
  %v922 = vsel %vm738, %v920, %v921
  %v923 = vrot.slane %v477, 2
  %v924 = vsel %vm738, %v921, %v923
  %v931 = vrot.slane %v424, 1
  %v932 = vrot.slane %v425, 1
  %v933 = vsel %vm577, %v931, %v932
  %v934 = vrot.slane %v426, 1
  %v935 = vsel %vm577, %v932, %v934
  %v936 = vrot.slane %v478, 1
  %v937 = vrot.slane %v479, 1
  %v938 = vsel %vm577, %v936, %v937
  %v939 = vrot.slane %v480, 1
  %v940 = vsel %vm577, %v937, %v939
  %v941 = vrot.slane %v424, 2
  %v942 = vrot.slane %v425, 2
  %v943 = vsel %vm738, %v941, %v942
  %v944 = vrot.slane %v426, 2
  %v945 = vsel %vm738, %v942, %v944
  %v946 = vrot.slane %v478, 2
  %v947 = vrot.slane %v479, 2
  %v948 = vsel %vm738, %v946, %v947
  %v949 = vrot.slane %v480, 2
  %v950 = vsel %vm738, %v947, %v949
  %951 = vrot.lane.b32.xlu0 %v580, 4
  %v952 = vpop.permute.xlu0 %951
  %953 = vrot.lane.b32.xlu0 %v582, 4
  %v954 = vpop.permute.xlu0 %953
  %955 = vrot.lane.b32.xlu0 %v585, 4
  %v956 = vpop.permute.xlu0 %955
  %957 = vrot.lane.b32.xlu0 %v587, 4
  %v958 = vpop.permute.xlu0 %957
  %959 = vrot.lane.b32.xlu0 %v590, 4
  %v960 = vpop.permute.xlu0 %959
  %961 = vrot.lane.b32.xlu0 %v592, 4
  %v962 = vpop.permute.xlu0 %961
  %963 = vrot.lane.b32.xlu0 %v595, 4
  %v964 = vpop.permute.xlu0 %963
  %965 = vrot.lane.b32.xlu0 %v597, 4
  %v966 = vpop.permute.xlu0 %965
  %967 = vrot.lane.b32.xlu0 %v600, 4
  %v968 = vpop.permute.xlu0 %967
  %969 = vrot.lane.b32.xlu0 %v602, 4
  %v970 = vpop.permute.xlu0 %969
  %971 = vrot.lane.b32.xlu0 %v605, 4
  %v972 = vpop.permute.xlu0 %971
  %973 = vrot.lane.b32.xlu0 %v607, 4
  %v974 = vpop.permute.xlu0 %973
  %975 = vrot.lane.b32.xlu0 %v610, 4
  %v976 = vpop.permute.xlu0 %975
  %977 = vrot.lane.b32.xlu0 %v612, 4
  %v978 = vpop.permute.xlu0 %977
  %979 = vrot.lane.b32.xlu0 %v615, 4
  %v980 = vpop.permute.xlu0 %979
  %981 = vrot.lane.b32.xlu0 %v617, 4
  %v982 = vpop.permute.xlu0 %981
  %983 = vrot.lane.b32.xlu0 %v620, 4
  %v984 = vpop.permute.xlu0 %983
  %985 = vrot.lane.b32.xlu0 %v622, 4
  %v986 = vpop.permute.xlu0 %985
  %987 = vrot.lane.b32.xlu0 %v625, 4
  %v988 = vpop.permute.xlu0 %987
  %989 = vrot.lane.b32.xlu0 %v627, 4
  %v990 = vpop.permute.xlu0 %989
  %991 = vrot.lane.b32.xlu0 %v630, 4
  %v992 = vpop.permute.xlu0 %991
  %993 = vrot.lane.b32.xlu0 %v632, 4
  %v994 = vpop.permute.xlu0 %993
  %995 = vrot.lane.b32.xlu0 %v635, 4
  %v996 = vpop.permute.xlu0 %995
  %997 = vrot.lane.b32.xlu0 %v637, 4
  %v998 = vpop.permute.xlu0 %997
  %999 = vrot.lane.b32.xlu0 %v640, 4
  %v1000 = vpop.permute.xlu0 %999
  %1001 = vrot.lane.b32.xlu0 %v642, 4
  %v1002 = vpop.permute.xlu0 %1001
  %1003 = vrot.lane.b32.xlu0 %v645, 4
  %v1004 = vpop.permute.xlu0 %1003
  %1005 = vrot.lane.b32.xlu0 %v647, 4
  %v1006 = vpop.permute.xlu0 %1005
  %1007 = vrot.lane.b32.xlu0 %v650, 4
  %v1008 = vpop.permute.xlu0 %1007
  %1009 = vrot.lane.b32.xlu0 %v652, 4
  %v1010 = vpop.permute.xlu0 %1009
  %1011 = vrot.lane.b32.xlu0 %v655, 4
  %v1012 = vpop.permute.xlu0 %1011
  %1013 = vrot.lane.b32.xlu0 %v657, 4
  %v1014 = vpop.permute.xlu0 %1013
  %1015 = vrot.lane.b32.xlu0 %v660, 4
  %v1016 = vpop.permute.xlu0 %1015
  %1017 = vrot.lane.b32.xlu0 %v662, 4
  %v1018 = vpop.permute.xlu0 %1017
  %1019 = vrot.lane.b32.xlu0 %v665, 4
  %v1020 = vpop.permute.xlu0 %1019
  %1021 = vrot.lane.b32.xlu0 %v667, 4
  %v1022 = vpop.permute.xlu0 %1021
  %1023 = vrot.lane.b32.xlu0 %v670, 4
  %v1024 = vpop.permute.xlu0 %1023
  %1025 = vrot.lane.b32.xlu0 %v672, 4
  %v1026 = vpop.permute.xlu0 %1025
  %1027 = vrot.lane.b32.xlu0 %v675, 4
  %v1028 = vpop.permute.xlu0 %1027
  %1029 = vrot.lane.b32.xlu0 %v677, 4
  %v1030 = vpop.permute.xlu0 %1029
  %1031 = vrot.lane.b32.xlu0 %v680, 4
  %v1032 = vpop.permute.xlu0 %1031
  %1033 = vrot.lane.b32.xlu0 %v682, 4
  %v1034 = vpop.permute.xlu0 %1033
  %1035 = vrot.lane.b32.xlu0 %v685, 4
  %v1036 = vpop.permute.xlu0 %1035
  %1037 = vrot.lane.b32.xlu0 %v687, 4
  %v1038 = vpop.permute.xlu0 %1037
  %1039 = vrot.lane.b32.xlu0 %v690, 4
  %v1040 = vpop.permute.xlu0 %1039
  %1041 = vrot.lane.b32.xlu0 %v692, 4
  %v1042 = vpop.permute.xlu0 %1041
  %1043 = vrot.lane.b32.xlu0 %v695, 4
  %v1044 = vpop.permute.xlu0 %1043
  %1045 = vrot.lane.b32.xlu0 %v697, 4
  %v1046 = vpop.permute.xlu0 %1045
  %1047 = vrot.lane.b32.xlu0 %v700, 4
  %v1048 = vpop.permute.xlu0 %1047
  %1049 = vrot.lane.b32.xlu0 %v702, 4
  %v1050 = vpop.permute.xlu0 %1049
  %1051 = vrot.lane.b32.xlu0 %v705, 4
  %v1052 = vpop.permute.xlu0 %1051
  %1053 = vrot.lane.b32.xlu0 %v707, 4
  %v1054 = vpop.permute.xlu0 %1053
  %1055 = vrot.lane.b32.xlu0 %v710, 4
  %v1056 = vpop.permute.xlu0 %1055
  %1057 = vrot.lane.b32.xlu0 %v712, 4
  %v1058 = vpop.permute.xlu0 %1057
  %1059 = vrot.lane.b32.xlu0 %v715, 4
  %v1060 = vpop.permute.xlu0 %1059
  %1061 = vrot.lane.b32.xlu0 %v717, 4
  %v1062 = vpop.permute.xlu0 %1061
  %1063 = vrot.lane.b32.xlu0 %v720, 4
  %v1064 = vpop.permute.xlu0 %1063
  %1065 = vrot.lane.b32.xlu0 %v722, 4
  %v1066 = vpop.permute.xlu0 %1065
  %1067 = vrot.lane.b32.xlu0 %v725, 4
  %v1068 = vpop.permute.xlu0 %1067
  %1069 = vrot.lane.b32.xlu0 %v727, 4
  %v1070 = vpop.permute.xlu0 %1069
  %1071 = vrot.lane.b32.xlu0 %v730, 4
  %v1072 = vpop.permute.xlu0 %1071
  %1073 = vrot.lane.b32.xlu0 %v732, 4
  %v1074 = vpop.permute.xlu0 %1073
  %1075 = vrot.lane.b32.xlu0 %v735, 4
  %v1076 = vpop.permute.xlu0 %1075
  %1077 = vrot.lane.b32.xlu0 %v737, 4
  %v1078 = vpop.permute.xlu0 %1077
  %1143 = vrot.lane.b32.xlu0 %v741, 8
  %v1144 = vpop.permute.xlu0 %1143
  %1145 = vrot.lane.b32.xlu0 %v743, 8
  %v1146 = vpop.permute.xlu0 %1145
  %1147 = vrot.lane.b32.xlu0 %v746, 8
  %v1148 = vpop.permute.xlu0 %1147
  %1149 = vrot.lane.b32.xlu0 %v748, 8
  %v1150 = vpop.permute.xlu0 %1149
  %1151 = vrot.lane.b32.xlu0 %v751, 8
  %v1152 = vpop.permute.xlu0 %1151
  %1153 = vrot.lane.b32.xlu0 %v753, 8
  %v1154 = vpop.permute.xlu0 %1153
  %1155 = vrot.lane.b32.xlu0 %v756, 8
  %v1156 = vpop.permute.xlu0 %1155
  %1157 = vrot.lane.b32.xlu0 %v758, 8
  %v1158 = vpop.permute.xlu0 %1157
  %1159 = vrot.lane.b32.xlu0 %v761, 8
  %v1160 = vpop.permute.xlu0 %1159
  %1161 = vrot.lane.b32.xlu0 %v763, 8
  %v1162 = vpop.permute.xlu0 %1161
  %1163 = vrot.lane.b32.xlu0 %v766, 8
  %v1164 = vpop.permute.xlu0 %1163
  %1165 = vrot.lane.b32.xlu0 %v768, 8
  %v1166 = vpop.permute.xlu0 %1165
  %1167 = vrot.lane.b32.xlu0 %v771, 8
  %v1168 = vpop.permute.xlu0 %1167
  %1169 = vrot.lane.b32.xlu0 %v773, 8
  %v1170 = vpop.permute.xlu0 %1169
  %1171 = vrot.lane.b32.xlu0 %v776, 8
  %v1172 = vpop.permute.xlu0 %1171
  %1173 = vrot.lane.b32.xlu0 %v778, 8
  %v1174 = vpop.permute.xlu0 %1173
  %1175 = vrot.lane.b32.xlu0 %v781, 8
  %v1176 = vpop.permute.xlu0 %1175
  %1177 = vrot.lane.b32.xlu0 %v783, 8
  %v1178 = vpop.permute.xlu0 %1177
  %1179 = vrot.lane.b32.xlu0 %v786, 8
  %v1180 = vpop.permute.xlu0 %1179
  %1181 = vrot.lane.b32.xlu0 %v788, 8
  %v1182 = vpop.permute.xlu0 %1181
  %1183 = vrot.lane.b32.xlu0 %v791, 8
  %v1184 = vpop.permute.xlu0 %1183
  %1185 = vrot.lane.b32.xlu0 %v793, 8
  %v1186 = vpop.permute.xlu0 %1185
  %1187 = vrot.lane.b32.xlu0 %v796, 8
  %v1188 = vpop.permute.xlu0 %1187
  %1189 = vrot.lane.b32.xlu0 %v798, 8
  %v1190 = vpop.permute.xlu0 %1189
  %1191 = vrot.lane.b32.xlu0 %v801, 8
  %v1192 = vpop.permute.xlu0 %1191
  %1193 = vrot.lane.b32.xlu0 %v803, 8
  %v1194 = vpop.permute.xlu0 %1193
  %1195 = vrot.lane.b32.xlu0 %v806, 8
  %v1196 = vpop.permute.xlu0 %1195
  %1197 = vrot.lane.b32.xlu0 %v808, 8
  %v1198 = vpop.permute.xlu0 %1197
  %1199 = vrot.lane.b32.xlu0 %v811, 8
  %v1200 = vpop.permute.xlu0 %1199
  %1201 = vrot.lane.b32.xlu0 %v813, 8
  %v1202 = vpop.permute.xlu0 %1201
  %1203 = vrot.lane.b32.xlu0 %v816, 8
  %v1204 = vpop.permute.xlu0 %1203
  %1205 = vrot.lane.b32.xlu0 %v818, 8
  %v1206 = vpop.permute.xlu0 %1205
  %1207 = vrot.lane.b32.xlu0 %v821, 8
  %v1208 = vpop.permute.xlu0 %1207
  %1209 = vrot.lane.b32.xlu0 %v823, 8
  %v1210 = vpop.permute.xlu0 %1209
  %1211 = vrot.lane.b32.xlu0 %v826, 8
  %v1212 = vpop.permute.xlu0 %1211
  %1213 = vrot.lane.b32.xlu0 %v828, 8
  %v1214 = vpop.permute.xlu0 %1213
  %1215 = vrot.lane.b32.xlu0 %v831, 8
  %v1216 = vpop.permute.xlu0 %1215
  %1217 = vrot.lane.b32.xlu0 %v833, 8
  %v1218 = vpop.permute.xlu0 %1217
  %1219 = vrot.lane.b32.xlu0 %v836, 8
  %v1220 = vpop.permute.xlu0 %1219
  %1221 = vrot.lane.b32.xlu0 %v838, 8
  %v1222 = vpop.permute.xlu0 %1221
  %1223 = vrot.lane.b32.xlu0 %v841, 8
  %v1224 = vpop.permute.xlu0 %1223
  %1225 = vrot.lane.b32.xlu0 %v843, 8
  %v1226 = vpop.permute.xlu0 %1225
  %1227 = vrot.lane.b32.xlu0 %v846, 8
  %v1228 = vpop.permute.xlu0 %1227
  %1229 = vrot.lane.b32.xlu0 %v848, 8
  %v1230 = vpop.permute.xlu0 %1229
  %1231 = vrot.lane.b32.xlu0 %v851, 8
  %v1232 = vpop.permute.xlu0 %1231
  %1233 = vrot.lane.b32.xlu0 %v853, 8
  %v1234 = vpop.permute.xlu0 %1233
  %1235 = vrot.lane.b32.xlu0 %v856, 8
  %v1236 = vpop.permute.xlu0 %1235
  %1237 = vrot.lane.b32.xlu0 %v858, 8
  %v1238 = vpop.permute.xlu0 %1237
  %1239 = vrot.lane.b32.xlu0 %v861, 8
  %v1240 = vpop.permute.xlu0 %1239
  %1241 = vrot.lane.b32.xlu0 %v863, 8
  %v1242 = vpop.permute.xlu0 %1241
  %1243 = vrot.lane.b32.xlu0 %v866, 8
  %v1244 = vpop.permute.xlu0 %1243
  %1245 = vrot.lane.b32.xlu0 %v868, 8
  %v1246 = vpop.permute.xlu0 %1245
  %1247 = vrot.lane.b32.xlu0 %v871, 8
  %v1248 = vpop.permute.xlu0 %1247
  %1249 = vrot.lane.b32.xlu0 %v873, 8
  %v1250 = vpop.permute.xlu0 %1249
  %1251 = vrot.lane.b32.xlu0 %v876, 8
  %v1252 = vpop.permute.xlu0 %1251
  %1253 = vrot.lane.b32.xlu0 %v878, 8
  %v1254 = vpop.permute.xlu0 %1253
  %1255 = vrot.lane.b32.xlu0 %v881, 8
  %v1256 = vpop.permute.xlu0 %1255
  %1257 = vrot.lane.b32.xlu0 %v883, 8
  %v1258 = vpop.permute.xlu0 %1257
  %1259 = vrot.lane.b32.xlu0 %v886, 8
  %v1260 = vpop.permute.xlu0 %1259
  %1261 = vrot.lane.b32.xlu0 %v888, 8
  %v1262 = vpop.permute.xlu0 %1261
  %1263 = vrot.lane.b32.xlu0 %v891, 8
  %v1264 = vpop.permute.xlu0 %1263
  %1265 = vrot.lane.b32.xlu0 %v893, 8
  %v1266 = vpop.permute.xlu0 %1265
  %1267 = vrot.lane.b32.xlu0 %v896, 8
  %v1268 = vpop.permute.xlu0 %1267
  %1269 = vrot.lane.b32.xlu0 %v898, 8
  %v1270 = vpop.permute.xlu0 %1269
  %1335 = vrot.lane.b32.xlu0 %v376, 12
  %v1336 = vpop.permute.xlu0 %1335
  %1337 = vrot.lane.b32.xlu0 %v377, 12
  %v1338 = vpop.permute.xlu0 %1337
  %1339 = vrot.lane.b32.xlu0 %v379, 12
  %v1340 = vpop.permute.xlu0 %1339
  %1341 = vrot.lane.b32.xlu0 %v380, 12
  %v1342 = vpop.permute.xlu0 %1341
  %1343 = vrot.lane.b32.xlu0 %v382, 12
  %v1344 = vpop.permute.xlu0 %1343
  %1345 = vrot.lane.b32.xlu0 %v383, 12
  %v1346 = vpop.permute.xlu0 %1345
  %1347 = vrot.lane.b32.xlu0 %v385, 12
  %v1348 = vpop.permute.xlu0 %1347
  %1349 = vrot.lane.b32.xlu0 %v386, 12
  %v1350 = vpop.permute.xlu0 %1349
  %1351 = vrot.lane.b32.xlu0 %v388, 12
  %v1352 = vpop.permute.xlu0 %1351
  %1353 = vrot.lane.b32.xlu0 %v389, 12
  %v1354 = vpop.permute.xlu0 %1353
  %1355 = vrot.lane.b32.xlu0 %v391, 12
  %v1356 = vpop.permute.xlu0 %1355
  %1357 = vrot.lane.b32.xlu0 %v392, 12
  %v1358 = vpop.permute.xlu0 %1357
  %1359 = vrot.lane.b32.xlu0 %v394, 12
  %v1360 = vpop.permute.xlu0 %1359
  %1361 = vrot.lane.b32.xlu0 %v395, 12
  %v1362 = vpop.permute.xlu0 %1361
  %1363 = vrot.lane.b32.xlu0 %v397, 12
  %v1364 = vpop.permute.xlu0 %1363
  %1365 = vrot.lane.b32.xlu0 %v398, 12
  %v1366 = vpop.permute.xlu0 %1365
  %1367 = vrot.lane.b32.xlu0 %v400, 12
  %v1368 = vpop.permute.xlu0 %1367
  %1369 = vrot.lane.b32.xlu0 %v401, 12
  %v1370 = vpop.permute.xlu0 %1369
  %1371 = vrot.lane.b32.xlu0 %v403, 12
  %v1372 = vpop.permute.xlu0 %1371
  %1373 = vrot.lane.b32.xlu0 %v404, 12
  %v1374 = vpop.permute.xlu0 %1373
  %1375 = vrot.lane.b32.xlu0 %v406, 12
  %v1376 = vpop.permute.xlu0 %1375
  %1377 = vrot.lane.b32.xlu0 %v407, 12
  %v1378 = vpop.permute.xlu0 %1377
  %1379 = vrot.lane.b32.xlu0 %v409, 12
  %v1380 = vpop.permute.xlu0 %1379
  %1381 = vrot.lane.b32.xlu0 %v410, 12
  %v1382 = vpop.permute.xlu0 %1381
  %1383 = vrot.lane.b32.xlu0 %v412, 12
  %v1384 = vpop.permute.xlu0 %1383
  %1385 = vrot.lane.b32.xlu0 %v413, 12
  %v1386 = vpop.permute.xlu0 %1385
  %1387 = vrot.lane.b32.xlu0 %v415, 12
  %v1388 = vpop.permute.xlu0 %1387
  %1389 = vrot.lane.b32.xlu0 %v416, 12
  %v1390 = vpop.permute.xlu0 %1389
  %1391 = vrot.lane.b32.xlu0 %v418, 12
  %v1392 = vpop.permute.xlu0 %1391
  %1393 = vrot.lane.b32.xlu0 %v419, 12
  %v1394 = vpop.permute.xlu0 %1393
  %1395 = vrot.lane.b32.xlu0 %v421, 12
  %v1396 = vpop.permute.xlu0 %1395
  %1397 = vrot.lane.b32.xlu0 %v422, 12
  %v1398 = vpop.permute.xlu0 %1397
  %1399 = vrot.lane.b32.xlu0 %v430, 12
  %v1400 = vpop.permute.xlu0 %1399
  %1401 = vrot.lane.b32.xlu0 %v431, 12
  %v1402 = vpop.permute.xlu0 %1401
  %1403 = vrot.lane.b32.xlu0 %v433, 12
  %v1404 = vpop.permute.xlu0 %1403
  %1405 = vrot.lane.b32.xlu0 %v434, 12
  %v1406 = vpop.permute.xlu0 %1405
  %1407 = vrot.lane.b32.xlu0 %v436, 12
  %v1408 = vpop.permute.xlu0 %1407
  %1409 = vrot.lane.b32.xlu0 %v437, 12
  %v1410 = vpop.permute.xlu0 %1409
  %1411 = vrot.lane.b32.xlu0 %v439, 12
  %v1412 = vpop.permute.xlu0 %1411
  %1413 = vrot.lane.b32.xlu0 %v440, 12
  %v1414 = vpop.permute.xlu0 %1413
  %1415 = vrot.lane.b32.xlu0 %v442, 12
  %v1416 = vpop.permute.xlu0 %1415
  %1417 = vrot.lane.b32.xlu0 %v443, 12
  %v1418 = vpop.permute.xlu0 %1417
  %1419 = vrot.lane.b32.xlu0 %v445, 12
  %v1420 = vpop.permute.xlu0 %1419
  %1421 = vrot.lane.b32.xlu0 %v446, 12
  %v1422 = vpop.permute.xlu0 %1421
  %1423 = vrot.lane.b32.xlu0 %v448, 12
  %v1424 = vpop.permute.xlu0 %1423
  %1425 = vrot.lane.b32.xlu0 %v449, 12
  %v1426 = vpop.permute.xlu0 %1425
  %1427 = vrot.lane.b32.xlu0 %v451, 12
  %v1428 = vpop.permute.xlu0 %1427
  %1429 = vrot.lane.b32.xlu0 %v452, 12
  %v1430 = vpop.permute.xlu0 %1429
  %1431 = vrot.lane.b32.xlu0 %v454, 12
  %v1432 = vpop.permute.xlu0 %1431
  %1433 = vrot.lane.b32.xlu0 %v455, 12
  %v1434 = vpop.permute.xlu0 %1433
  %1435 = vrot.lane.b32.xlu0 %v457, 12
  %v1436 = vpop.permute.xlu0 %1435
  %1437 = vrot.lane.b32.xlu0 %v458, 12
  %v1438 = vpop.permute.xlu0 %1437
  %1439 = vrot.lane.b32.xlu0 %v460, 12
  %v1440 = vpop.permute.xlu0 %1439
  %1441 = vrot.lane.b32.xlu0 %v461, 12
  %v1442 = vpop.permute.xlu0 %1441
  %1443 = vrot.lane.b32.xlu0 %v463, 12
  %v1444 = vpop.permute.xlu0 %1443
  %1445 = vrot.lane.b32.xlu0 %v464, 12
  %v1446 = vpop.permute.xlu0 %1445
  %1447 = vrot.lane.b32.xlu0 %v466, 12
  %v1448 = vpop.permute.xlu0 %1447
  %1449 = vrot.lane.b32.xlu0 %v467, 12
  %v1450 = vpop.permute.xlu0 %1449
  %1451 = vrot.lane.b32.xlu0 %v469, 12
  %v1452 = vpop.permute.xlu0 %1451
  %1453 = vrot.lane.b32.xlu0 %v470, 12
  %v1454 = vpop.permute.xlu0 %1453
  %1455 = vrot.lane.b32.xlu0 %v472, 12
  %v1456 = vpop.permute.xlu0 %1455
  %1457 = vrot.lane.b32.xlu0 %v473, 12
  %v1458 = vpop.permute.xlu0 %1457
  %1459 = vrot.lane.b32.xlu0 %v475, 12
  %v1460 = vpop.permute.xlu0 %1459
  %1461 = vrot.lane.b32.xlu0 %v476, 12
  %v1462 = vpop.permute.xlu0 %1461
  %1527 = vrot.lane.b32.xlu0 %v585, 16
  %v1528 = vpop.permute.xlu0 %1527
  %1529 = vrot.lane.b32.xlu0 %v587, 16
  %v1530 = vpop.permute.xlu0 %1529
  %1531 = vrot.lane.b32.xlu0 %v590, 16
  %v1532 = vpop.permute.xlu0 %1531
  %1533 = vrot.lane.b32.xlu0 %v592, 16
  %v1534 = vpop.permute.xlu0 %1533
  %1535 = vrot.lane.b32.xlu0 %v595, 16
  %v1536 = vpop.permute.xlu0 %1535
  %1537 = vrot.lane.b32.xlu0 %v597, 16
  %v1538 = vpop.permute.xlu0 %1537
  %1539 = vrot.lane.b32.xlu0 %v600, 16
  %v1540 = vpop.permute.xlu0 %1539
  %1541 = vrot.lane.b32.xlu0 %v602, 16
  %v1542 = vpop.permute.xlu0 %1541
  %1543 = vrot.lane.b32.xlu0 %v605, 16
  %v1544 = vpop.permute.xlu0 %1543
  %1545 = vrot.lane.b32.xlu0 %v607, 16
  %v1546 = vpop.permute.xlu0 %1545
  %1547 = vrot.lane.b32.xlu0 %v610, 16
  %v1548 = vpop.permute.xlu0 %1547
  %1549 = vrot.lane.b32.xlu0 %v612, 16
  %v1550 = vpop.permute.xlu0 %1549
  %1551 = vrot.lane.b32.xlu0 %v615, 16
  %v1552 = vpop.permute.xlu0 %1551
  %1553 = vrot.lane.b32.xlu0 %v617, 16
  %v1554 = vpop.permute.xlu0 %1553
  %1555 = vrot.lane.b32.xlu0 %v620, 16
  %v1556 = vpop.permute.xlu0 %1555
  %1557 = vrot.lane.b32.xlu0 %v622, 16
  %v1558 = vpop.permute.xlu0 %1557
  %1559 = vrot.lane.b32.xlu0 %v625, 16
  %v1560 = vpop.permute.xlu0 %1559
  %1561 = vrot.lane.b32.xlu0 %v627, 16
  %v1562 = vpop.permute.xlu0 %1561
  %1563 = vrot.lane.b32.xlu0 %v630, 16
  %v1564 = vpop.permute.xlu0 %1563
  %1565 = vrot.lane.b32.xlu0 %v632, 16
  %v1566 = vpop.permute.xlu0 %1565
  %1567 = vrot.lane.b32.xlu0 %v635, 16
  %v1568 = vpop.permute.xlu0 %1567
  %1569 = vrot.lane.b32.xlu0 %v637, 16
  %v1570 = vpop.permute.xlu0 %1569
  %1571 = vrot.lane.b32.xlu0 %v640, 16
  %v1572 = vpop.permute.xlu0 %1571
  %1573 = vrot.lane.b32.xlu0 %v642, 16
  %v1574 = vpop.permute.xlu0 %1573
  %1575 = vrot.lane.b32.xlu0 %v645, 16
  %v1576 = vpop.permute.xlu0 %1575
  %1577 = vrot.lane.b32.xlu0 %v647, 16
  %v1578 = vpop.permute.xlu0 %1577
  %1579 = vrot.lane.b32.xlu0 %v650, 16
  %v1580 = vpop.permute.xlu0 %1579
  %1581 = vrot.lane.b32.xlu0 %v652, 16
  %v1582 = vpop.permute.xlu0 %1581
  %1583 = vrot.lane.b32.xlu0 %v655, 16
  %v1584 = vpop.permute.xlu0 %1583
  %1585 = vrot.lane.b32.xlu0 %v657, 16
  %v1586 = vpop.permute.xlu0 %1585
  %1587 = vrot.lane.b32.xlu0 %v907, 16
  %v1588 = vpop.permute.xlu0 %1587
  %1589 = vrot.lane.b32.xlu0 %v909, 16
  %v1590 = vpop.permute.xlu0 %1589
  %1591 = vrot.lane.b32.xlu0 %v665, 16
  %v1592 = vpop.permute.xlu0 %1591
  %1593 = vrot.lane.b32.xlu0 %v667, 16
  %v1594 = vpop.permute.xlu0 %1593
  %1595 = vrot.lane.b32.xlu0 %v670, 16
  %v1596 = vpop.permute.xlu0 %1595
  %1597 = vrot.lane.b32.xlu0 %v672, 16
  %v1598 = vpop.permute.xlu0 %1597
  %1599 = vrot.lane.b32.xlu0 %v675, 16
  %v1600 = vpop.permute.xlu0 %1599
  %1601 = vrot.lane.b32.xlu0 %v677, 16
  %v1602 = vpop.permute.xlu0 %1601
  %1603 = vrot.lane.b32.xlu0 %v680, 16
  %v1604 = vpop.permute.xlu0 %1603
  %1605 = vrot.lane.b32.xlu0 %v682, 16
  %v1606 = vpop.permute.xlu0 %1605
  %1607 = vrot.lane.b32.xlu0 %v685, 16
  %v1608 = vpop.permute.xlu0 %1607
  %1609 = vrot.lane.b32.xlu0 %v687, 16
  %v1610 = vpop.permute.xlu0 %1609
  %1611 = vrot.lane.b32.xlu0 %v690, 16
  %v1612 = vpop.permute.xlu0 %1611
  %1613 = vrot.lane.b32.xlu0 %v692, 16
  %v1614 = vpop.permute.xlu0 %1613
  %1615 = vrot.lane.b32.xlu0 %v695, 16
  %v1616 = vpop.permute.xlu0 %1615
  %1617 = vrot.lane.b32.xlu0 %v697, 16
  %v1618 = vpop.permute.xlu0 %1617
  %1619 = vrot.lane.b32.xlu0 %v700, 16
  %v1620 = vpop.permute.xlu0 %1619
  %1621 = vrot.lane.b32.xlu0 %v702, 16
  %v1622 = vpop.permute.xlu0 %1621
  %1623 = vrot.lane.b32.xlu0 %v705, 16
  %v1624 = vpop.permute.xlu0 %1623
  %1625 = vrot.lane.b32.xlu0 %v707, 16
  %v1626 = vpop.permute.xlu0 %1625
  %1627 = vrot.lane.b32.xlu0 %v710, 16
  %v1628 = vpop.permute.xlu0 %1627
  %1629 = vrot.lane.b32.xlu0 %v712, 16
  %v1630 = vpop.permute.xlu0 %1629
  %1631 = vrot.lane.b32.xlu0 %v715, 16
  %v1632 = vpop.permute.xlu0 %1631
  %1633 = vrot.lane.b32.xlu0 %v717, 16
  %v1634 = vpop.permute.xlu0 %1633
  %1635 = vrot.lane.b32.xlu0 %v720, 16
  %v1636 = vpop.permute.xlu0 %1635
  %1637 = vrot.lane.b32.xlu0 %v722, 16
  %v1638 = vpop.permute.xlu0 %1637
  %1639 = vrot.lane.b32.xlu0 %v725, 16
  %v1640 = vpop.permute.xlu0 %1639
  %1641 = vrot.lane.b32.xlu0 %v727, 16
  %v1642 = vpop.permute.xlu0 %1641
  %1643 = vrot.lane.b32.xlu0 %v730, 16
  %v1644 = vpop.permute.xlu0 %1643
  %1645 = vrot.lane.b32.xlu0 %v732, 16
  %v1646 = vpop.permute.xlu0 %1645
  %1647 = vrot.lane.b32.xlu0 %v735, 16
  %v1648 = vpop.permute.xlu0 %1647
  %1649 = vrot.lane.b32.xlu0 %v737, 16
  %v1650 = vpop.permute.xlu0 %1649
  %1651 = vrot.lane.b32.xlu0 %v912, 16
  %v1652 = vpop.permute.xlu0 %1651
  %1653 = vrot.lane.b32.xlu0 %v914, 16
  %v1654 = vpop.permute.xlu0 %1653
  %1719 = vrot.lane.b32.xlu0 %v746, 20
  %v1720 = vpop.permute.xlu0 %1719
  %1721 = vrot.lane.b32.xlu0 %v748, 20
  %v1722 = vpop.permute.xlu0 %1721
  %1723 = vrot.lane.b32.xlu0 %v751, 20
  %v1724 = vpop.permute.xlu0 %1723
  %1725 = vrot.lane.b32.xlu0 %v753, 20
  %v1726 = vpop.permute.xlu0 %1725
  %1727 = vrot.lane.b32.xlu0 %v756, 20
  %v1728 = vpop.permute.xlu0 %1727
  %1729 = vrot.lane.b32.xlu0 %v758, 20
  %v1730 = vpop.permute.xlu0 %1729
  %1731 = vrot.lane.b32.xlu0 %v761, 20
  %v1732 = vpop.permute.xlu0 %1731
  %1733 = vrot.lane.b32.xlu0 %v763, 20
  %v1734 = vpop.permute.xlu0 %1733
  %1735 = vrot.lane.b32.xlu0 %v766, 20
  %v1736 = vpop.permute.xlu0 %1735
  %1737 = vrot.lane.b32.xlu0 %v768, 20
  %v1738 = vpop.permute.xlu0 %1737
  %1739 = vrot.lane.b32.xlu0 %v771, 20
  %v1740 = vpop.permute.xlu0 %1739
  %1741 = vrot.lane.b32.xlu0 %v773, 20
  %v1742 = vpop.permute.xlu0 %1741
  %1743 = vrot.lane.b32.xlu0 %v776, 20
  %v1744 = vpop.permute.xlu0 %1743
  %1745 = vrot.lane.b32.xlu0 %v778, 20
  %v1746 = vpop.permute.xlu0 %1745
  %1747 = vrot.lane.b32.xlu0 %v781, 20
  %v1748 = vpop.permute.xlu0 %1747
  %1749 = vrot.lane.b32.xlu0 %v783, 20
  %v1750 = vpop.permute.xlu0 %1749
  %1751 = vrot.lane.b32.xlu0 %v786, 20
  %v1752 = vpop.permute.xlu0 %1751
  %1753 = vrot.lane.b32.xlu0 %v788, 20
  %v1754 = vpop.permute.xlu0 %1753
  %1755 = vrot.lane.b32.xlu0 %v791, 20
  %v1756 = vpop.permute.xlu0 %1755
  %1757 = vrot.lane.b32.xlu0 %v793, 20
  %v1758 = vpop.permute.xlu0 %1757
  %1759 = vrot.lane.b32.xlu0 %v796, 20
  %v1760 = vpop.permute.xlu0 %1759
  %1761 = vrot.lane.b32.xlu0 %v798, 20
  %v1762 = vpop.permute.xlu0 %1761
  %1763 = vrot.lane.b32.xlu0 %v801, 20
  %v1764 = vpop.permute.xlu0 %1763
  %1765 = vrot.lane.b32.xlu0 %v803, 20
  %v1766 = vpop.permute.xlu0 %1765
  %1767 = vrot.lane.b32.xlu0 %v806, 20
  %v1768 = vpop.permute.xlu0 %1767
  %1769 = vrot.lane.b32.xlu0 %v808, 20
  %v1770 = vpop.permute.xlu0 %1769
  %1771 = vrot.lane.b32.xlu0 %v811, 20
  %v1772 = vpop.permute.xlu0 %1771
  %1773 = vrot.lane.b32.xlu0 %v813, 20
  %v1774 = vpop.permute.xlu0 %1773
  %1775 = vrot.lane.b32.xlu0 %v816, 20
  %v1776 = vpop.permute.xlu0 %1775
  %1777 = vrot.lane.b32.xlu0 %v818, 20
  %v1778 = vpop.permute.xlu0 %1777
  %1779 = vrot.lane.b32.xlu0 %v917, 20
  %v1780 = vpop.permute.xlu0 %1779
  %1781 = vrot.lane.b32.xlu0 %v919, 20
  %v1782 = vpop.permute.xlu0 %1781
  %1783 = vrot.lane.b32.xlu0 %v826, 20
  %v1784 = vpop.permute.xlu0 %1783
  %1785 = vrot.lane.b32.xlu0 %v828, 20
  %v1786 = vpop.permute.xlu0 %1785
  %1787 = vrot.lane.b32.xlu0 %v831, 20
  %v1788 = vpop.permute.xlu0 %1787
  %1789 = vrot.lane.b32.xlu0 %v833, 20
  %v1790 = vpop.permute.xlu0 %1789
  %1791 = vrot.lane.b32.xlu0 %v836, 20
  %v1792 = vpop.permute.xlu0 %1791
  %1793 = vrot.lane.b32.xlu0 %v838, 20
  %v1794 = vpop.permute.xlu0 %1793
  %1795 = vrot.lane.b32.xlu0 %v841, 20
  %v1796 = vpop.permute.xlu0 %1795
  %1797 = vrot.lane.b32.xlu0 %v843, 20
  %v1798 = vpop.permute.xlu0 %1797
  %1799 = vrot.lane.b32.xlu0 %v846, 20
  %v1800 = vpop.permute.xlu0 %1799
  %1801 = vrot.lane.b32.xlu0 %v848, 20
  %v1802 = vpop.permute.xlu0 %1801
  %1803 = vrot.lane.b32.xlu0 %v851, 20
  %v1804 = vpop.permute.xlu0 %1803
  %1805 = vrot.lane.b32.xlu0 %v853, 20
  %v1806 = vpop.permute.xlu0 %1805
  %1807 = vrot.lane.b32.xlu0 %v856, 20
  %v1808 = vpop.permute.xlu0 %1807
  %1809 = vrot.lane.b32.xlu0 %v858, 20
  %v1810 = vpop.permute.xlu0 %1809
  %1811 = vrot.lane.b32.xlu0 %v861, 20
  %v1812 = vpop.permute.xlu0 %1811
  %1813 = vrot.lane.b32.xlu0 %v863, 20
  %v1814 = vpop.permute.xlu0 %1813
  %1815 = vrot.lane.b32.xlu0 %v866, 20
  %v1816 = vpop.permute.xlu0 %1815
  %1817 = vrot.lane.b32.xlu0 %v868, 20
  %v1818 = vpop.permute.xlu0 %1817
  %1819 = vrot.lane.b32.xlu0 %v871, 20
  %v1820 = vpop.permute.xlu0 %1819
  %1821 = vrot.lane.b32.xlu0 %v873, 20
  %v1822 = vpop.permute.xlu0 %1821
  %1823 = vrot.lane.b32.xlu0 %v876, 20
  %v1824 = vpop.permute.xlu0 %1823
  %1825 = vrot.lane.b32.xlu0 %v878, 20
  %v1826 = vpop.permute.xlu0 %1825
  %1827 = vrot.lane.b32.xlu0 %v881, 20
  %v1828 = vpop.permute.xlu0 %1827
  %1829 = vrot.lane.b32.xlu0 %v883, 20
  %v1830 = vpop.permute.xlu0 %1829
  %1831 = vrot.lane.b32.xlu0 %v886, 20
  %v1832 = vpop.permute.xlu0 %1831
  %1833 = vrot.lane.b32.xlu0 %v888, 20
  %v1834 = vpop.permute.xlu0 %1833
  %1835 = vrot.lane.b32.xlu0 %v891, 20
  %v1836 = vpop.permute.xlu0 %1835
  %1837 = vrot.lane.b32.xlu0 %v893, 20
  %v1838 = vpop.permute.xlu0 %1837
  %1839 = vrot.lane.b32.xlu0 %v896, 20
  %v1840 = vpop.permute.xlu0 %1839
  %1841 = vrot.lane.b32.xlu0 %v898, 20
  %v1842 = vpop.permute.xlu0 %1841
  %1843 = vrot.lane.b32.xlu0 %v922, 20
  %v1844 = vpop.permute.xlu0 %1843
  %1845 = vrot.lane.b32.xlu0 %v924, 20
  %v1846 = vpop.permute.xlu0 %1845
  %1911 = vrot.lane.b32.xlu0 %v379, 24
  %v1912 = vpop.permute.xlu0 %1911
  %1913 = vrot.lane.b32.xlu0 %v380, 24
  %v1914 = vpop.permute.xlu0 %1913
  %1915 = vrot.lane.b32.xlu0 %v382, 24
  %v1916 = vpop.permute.xlu0 %1915
  %1917 = vrot.lane.b32.xlu0 %v383, 24
  %v1918 = vpop.permute.xlu0 %1917
  %1919 = vrot.lane.b32.xlu0 %v385, 24
  %v1920 = vpop.permute.xlu0 %1919
  %1921 = vrot.lane.b32.xlu0 %v386, 24
  %v1922 = vpop.permute.xlu0 %1921
  %1923 = vrot.lane.b32.xlu0 %v388, 24
  %v1924 = vpop.permute.xlu0 %1923
  %1925 = vrot.lane.b32.xlu0 %v389, 24
  %v1926 = vpop.permute.xlu0 %1925
  %1927 = vrot.lane.b32.xlu0 %v391, 24
  %v1928 = vpop.permute.xlu0 %1927
  %1929 = vrot.lane.b32.xlu0 %v392, 24
  %v1930 = vpop.permute.xlu0 %1929
  %1931 = vrot.lane.b32.xlu0 %v394, 24
  %v1932 = vpop.permute.xlu0 %1931
  %1933 = vrot.lane.b32.xlu0 %v395, 24
  %v1934 = vpop.permute.xlu0 %1933
  %1935 = vrot.lane.b32.xlu0 %v397, 24
  %v1936 = vpop.permute.xlu0 %1935
  %1937 = vrot.lane.b32.xlu0 %v398, 24
  %v1938 = vpop.permute.xlu0 %1937
  %1939 = vrot.lane.b32.xlu0 %v400, 24
  %v1940 = vpop.permute.xlu0 %1939
  %1941 = vrot.lane.b32.xlu0 %v401, 24
  %v1942 = vpop.permute.xlu0 %1941
  %1943 = vrot.lane.b32.xlu0 %v403, 24
  %v1944 = vpop.permute.xlu0 %1943
  %1945 = vrot.lane.b32.xlu0 %v404, 24
  %v1946 = vpop.permute.xlu0 %1945
  %1947 = vrot.lane.b32.xlu0 %v406, 24
  %v1948 = vpop.permute.xlu0 %1947
  %1949 = vrot.lane.b32.xlu0 %v407, 24
  %v1950 = vpop.permute.xlu0 %1949
  %1951 = vrot.lane.b32.xlu0 %v409, 24
  %v1952 = vpop.permute.xlu0 %1951
  %1953 = vrot.lane.b32.xlu0 %v410, 24
  %v1954 = vpop.permute.xlu0 %1953
  %1955 = vrot.lane.b32.xlu0 %v412, 24
  %v1956 = vpop.permute.xlu0 %1955
  %1957 = vrot.lane.b32.xlu0 %v413, 24
  %v1958 = vpop.permute.xlu0 %1957
  %1959 = vrot.lane.b32.xlu0 %v415, 24
  %v1960 = vpop.permute.xlu0 %1959
  %1961 = vrot.lane.b32.xlu0 %v416, 24
  %v1962 = vpop.permute.xlu0 %1961
  %1963 = vrot.lane.b32.xlu0 %v418, 24
  %v1964 = vpop.permute.xlu0 %1963
  %1965 = vrot.lane.b32.xlu0 %v419, 24
  %v1966 = vpop.permute.xlu0 %1965
  %1967 = vrot.lane.b32.xlu0 %v421, 24
  %v1968 = vpop.permute.xlu0 %1967
  %1969 = vrot.lane.b32.xlu0 %v422, 24
  %v1970 = vpop.permute.xlu0 %1969
  %1971 = vrot.lane.b32.xlu0 %v424, 24
  %v1972 = vpop.permute.xlu0 %1971
  %1973 = vrot.lane.b32.xlu0 %v425, 24
  %v1974 = vpop.permute.xlu0 %1973
  %1975 = vrot.lane.b32.xlu0 %v433, 24
  %v1976 = vpop.permute.xlu0 %1975
  %1977 = vrot.lane.b32.xlu0 %v434, 24
  %v1978 = vpop.permute.xlu0 %1977
  %1979 = vrot.lane.b32.xlu0 %v436, 24
  %v1980 = vpop.permute.xlu0 %1979
  %1981 = vrot.lane.b32.xlu0 %v437, 24
  %v1982 = vpop.permute.xlu0 %1981
  %1983 = vrot.lane.b32.xlu0 %v439, 24
  %v1984 = vpop.permute.xlu0 %1983
  %1985 = vrot.lane.b32.xlu0 %v440, 24
  %v1986 = vpop.permute.xlu0 %1985
  %1987 = vrot.lane.b32.xlu0 %v442, 24
  %v1988 = vpop.permute.xlu0 %1987
  %1989 = vrot.lane.b32.xlu0 %v443, 24
  %v1990 = vpop.permute.xlu0 %1989
  %1991 = vrot.lane.b32.xlu0 %v445, 24
  %v1992 = vpop.permute.xlu0 %1991
  %1993 = vrot.lane.b32.xlu0 %v446, 24
  %v1994 = vpop.permute.xlu0 %1993
  %1995 = vrot.lane.b32.xlu0 %v448, 24
  %v1996 = vpop.permute.xlu0 %1995
  %1997 = vrot.lane.b32.xlu0 %v449, 24
  %v1998 = vpop.permute.xlu0 %1997
  %1999 = vrot.lane.b32.xlu0 %v451, 24
  %v2000 = vpop.permute.xlu0 %1999
  %2001 = vrot.lane.b32.xlu0 %v452, 24
  %v2002 = vpop.permute.xlu0 %2001
  %2003 = vrot.lane.b32.xlu0 %v454, 24
  %v2004 = vpop.permute.xlu0 %2003
  %2005 = vrot.lane.b32.xlu0 %v455, 24
  %v2006 = vpop.permute.xlu0 %2005
  %2007 = vrot.lane.b32.xlu0 %v457, 24
  %v2008 = vpop.permute.xlu0 %2007
  %2009 = vrot.lane.b32.xlu0 %v458, 24
  %v2010 = vpop.permute.xlu0 %2009
  %2011 = vrot.lane.b32.xlu0 %v460, 24
  %v2012 = vpop.permute.xlu0 %2011
  %2013 = vrot.lane.b32.xlu0 %v461, 24
  %v2014 = vpop.permute.xlu0 %2013
  %2015 = vrot.lane.b32.xlu0 %v463, 24
  %v2016 = vpop.permute.xlu0 %2015
  %2017 = vrot.lane.b32.xlu0 %v464, 24
  %v2018 = vpop.permute.xlu0 %2017
  %2019 = vrot.lane.b32.xlu0 %v466, 24
  %v2020 = vpop.permute.xlu0 %2019
  %2021 = vrot.lane.b32.xlu0 %v467, 24
  %v2022 = vpop.permute.xlu0 %2021
  %2023 = vrot.lane.b32.xlu0 %v469, 24
  %v2024 = vpop.permute.xlu0 %2023
  %2025 = vrot.lane.b32.xlu0 %v470, 24
  %v2026 = vpop.permute.xlu0 %2025
  %2027 = vrot.lane.b32.xlu0 %v472, 24
  %v2028 = vpop.permute.xlu0 %2027
  %2029 = vrot.lane.b32.xlu0 %v473, 24
  %v2030 = vpop.permute.xlu0 %2029
  %2031 = vrot.lane.b32.xlu0 %v475, 24
  %v2032 = vpop.permute.xlu0 %2031
  %2033 = vrot.lane.b32.xlu0 %v476, 24
  %v2034 = vpop.permute.xlu0 %2033
  %2035 = vrot.lane.b32.xlu0 %v478, 24
  %v2036 = vpop.permute.xlu0 %2035
  %2037 = vrot.lane.b32.xlu0 %v479, 24
  %v2038 = vpop.permute.xlu0 %2037
  %2103 = vrot.lane.b32.xlu0 %v590, 28
  %v2104 = vpop.permute.xlu0 %2103
  %2105 = vrot.lane.b32.xlu0 %v592, 28
  %v2106 = vpop.permute.xlu0 %2105
  %2107 = vrot.lane.b32.xlu0 %v595, 28
  %v2108 = vpop.permute.xlu0 %2107
  %2109 = vrot.lane.b32.xlu0 %v597, 28
  %v2110 = vpop.permute.xlu0 %2109
  %2111 = vrot.lane.b32.xlu0 %v600, 28
  %v2112 = vpop.permute.xlu0 %2111
  %2113 = vrot.lane.b32.xlu0 %v602, 28
  %v2114 = vpop.permute.xlu0 %2113
  %2115 = vrot.lane.b32.xlu0 %v605, 28
  %v2116 = vpop.permute.xlu0 %2115
  %2117 = vrot.lane.b32.xlu0 %v607, 28
  %v2118 = vpop.permute.xlu0 %2117
  %2119 = vrot.lane.b32.xlu0 %v610, 28
  %v2120 = vpop.permute.xlu0 %2119
  %2121 = vrot.lane.b32.xlu0 %v612, 28
  %v2122 = vpop.permute.xlu0 %2121
  %2123 = vrot.lane.b32.xlu0 %v615, 28
  %v2124 = vpop.permute.xlu0 %2123
  %2125 = vrot.lane.b32.xlu0 %v617, 28
  %v2126 = vpop.permute.xlu0 %2125
  %2127 = vrot.lane.b32.xlu0 %v620, 28
  %v2128 = vpop.permute.xlu0 %2127
  %2129 = vrot.lane.b32.xlu0 %v622, 28
  %v2130 = vpop.permute.xlu0 %2129
  %2131 = vrot.lane.b32.xlu0 %v625, 28
  %v2132 = vpop.permute.xlu0 %2131
  %2133 = vrot.lane.b32.xlu0 %v627, 28
  %v2134 = vpop.permute.xlu0 %2133
  %2135 = vrot.lane.b32.xlu0 %v630, 28
  %v2136 = vpop.permute.xlu0 %2135
  %2137 = vrot.lane.b32.xlu0 %v632, 28
  %v2138 = vpop.permute.xlu0 %2137
  %2139 = vrot.lane.b32.xlu0 %v635, 28
  %v2140 = vpop.permute.xlu0 %2139
  %2141 = vrot.lane.b32.xlu0 %v637, 28
  %v2142 = vpop.permute.xlu0 %2141
  %2143 = vrot.lane.b32.xlu0 %v640, 28
  %v2144 = vpop.permute.xlu0 %2143
  %2145 = vrot.lane.b32.xlu0 %v642, 28
  %v2146 = vpop.permute.xlu0 %2145
  %2147 = vrot.lane.b32.xlu0 %v645, 28
  %v2148 = vpop.permute.xlu0 %2147
  %2149 = vrot.lane.b32.xlu0 %v647, 28
  %v2150 = vpop.permute.xlu0 %2149
  %2151 = vrot.lane.b32.xlu0 %v650, 28
  %v2152 = vpop.permute.xlu0 %2151
  %2153 = vrot.lane.b32.xlu0 %v652, 28
  %v2154 = vpop.permute.xlu0 %2153
  %2155 = vrot.lane.b32.xlu0 %v655, 28
  %v2156 = vpop.permute.xlu0 %2155
  %2157 = vrot.lane.b32.xlu0 %v657, 28
  %v2158 = vpop.permute.xlu0 %2157
  %2159 = vrot.lane.b32.xlu0 %v907, 28
  %v2160 = vpop.permute.xlu0 %2159
  %2161 = vrot.lane.b32.xlu0 %v909, 28
  %v2162 = vpop.permute.xlu0 %2161
  %2163 = vrot.lane.b32.xlu0 %v933, 28
  %v2164 = vpop.permute.xlu0 %2163
  %2165 = vrot.lane.b32.xlu0 %v935, 28
  %v2166 = vpop.permute.xlu0 %2165
  %2167 = vrot.lane.b32.xlu0 %v670, 28
  %v2168 = vpop.permute.xlu0 %2167
  %2169 = vrot.lane.b32.xlu0 %v672, 28
  %v2170 = vpop.permute.xlu0 %2169
  %2171 = vrot.lane.b32.xlu0 %v675, 28
  %v2172 = vpop.permute.xlu0 %2171
  %2173 = vrot.lane.b32.xlu0 %v677, 28
  %v2174 = vpop.permute.xlu0 %2173
  %2175 = vrot.lane.b32.xlu0 %v680, 28
  %v2176 = vpop.permute.xlu0 %2175
  %2177 = vrot.lane.b32.xlu0 %v682, 28
  %v2178 = vpop.permute.xlu0 %2177
  %2179 = vrot.lane.b32.xlu0 %v685, 28
  %v2180 = vpop.permute.xlu0 %2179
  %2181 = vrot.lane.b32.xlu0 %v687, 28
  %v2182 = vpop.permute.xlu0 %2181
  %2183 = vrot.lane.b32.xlu0 %v690, 28
  %v2184 = vpop.permute.xlu0 %2183
  %2185 = vrot.lane.b32.xlu0 %v692, 28
  %v2186 = vpop.permute.xlu0 %2185
  %2187 = vrot.lane.b32.xlu0 %v695, 28
  %v2188 = vpop.permute.xlu0 %2187
  %2189 = vrot.lane.b32.xlu0 %v697, 28
  %v2190 = vpop.permute.xlu0 %2189
  %2191 = vrot.lane.b32.xlu0 %v700, 28
  %v2192 = vpop.permute.xlu0 %2191
  %2193 = vrot.lane.b32.xlu0 %v702, 28
  %v2194 = vpop.permute.xlu0 %2193
  %2195 = vrot.lane.b32.xlu0 %v705, 28
  %v2196 = vpop.permute.xlu0 %2195
  %2197 = vrot.lane.b32.xlu0 %v707, 28
  %v2198 = vpop.permute.xlu0 %2197
  %2199 = vrot.lane.b32.xlu0 %v710, 28
  %v2200 = vpop.permute.xlu0 %2199
  %2201 = vrot.lane.b32.xlu0 %v712, 28
  %v2202 = vpop.permute.xlu0 %2201
  %2203 = vrot.lane.b32.xlu0 %v715, 28
  %v2204 = vpop.permute.xlu0 %2203
  %2205 = vrot.lane.b32.xlu0 %v717, 28
  %v2206 = vpop.permute.xlu0 %2205
  %2207 = vrot.lane.b32.xlu0 %v720, 28
  %v2208 = vpop.permute.xlu0 %2207
  %2209 = vrot.lane.b32.xlu0 %v722, 28
  %v2210 = vpop.permute.xlu0 %2209
  %2211 = vrot.lane.b32.xlu0 %v725, 28
  %v2212 = vpop.permute.xlu0 %2211
  %2213 = vrot.lane.b32.xlu0 %v727, 28
  %v2214 = vpop.permute.xlu0 %2213
  %2215 = vrot.lane.b32.xlu0 %v730, 28
  %v2216 = vpop.permute.xlu0 %2215
  %2217 = vrot.lane.b32.xlu0 %v732, 28
  %v2218 = vpop.permute.xlu0 %2217
  %2219 = vrot.lane.b32.xlu0 %v735, 28
  %v2220 = vpop.permute.xlu0 %2219
  %2221 = vrot.lane.b32.xlu0 %v737, 28
  %v2222 = vpop.permute.xlu0 %2221
  %2223 = vrot.lane.b32.xlu0 %v912, 28
  %v2224 = vpop.permute.xlu0 %2223
  %2225 = vrot.lane.b32.xlu0 %v914, 28
  %v2226 = vpop.permute.xlu0 %2225
  %2227 = vrot.lane.b32.xlu0 %v938, 28
  %v2228 = vpop.permute.xlu0 %2227
  %2229 = vrot.lane.b32.xlu0 %v940, 28
  %v2230 = vpop.permute.xlu0 %2229
  %2295 = vrot.lane.b32.xlu0 %v751, 32
  %v2296 = vpop.permute.xlu0 %2295
  %2297 = vrot.lane.b32.xlu0 %v753, 32
  %v2298 = vpop.permute.xlu0 %2297
  %2299 = vrot.lane.b32.xlu0 %v756, 32
  %v2300 = vpop.permute.xlu0 %2299
  %2301 = vrot.lane.b32.xlu0 %v758, 32
  %v2302 = vpop.permute.xlu0 %2301
  %2303 = vrot.lane.b32.xlu0 %v761, 32
  %v2304 = vpop.permute.xlu0 %2303
  %2305 = vrot.lane.b32.xlu0 %v763, 32
  %v2306 = vpop.permute.xlu0 %2305
  %2307 = vrot.lane.b32.xlu0 %v766, 32
  %v2308 = vpop.permute.xlu0 %2307
  %2309 = vrot.lane.b32.xlu0 %v768, 32
  %v2310 = vpop.permute.xlu0 %2309
  %2311 = vrot.lane.b32.xlu0 %v771, 32
  %v2312 = vpop.permute.xlu0 %2311
  %2313 = vrot.lane.b32.xlu0 %v773, 32
  %v2314 = vpop.permute.xlu0 %2313
  %2315 = vrot.lane.b32.xlu0 %v776, 32
  %v2316 = vpop.permute.xlu0 %2315
  %2317 = vrot.lane.b32.xlu0 %v778, 32
  %v2318 = vpop.permute.xlu0 %2317
  %2319 = vrot.lane.b32.xlu0 %v781, 32
  %v2320 = vpop.permute.xlu0 %2319
  %2321 = vrot.lane.b32.xlu0 %v783, 32
  %v2322 = vpop.permute.xlu0 %2321
  %2323 = vrot.lane.b32.xlu0 %v786, 32
  %v2324 = vpop.permute.xlu0 %2323
  %2325 = vrot.lane.b32.xlu0 %v788, 32
  %v2326 = vpop.permute.xlu0 %2325
  %2327 = vrot.lane.b32.xlu0 %v791, 32
  %v2328 = vpop.permute.xlu0 %2327
  %2329 = vrot.lane.b32.xlu0 %v793, 32
  %v2330 = vpop.permute.xlu0 %2329
  %2331 = vrot.lane.b32.xlu0 %v796, 32
  %v2332 = vpop.permute.xlu0 %2331
  %2333 = vrot.lane.b32.xlu0 %v798, 32
  %v2334 = vpop.permute.xlu0 %2333
  %2335 = vrot.lane.b32.xlu0 %v801, 32
  %v2336 = vpop.permute.xlu0 %2335
  %2337 = vrot.lane.b32.xlu0 %v803, 32
  %v2338 = vpop.permute.xlu0 %2337
  %2339 = vrot.lane.b32.xlu0 %v806, 32
  %v2340 = vpop.permute.xlu0 %2339
  %2341 = vrot.lane.b32.xlu0 %v808, 32
  %v2342 = vpop.permute.xlu0 %2341
  %2343 = vrot.lane.b32.xlu0 %v811, 32
  %v2344 = vpop.permute.xlu0 %2343
  %2345 = vrot.lane.b32.xlu0 %v813, 32
  %v2346 = vpop.permute.xlu0 %2345
  %2347 = vrot.lane.b32.xlu0 %v816, 32
  %v2348 = vpop.permute.xlu0 %2347
  %2349 = vrot.lane.b32.xlu0 %v818, 32
  %v2350 = vpop.permute.xlu0 %2349
  %2351 = vrot.lane.b32.xlu0 %v917, 32
  %v2352 = vpop.permute.xlu0 %2351
  %2353 = vrot.lane.b32.xlu0 %v919, 32
  %v2354 = vpop.permute.xlu0 %2353
  %2355 = vrot.lane.b32.xlu0 %v943, 32
  %v2356 = vpop.permute.xlu0 %2355
  %2357 = vrot.lane.b32.xlu0 %v945, 32
  %v2358 = vpop.permute.xlu0 %2357
  %2359 = vrot.lane.b32.xlu0 %v831, 32
  %v2360 = vpop.permute.xlu0 %2359
  %2361 = vrot.lane.b32.xlu0 %v833, 32
  %v2362 = vpop.permute.xlu0 %2361
  %2363 = vrot.lane.b32.xlu0 %v836, 32
  %v2364 = vpop.permute.xlu0 %2363
  %2365 = vrot.lane.b32.xlu0 %v838, 32
  %v2366 = vpop.permute.xlu0 %2365
  %2367 = vrot.lane.b32.xlu0 %v841, 32
  %v2368 = vpop.permute.xlu0 %2367
  %2369 = vrot.lane.b32.xlu0 %v843, 32
  %v2370 = vpop.permute.xlu0 %2369
  %2371 = vrot.lane.b32.xlu0 %v846, 32
  %v2372 = vpop.permute.xlu0 %2371
  %2373 = vrot.lane.b32.xlu0 %v848, 32
  %v2374 = vpop.permute.xlu0 %2373
  %2375 = vrot.lane.b32.xlu0 %v851, 32
  %v2376 = vpop.permute.xlu0 %2375
  %2377 = vrot.lane.b32.xlu0 %v853, 32
  %v2378 = vpop.permute.xlu0 %2377
  %2379 = vrot.lane.b32.xlu0 %v856, 32
  %v2380 = vpop.permute.xlu0 %2379
  %2381 = vrot.lane.b32.xlu0 %v858, 32
  %v2382 = vpop.permute.xlu0 %2381
  %2383 = vrot.lane.b32.xlu0 %v861, 32
  %v2384 = vpop.permute.xlu0 %2383
  %2385 = vrot.lane.b32.xlu0 %v863, 32
  %v2386 = vpop.permute.xlu0 %2385
  %2387 = vrot.lane.b32.xlu0 %v866, 32
  %v2388 = vpop.permute.xlu0 %2387
  %2389 = vrot.lane.b32.xlu0 %v868, 32
  %v2390 = vpop.permute.xlu0 %2389
  %2391 = vrot.lane.b32.xlu0 %v871, 32
  %v2392 = vpop.permute.xlu0 %2391
  %2393 = vrot.lane.b32.xlu0 %v873, 32
  %v2394 = vpop.permute.xlu0 %2393
  %2395 = vrot.lane.b32.xlu0 %v876, 32
  %v2396 = vpop.permute.xlu0 %2395
  %2397 = vrot.lane.b32.xlu0 %v878, 32
  %v2398 = vpop.permute.xlu0 %2397
  %2399 = vrot.lane.b32.xlu0 %v881, 32
  %v2400 = vpop.permute.xlu0 %2399
  %2401 = vrot.lane.b32.xlu0 %v883, 32
  %v2402 = vpop.permute.xlu0 %2401
  %2403 = vrot.lane.b32.xlu0 %v886, 32
  %v2404 = vpop.permute.xlu0 %2403
  %2405 = vrot.lane.b32.xlu0 %v888, 32
  %v2406 = vpop.permute.xlu0 %2405
  %2407 = vrot.lane.b32.xlu0 %v891, 32
  %v2408 = vpop.permute.xlu0 %2407
  %2409 = vrot.lane.b32.xlu0 %v893, 32
  %v2410 = vpop.permute.xlu0 %2409
  %2411 = vrot.lane.b32.xlu0 %v896, 32
  %v2412 = vpop.permute.xlu0 %2411
  %2413 = vrot.lane.b32.xlu0 %v898, 32
  %v2414 = vpop.permute.xlu0 %2413
  %2415 = vrot.lane.b32.xlu0 %v922, 32
  %v2416 = vpop.permute.xlu0 %2415
  %2417 = vrot.lane.b32.xlu0 %v924, 32
  %v2418 = vpop.permute.xlu0 %2417
  %2419 = vrot.lane.b32.xlu0 %v948, 32
  %v2420 = vpop.permute.xlu0 %2419
  %2421 = vrot.lane.b32.xlu0 %v950, 32
  %v2422 = vpop.permute.xlu0 %2421
  %v2487 = vsel %vm198, %v373, %v952
  %v2488 = vsel %vm198, %v374, %v954
  %v2489 = vsel %vm198, %v376, %v956
  %v2490 = vsel %vm198, %v377, %v958
  %v2491 = vsel %vm198, %v379, %v960
  %v2492 = vsel %vm198, %v380, %v962
  %v2493 = vsel %vm198, %v382, %v964
  %v2494 = vsel %vm198, %v383, %v966
  %v2495 = vsel %vm198, %v385, %v968
  %v2496 = vsel %vm198, %v386, %v970
  %v2497 = vsel %vm198, %v388, %v972
  %v2498 = vsel %vm198, %v389, %v974
  %v2499 = vsel %vm198, %v391, %v976
  %v2500 = vsel %vm198, %v392, %v978
  %v2501 = vsel %vm198, %v394, %v980
  %v2502 = vsel %vm198, %v395, %v982
  %v2503 = vsel %vm198, %v397, %v984
  %v2504 = vsel %vm198, %v398, %v986
  %v2505 = vsel %vm198, %v400, %v988
  %v2506 = vsel %vm198, %v401, %v990
  %v2507 = vsel %vm198, %v403, %v992
  %v2508 = vsel %vm198, %v404, %v994
  %v2509 = vsel %vm198, %v406, %v996
  %v2510 = vsel %vm198, %v407, %v998
  %v2511 = vsel %vm198, %v409, %v1000
  %v2512 = vsel %vm198, %v410, %v1002
  %v2513 = vsel %vm198, %v412, %v1004
  %v2514 = vsel %vm198, %v413, %v1006
  %v2515 = vsel %vm198, %v415, %v1008
  %v2516 = vsel %vm198, %v416, %v1010
  %v2517 = vsel %vm198, %v418, %v1012
  %v2518 = vsel %vm198, %v419, %v1014
  %v2519 = vsel %vm198, %v427, %v1016
  %v2520 = vsel %vm198, %v428, %v1018
  %v2521 = vsel %vm198, %v430, %v1020
  %v2522 = vsel %vm198, %v431, %v1022
  %v2523 = vsel %vm198, %v433, %v1024
  %v2524 = vsel %vm198, %v434, %v1026
  %v2525 = vsel %vm198, %v436, %v1028
  %v2526 = vsel %vm198, %v437, %v1030
  %v2527 = vsel %vm198, %v439, %v1032
  %v2528 = vsel %vm198, %v440, %v1034
  %v2529 = vsel %vm198, %v442, %v1036
  %v2530 = vsel %vm198, %v443, %v1038
  %v2531 = vsel %vm198, %v445, %v1040
  %v2532 = vsel %vm198, %v446, %v1042
  %v2533 = vsel %vm198, %v448, %v1044
  %v2534 = vsel %vm198, %v449, %v1046
  %v2535 = vsel %vm198, %v451, %v1048
  %v2536 = vsel %vm198, %v452, %v1050
  %v2537 = vsel %vm198, %v454, %v1052
  %v2538 = vsel %vm198, %v455, %v1054
  %v2539 = vsel %vm198, %v457, %v1056
  %v2540 = vsel %vm198, %v458, %v1058
  %v2541 = vsel %vm198, %v460, %v1060
  %v2542 = vsel %vm198, %v461, %v1062
  %v2543 = vsel %vm198, %v463, %v1064
  %v2544 = vsel %vm198, %v464, %v1066
  %v2545 = vsel %vm198, %v466, %v1068
  %v2546 = vsel %vm198, %v467, %v1070
  %v2547 = vsel %vm198, %v469, %v1072
  %v2548 = vsel %vm198, %v470, %v1074
  %v2549 = vsel %vm198, %v472, %v1076
  %v2550 = vsel %vm198, %v473, %v1078
  %vm2551 = vcmask 64512
  %v2552 = vsel %vm2551, %v2487, %v1144
  %v2553 = vsel %vm2551, %v2488, %v1146
  %v2554 = vsel %vm2551, %v2489, %v1148
  %v2555 = vsel %vm2551, %v2490, %v1150
  %v2556 = vsel %vm2551, %v2491, %v1152
  %v2557 = vsel %vm2551, %v2492, %v1154
  %v2558 = vsel %vm2551, %v2493, %v1156
  %v2559 = vsel %vm2551, %v2494, %v1158
  %v2560 = vsel %vm2551, %v2495, %v1160
  %v2561 = vsel %vm2551, %v2496, %v1162
  %v2562 = vsel %vm2551, %v2497, %v1164
  %v2563 = vsel %vm2551, %v2498, %v1166
  %v2564 = vsel %vm2551, %v2499, %v1168
  %v2565 = vsel %vm2551, %v2500, %v1170
  %v2566 = vsel %vm2551, %v2501, %v1172
  %v2567 = vsel %vm2551, %v2502, %v1174
  %v2568 = vsel %vm2551, %v2503, %v1176
  %v2569 = vsel %vm2551, %v2504, %v1178
  %v2570 = vsel %vm2551, %v2505, %v1180
  %v2571 = vsel %vm2551, %v2506, %v1182
  %v2572 = vsel %vm2551, %v2507, %v1184
  %v2573 = vsel %vm2551, %v2508, %v1186
  %v2574 = vsel %vm2551, %v2509, %v1188
  %v2575 = vsel %vm2551, %v2510, %v1190
  %v2576 = vsel %vm2551, %v2511, %v1192
  %v2577 = vsel %vm2551, %v2512, %v1194
  %v2578 = vsel %vm2551, %v2513, %v1196
  %v2579 = vsel %vm2551, %v2514, %v1198
  %v2580 = vsel %vm2551, %v2515, %v1200
  %v2581 = vsel %vm2551, %v2516, %v1202
  %v2582 = vsel %vm2551, %v2517, %v1204
  %v2583 = vsel %vm2551, %v2518, %v1206
  %v2584 = vsel %vm2551, %v2519, %v1208
  %v2585 = vsel %vm2551, %v2520, %v1210
  %v2586 = vsel %vm2551, %v2521, %v1212
  %v2587 = vsel %vm2551, %v2522, %v1214
  %v2588 = vsel %vm2551, %v2523, %v1216
  %v2589 = vsel %vm2551, %v2524, %v1218
  %v2590 = vsel %vm2551, %v2525, %v1220
  %v2591 = vsel %vm2551, %v2526, %v1222
  %v2592 = vsel %vm2551, %v2527, %v1224
  %v2593 = vsel %vm2551, %v2528, %v1226
  %v2594 = vsel %vm2551, %v2529, %v1228
  %v2595 = vsel %vm2551, %v2530, %v1230
  %v2596 = vsel %vm2551, %v2531, %v1232
  %v2597 = vsel %vm2551, %v2532, %v1234
  %v2598 = vsel %vm2551, %v2533, %v1236
  %v2599 = vsel %vm2551, %v2534, %v1238
  %v2600 = vsel %vm2551, %v2535, %v1240
  %v2601 = vsel %vm2551, %v2536, %v1242
  %v2602 = vsel %vm2551, %v2537, %v1244
  %v2603 = vsel %vm2551, %v2538, %v1246
  %v2604 = vsel %vm2551, %v2539, %v1248
  %v2605 = vsel %vm2551, %v2540, %v1250
  %v2606 = vsel %vm2551, %v2541, %v1252
  %v2607 = vsel %vm2551, %v2542, %v1254
  %v2608 = vsel %vm2551, %v2543, %v1256
  %v2609 = vsel %vm2551, %v2544, %v1258
  %v2610 = vsel %vm2551, %v2545, %v1260
  %v2611 = vsel %vm2551, %v2546, %v1262
  %v2612 = vsel %vm2551, %v2547, %v1264
  %v2613 = vsel %vm2551, %v2548, %v1266
  %v2614 = vsel %vm2551, %v2549, %v1268
  %v2615 = vsel %vm2551, %v2550, %v1270
  %vm2616 = vcmask 97280
  %v2617 = vsel %vm2616, %v2552, %v1336
  %v2618 = vsel %vm2616, %v2553, %v1338
  %v2619 = vsel %vm2616, %v2554, %v1340
  %v2620 = vsel %vm2616, %v2555, %v1342
  %v2621 = vsel %vm2616, %v2556, %v1344
  %v2622 = vsel %vm2616, %v2557, %v1346
  %v2623 = vsel %vm2616, %v2558, %v1348
  %v2624 = vsel %vm2616, %v2559, %v1350
  %v2625 = vsel %vm2616, %v2560, %v1352
  %v2626 = vsel %vm2616, %v2561, %v1354
  %v2627 = vsel %vm2616, %v2562, %v1356
  %v2628 = vsel %vm2616, %v2563, %v1358
  %v2629 = vsel %vm2616, %v2564, %v1360
  %v2630 = vsel %vm2616, %v2565, %v1362
  %v2631 = vsel %vm2616, %v2566, %v1364
  %v2632 = vsel %vm2616, %v2567, %v1366
  %v2633 = vsel %vm2616, %v2568, %v1368
  %v2634 = vsel %vm2616, %v2569, %v1370
  %v2635 = vsel %vm2616, %v2570, %v1372
  %v2636 = vsel %vm2616, %v2571, %v1374
  %v2637 = vsel %vm2616, %v2572, %v1376
  %v2638 = vsel %vm2616, %v2573, %v1378
  %v2639 = vsel %vm2616, %v2574, %v1380
  %v2640 = vsel %vm2616, %v2575, %v1382
  %v2641 = vsel %vm2616, %v2576, %v1384
  %v2642 = vsel %vm2616, %v2577, %v1386
  %v2643 = vsel %vm2616, %v2578, %v1388
  %v2644 = vsel %vm2616, %v2579, %v1390
  %v2645 = vsel %vm2616, %v2580, %v1392
  %v2646 = vsel %vm2616, %v2581, %v1394
  %v2647 = vsel %vm2616, %v2582, %v1396
  %v2648 = vsel %vm2616, %v2583, %v1398
  %v2649 = vsel %vm2616, %v2584, %v1400
  %v2650 = vsel %vm2616, %v2585, %v1402
  %v2651 = vsel %vm2616, %v2586, %v1404
  %v2652 = vsel %vm2616, %v2587, %v1406
  %v2653 = vsel %vm2616, %v2588, %v1408
  %v2654 = vsel %vm2616, %v2589, %v1410
  %v2655 = vsel %vm2616, %v2590, %v1412
  %v2656 = vsel %vm2616, %v2591, %v1414
  %v2657 = vsel %vm2616, %v2592, %v1416
  %v2658 = vsel %vm2616, %v2593, %v1418
  %v2659 = vsel %vm2616, %v2594, %v1420
  %v2660 = vsel %vm2616, %v2595, %v1422
  %v2661 = vsel %vm2616, %v2596, %v1424
  %v2662 = vsel %vm2616, %v2597, %v1426
  %v2663 = vsel %vm2616, %v2598, %v1428
  %v2664 = vsel %vm2616, %v2599, %v1430
  %v2665 = vsel %vm2616, %v2600, %v1432
  %v2666 = vsel %vm2616, %v2601, %v1434
  %v2667 = vsel %vm2616, %v2602, %v1436
  %v2668 = vsel %vm2616, %v2603, %v1438
  %v2669 = vsel %vm2616, %v2604, %v1440
  %v2670 = vsel %vm2616, %v2605, %v1442
  %v2671 = vsel %vm2616, %v2606, %v1444
  %v2672 = vsel %vm2616, %v2607, %v1446
  %v2673 = vsel %vm2616, %v2608, %v1448
  %v2674 = vsel %vm2616, %v2609, %v1450
  %v2675 = vsel %vm2616, %v2610, %v1452
  %v2676 = vsel %vm2616, %v2611, %v1454
  %v2677 = vsel %vm2616, %v2612, %v1456
  %v2678 = vsel %vm2616, %v2613, %v1458
  %v2679 = vsel %vm2616, %v2614, %v1460
  %v2680 = vsel %vm2616, %v2615, %v1462
  %vm2681 = vcmask 130048
  %v2682 = vsel %vm2681, %v2617, %v1528
  %v2683 = vsel %vm2681, %v2618, %v1530
  %v2684 = vsel %vm2681, %v2619, %v1532
  %v2685 = vsel %vm2681, %v2620, %v1534
  %v2686 = vsel %vm2681, %v2621, %v1536
  %v2687 = vsel %vm2681, %v2622, %v1538
  %v2688 = vsel %vm2681, %v2623, %v1540
  %v2689 = vsel %vm2681, %v2624, %v1542
  %v2690 = vsel %vm2681, %v2625, %v1544
  %v2691 = vsel %vm2681, %v2626, %v1546
  %v2692 = vsel %vm2681, %v2627, %v1548
  %v2693 = vsel %vm2681, %v2628, %v1550
  %v2694 = vsel %vm2681, %v2629, %v1552
  %v2695 = vsel %vm2681, %v2630, %v1554
  %v2696 = vsel %vm2681, %v2631, %v1556
  %v2697 = vsel %vm2681, %v2632, %v1558
  %v2698 = vsel %vm2681, %v2633, %v1560
  %v2699 = vsel %vm2681, %v2634, %v1562
  %v2700 = vsel %vm2681, %v2635, %v1564
  %v2701 = vsel %vm2681, %v2636, %v1566
  %v2702 = vsel %vm2681, %v2637, %v1568
  %v2703 = vsel %vm2681, %v2638, %v1570
  %v2704 = vsel %vm2681, %v2639, %v1572
  %v2705 = vsel %vm2681, %v2640, %v1574
  %v2706 = vsel %vm2681, %v2641, %v1576
  %v2707 = vsel %vm2681, %v2642, %v1578
  %v2708 = vsel %vm2681, %v2643, %v1580
  %v2709 = vsel %vm2681, %v2644, %v1582
  %v2710 = vsel %vm2681, %v2645, %v1584
  %v2711 = vsel %vm2681, %v2646, %v1586
  %v2712 = vsel %vm2681, %v2647, %v1588
  %v2713 = vsel %vm2681, %v2648, %v1590
  %v2714 = vsel %vm2681, %v2649, %v1592
  %v2715 = vsel %vm2681, %v2650, %v1594
  %v2716 = vsel %vm2681, %v2651, %v1596
  %v2717 = vsel %vm2681, %v2652, %v1598
  %v2718 = vsel %vm2681, %v2653, %v1600
  %v2719 = vsel %vm2681, %v2654, %v1602
  %v2720 = vsel %vm2681, %v2655, %v1604
  %v2721 = vsel %vm2681, %v2656, %v1606
  %v2722 = vsel %vm2681, %v2657, %v1608
  %v2723 = vsel %vm2681, %v2658, %v1610
  %v2724 = vsel %vm2681, %v2659, %v1612
  %v2725 = vsel %vm2681, %v2660, %v1614
  %v2726 = vsel %vm2681, %v2661, %v1616
  %v2727 = vsel %vm2681, %v2662, %v1618
  %v2728 = vsel %vm2681, %v2663, %v1620
  %v2729 = vsel %vm2681, %v2664, %v1622
  %v2730 = vsel %vm2681, %v2665, %v1624
  %v2731 = vsel %vm2681, %v2666, %v1626
  %v2732 = vsel %vm2681, %v2667, %v1628
  %v2733 = vsel %vm2681, %v2668, %v1630
  %v2734 = vsel %vm2681, %v2669, %v1632
  %v2735 = vsel %vm2681, %v2670, %v1634
  %v2736 = vsel %vm2681, %v2671, %v1636
  %v2737 = vsel %vm2681, %v2672, %v1638
  %v2738 = vsel %vm2681, %v2673, %v1640
  %v2739 = vsel %vm2681, %v2674, %v1642
  %v2740 = vsel %vm2681, %v2675, %v1644
  %v2741 = vsel %vm2681, %v2676, %v1646
  %v2742 = vsel %vm2681, %v2677, %v1648
  %v2743 = vsel %vm2681, %v2678, %v1650
  %v2744 = vsel %vm2681, %v2679, %v1652
  %v2745 = vsel %vm2681, %v2680, %v1654
  %vm2746 = vcmask 162816
  %v2747 = vsel %vm2746, %v2682, %v1720
  %v2748 = vsel %vm2746, %v2683, %v1722
  %v2749 = vsel %vm2746, %v2684, %v1724
  %v2750 = vsel %vm2746, %v2685, %v1726
  %v2751 = vsel %vm2746, %v2686, %v1728
  %v2752 = vsel %vm2746, %v2687, %v1730
  %v2753 = vsel %vm2746, %v2688, %v1732
  %v2754 = vsel %vm2746, %v2689, %v1734
  %v2755 = vsel %vm2746, %v2690, %v1736
  %v2756 = vsel %vm2746, %v2691, %v1738
  %v2757 = vsel %vm2746, %v2692, %v1740
  %v2758 = vsel %vm2746, %v2693, %v1742
  %v2759 = vsel %vm2746, %v2694, %v1744
  %v2760 = vsel %vm2746, %v2695, %v1746
  %v2761 = vsel %vm2746, %v2696, %v1748
  %v2762 = vsel %vm2746, %v2697, %v1750
  %v2763 = vsel %vm2746, %v2698, %v1752
  %v2764 = vsel %vm2746, %v2699, %v1754
  %v2765 = vsel %vm2746, %v2700, %v1756
  %v2766 = vsel %vm2746, %v2701, %v1758
  %v2767 = vsel %vm2746, %v2702, %v1760
  %v2768 = vsel %vm2746, %v2703, %v1762
  %v2769 = vsel %vm2746, %v2704, %v1764
  %v2770 = vsel %vm2746, %v2705, %v1766
  %v2771 = vsel %vm2746, %v2706, %v1768
  %v2772 = vsel %vm2746, %v2707, %v1770
  %v2773 = vsel %vm2746, %v2708, %v1772
  %v2774 = vsel %vm2746, %v2709, %v1774
  %v2775 = vsel %vm2746, %v2710, %v1776
  %v2776 = vsel %vm2746, %v2711, %v1778
  %v2777 = vsel %vm2746, %v2712, %v1780
  %v2778 = vsel %vm2746, %v2713, %v1782
  %v2779 = vsel %vm2746, %v2714, %v1784
  %v2780 = vsel %vm2746, %v2715, %v1786
  %v2781 = vsel %vm2746, %v2716, %v1788
  %v2782 = vsel %vm2746, %v2717, %v1790
  %v2783 = vsel %vm2746, %v2718, %v1792
  %v2784 = vsel %vm2746, %v2719, %v1794
  %v2785 = vsel %vm2746, %v2720, %v1796
  %v2786 = vsel %vm2746, %v2721, %v1798
  %v2787 = vsel %vm2746, %v2722, %v1800
  %v2788 = vsel %vm2746, %v2723, %v1802
  %v2789 = vsel %vm2746, %v2724, %v1804
  %v2790 = vsel %vm2746, %v2725, %v1806
  %v2791 = vsel %vm2746, %v2726, %v1808
  %v2792 = vsel %vm2746, %v2727, %v1810
  %v2793 = vsel %vm2746, %v2728, %v1812
  %v2794 = vsel %vm2746, %v2729, %v1814
  %v2795 = vsel %vm2746, %v2730, %v1816
  %v2796 = vsel %vm2746, %v2731, %v1818
  %v2797 = vsel %vm2746, %v2732, %v1820
  %v2798 = vsel %vm2746, %v2733, %v1822
  %v2799 = vsel %vm2746, %v2734, %v1824
  %v2800 = vsel %vm2746, %v2735, %v1826
  %v2801 = vsel %vm2746, %v2736, %v1828
  %v2802 = vsel %vm2746, %v2737, %v1830
  %v2803 = vsel %vm2746, %v2738, %v1832
  %v2804 = vsel %vm2746, %v2739, %v1834
  %v2805 = vsel %vm2746, %v2740, %v1836
  %v2806 = vsel %vm2746, %v2741, %v1838
  %v2807 = vsel %vm2746, %v2742, %v1840
  %v2808 = vsel %vm2746, %v2743, %v1842
  %v2809 = vsel %vm2746, %v2744, %v1844
  %v2810 = vsel %vm2746, %v2745, %v1846
  %vm2811 = vcmask 195584
  %v2812 = vsel %vm2811, %v2747, %v1912
  %v2813 = vsel %vm2811, %v2748, %v1914
  %v2814 = vsel %vm2811, %v2749, %v1916
  %v2815 = vsel %vm2811, %v2750, %v1918
  %v2816 = vsel %vm2811, %v2751, %v1920
  %v2817 = vsel %vm2811, %v2752, %v1922
  %v2818 = vsel %vm2811, %v2753, %v1924
  %v2819 = vsel %vm2811, %v2754, %v1926
  %v2820 = vsel %vm2811, %v2755, %v1928
  %v2821 = vsel %vm2811, %v2756, %v1930
  %v2822 = vsel %vm2811, %v2757, %v1932
  %v2823 = vsel %vm2811, %v2758, %v1934
  %v2824 = vsel %vm2811, %v2759, %v1936
  %v2825 = vsel %vm2811, %v2760, %v1938
  %v2826 = vsel %vm2811, %v2761, %v1940
  %v2827 = vsel %vm2811, %v2762, %v1942
  %v2828 = vsel %vm2811, %v2763, %v1944
  %v2829 = vsel %vm2811, %v2764, %v1946
  %v2830 = vsel %vm2811, %v2765, %v1948
  %v2831 = vsel %vm2811, %v2766, %v1950
  %v2832 = vsel %vm2811, %v2767, %v1952
  %v2833 = vsel %vm2811, %v2768, %v1954
  %v2834 = vsel %vm2811, %v2769, %v1956
  %v2835 = vsel %vm2811, %v2770, %v1958
  %v2836 = vsel %vm2811, %v2771, %v1960
  %v2837 = vsel %vm2811, %v2772, %v1962
  %v2838 = vsel %vm2811, %v2773, %v1964
  %v2839 = vsel %vm2811, %v2774, %v1966
  %v2840 = vsel %vm2811, %v2775, %v1968
  %v2841 = vsel %vm2811, %v2776, %v1970
  %v2842 = vsel %vm2811, %v2777, %v1972
  %v2843 = vsel %vm2811, %v2778, %v1974
  %v2844 = vsel %vm2811, %v2779, %v1976
  %v2845 = vsel %vm2811, %v2780, %v1978
  %v2846 = vsel %vm2811, %v2781, %v1980
  %v2847 = vsel %vm2811, %v2782, %v1982
  %v2848 = vsel %vm2811, %v2783, %v1984
  %v2849 = vsel %vm2811, %v2784, %v1986
  %v2850 = vsel %vm2811, %v2785, %v1988
  %v2851 = vsel %vm2811, %v2786, %v1990
  %v2852 = vsel %vm2811, %v2787, %v1992
  %v2853 = vsel %vm2811, %v2788, %v1994
  %v2854 = vsel %vm2811, %v2789, %v1996
  %v2855 = vsel %vm2811, %v2790, %v1998
  %v2856 = vsel %vm2811, %v2791, %v2000
  %v2857 = vsel %vm2811, %v2792, %v2002
  %v2858 = vsel %vm2811, %v2793, %v2004
  %v2859 = vsel %vm2811, %v2794, %v2006
  %v2860 = vsel %vm2811, %v2795, %v2008
  %v2861 = vsel %vm2811, %v2796, %v2010
  %v2862 = vsel %vm2811, %v2797, %v2012
  %v2863 = vsel %vm2811, %v2798, %v2014
  %v2864 = vsel %vm2811, %v2799, %v2016
  %v2865 = vsel %vm2811, %v2800, %v2018
  %v2866 = vsel %vm2811, %v2801, %v2020
  %v2867 = vsel %vm2811, %v2802, %v2022
  %v2868 = vsel %vm2811, %v2803, %v2024
  %v2869 = vsel %vm2811, %v2804, %v2026
  %v2870 = vsel %vm2811, %v2805, %v2028
  %v2871 = vsel %vm2811, %v2806, %v2030
  %v2872 = vsel %vm2811, %v2807, %v2032
  %v2873 = vsel %vm2811, %v2808, %v2034
  %v2874 = vsel %vm2811, %v2809, %v2036
  %v2875 = vsel %vm2811, %v2810, %v2038
  %vm2876 = vcmask 228352
  %v2877 = vsel %vm2876, %v2812, %v2104
  %v2878 = vsel %vm2876, %v2813, %v2106
  %v2879 = vsel %vm2876, %v2814, %v2108
  %v2880 = vsel %vm2876, %v2815, %v2110
  %v2881 = vsel %vm2876, %v2816, %v2112
  %v2882 = vsel %vm2876, %v2817, %v2114
  %v2883 = vsel %vm2876, %v2818, %v2116
  %v2884 = vsel %vm2876, %v2819, %v2118
  %v2885 = vsel %vm2876, %v2820, %v2120
  %v2886 = vsel %vm2876, %v2821, %v2122
  %v2887 = vsel %vm2876, %v2822, %v2124
  %v2888 = vsel %vm2876, %v2823, %v2126
  %v2889 = vsel %vm2876, %v2824, %v2128
  %v2890 = vsel %vm2876, %v2825, %v2130
  %v2891 = vsel %vm2876, %v2826, %v2132
  %v2892 = vsel %vm2876, %v2827, %v2134
  %v2893 = vsel %vm2876, %v2828, %v2136
  %v2894 = vsel %vm2876, %v2829, %v2138
  %v2895 = vsel %vm2876, %v2830, %v2140
  %v2896 = vsel %vm2876, %v2831, %v2142
  %v2897 = vsel %vm2876, %v2832, %v2144
  %v2898 = vsel %vm2876, %v2833, %v2146
  %v2899 = vsel %vm2876, %v2834, %v2148
  %v2900 = vsel %vm2876, %v2835, %v2150
  %v2901 = vsel %vm2876, %v2836, %v2152
  %v2902 = vsel %vm2876, %v2837, %v2154
  %v2903 = vsel %vm2876, %v2838, %v2156
  %v2904 = vsel %vm2876, %v2839, %v2158
  %v2905 = vsel %vm2876, %v2840, %v2160
  %v2906 = vsel %vm2876, %v2841, %v2162
  %v2907 = vsel %vm2876, %v2842, %v2164
  %v2908 = vsel %vm2876, %v2843, %v2166
  %v2909 = vsel %vm2876, %v2844, %v2168
  %v2910 = vsel %vm2876, %v2845, %v2170
  %v2911 = vsel %vm2876, %v2846, %v2172
  %v2912 = vsel %vm2876, %v2847, %v2174
  %v2913 = vsel %vm2876, %v2848, %v2176
  %v2914 = vsel %vm2876, %v2849, %v2178
  %v2915 = vsel %vm2876, %v2850, %v2180
  %v2916 = vsel %vm2876, %v2851, %v2182
  %v2917 = vsel %vm2876, %v2852, %v2184
  %v2918 = vsel %vm2876, %v2853, %v2186
  %v2919 = vsel %vm2876, %v2854, %v2188
  %v2920 = vsel %vm2876, %v2855, %v2190
  %v2921 = vsel %vm2876, %v2856, %v2192
  %v2922 = vsel %vm2876, %v2857, %v2194
  %v2923 = vsel %vm2876, %v2858, %v2196
  %v2924 = vsel %vm2876, %v2859, %v2198
  %v2925 = vsel %vm2876, %v2860, %v2200
  %v2926 = vsel %vm2876, %v2861, %v2202
  %v2927 = vsel %vm2876, %v2862, %v2204
  %v2928 = vsel %vm2876, %v2863, %v2206
  %v2929 = vsel %vm2876, %v2864, %v2208
  %v2930 = vsel %vm2876, %v2865, %v2210
  %v2931 = vsel %vm2876, %v2866, %v2212
  %v2932 = vsel %vm2876, %v2867, %v2214
  %v2933 = vsel %vm2876, %v2868, %v2216
  %v2934 = vsel %vm2876, %v2869, %v2218
  %v2935 = vsel %vm2876, %v2870, %v2220
  %v2936 = vsel %vm2876, %v2871, %v2222
  %v2937 = vsel %vm2876, %v2872, %v2224
  %v2938 = vsel %vm2876, %v2873, %v2226
  %v2939 = vsel %vm2876, %v2874, %v2228
  %v2940 = vsel %vm2876, %v2875, %v2230
  %v2941 = vsel %vm59, %v2877, %v2296
  %v2942 = vsel %vm59, %v2878, %v2298
  %v2943 = vsel %vm59, %v2879, %v2300
  %v2944 = vsel %vm59, %v2880, %v2302
  %v2945 = vsel %vm59, %v2881, %v2304
  %v2946 = vsel %vm59, %v2882, %v2306
  %v2947 = vsel %vm59, %v2883, %v2308
  %v2948 = vsel %vm59, %v2884, %v2310
  %v2949 = vsel %vm59, %v2885, %v2312
  %v2950 = vsel %vm59, %v2886, %v2314
  %v2951 = vsel %vm59, %v2887, %v2316
  %v2952 = vsel %vm59, %v2888, %v2318
  %v2953 = vsel %vm59, %v2889, %v2320
  %v2954 = vsel %vm59, %v2890, %v2322
  %v2955 = vsel %vm59, %v2891, %v2324
  %v2956 = vsel %vm59, %v2892, %v2326
  %v2957 = vsel %vm59, %v2893, %v2328
  %v2958 = vsel %vm59, %v2894, %v2330
  %v2959 = vsel %vm59, %v2895, %v2332
  %v2960 = vsel %vm59, %v2896, %v2334
  %v2961 = vsel %vm59, %v2897, %v2336
  %v2962 = vsel %vm59, %v2898, %v2338
  %v2963 = vsel %vm59, %v2899, %v2340
  %v2964 = vsel %vm59, %v2900, %v2342
  %v2965 = vsel %vm59, %v2901, %v2344
  %v2966 = vsel %vm59, %v2902, %v2346
  %v2967 = vsel %vm59, %v2903, %v2348
  %v2968 = vsel %vm59, %v2904, %v2350
  %v2969 = vsel %vm59, %v2905, %v2352
  %v2970 = vsel %vm59, %v2906, %v2354
  %v2971 = vsel %vm59, %v2907, %v2356
  %v2972 = vsel %vm59, %v2908, %v2358
  %v2973 = vsel %vm59, %v2909, %v2360
  %v2974 = vsel %vm59, %v2910, %v2362
  %v2975 = vsel %vm59, %v2911, %v2364
  %v2976 = vsel %vm59, %v2912, %v2366
  %v2977 = vsel %vm59, %v2913, %v2368
  %v2978 = vsel %vm59, %v2914, %v2370
  %v2979 = vsel %vm59, %v2915, %v2372
  %v2980 = vsel %vm59, %v2916, %v2374
  %v2981 = vsel %vm59, %v2917, %v2376
  %v2982 = vsel %vm59, %v2918, %v2378
  %v2983 = vsel %vm59, %v2919, %v2380
  %v2984 = vsel %vm59, %v2920, %v2382
  %v2985 = vsel %vm59, %v2921, %v2384
  %v2986 = vsel %vm59, %v2922, %v2386
  %v2987 = vsel %vm59, %v2923, %v2388
  %v2988 = vsel %vm59, %v2924, %v2390
  %v2989 = vsel %vm59, %v2925, %v2392
  %v2990 = vsel %vm59, %v2926, %v2394
  %v2991 = vsel %vm59, %v2927, %v2396
  %v2992 = vsel %vm59, %v2928, %v2398
  %v2993 = vsel %vm59, %v2929, %v2400
  %v2994 = vsel %vm59, %v2930, %v2402
  %v2995 = vsel %vm59, %v2931, %v2404
  %v2996 = vsel %vm59, %v2932, %v2406
  %v2997 = vsel %vm59, %v2933, %v2408
  %v2998 = vsel %vm59, %v2934, %v2410
  %v2999 = vsel %vm59, %v2935, %v2412
  %v3000 = vsel %vm59, %v2936, %v2414
  %v3001 = vsel %vm59, %v2937, %v2416
  %v3002 = vsel %vm59, %v2938, %v2418
  %v3003 = vsel %vm59, %v2939, %v2420
  %v3004 = vsel %vm59, %v2940, %v2422
  %v3005 = vld [vmem:[%s4] sm:$0xff]
  %v3006 = vld [vmem:[%s4 + $0x8] sm:$0xff]
  %v3007 = vld [vmem:[%s4 + $0x10] sm:$0xff]
  %v3008 = vld [vmem:[%s4 + $0x18] sm:$0xff]
  %v3009 = vld [vmem:[%s4 + $0x20] sm:$0xf]
  %v3010 = vld [vmem:[%s5] sm:$0x1]
  %v3012 = vlaneseq
  %v3013 = vshrl.u32 %v3012, 7
  %v3014 = vsub.s32 0, %v3013
  %v3015 = vrot.slane %v3010, %v3014
  %vm3017 = vcmask 293888
  %v3019 = vsel %vm3017, %v2941, 0
  %v3022 = vsel %vm3017, %v2942, 0
  %v3025 = vsel %vm3017, %v2943, 0
  %v3028 = vsel %vm3017, %v2944, 0
  %v3031 = vsel %vm3017, %v2945, 0
  %v3034 = vsel %vm3017, %v2946, 0
  %v3037 = vsel %vm3017, %v2947, 0
  %v3040 = vsel %vm3017, %v2948, 0
  %v3043 = vsel %vm3017, %v2949, 0
  %v3046 = vsel %vm3017, %v2950, 0
  %v3049 = vsel %vm3017, %v2951, 0
  %v3052 = vsel %vm3017, %v2952, 0
  %v3055 = vsel %vm3017, %v2953, 0
  %v3058 = vsel %vm3017, %v2954, 0
  %v3061 = vsel %vm3017, %v2955, 0
  %v3064 = vsel %vm3017, %v2956, 0
  %v3067 = vsel %vm3017, %v2957, 0
  %v3070 = vsel %vm3017, %v2958, 0
  %v3073 = vsel %vm3017, %v2959, 0
  %v3076 = vsel %vm3017, %v2960, 0
  %v3079 = vsel %vm3017, %v2961, 0
  %v3082 = vsel %vm3017, %v2962, 0
  %v3085 = vsel %vm3017, %v2963, 0
  %v3088 = vsel %vm3017, %v2964, 0
  %v3091 = vsel %vm3017, %v2965, 0
  %v3094 = vsel %vm3017, %v2966, 0
  %v3097 = vsel %vm3017, %v2967, 0
  %v3100 = vsel %vm3017, %v2968, 0
  %v3103 = vsel %vm3017, %v2969, 0
  %v3106 = vsel %vm3017, %v2970, 0
  %v3109 = vsel %vm3017, %v2971, 0
  %v3112 = vsel %vm3017, %v2972, 0
  %v3115 = vsel %vm3017, %v2973, 0
  %v3118 = vsel %vm3017, %v2974, 0
  %v3121 = vsel %vm3017, %v2975, 0
  %v3124 = vsel %vm3017, %v2976, 0
  %v3127 = vsel %vm3017, %v2977, 0
  %v3130 = vsel %vm3017, %v2978, 0
  %v3133 = vsel %vm3017, %v2979, 0
  %v3136 = vsel %vm3017, %v2980, 0
  %v3139 = vsel %vm3017, %v2981, 0
  %v3142 = vsel %vm3017, %v2982, 0
  %v3145 = vsel %vm3017, %v2983, 0
  %v3148 = vsel %vm3017, %v2984, 0
  %v3151 = vsel %vm3017, %v2985, 0
  %v3154 = vsel %vm3017, %v2986, 0
  %v3157 = vsel %vm3017, %v2987, 0
  %v3160 = vsel %vm3017, %v2988, 0
  %v3163 = vsel %vm3017, %v2989, 0
  %v3166 = vsel %vm3017, %v2990, 0
  %v3169 = vsel %vm3017, %v2991, 0
  %v3172 = vsel %vm3017, %v2992, 0
  %v3175 = vsel %vm3017, %v2993, 0
  %v3178 = vsel %vm3017, %v2994, 0
  %v3181 = vsel %vm3017, %v2995, 0
  %v3184 = vsel %vm3017, %v2996, 0
  %v3187 = vsel %vm3017, %v2997, 0
  %v3190 = vsel %vm3017, %v2998, 0
  %v3193 = vsel %vm3017, %v2999, 0
  %v3196 = vsel %vm3017, %v3000, 0
  %v3199 = vsel %vm3017, %v3001, 0
  %v3202 = vsel %vm3017, %v3002, 0
  %v3205 = vsel %vm3017, %v3003, 0
  %v3208 = vsel %vm3017, %v3004, 0
  %vm3210 = vcmask 1043456
  %v3212 = vsel %vm3210, %v3009, 0
  %3214 = vmatprep.subr.mxu0 0.0
  %3215 = vmatpush1.msra.mxu0 %v3005
  %3216 = vmatprep.subr.mxu0 0.0
  %3217 = vmatpush1.msra.mxu0 %v3006
  %3218 = vmatprep.subr.mxu0 0.0
  %3219 = vmatpush1.msra.mxu0 %v3007
  %3220 = vmatprep.subr.mxu0 0.0
  %3221 = vmatpush1.msra.mxu0 %v3008
  %3222 = vmatprep.subr.mxu0 0.0
  %3223 = vmatpush1.msra.mxu0 %v3212
  %3224 = vmatprep.subr.mxu0 0.0
  %3225 = vmatpush1.msra.mxu0 0.0
  %3226 = vmatprep.subr.mxu0 0.0
  %3227 = vmatpush1.msra.mxu0 0.0
  %3228 = vmatprep.subr.mxu0 0.0
  %3229 = vmatpush1.msra.mxu0 0.0
  %3230 = vmatprep.subr.mxu0 0.0
  %3231 = vmatpush1.msra.mxu0 0.0
  %3232 = vmatprep.subr.mxu0 0.0
  %3233 = vmatpush1.msra.mxu0 0.0
  %3234 = vmatprep.subr.mxu0 0.0
  %3235 = vmatpush1.msra.mxu0 0.0
  %3236 = vmatprep.subr.mxu0 0.0
  %3237 = vmatpush1.msra.mxu0 0.0
  %3238 = vmatprep.subr.mxu0 0.0
  %3239 = vmatpush1.msra.mxu0 0.0
  %3240 = vmatprep.subr.mxu0 0.0
  %3241 = vmatpush1.msra.mxu0 0.0
  %3242 = vmatprep.subr.mxu0 0.0
  %3243 = vmatpush1.msra.mxu0 0.0
  %3244 = vmatprep.subr.mxu0 0.0
  %3245 = vmatpush1.msra.mxu0 0.0
  %3246 = vmatprep.subr.mxu0 0.0
  %3247 = vmatpush1.msra.mxu0 0.0
  %3248 = vmatprep.subr.mxu0 0.0
  %3249 = vmatpush1.msra.mxu0 0.0
  %3250 = vmatprep.subr.mxu0 0.0
  %3251 = vmatpush1.msra.mxu0 0.0
  %3252 = vmatprep.subr.mxu0 0.0
  %3253 = vmatpush1.msra.mxu0 0.0
  %3254 = vmatprep.subr.mxu0 0.0
  %3255 = vmatpush1.msra.mxu0 0.0
  %3256 = vmatprep.subr.mxu0 0.0
  %3257 = vmatpush1.msra.mxu0 0.0
  %3258 = vmatprep.subr.mxu0 0.0
  %3259 = vmatpush1.msra.mxu0 0.0
  %3260 = vmatprep.subr.mxu0 0.0
  %3261 = vmatpush1.msra.mxu0 0.0
  %3262 = vmatprep.subr.mxu0 0.0
  %3263 = vmatpush1.msra.mxu0 0.0
  %3264 = vmatprep.subr.mxu0 0.0
  %3265 = vmatpush1.msra.mxu0 0.0
  %3266 = vmatprep.subr.mxu0 0.0
  %3267 = vmatpush1.msra.mxu0 0.0
  %3268 = vmatprep.subr.mxu0 0.0
  %3269 = vmatpush1.msra.mxu0 0.0
  %3270 = vmatprep.subr.mxu0 0.0
  %3271 = vmatpush1.msra.mxu0 0.0
  %3272 = vmatprep.subr.mxu0 0.0
  %3273 = vmatpush1.msra.mxu0 0.0
  %3274 = vmatprep.subr.mxu0 0.0
  %3275 = vmatpush1.msra.mxu0 0.0
  %3276 = vmatprep.subr.mxu0 0.0
  %3277 = vmatpush1.msra.mxu0 0.0
  %3278 = vmatprep.mubr.f32.mxu0 0.0
  %3279 = vmatmul.mubr.f32.gmra.mrb[0].mxu0 %v3019
  %v3280 = vpop.f32.mrb[0].mxu0
  %v3281 = vadd.f32 %v3015, %v3280
  %v3282 = vpop.f32.mrb[0].mxu0
  %3283 = vmatprep.mubr.f32.mxu0 0.0
  %3284 = vmatmul.mubr.f32.gmra.mrb[0].mxu0 %v3022
  %v3285 = vpop.f32.mrb[0].mxu0
  %v3286 = vadd.f32 %v3015, %v3285
  %v3287 = vpop.f32.mrb[0].mxu0
  %3288 = vmatprep.mubr.f32.mxu0 0.0
  %3289 = vmatmul.mubr.f32.gmra.mrb[0].mxu0 %v3025
  %v3290 = vpop.f32.mrb[0].mxu0
  %v3291 = vadd.f32 %v3015, %v3290
  %v3292 = vpop.f32.mrb[0].mxu0
  %3293 = vmatprep.mubr.f32.mxu0 0.0
  %3294 = vmatmul.mubr.f32.gmra.mrb[0].mxu0 %v3028
  %v3295 = vpop.f32.mrb[0].mxu0
  %v3296 = vadd.f32 %v3015, %v3295
  %v3297 = vpop.f32.mrb[0].mxu0
  %3298 = vmatprep.mubr.f32.mxu0 0.0
  %3299 = vmatmul.mubr.f32.gmra.mrb[0].mxu0 %v3031
  %v3300 = vpop.f32.mrb[0].mxu0
  %v3301 = vadd.f32 %v3015, %v3300
  %v3302 = vpop.f32.mrb[0].mxu0
  %3303 = vmatprep.mubr.f32.mxu0 0.0
  %3304 = vmatmul.mubr.f32.gmra.mrb[0].mxu0 %v3034
  %v3305 = vpop.f32.mrb[0].mxu0
  %v3306 = vadd.f32 %v3015, %v3305
  %v3307 = vpop.f32.mrb[0].mxu0
  %3308 = vmatprep.mubr.f32.mxu0 0.0
  %3309 = vmatmul.mubr.f32.gmra.mrb[0].mxu0 %v3037
  %v3310 = vpop.f32.mrb[0].mxu0
  %v3311 = vadd.f32 %v3015, %v3310
  %v3312 = vpop.f32.mrb[0].mxu0
  %3313 = vmatprep.mubr.f32.mxu0 0.0
  %3314 = vmatmul.mubr.f32.gmra.mrb[0].mxu0 %v3040
  %v3315 = vpop.f32.mrb[0].mxu0
  %v3316 = vadd.f32 %v3015, %v3315
  %v3317 = vpop.f32.mrb[0].mxu0
  %3318 = vmatprep.mubr.f32.mxu0 0.0
  %3319 = vmatmul.mubr.f32.gmra.mrb[0].mxu0 %v3043
  %v3320 = vpop.f32.mrb[0].mxu0
  %v3321 = vadd.f32 %v3015, %v3320
  %v3322 = vpop.f32.mrb[0].mxu0
  %3323 = vmatprep.mubr.f32.mxu0 0.0
  %3324 = vmatmul.mubr.f32.gmra.mrb[0].mxu0 %v3046
  %v3325 = vpop.f32.mrb[0].mxu0
  %v3326 = vadd.f32 %v3015, %v3325
  %v3327 = vpop.f32.mrb[0].mxu0
  %3328 = vmatprep.mubr.f32.mxu0 0.0
  %3329 = vmatmul.mubr.f32.gmra.mrb[0].mxu0 %v3049
  %v3330 = vpop.f32.mrb[0].mxu0
  %v3331 = vadd.f32 %v3015, %v3330
  %v3332 = vpop.f32.mrb[0].mxu0
  %3333 = vmatprep.mubr.f32.mxu0 0.0
  %3334 = vmatmul.mubr.f32.gmra.mrb[0].mxu0 %v3052
  %v3335 = vpop.f32.mrb[0].mxu0
  %v3336 = vadd.f32 %v3015, %v3335
  %v3337 = vpop.f32.mrb[0].mxu0
  %3338 = vmatprep.mubr.f32.mxu0 0.0
  %3339 = vmatmul.mubr.f32.gmra.mrb[0].mxu0 %v3055
  %v3340 = vpop.f32.mrb[0].mxu0
  %v3341 = vadd.f32 %v3015, %v3340
  %v3342 = vpop.f32.mrb[0].mxu0
  %3343 = vmatprep.mubr.f32.mxu0 0.0
  %3344 = vmatmul.mubr.f32.gmra.mrb[0].mxu0 %v3058
  %v3345 = vpop.f32.mrb[0].mxu0
  %v3346 = vadd.f32 %v3015, %v3345
  %v3347 = vpop.f32.mrb[0].mxu0
  %3348 = vmatprep.mubr.f32.mxu0 0.0
  %3349 = vmatmul.mubr.f32.gmra.mrb[0].mxu0 %v3061
  %v3350 = vpop.f32.mrb[0].mxu0
  %v3351 = vadd.f32 %v3015, %v3350
  %v3352 = vpop.f32.mrb[0].mxu0
  %3353 = vmatprep.mubr.f32.mxu0 0.0
  %3354 = vmatmul.mubr.f32.gmra.mrb[0].mxu0 %v3064
  %v3355 = vpop.f32.mrb[0].mxu0
  %v3356 = vadd.f32 %v3015, %v3355
  %v3357 = vpop.f32.mrb[0].mxu0
  %3358 = vmatprep.mubr.f32.mxu0 0.0
  %3359 = vmatmul.mubr.f32.gmra.mrb[0].mxu0 %v3067
  %v3360 = vpop.f32.mrb[0].mxu0
  %v3361 = vadd.f32 %v3015, %v3360
  %v3362 = vpop.f32.mrb[0].mxu0
  %3363 = vmatprep.mubr.f32.mxu0 0.0
  %3364 = vmatmul.mubr.f32.gmra.mrb[0].mxu0 %v3070
  %v3365 = vpop.f32.mrb[0].mxu0
  %v3366 = vadd.f32 %v3015, %v3365
  %v3367 = vpop.f32.mrb[0].mxu0
  %3368 = vmatprep.mubr.f32.mxu0 0.0
  %3369 = vmatmul.mubr.f32.gmra.mrb[0].mxu0 %v3073
  %v3370 = vpop.f32.mrb[0].mxu0
  %v3371 = vadd.f32 %v3015, %v3370
  %v3372 = vpop.f32.mrb[0].mxu0
  %3373 = vmatprep.mubr.f32.mxu0 0.0
  %3374 = vmatmul.mubr.f32.gmra.mrb[0].mxu0 %v3076
  %v3375 = vpop.f32.mrb[0].mxu0
  %v3376 = vadd.f32 %v3015, %v3375
  %v3377 = vpop.f32.mrb[0].mxu0
  %3378 = vmatprep.mubr.f32.mxu0 0.0
  %3379 = vmatmul.mubr.f32.gmra.mrb[0].mxu0 %v3079
  %v3380 = vpop.f32.mrb[0].mxu0
  %v3381 = vadd.f32 %v3015, %v3380
  %v3382 = vpop.f32.mrb[0].mxu0
  %3383 = vmatprep.mubr.f32.mxu0 0.0
  %3384 = vmatmul.mubr.f32.gmra.mrb[0].mxu0 %v3082
  %v3385 = vpop.f32.mrb[0].mxu0
  %v3386 = vadd.f32 %v3015, %v3385
  %v3387 = vpop.f32.mrb[0].mxu0
  %3388 = vmatprep.mubr.f32.mxu0 0.0
  %3389 = vmatmul.mubr.f32.gmra.mrb[0].mxu0 %v3085
  %v3390 = vpop.f32.mrb[0].mxu0
  %v3391 = vadd.f32 %v3015, %v3390
  %v3392 = vpop.f32.mrb[0].mxu0
  %3393 = vmatprep.mubr.f32.mxu0 0.0
  %3394 = vmatmul.mubr.f32.gmra.mrb[0].mxu0 %v3088
  %v3395 = vpop.f32.mrb[0].mxu0
  %v3396 = vadd.f32 %v3015, %v3395
  %v3397 = vpop.f32.mrb[0].mxu0
  %3398 = vmatprep.mubr.f32.mxu0 0.0
  %3399 = vmatmul.mubr.f32.gmra.mrb[0].mxu0 %v3091
  %v3400 = vpop.f32.mrb[0].mxu0
  %v3401 = vadd.f32 %v3015, %v3400
  %v3402 = vpop.f32.mrb[0].mxu0
  %3403 = vmatprep.mubr.f32.mxu0 0.0
  %3404 = vmatmul.mubr.f32.gmra.mrb[0].mxu0 %v3094
  %v3405 = vpop.f32.mrb[0].mxu0
  %v3406 = vadd.f32 %v3015, %v3405
  %v3407 = vpop.f32.mrb[0].mxu0
  %3408 = vmatprep.mubr.f32.mxu0 0.0
  %3409 = vmatmul.mubr.f32.gmra.mrb[0].mxu0 %v3097
  %v3410 = vpop.f32.mrb[0].mxu0
  %v3411 = vadd.f32 %v3015, %v3410
  %v3412 = vpop.f32.mrb[0].mxu0
  %3413 = vmatprep.mubr.f32.mxu0 0.0
  %3414 = vmatmul.mubr.f32.gmra.mrb[0].mxu0 %v3100
  %v3415 = vpop.f32.mrb[0].mxu0
  %v3416 = vadd.f32 %v3015, %v3415
  %v3417 = vpop.f32.mrb[0].mxu0
  %3418 = vmatprep.mubr.f32.mxu0 0.0
  %3419 = vmatmul.mubr.f32.gmra.mrb[0].mxu0 %v3103
  %v3420 = vpop.f32.mrb[0].mxu0
  %v3421 = vadd.f32 %v3015, %v3420
  %v3422 = vpop.f32.mrb[0].mxu0
  %3423 = vmatprep.mubr.f32.mxu0 0.0
  %3424 = vmatmul.mubr.f32.gmra.mrb[0].mxu0 %v3106
  %v3425 = vpop.f32.mrb[0].mxu0
  %v3426 = vadd.f32 %v3015, %v3425
  %v3427 = vpop.f32.mrb[0].mxu0
  %3428 = vmatprep.mubr.f32.mxu0 0.0
  %3429 = vmatmul.mubr.f32.gmra.mrb[0].mxu0 %v3109
  %v3430 = vpop.f32.mrb[0].mxu0
  %v3431 = vadd.f32 %v3015, %v3430
  %v3432 = vpop.f32.mrb[0].mxu0
  %3433 = vmatprep.mubr.f32.mxu0 0.0
  %3434 = vmatmul.mubr.f32.gmra.mrb[0].mxu0 %v3112
  %v3435 = vpop.f32.mrb[0].mxu0
  %v3436 = vadd.f32 %v3015, %v3435
  %v3437 = vpop.f32.mrb[0].mxu0
  %3438 = vmatprep.mubr.f32.mxu0 0.0
  %3439 = vmatmul.mubr.f32.gmra.mrb[0].mxu0 %v3115
  %v3440 = vpop.f32.mrb[0].mxu0
  %v3441 = vadd.f32 %v3015, %v3440
  %v3442 = vpop.f32.mrb[0].mxu0
  %3443 = vmatprep.mubr.f32.mxu0 0.0
  %3444 = vmatmul.mubr.f32.gmra.mrb[0].mxu0 %v3118
  %v3445 = vpop.f32.mrb[0].mxu0
  %v3446 = vadd.f32 %v3015, %v3445
  %v3447 = vpop.f32.mrb[0].mxu0
  %3448 = vmatprep.mubr.f32.mxu0 0.0
  %3449 = vmatmul.mubr.f32.gmra.mrb[0].mxu0 %v3121
  %v3450 = vpop.f32.mrb[0].mxu0
  %v3451 = vadd.f32 %v3015, %v3450
  %v3452 = vpop.f32.mrb[0].mxu0
  %3453 = vmatprep.mubr.f32.mxu0 0.0
  %3454 = vmatmul.mubr.f32.gmra.mrb[0].mxu0 %v3124
  %v3455 = vpop.f32.mrb[0].mxu0
  %v3456 = vadd.f32 %v3015, %v3455
  %v3457 = vpop.f32.mrb[0].mxu0
  %3458 = vmatprep.mubr.f32.mxu0 0.0
  %3459 = vmatmul.mubr.f32.gmra.mrb[0].mxu0 %v3127
  %v3460 = vpop.f32.mrb[0].mxu0
  %v3461 = vadd.f32 %v3015, %v3460
  %v3462 = vpop.f32.mrb[0].mxu0
  %3463 = vmatprep.mubr.f32.mxu0 0.0
  %3464 = vmatmul.mubr.f32.gmra.mrb[0].mxu0 %v3130
  %v3465 = vpop.f32.mrb[0].mxu0
  %v3466 = vadd.f32 %v3015, %v3465
  %v3467 = vpop.f32.mrb[0].mxu0
  %3468 = vmatprep.mubr.f32.mxu0 0.0
  %3469 = vmatmul.mubr.f32.gmra.mrb[0].mxu0 %v3133
  %v3470 = vpop.f32.mrb[0].mxu0
  %v3471 = vadd.f32 %v3015, %v3470
  %v3472 = vpop.f32.mrb[0].mxu0
  %3473 = vmatprep.mubr.f32.mxu0 0.0
  %3474 = vmatmul.mubr.f32.gmra.mrb[0].mxu0 %v3136
  %v3475 = vpop.f32.mrb[0].mxu0
  %v3476 = vadd.f32 %v3015, %v3475
  %v3477 = vpop.f32.mrb[0].mxu0
  %3478 = vmatprep.mubr.f32.mxu0 0.0
  %3479 = vmatmul.mubr.f32.gmra.mrb[0].mxu0 %v3139
  %v3480 = vpop.f32.mrb[0].mxu0
  %v3481 = vadd.f32 %v3015, %v3480
  %v3482 = vpop.f32.mrb[0].mxu0
  %3483 = vmatprep.mubr.f32.mxu0 0.0
  %3484 = vmatmul.mubr.f32.gmra.mrb[0].mxu0 %v3142
  %v3485 = vpop.f32.mrb[0].mxu0
  %v3486 = vadd.f32 %v3015, %v3485
  %v3487 = vpop.f32.mrb[0].mxu0
  %3488 = vmatprep.mubr.f32.mxu0 0.0
  %3489 = vmatmul.mubr.f32.gmra.mrb[0].mxu0 %v3145
  %v3490 = vpop.f32.mrb[0].mxu0
  %v3491 = vadd.f32 %v3015, %v3490
  %v3492 = vpop.f32.mrb[0].mxu0
  %3493 = vmatprep.mubr.f32.mxu0 0.0
  %3494 = vmatmul.mubr.f32.gmra.mrb[0].mxu0 %v3148
  %v3495 = vpop.f32.mrb[0].mxu0
  %v3496 = vadd.f32 %v3015, %v3495
  %v3497 = vpop.f32.mrb[0].mxu0
  %3498 = vmatprep.mubr.f32.mxu0 0.0
  %3499 = vmatmul.mubr.f32.gmra.mrb[0].mxu0 %v3151
  %v3500 = vpop.f32.mrb[0].mxu0
  %v3501 = vadd.f32 %v3015, %v3500
  %v3502 = vpop.f32.mrb[0].mxu0
  %3503 = vmatprep.mubr.f32.mxu0 0.0
  %3504 = vmatmul.mubr.f32.gmra.mrb[0].mxu0 %v3154
  %v3505 = vpop.f32.mrb[0].mxu0
  %v3506 = vadd.f32 %v3015, %v3505
  %v3507 = vpop.f32.mrb[0].mxu0
  %3508 = vmatprep.mubr.f32.mxu0 0.0
  %3509 = vmatmul.mubr.f32.gmra.mrb[0].mxu0 %v3157
  %v3510 = vpop.f32.mrb[0].mxu0
  %v3511 = vadd.f32 %v3015, %v3510
  %v3512 = vpop.f32.mrb[0].mxu0
  %3513 = vmatprep.mubr.f32.mxu0 0.0
  %3514 = vmatmul.mubr.f32.gmra.mrb[0].mxu0 %v3160
  %v3515 = vpop.f32.mrb[0].mxu0
  %v3516 = vadd.f32 %v3015, %v3515
  %v3517 = vpop.f32.mrb[0].mxu0
  %3518 = vmatprep.mubr.f32.mxu0 0.0
  %3519 = vmatmul.mubr.f32.gmra.mrb[0].mxu0 %v3163
  %v3520 = vpop.f32.mrb[0].mxu0
  %v3521 = vadd.f32 %v3015, %v3520
  %v3522 = vpop.f32.mrb[0].mxu0
  %3523 = vmatprep.mubr.f32.mxu0 0.0
  %3524 = vmatmul.mubr.f32.gmra.mrb[0].mxu0 %v3166
  %v3525 = vpop.f32.mrb[0].mxu0
  %v3526 = vadd.f32 %v3015, %v3525
  %v3527 = vpop.f32.mrb[0].mxu0
  %3528 = vmatprep.mubr.f32.mxu0 0.0
  %3529 = vmatmul.mubr.f32.gmra.mrb[0].mxu0 %v3169
  %v3530 = vpop.f32.mrb[0].mxu0
  %v3531 = vadd.f32 %v3015, %v3530
  %v3532 = vpop.f32.mrb[0].mxu0
  %3533 = vmatprep.mubr.f32.mxu0 0.0
  %3534 = vmatmul.mubr.f32.gmra.mrb[0].mxu0 %v3172
  %v3535 = vpop.f32.mrb[0].mxu0
  %v3536 = vadd.f32 %v3015, %v3535
  %v3537 = vpop.f32.mrb[0].mxu0
  %3538 = vmatprep.mubr.f32.mxu0 0.0
  %3539 = vmatmul.mubr.f32.gmra.mrb[0].mxu0 %v3175
  %v3540 = vpop.f32.mrb[0].mxu0
  %v3541 = vadd.f32 %v3015, %v3540
  %v3542 = vpop.f32.mrb[0].mxu0
  %3543 = vmatprep.mubr.f32.mxu0 0.0
  %3544 = vmatmul.mubr.f32.gmra.mrb[0].mxu0 %v3178
  %v3545 = vpop.f32.mrb[0].mxu0
  %v3546 = vadd.f32 %v3015, %v3545
  %v3547 = vpop.f32.mrb[0].mxu0
  %3548 = vmatprep.mubr.f32.mxu0 0.0
  %3549 = vmatmul.mubr.f32.gmra.mrb[0].mxu0 %v3181
  %v3550 = vpop.f32.mrb[0].mxu0
  %v3551 = vadd.f32 %v3015, %v3550
  %v3552 = vpop.f32.mrb[0].mxu0
  %3553 = vmatprep.mubr.f32.mxu0 0.0
  %3554 = vmatmul.mubr.f32.gmra.mrb[0].mxu0 %v3184
  %v3555 = vpop.f32.mrb[0].mxu0
  %v3556 = vadd.f32 %v3015, %v3555
  %v3557 = vpop.f32.mrb[0].mxu0
  %3558 = vmatprep.mubr.f32.mxu0 0.0
  %3559 = vmatmul.mubr.f32.gmra.mrb[0].mxu0 %v3187
  %v3560 = vpop.f32.mrb[0].mxu0
  %v3561 = vadd.f32 %v3015, %v3560
  %v3562 = vpop.f32.mrb[0].mxu0
  %3563 = vmatprep.mubr.f32.mxu0 0.0
  %3564 = vmatmul.mubr.f32.gmra.mrb[0].mxu0 %v3190
  %v3565 = vpop.f32.mrb[0].mxu0
  %v3566 = vadd.f32 %v3015, %v3565
  %v3567 = vpop.f32.mrb[0].mxu0
  %3568 = vmatprep.mubr.f32.mxu0 0.0
  %3569 = vmatmul.mubr.f32.gmra.mrb[0].mxu0 %v3193
  %v3570 = vpop.f32.mrb[0].mxu0
  %v3571 = vadd.f32 %v3015, %v3570
  %v3572 = vpop.f32.mrb[0].mxu0
  %3573 = vmatprep.mubr.f32.mxu0 0.0
  %3574 = vmatmul.mubr.f32.gmra.mrb[0].mxu0 %v3196
  %v3575 = vpop.f32.mrb[0].mxu0
  %v3576 = vadd.f32 %v3015, %v3575
  %v3577 = vpop.f32.mrb[0].mxu0
  %3578 = vmatprep.mubr.f32.mxu0 0.0
  %3579 = vmatmul.mubr.f32.gmra.mrb[0].mxu0 %v3199
  %v3580 = vpop.f32.mrb[0].mxu0
  %v3581 = vadd.f32 %v3015, %v3580
  %v3582 = vpop.f32.mrb[0].mxu0
  %3583 = vmatprep.mubr.f32.mxu0 0.0
  %3584 = vmatmul.mubr.f32.gmra.mrb[0].mxu0 %v3202
  %v3585 = vpop.f32.mrb[0].mxu0
  %v3586 = vadd.f32 %v3015, %v3585
  %v3587 = vpop.f32.mrb[0].mxu0
  %3588 = vmatprep.mubr.f32.mxu0 0.0
  %3589 = vmatmul.mubr.f32.gmra.mrb[0].mxu0 %v3205
  %v3590 = vpop.f32.mrb[0].mxu0
  %v3591 = vadd.f32 %v3015, %v3590
  %v3592 = vpop.f32.mrb[0].mxu0
  %3593 = vmatprep.mubr.f32.mxu0 0.0
  %3594 = vmatmul.mubr.f32.gmra.mrb[0].mxu0 %v3208
  %v3595 = vpop.f32.mrb[0].mxu0
  %v3596 = vadd.f32 %v3015, %v3595
  %v3597 = vpop.f32.mrb[0].mxu0
  %3598 = vdwg.mxu0
  %v3599 = vmax.f32 %v3281, 0.0
  %v3600 = vmax.f32 %v3286, 0.0
  %v3601 = vmax.f32 %v3291, 0.0
  %v3602 = vmax.f32 %v3296, 0.0
  %v3603 = vmax.f32 %v3301, 0.0
  %v3604 = vmax.f32 %v3306, 0.0
  %v3605 = vmax.f32 %v3311, 0.0
  %v3606 = vmax.f32 %v3316, 0.0
  %v3607 = vmax.f32 %v3321, 0.0
  %v3608 = vmax.f32 %v3326, 0.0
  %v3609 = vmax.f32 %v3331, 0.0
  %v3610 = vmax.f32 %v3336, 0.0
  %v3611 = vmax.f32 %v3341, 0.0
  %v3612 = vmax.f32 %v3346, 0.0
  %v3613 = vmax.f32 %v3351, 0.0
  %v3614 = vmax.f32 %v3356, 0.0
  %v3615 = vmax.f32 %v3361, 0.0
  %v3616 = vmax.f32 %v3366, 0.0
  %v3617 = vmax.f32 %v3371, 0.0
  %v3618 = vmax.f32 %v3376, 0.0
  %v3619 = vmax.f32 %v3381, 0.0
  %v3620 = vmax.f32 %v3386, 0.0
  %v3621 = vmax.f32 %v3391, 0.0
  %v3622 = vmax.f32 %v3396, 0.0
  %v3623 = vmax.f32 %v3401, 0.0
  %v3624 = vmax.f32 %v3406, 0.0
  %v3625 = vmax.f32 %v3411, 0.0
  %v3626 = vmax.f32 %v3416, 0.0
  %v3627 = vmax.f32 %v3421, 0.0
  %v3628 = vmax.f32 %v3426, 0.0
  %v3629 = vmax.f32 %v3431, 0.0
  %v3630 = vmax.f32 %v3436, 0.0
  %v3631 = vmax.f32 %v3441, 0.0
  %v3632 = vmax.f32 %v3446, 0.0
  %v3633 = vmax.f32 %v3451, 0.0
  %v3634 = vmax.f32 %v3456, 0.0
  %v3635 = vmax.f32 %v3461, 0.0
  %v3636 = vmax.f32 %v3466, 0.0
  %v3637 = vmax.f32 %v3471, 0.0
  %v3638 = vmax.f32 %v3476, 0.0
  %v3639 = vmax.f32 %v3481, 0.0
  %v3640 = vmax.f32 %v3486, 0.0
  %v3641 = vmax.f32 %v3491, 0.0
  %v3642 = vmax.f32 %v3496, 0.0
  %v3643 = vmax.f32 %v3501, 0.0
  %v3644 = vmax.f32 %v3506, 0.0
  %v3645 = vmax.f32 %v3511, 0.0
  %v3646 = vmax.f32 %v3516, 0.0
  %v3647 = vmax.f32 %v3521, 0.0
  %v3648 = vmax.f32 %v3526, 0.0
  %v3649 = vmax.f32 %v3531, 0.0
  %v3650 = vmax.f32 %v3536, 0.0
  %v3651 = vmax.f32 %v3541, 0.0
  %v3652 = vmax.f32 %v3546, 0.0
  %v3653 = vmax.f32 %v3551, 0.0
  %v3654 = vmax.f32 %v3556, 0.0
  %v3655 = vmax.f32 %v3561, 0.0
  %v3656 = vmax.f32 %v3566, 0.0
  %v3657 = vmax.f32 %v3571, 0.0
  %v3658 = vmax.f32 %v3576, 0.0
  %v3659 = vmax.f32 %v3581, 0.0
  %v3660 = vmax.f32 %v3586, 0.0
  %v3661 = vmax.f32 %v3591, 0.0
  %v3662 = vmax.f32 %v3596, 0.0
  %v3663 = vsel %vm2551, %v3599, 0.0
  %v3664 = vsel %vm2551, %v3600, 0.0
  %v3665 = vadd.f32 %v3663, %v3664
  %v3666 = vsel %vm2551, %v3601, 0.0
  %v3667 = vadd.f32 %v3665, %v3666
  %v3668 = vsel %vm2551, %v3602, 0.0
  %v3669 = vadd.f32 %v3667, %v3668
  %v3670 = vsel %vm2551, %v3603, 0.0
  %v3671 = vadd.f32 %v3669, %v3670
  %v3672 = vsel %vm2551, %v3604, 0.0
  %v3673 = vadd.f32 %v3671, %v3672
  %v3674 = vsel %vm2551, %v3605, 0.0
  %v3675 = vadd.f32 %v3673, %v3674
  %v3676 = vsel %vm2551, %v3606, 0.0
  %v3677 = vadd.f32 %v3675, %v3676
  %v3678 = vsel %vm2551, %v3607, 0.0
  %v3679 = vadd.f32 %v3677, %v3678
  %v3680 = vsel %vm2551, %v3608, 0.0
  %v3681 = vadd.f32 %v3679, %v3680
  %v3682 = vsel %vm2551, %v3609, 0.0
  %v3683 = vadd.f32 %v3681, %v3682
  %v3684 = vsel %vm2551, %v3610, 0.0
  %v3685 = vadd.f32 %v3683, %v3684
  %v3686 = vsel %vm2551, %v3611, 0.0
  %v3687 = vadd.f32 %v3685, %v3686
  %v3688 = vsel %vm2551, %v3612, 0.0
  %v3689 = vadd.f32 %v3687, %v3688
  %v3690 = vsel %vm2551, %v3613, 0.0
  %v3691 = vadd.f32 %v3689, %v3690
  %v3692 = vsel %vm2551, %v3614, 0.0
  %v3693 = vadd.f32 %v3691, %v3692
  %v3694 = vsel %vm2551, %v3615, 0.0
  %v3695 = vadd.f32 %v3693, %v3694
  %v3696 = vsel %vm2551, %v3616, 0.0
  %v3697 = vadd.f32 %v3695, %v3696
  %v3698 = vsel %vm2551, %v3617, 0.0
  %v3699 = vadd.f32 %v3697, %v3698
  %v3700 = vsel %vm2551, %v3618, 0.0
  %v3701 = vadd.f32 %v3699, %v3700
  %v3702 = vsel %vm2551, %v3619, 0.0
  %v3703 = vadd.f32 %v3701, %v3702
  %v3704 = vsel %vm2551, %v3620, 0.0
  %v3705 = vadd.f32 %v3703, %v3704
  %v3706 = vsel %vm2551, %v3621, 0.0
  %v3707 = vadd.f32 %v3705, %v3706
  %v3708 = vsel %vm2551, %v3622, 0.0
  %v3709 = vadd.f32 %v3707, %v3708
  %v3710 = vsel %vm2551, %v3623, 0.0
  %v3711 = vadd.f32 %v3709, %v3710
  %v3712 = vsel %vm2551, %v3624, 0.0
  %v3713 = vadd.f32 %v3711, %v3712
  %v3714 = vsel %vm2551, %v3625, 0.0
  %v3715 = vadd.f32 %v3713, %v3714
  %v3716 = vsel %vm2551, %v3626, 0.0
  %v3717 = vadd.f32 %v3715, %v3716
  %v3718 = vsel %vm2551, %v3627, 0.0
  %v3719 = vadd.f32 %v3717, %v3718
  %v3720 = vsel %vm2551, %v3628, 0.0
  %v3721 = vadd.f32 %v3719, %v3720
  %v3722 = vsel %vm2551, %v3629, 0.0
  %v3723 = vadd.f32 %v3721, %v3722
  %v3724 = vsel %vm2551, %v3630, 0.0
  %v3725 = vadd.f32 %v3723, %v3724
  %v3726 = vsel %vm2551, %v3631, 0.0
  %v3727 = vadd.f32 %v3725, %v3726
  %v3728 = vsel %vm2551, %v3632, 0.0
  %v3729 = vadd.f32 %v3727, %v3728
  %v3730 = vsel %vm2551, %v3633, 0.0
  %v3731 = vadd.f32 %v3729, %v3730
  %v3732 = vsel %vm2551, %v3634, 0.0
  %v3733 = vadd.f32 %v3731, %v3732
  %v3734 = vsel %vm2551, %v3635, 0.0
  %v3735 = vadd.f32 %v3733, %v3734
  %v3736 = vsel %vm2551, %v3636, 0.0
  %v3737 = vadd.f32 %v3735, %v3736
  %v3738 = vsel %vm2551, %v3637, 0.0
  %v3739 = vadd.f32 %v3737, %v3738
  %v3740 = vsel %vm2551, %v3638, 0.0
  %v3741 = vadd.f32 %v3739, %v3740
  %v3742 = vsel %vm2551, %v3639, 0.0
  %v3743 = vadd.f32 %v3741, %v3742
  %v3744 = vsel %vm2551, %v3640, 0.0
  %v3745 = vadd.f32 %v3743, %v3744
  %v3746 = vsel %vm2551, %v3641, 0.0
  %v3747 = vadd.f32 %v3745, %v3746
  %v3748 = vsel %vm2551, %v3642, 0.0
  %v3749 = vadd.f32 %v3747, %v3748
  %v3750 = vsel %vm2551, %v3643, 0.0
  %v3751 = vadd.f32 %v3749, %v3750
  %v3752 = vsel %vm2551, %v3644, 0.0
  %v3753 = vadd.f32 %v3751, %v3752
  %v3754 = vsel %vm2551, %v3645, 0.0
  %v3755 = vadd.f32 %v3753, %v3754
  %v3756 = vsel %vm2551, %v3646, 0.0
  %v3757 = vadd.f32 %v3755, %v3756
  %v3758 = vsel %vm2551, %v3647, 0.0
  %v3759 = vadd.f32 %v3757, %v3758
  %v3760 = vsel %vm2551, %v3648, 0.0
  %v3761 = vadd.f32 %v3759, %v3760
  %v3762 = vsel %vm2551, %v3649, 0.0
  %v3763 = vadd.f32 %v3761, %v3762
  %v3764 = vsel %vm2551, %v3650, 0.0
  %v3765 = vadd.f32 %v3763, %v3764
  %v3766 = vsel %vm2551, %v3651, 0.0
  %v3767 = vadd.f32 %v3765, %v3766
  %v3768 = vsel %vm2551, %v3652, 0.0
  %v3769 = vadd.f32 %v3767, %v3768
  %v3770 = vsel %vm2551, %v3653, 0.0
  %v3771 = vadd.f32 %v3769, %v3770
  %v3772 = vsel %vm2551, %v3654, 0.0
  %v3773 = vadd.f32 %v3771, %v3772
  %v3774 = vsel %vm2551, %v3655, 0.0
  %v3775 = vadd.f32 %v3773, %v3774
  %v3776 = vsel %vm2551, %v3656, 0.0
  %v3777 = vadd.f32 %v3775, %v3776
  %v3778 = vsel %vm2551, %v3657, 0.0
  %v3779 = vadd.f32 %v3777, %v3778
  %v3780 = vsel %vm2551, %v3658, 0.0
  %v3781 = vadd.f32 %v3779, %v3780
  %v3782 = vsel %vm2551, %v3659, 0.0
  %v3783 = vadd.f32 %v3781, %v3782
  %v3784 = vsel %vm2551, %v3660, 0.0
  %v3785 = vadd.f32 %v3783, %v3784
  %v3786 = vsel %vm2551, %v3661, 0.0
  %v3787 = vadd.f32 %v3785, %v3786
  %v3788 = vsel %vm2551, %v3662, 0.0
  %v3789 = vadd.f32 %v3787, %v3788
  %v3790 = vrot.slane %v3789, 4
  %v3791 = vadd.f32 %v3789, %v3790
  %v3792 = vrot.slane %v3791, 2
  %v3793 = vadd.f32 %v3791, %v3792
  %v3794 = vrot.slane %v3793, 1
  %v3795 = vadd.f32 %v3793, %v3794
  %v3796 = vmul.f32 %v3599, %v3599
  %v3797 = vmul.f32 %v3600, %v3600
  %v3798 = vmul.f32 %v3601, %v3601
  %v3799 = vmul.f32 %v3602, %v3602
  %v3800 = vmul.f32 %v3603, %v3603
  %v3801 = vmul.f32 %v3604, %v3604
  %v3802 = vmul.f32 %v3605, %v3605
  %v3803 = vmul.f32 %v3606, %v3606
  %v3804 = vmul.f32 %v3607, %v3607
  %v3805 = vmul.f32 %v3608, %v3608
  %v3806 = vmul.f32 %v3609, %v3609
  %v3807 = vmul.f32 %v3610, %v3610
  %v3808 = vmul.f32 %v3611, %v3611
  %v3809 = vmul.f32 %v3612, %v3612
  %v3810 = vmul.f32 %v3613, %v3613
  %v3811 = vmul.f32 %v3614, %v3614
  %v3812 = vmul.f32 %v3615, %v3615
  %v3813 = vmul.f32 %v3616, %v3616
  %v3814 = vmul.f32 %v3617, %v3617
  %v3815 = vmul.f32 %v3618, %v3618
  %v3816 = vmul.f32 %v3619, %v3619
  %v3817 = vmul.f32 %v3620, %v3620
  %v3818 = vmul.f32 %v3621, %v3621
  %v3819 = vmul.f32 %v3622, %v3622
  %v3820 = vmul.f32 %v3623, %v3623
  %v3821 = vmul.f32 %v3624, %v3624
  %v3822 = vmul.f32 %v3625, %v3625
  %v3823 = vmul.f32 %v3626, %v3626
  %v3824 = vmul.f32 %v3627, %v3627
  %v3825 = vmul.f32 %v3628, %v3628
  %v3826 = vmul.f32 %v3629, %v3629
  %v3827 = vmul.f32 %v3630, %v3630
  %v3828 = vmul.f32 %v3631, %v3631
  %v3829 = vmul.f32 %v3632, %v3632
  %v3830 = vmul.f32 %v3633, %v3633
  %v3831 = vmul.f32 %v3634, %v3634
  %v3832 = vmul.f32 %v3635, %v3635
  %v3833 = vmul.f32 %v3636, %v3636
  %v3834 = vmul.f32 %v3637, %v3637
  %v3835 = vmul.f32 %v3638, %v3638
  %v3836 = vmul.f32 %v3639, %v3639
  %v3837 = vmul.f32 %v3640, %v3640
  %v3838 = vmul.f32 %v3641, %v3641
  %v3839 = vmul.f32 %v3642, %v3642
  %v3840 = vmul.f32 %v3643, %v3643
  %v3841 = vmul.f32 %v3644, %v3644
  %v3842 = vmul.f32 %v3645, %v3645
  %v3843 = vmul.f32 %v3646, %v3646
  %v3844 = vmul.f32 %v3647, %v3647
  %v3845 = vmul.f32 %v3648, %v3648
  %v3846 = vmul.f32 %v3649, %v3649
  %v3847 = vmul.f32 %v3650, %v3650
  %v3848 = vmul.f32 %v3651, %v3651
  %v3849 = vmul.f32 %v3652, %v3652
  %v3850 = vmul.f32 %v3653, %v3653
  %v3851 = vmul.f32 %v3654, %v3654
  %v3852 = vmul.f32 %v3655, %v3655
  %v3853 = vmul.f32 %v3656, %v3656
  %v3854 = vmul.f32 %v3657, %v3657
  %v3855 = vmul.f32 %v3658, %v3658
  %v3856 = vmul.f32 %v3659, %v3659
  %v3857 = vmul.f32 %v3660, %v3660
  %v3858 = vmul.f32 %v3661, %v3661
  %v3859 = vmul.f32 %v3662, %v3662
  %v3860 = vsel %vm2551, %v3796, 0.0
  %v3861 = vsel %vm2551, %v3797, 0.0
  %v3862 = vadd.f32 %v3860, %v3861
  %v3863 = vsel %vm2551, %v3798, 0.0
  %v3864 = vadd.f32 %v3862, %v3863
  %v3865 = vsel %vm2551, %v3799, 0.0
  %v3866 = vadd.f32 %v3864, %v3865
  %v3867 = vsel %vm2551, %v3800, 0.0
  %v3868 = vadd.f32 %v3866, %v3867
  %v3869 = vsel %vm2551, %v3801, 0.0
  %v3870 = vadd.f32 %v3868, %v3869
  %v3871 = vsel %vm2551, %v3802, 0.0
  %v3872 = vadd.f32 %v3870, %v3871
  %v3873 = vsel %vm2551, %v3803, 0.0
  %v3874 = vadd.f32 %v3872, %v3873
  %v3875 = vsel %vm2551, %v3804, 0.0
  %v3876 = vadd.f32 %v3874, %v3875
  %v3877 = vsel %vm2551, %v3805, 0.0
  %v3878 = vadd.f32 %v3876, %v3877
  %v3879 = vsel %vm2551, %v3806, 0.0
  %v3880 = vadd.f32 %v3878, %v3879
  %v3881 = vsel %vm2551, %v3807, 0.0
  %v3882 = vadd.f32 %v3880, %v3881
  %v3883 = vsel %vm2551, %v3808, 0.0
  %v3884 = vadd.f32 %v3882, %v3883
  %v3885 = vsel %vm2551, %v3809, 0.0
  %v3886 = vadd.f32 %v3884, %v3885
  %v3887 = vsel %vm2551, %v3810, 0.0
  %v3888 = vadd.f32 %v3886, %v3887
  %v3889 = vsel %vm2551, %v3811, 0.0
  %v3890 = vadd.f32 %v3888, %v3889
  %v3891 = vsel %vm2551, %v3812, 0.0
  %v3892 = vadd.f32 %v3890, %v3891
  %v3893 = vsel %vm2551, %v3813, 0.0
  %v3894 = vadd.f32 %v3892, %v3893
  %v3895 = vsel %vm2551, %v3814, 0.0
  %v3896 = vadd.f32 %v3894, %v3895
  %v3897 = vsel %vm2551, %v3815, 0.0
  %v3898 = vadd.f32 %v3896, %v3897
  %v3899 = vsel %vm2551, %v3816, 0.0
  %v3900 = vadd.f32 %v3898, %v3899
  %v3901 = vsel %vm2551, %v3817, 0.0
  %v3902 = vadd.f32 %v3900, %v3901
  %v3903 = vsel %vm2551, %v3818, 0.0
  %v3904 = vadd.f32 %v3902, %v3903
  %v3905 = vsel %vm2551, %v3819, 0.0
  %v3906 = vadd.f32 %v3904, %v3905
  %v3907 = vsel %vm2551, %v3820, 0.0
  %v3908 = vadd.f32 %v3906, %v3907
  %v3909 = vsel %vm2551, %v3821, 0.0
  %v3910 = vadd.f32 %v3908, %v3909
  %v3911 = vsel %vm2551, %v3822, 0.0
  %v3912 = vadd.f32 %v3910, %v3911
  %v3913 = vsel %vm2551, %v3823, 0.0
  %v3914 = vadd.f32 %v3912, %v3913
  %v3915 = vsel %vm2551, %v3824, 0.0
  %v3916 = vadd.f32 %v3914, %v3915
  %v3917 = vsel %vm2551, %v3825, 0.0
  %v3918 = vadd.f32 %v3916, %v3917
  %v3919 = vsel %vm2551, %v3826, 0.0
  %v3920 = vadd.f32 %v3918, %v3919
  %v3921 = vsel %vm2551, %v3827, 0.0
  %v3922 = vadd.f32 %v3920, %v3921
  %v3923 = vsel %vm2551, %v3828, 0.0
  %v3924 = vadd.f32 %v3922, %v3923
  %v3925 = vsel %vm2551, %v3829, 0.0
  %v3926 = vadd.f32 %v3924, %v3925
  %v3927 = vsel %vm2551, %v3830, 0.0
  %v3928 = vadd.f32 %v3926, %v3927
  %v3929 = vsel %vm2551, %v3831, 0.0
  %v3930 = vadd.f32 %v3928, %v3929
  %v3931 = vsel %vm2551, %v3832, 0.0
  %v3932 = vadd.f32 %v3930, %v3931
  %v3933 = vsel %vm2551, %v3833, 0.0
  %v3934 = vadd.f32 %v3932, %v3933
  %v3935 = vsel %vm2551, %v3834, 0.0
  %v3936 = vadd.f32 %v3934, %v3935
  %v3937 = vsel %vm2551, %v3835, 0.0
  %v3938 = vadd.f32 %v3936, %v3937
  %v3939 = vsel %vm2551, %v3836, 0.0
  %v3940 = vadd.f32 %v3938, %v3939
  %v3941 = vsel %vm2551, %v3837, 0.0
  %v3942 = vadd.f32 %v3940, %v3941
  %v3943 = vsel %vm2551, %v3838, 0.0
  %v3944 = vadd.f32 %v3942, %v3943
  %v3945 = vsel %vm2551, %v3839, 0.0
  %v3946 = vadd.f32 %v3944, %v3945
  %v3947 = vsel %vm2551, %v3840, 0.0
  %v3948 = vadd.f32 %v3946, %v3947
  %v3949 = vsel %vm2551, %v3841, 0.0
  %v3950 = vadd.f32 %v3948, %v3949
  %v3951 = vsel %vm2551, %v3842, 0.0
  %v3952 = vadd.f32 %v3950, %v3951
  %v3953 = vsel %vm2551, %v3843, 0.0
  %v3954 = vadd.f32 %v3952, %v3953
  %v3955 = vsel %vm2551, %v3844, 0.0
  %v3956 = vadd.f32 %v3954, %v3955
  %v3957 = vsel %vm2551, %v3845, 0.0
  %v3958 = vadd.f32 %v3956, %v3957
  %v3959 = vsel %vm2551, %v3846, 0.0
  %v3960 = vadd.f32 %v3958, %v3959
  %v3961 = vsel %vm2551, %v3847, 0.0
  %v3962 = vadd.f32 %v3960, %v3961
  %v3963 = vsel %vm2551, %v3848, 0.0
  %v3964 = vadd.f32 %v3962, %v3963
  %v3965 = vsel %vm2551, %v3849, 0.0
  %v3966 = vadd.f32 %v3964, %v3965
  %v3967 = vsel %vm2551, %v3850, 0.0
  %v3968 = vadd.f32 %v3966, %v3967
  %v3969 = vsel %vm2551, %v3851, 0.0
  %v3970 = vadd.f32 %v3968, %v3969
  %v3971 = vsel %vm2551, %v3852, 0.0
  %v3972 = vadd.f32 %v3970, %v3971
  %v3973 = vsel %vm2551, %v3853, 0.0
  %v3974 = vadd.f32 %v3972, %v3973
  %v3975 = vsel %vm2551, %v3854, 0.0
  %v3976 = vadd.f32 %v3974, %v3975
  %v3977 = vsel %vm2551, %v3855, 0.0
  %v3978 = vadd.f32 %v3976, %v3977
  %v3979 = vsel %vm2551, %v3856, 0.0
  %v3980 = vadd.f32 %v3978, %v3979
  %v3981 = vsel %vm2551, %v3857, 0.0
  %v3982 = vadd.f32 %v3980, %v3981
  %v3983 = vsel %vm2551, %v3858, 0.0
  %v3984 = vadd.f32 %v3982, %v3983
  %v3985 = vsel %vm2551, %v3859, 0.0
  %v3986 = vadd.f32 %v3984, %v3985
  %v3987 = vrot.slane %v3986, 4
  %v3988 = vadd.f32 %v3986, %v3987
  %v3989 = vrot.slane %v3988, 2
  %v3990 = vadd.f32 %v3988, %v3989
  %v3991 = vrot.slane %v3990, 1
  %v3992 = vadd.f32 %v3990, %v3991
  %v3993 = vmul.f32 %v3795, 0.001953125
  %v3994 = vmul.f32 %v3992, 0.001953125
  %v3995 = vmul.f32 %v3993, %v3993
  %v3996 = vsub.f32 %v3994, %v3995
  %v3997 = vsub.f32 %v3599, %v3993
  %v3998 = vsub.f32 %v3600, %v3993
  %v3999 = vsub.f32 %v3601, %v3993
  %v4000 = vsub.f32 %v3602, %v3993
  %v4001 = vsub.f32 %v3603, %v3993
  %v4002 = vsub.f32 %v3604, %v3993
  %v4003 = vsub.f32 %v3605, %v3993
  %v4004 = vsub.f32 %v3606, %v3993
  %v4005 = vsub.f32 %v3607, %v3993
  %v4006 = vsub.f32 %v3608, %v3993
  %v4007 = vsub.f32 %v3609, %v3993
  %v4008 = vsub.f32 %v3610, %v3993
  %v4009 = vsub.f32 %v3611, %v3993
  %v4010 = vsub.f32 %v3612, %v3993
  %v4011 = vsub.f32 %v3613, %v3993
  %v4012 = vsub.f32 %v3614, %v3993
  %v4013 = vsub.f32 %v3615, %v3993
  %v4014 = vsub.f32 %v3616, %v3993
  %v4015 = vsub.f32 %v3617, %v3993
  %v4016 = vsub.f32 %v3618, %v3993
  %v4017 = vsub.f32 %v3619, %v3993
  %v4018 = vsub.f32 %v3620, %v3993
  %v4019 = vsub.f32 %v3621, %v3993
  %v4020 = vsub.f32 %v3622, %v3993
  %v4021 = vsub.f32 %v3623, %v3993
  %v4022 = vsub.f32 %v3624, %v3993
  %v4023 = vsub.f32 %v3625, %v3993
  %v4024 = vsub.f32 %v3626, %v3993
  %v4025 = vsub.f32 %v3627, %v3993
  %v4026 = vsub.f32 %v3628, %v3993
  %v4027 = vsub.f32 %v3629, %v3993
  %v4028 = vsub.f32 %v3630, %v3993
  %v4029 = vsub.f32 %v3631, %v3993
  %v4030 = vsub.f32 %v3632, %v3993
  %v4031 = vsub.f32 %v3633, %v3993
  %v4032 = vsub.f32 %v3634, %v3993
  %v4033 = vsub.f32 %v3635, %v3993
  %v4034 = vsub.f32 %v3636, %v3993
  %v4035 = vsub.f32 %v3637, %v3993
  %v4036 = vsub.f32 %v3638, %v3993
  %v4037 = vsub.f32 %v3639, %v3993
  %v4038 = vsub.f32 %v3640, %v3993
  %v4039 = vsub.f32 %v3641, %v3993
  %v4040 = vsub.f32 %v3642, %v3993
  %v4041 = vsub.f32 %v3643, %v3993
  %v4042 = vsub.f32 %v3644, %v3993
  %v4043 = vsub.f32 %v3645, %v3993
  %v4044 = vsub.f32 %v3646, %v3993
  %v4045 = vsub.f32 %v3647, %v3993
  %v4046 = vsub.f32 %v3648, %v3993
  %v4047 = vsub.f32 %v3649, %v3993
  %v4048 = vsub.f32 %v3650, %v3993
  %v4049 = vsub.f32 %v3651, %v3993
  %v4050 = vsub.f32 %v3652, %v3993
  %v4051 = vsub.f32 %v3653, %v3993
  %v4052 = vsub.f32 %v3654, %v3993
  %v4053 = vsub.f32 %v3655, %v3993
  %v4054 = vsub.f32 %v3656, %v3993
  %v4055 = vsub.f32 %v3657, %v3993
  %v4056 = vsub.f32 %v3658, %v3993
  %v4057 = vsub.f32 %v3659, %v3993
  %v4058 = vsub.f32 %v3660, %v3993
  %v4059 = vsub.f32 %v3661, %v3993
  %v4060 = vsub.f32 %v3662, %v3993
  %v4061 = vadd.f32 %v3996, 1e-05
  %v4062 = vrsqrt.pop %v4061
  %v4063 = vmul.f32 %v3997, %v4062
  %v4064 = vmul.f32 %v3998, %v4062
  %v4065 = vmul.f32 %v3999, %v4062
  %v4066 = vmul.f32 %v4000, %v4062
  %v4067 = vmul.f32 %v4001, %v4062
  %v4068 = vmul.f32 %v4002, %v4062
  %v4069 = vmul.f32 %v4003, %v4062
  %v4070 = vmul.f32 %v4004, %v4062
  %v4071 = vmul.f32 %v4005, %v4062
  %v4072 = vmul.f32 %v4006, %v4062
  %v4073 = vmul.f32 %v4007, %v4062
  %v4074 = vmul.f32 %v4008, %v4062
  %v4075 = vmul.f32 %v4009, %v4062
  %v4076 = vmul.f32 %v4010, %v4062
  %v4077 = vmul.f32 %v4011, %v4062
  %v4078 = vmul.f32 %v4012, %v4062
  %v4079 = vmul.f32 %v4013, %v4062
  %v4080 = vmul.f32 %v4014, %v4062
  %v4081 = vmul.f32 %v4015, %v4062
  %v4082 = vmul.f32 %v4016, %v4062
  %v4083 = vmul.f32 %v4017, %v4062
  %v4084 = vmul.f32 %v4018, %v4062
  %v4085 = vmul.f32 %v4019, %v4062
  %v4086 = vmul.f32 %v4020, %v4062
  %v4087 = vmul.f32 %v4021, %v4062
  %v4088 = vmul.f32 %v4022, %v4062
  %v4089 = vmul.f32 %v4023, %v4062
  %v4090 = vmul.f32 %v4024, %v4062
  %v4091 = vmul.f32 %v4025, %v4062
  %v4092 = vmul.f32 %v4026, %v4062
  %v4093 = vmul.f32 %v4027, %v4062
  %v4094 = vmul.f32 %v4028, %v4062
  %v4095 = vmul.f32 %v4029, %v4062
  %v4096 = vmul.f32 %v4030, %v4062
  %v4097 = vmul.f32 %v4031, %v4062
  %v4098 = vmul.f32 %v4032, %v4062
  %v4099 = vmul.f32 %v4033, %v4062
  %v4100 = vmul.f32 %v4034, %v4062
  %v4101 = vmul.f32 %v4035, %v4062
  %v4102 = vmul.f32 %v4036, %v4062
  %v4103 = vmul.f32 %v4037, %v4062
  %v4104 = vmul.f32 %v4038, %v4062
  %v4105 = vmul.f32 %v4039, %v4062
  %v4106 = vmul.f32 %v4040, %v4062
  %v4107 = vmul.f32 %v4041, %v4062
  %v4108 = vmul.f32 %v4042, %v4062
  %v4109 = vmul.f32 %v4043, %v4062
  %v4110 = vmul.f32 %v4044, %v4062
  %v4111 = vmul.f32 %v4045, %v4062
  %v4112 = vmul.f32 %v4046, %v4062
  %v4113 = vmul.f32 %v4047, %v4062
  %v4114 = vmul.f32 %v4048, %v4062
  %v4115 = vmul.f32 %v4049, %v4062
  %v4116 = vmul.f32 %v4050, %v4062
  %v4117 = vmul.f32 %v4051, %v4062
  %v4118 = vmul.f32 %v4052, %v4062
  %v4119 = vmul.f32 %v4053, %v4062
  %v4120 = vmul.f32 %v4054, %v4062
  %v4121 = vmul.f32 %v4055, %v4062
  %v4122 = vmul.f32 %v4056, %v4062
  %v4123 = vmul.f32 %v4057, %v4062
  %v4124 = vmul.f32 %v4058, %v4062
  %v4125 = vmul.f32 %v4059, %v4062
  %v4126 = vmul.f32 %v4060, %v4062
  %v4127 = vld [vmem:[%s6] sm:$0x1]
  %v4129 = vlaneseq
  %v4130 = vshrl.u32 %v4129, 7
  %v4131 = vsub.s32 0, %v4130
  %v4132 = vrot.slane %v4127, %v4131
  %v4134 = vmul.f32 %v4063, %v4132
  %v4135 = vmul.f32 %v4064, %v4132
  %v4136 = vmul.f32 %v4065, %v4132
  %v4137 = vmul.f32 %v4066, %v4132
  %v4138 = vmul.f32 %v4067, %v4132
  %v4139 = vmul.f32 %v4068, %v4132
  %v4140 = vmul.f32 %v4069, %v4132
  %v4141 = vmul.f32 %v4070, %v4132
  %v4142 = vmul.f32 %v4071, %v4132
  %v4143 = vmul.f32 %v4072, %v4132
  %v4144 = vmul.f32 %v4073, %v4132
  %v4145 = vmul.f32 %v4074, %v4132
  %v4146 = vmul.f32 %v4075, %v4132
  %v4147 = vmul.f32 %v4076, %v4132
  %v4148 = vmul.f32 %v4077, %v4132
  %v4149 = vmul.f32 %v4078, %v4132
  %v4150 = vmul.f32 %v4079, %v4132
  %v4151 = vmul.f32 %v4080, %v4132
  %v4152 = vmul.f32 %v4081, %v4132
  %v4153 = vmul.f32 %v4082, %v4132
  %v4154 = vmul.f32 %v4083, %v4132
  %v4155 = vmul.f32 %v4084, %v4132
  %v4156 = vmul.f32 %v4085, %v4132
  %v4157 = vmul.f32 %v4086, %v4132
  %v4158 = vmul.f32 %v4087, %v4132
  %v4159 = vmul.f32 %v4088, %v4132
  %v4160 = vmul.f32 %v4089, %v4132
  %v4161 = vmul.f32 %v4090, %v4132
  %v4162 = vmul.f32 %v4091, %v4132
  %v4163 = vmul.f32 %v4092, %v4132
  %v4164 = vmul.f32 %v4093, %v4132
  %v4165 = vmul.f32 %v4094, %v4132
  %v4166 = vmul.f32 %v4095, %v4132
  %v4167 = vmul.f32 %v4096, %v4132
  %v4168 = vmul.f32 %v4097, %v4132
  %v4169 = vmul.f32 %v4098, %v4132
  %v4170 = vmul.f32 %v4099, %v4132
  %v4171 = vmul.f32 %v4100, %v4132
  %v4172 = vmul.f32 %v4101, %v4132
  %v4173 = vmul.f32 %v4102, %v4132
  %v4174 = vmul.f32 %v4103, %v4132
  %v4175 = vmul.f32 %v4104, %v4132
  %v4176 = vmul.f32 %v4105, %v4132
  %v4177 = vmul.f32 %v4106, %v4132
  %v4178 = vmul.f32 %v4107, %v4132
  %v4179 = vmul.f32 %v4108, %v4132
  %v4180 = vmul.f32 %v4109, %v4132
  %v4181 = vmul.f32 %v4110, %v4132
  %v4182 = vmul.f32 %v4111, %v4132
  %v4183 = vmul.f32 %v4112, %v4132
  %v4184 = vmul.f32 %v4113, %v4132
  %v4185 = vmul.f32 %v4114, %v4132
  %v4186 = vmul.f32 %v4115, %v4132
  %v4187 = vmul.f32 %v4116, %v4132
  %v4188 = vmul.f32 %v4117, %v4132
  %v4189 = vmul.f32 %v4118, %v4132
  %v4190 = vmul.f32 %v4119, %v4132
  %v4191 = vmul.f32 %v4120, %v4132
  %v4192 = vmul.f32 %v4121, %v4132
  %v4193 = vmul.f32 %v4122, %v4132
  %v4194 = vmul.f32 %v4123, %v4132
  %v4195 = vmul.f32 %v4124, %v4132
  %v4196 = vmul.f32 %v4125, %v4132
  %v4197 = vmul.f32 %v4126, %v4132
  %v4198 = vld [vmem:[%s7] sm:$0x1]
  %v4200 = vlaneseq
  %v4201 = vshrl.u32 %v4200, 7
  %v4202 = vsub.s32 0, %v4201
  %v4203 = vrot.slane %v4198, %v4202
  %v4205 = vadd.f32 %v4134, %v4203
  %v4206 = vadd.f32 %v4135, %v4203
  %v4207 = vadd.f32 %v4136, %v4203
  %v4208 = vadd.f32 %v4137, %v4203
  %v4209 = vadd.f32 %v4138, %v4203
  %v4210 = vadd.f32 %v4139, %v4203
  %v4211 = vadd.f32 %v4140, %v4203
  %v4212 = vadd.f32 %v4141, %v4203
  %v4213 = vadd.f32 %v4142, %v4203
  %v4214 = vadd.f32 %v4143, %v4203
  %v4215 = vadd.f32 %v4144, %v4203
  %v4216 = vadd.f32 %v4145, %v4203
  %v4217 = vadd.f32 %v4146, %v4203
  %v4218 = vadd.f32 %v4147, %v4203
  %v4219 = vadd.f32 %v4148, %v4203
  %v4220 = vadd.f32 %v4149, %v4203
  %v4221 = vadd.f32 %v4150, %v4203
  %v4222 = vadd.f32 %v4151, %v4203
  %v4223 = vadd.f32 %v4152, %v4203
  %v4224 = vadd.f32 %v4153, %v4203
  %v4225 = vadd.f32 %v4154, %v4203
  %v4226 = vadd.f32 %v4155, %v4203
  %v4227 = vadd.f32 %v4156, %v4203
  %v4228 = vadd.f32 %v4157, %v4203
  %v4229 = vadd.f32 %v4158, %v4203
  %v4230 = vadd.f32 %v4159, %v4203
  %v4231 = vadd.f32 %v4160, %v4203
  %v4232 = vadd.f32 %v4161, %v4203
  %v4233 = vadd.f32 %v4162, %v4203
  %v4234 = vadd.f32 %v4163, %v4203
  %v4235 = vadd.f32 %v4164, %v4203
  %v4236 = vadd.f32 %v4165, %v4203
  %v4237 = vadd.f32 %v4166, %v4203
  %v4238 = vadd.f32 %v4167, %v4203
  %v4239 = vadd.f32 %v4168, %v4203
  %v4240 = vadd.f32 %v4169, %v4203
  %v4241 = vadd.f32 %v4170, %v4203
  %v4242 = vadd.f32 %v4171, %v4203
  %v4243 = vadd.f32 %v4172, %v4203
  %v4244 = vadd.f32 %v4173, %v4203
  %v4245 = vadd.f32 %v4174, %v4203
  %v4246 = vadd.f32 %v4175, %v4203
  %v4247 = vadd.f32 %v4176, %v4203
  %v4248 = vadd.f32 %v4177, %v4203
  %v4249 = vadd.f32 %v4178, %v4203
  %v4250 = vadd.f32 %v4179, %v4203
  %v4251 = vadd.f32 %v4180, %v4203
  %v4252 = vadd.f32 %v4181, %v4203
  %v4253 = vadd.f32 %v4182, %v4203
  %v4254 = vadd.f32 %v4183, %v4203
  %v4255 = vadd.f32 %v4184, %v4203
  %v4256 = vadd.f32 %v4185, %v4203
  %v4257 = vadd.f32 %v4186, %v4203
  %v4258 = vadd.f32 %v4187, %v4203
  %v4259 = vadd.f32 %v4188, %v4203
  %v4260 = vadd.f32 %v4189, %v4203
  %v4261 = vadd.f32 %v4190, %v4203
  %v4262 = vadd.f32 %v4191, %v4203
  %v4263 = vadd.f32 %v4192, %v4203
  %v4264 = vadd.f32 %v4193, %v4203
  %v4265 = vadd.f32 %v4194, %v4203
  %v4266 = vadd.f32 %v4195, %v4203
  %v4267 = vadd.f32 %v4196, %v4203
  %v4268 = vadd.f32 %v4197, %v4203
  %v4271 = vunpack.c.l.s4 1966171168
  %v4272 = vunpack.c.0.s8 %v4271
  %v4273 = vlaneseq
  %v4274 = vshrl.u32 %v4273, 7
  %v4275 = vsub.s32 %v4272, %v4274
  %v4276 = vrot.slane %v133, %v4275
  %v4277 = vcombine.high %v4276, %v4276
  %v4279 = vunpack.c.l.s4 1966171168
  %v4280 = vunpack.c.0.s8 %v4279
  %v4281 = vlaneseq
  %v4282 = vshrl.u32 %v4281, 7
  %v4283 = vsub.s32 %v4280, %v4282
  %v4284 = vrot.slane %v4276, %v4283
  %v4286 = vunpack.c.l.s4 1966171168
  %v4287 = vunpack.c.0.s8 %v4286
  %v4288 = vlaneseq
  %v4289 = vshrl.u32 %v4288, 7
  %v4290 = vsub.s32 %v4287, %v4289
  %v4291 = vrot.slane %v4277, %v4290
  %v4292 = vlaneseq
  %v4293 = vshrl.u32 %v4292, 7
  %v4294 = vsub.s32 0, %v4293
  %v4295 = vrot.slane %v4284, %v4294
  %v4296 = vlaneseq
  %v4297 = vshrl.u32 %v4296, 7
  %v4298 = vsub.s32 0, %v4297
  %v4299 = vrot.slane %v4291, %v4298
  %v4302 = vadd.f32 %v4205, %v4295
  %v4303 = vadd.f32 %v4206, %v4295
  %v4304 = vadd.f32 %v4207, %v4295
  %v4305 = vadd.f32 %v4208, %v4295
  %v4306 = vadd.f32 %v4209, %v4295
  %v4307 = vadd.f32 %v4210, %v4295
  %v4308 = vadd.f32 %v4211, %v4295
  %v4309 = vadd.f32 %v4212, %v4295
  %v4310 = vadd.f32 %v4213, %v4295
  %v4311 = vadd.f32 %v4214, %v4295
  %v4312 = vadd.f32 %v4215, %v4295
  %v4313 = vadd.f32 %v4216, %v4295
  %v4314 = vadd.f32 %v4217, %v4295
  %v4315 = vadd.f32 %v4218, %v4295
  %v4316 = vadd.f32 %v4219, %v4295
  %v4317 = vadd.f32 %v4220, %v4295
  %v4318 = vadd.f32 %v4221, %v4295
  %v4319 = vadd.f32 %v4222, %v4295
  %v4320 = vadd.f32 %v4223, %v4295
  %v4321 = vadd.f32 %v4224, %v4295
  %v4322 = vadd.f32 %v4225, %v4295
  %v4323 = vadd.f32 %v4226, %v4295
  %v4324 = vadd.f32 %v4227, %v4295
  %v4325 = vadd.f32 %v4228, %v4295
  %v4326 = vadd.f32 %v4229, %v4295
  %v4327 = vadd.f32 %v4230, %v4295
  %v4328 = vadd.f32 %v4231, %v4295
  %v4329 = vadd.f32 %v4232, %v4295
  %v4330 = vadd.f32 %v4233, %v4295
  %v4331 = vadd.f32 %v4234, %v4295
  %v4332 = vadd.f32 %v4235, %v4295
  %v4333 = vadd.f32 %v4236, %v4295
  %v4334 = vadd.f32 %v4237, %v4299
  %v4335 = vadd.f32 %v4238, %v4299
  %v4336 = vadd.f32 %v4239, %v4299
  %v4337 = vadd.f32 %v4240, %v4299
  %v4338 = vadd.f32 %v4241, %v4299
  %v4339 = vadd.f32 %v4242, %v4299
  %v4340 = vadd.f32 %v4243, %v4299
  %v4341 = vadd.f32 %v4244, %v4299
  %v4342 = vadd.f32 %v4245, %v4299
  %v4343 = vadd.f32 %v4246, %v4299
  %v4344 = vadd.f32 %v4247, %v4299
  %v4345 = vadd.f32 %v4248, %v4299
  %v4346 = vadd.f32 %v4249, %v4299
  %v4347 = vadd.f32 %v4250, %v4299
  %v4348 = vadd.f32 %v4251, %v4299
  %v4349 = vadd.f32 %v4252, %v4299
  %v4350 = vadd.f32 %v4253, %v4299
  %v4351 = vadd.f32 %v4254, %v4299
  %v4352 = vadd.f32 %v4255, %v4299
  %v4353 = vadd.f32 %v4256, %v4299
  %v4354 = vadd.f32 %v4257, %v4299
  %v4355 = vadd.f32 %v4258, %v4299
  %v4356 = vadd.f32 %v4259, %v4299
  %v4357 = vadd.f32 %v4260, %v4299
  %v4358 = vadd.f32 %v4261, %v4299
  %v4359 = vadd.f32 %v4262, %v4299
  %v4360 = vadd.f32 %v4263, %v4299
  %v4361 = vadd.f32 %v4264, %v4299
  %v4362 = vadd.f32 %v4265, %v4299
  %v4363 = vadd.f32 %v4266, %v4299
  %v4364 = vadd.f32 %v4267, %v4299
  %v4365 = vadd.f32 %v4268, %v4299
  %4366 = vst.msk [vmem:[#allocation3] sm:$0xff] %vm2551, 0.0
  %4367 = vst.msk [vmem:[#allocation3 + $0x8] sm:$0xff] %vm2551, 0.0
  %vm4368 = vcmask 58368
  %4369 = vst.msk [vmem:[#allocation3 + $0x10] sm:$0x3] %vm4368, 0.0
  %4370 = vst.msk [vmem:[#allocation3 + $0x18] sm:$0xff] %vm2551, 0.0
  %4371 = vst.msk [vmem:[#allocation3 + $0x20] sm:$0xff] %vm2551, 0.0
  %4372 = vst.msk [vmem:[#allocation3 + $0x28] sm:$0x3] %vm4368, 0.0
  %4373 = vst.msk [vmem:[#allocation3 + $0x30] sm:$0xff] %vm2551, 0.0
  %4374 = vst.msk [vmem:[#allocation3 + $0x38] sm:$0xff] %vm2551, 0.0
  %4375 = vst.msk [vmem:[#allocation3 + $0x40] sm:$0x3] %vm4368, 0.0
  %4376 = vst.msk [vmem:[#allocation3 + $0x48] sm:$0xff] %vm2551, 0.0
  %4377 = vst.msk [vmem:[#allocation3 + $0x50] sm:$0xff] %vm2551, 0.0
  %4378 = vst.msk [vmem:[#allocation3 + $0x58] sm:$0x3] %vm4368, 0.0
  %4379 = vst.msk [vmem:[#allocation3 + $0x60] sm:$0xff] %vm2551, 0.0
  %4380 = vst.msk [vmem:[#allocation3 + $0x68] sm:$0xff] %vm2551, 0.0
  %4381 = vst.msk [vmem:[#allocation3 + $0x70] sm:$0x3] %vm4368, 0.0
  %4382 = vst.msk [vmem:[#allocation3 + $0x78] sm:$0xff] %vm2551, 0.0
  %4383 = vst.msk [vmem:[#allocation3 + $0x80] sm:$0xff] %vm2551, 0.0
  %4384 = vst.msk [vmem:[#allocation3 + $0x88] sm:$0x3] %vm4368, 0.0
  %4385 = vst.msk [vmem:[#allocation3 + $0x90] sm:$0xff] %vm2551, 0.0
  %4386 = vst.msk [vmem:[#allocation3 + $0x98] sm:$0xff] %vm2551, 0.0
  %4387 = vst.msk [vmem:[#allocation3 + $0xa0] sm:$0x3] %vm4368, 0.0
  %4388 = vst.msk [vmem:[#allocation3 + $0xa8] sm:$0xff] %vm2551, 0.0
  %4389 = vst.msk [vmem:[#allocation3 + $0xb0] sm:$0xff] %vm2551, 0.0
  %4390 = vst.msk [vmem:[#allocation3 + $0xb8] sm:$0x3] %vm4368, 0.0
  %4391 = vst.msk [vmem:[#allocation3 + $0xc0] sm:$0xff] %vm2551, 0.0
  %4392 = vst.msk [vmem:[#allocation3 + $0xc8] sm:$0xff] %vm2551, 0.0
  %4393 = vst.msk [vmem:[#allocation3 + $0xd0] sm:$0x3] %vm4368, 0.0
  %4394 = vst.msk [vmem:[#allocation3 + $0xd8] sm:$0xff] %vm2551, 0.0
  %4395 = vst.msk [vmem:[#allocation3 + $0xe0] sm:$0xff] %vm2551, 0.0
  %4396 = vst.msk [vmem:[#allocation3 + $0xe8] sm:$0x3] %vm4368, 0.0
  %4397 = vst.msk [vmem:[#allocation3 + $0xf0] sm:$0xff] %vm2551, 0.0
  %4398 = vst.msk [vmem:[#allocation3 + $0xf8] sm:$0xff] %vm2551, 0.0
  %4399 = vst.msk [vmem:[#allocation3 + $0x100] sm:$0x3] %vm4368, 0.0
  %4400 = vst.msk [vmem:[#allocation3 + $0x108] sm:$0xff] %vm2551, 0.0
  %4401 = vst.msk [vmem:[#allocation3 + $0x110] sm:$0xff] %vm2551, 0.0
  %4402 = vst.msk [vmem:[#allocation3 + $0x118] sm:$0x3] %vm4368, 0.0
  %4403 = vst.msk [vmem:[#allocation3 + $0x120] sm:$0xff] %vm2551, 0.0
  %4404 = vst.msk [vmem:[#allocation3 + $0x128] sm:$0xff] %vm2551, 0.0
  %4405 = vst.msk [vmem:[#allocation3 + $0x130] sm:$0x3] %vm4368, 0.0
  %4406 = vst.msk [vmem:[#allocation3 + $0x138] sm:$0xff] %vm2551, 0.0
  %4407 = vst.msk [vmem:[#allocation3 + $0x140] sm:$0xff] %vm2551, 0.0
  %4408 = vst.msk [vmem:[#allocation3 + $0x148] sm:$0x3] %vm4368, 0.0
  %4409 = vst.msk [vmem:[#allocation3 + $0x150] sm:$0xff] %vm2551, 0.0
  %4410 = vst.msk [vmem:[#allocation3 + $0x158] sm:$0xff] %vm2551, 0.0
  %4411 = vst.msk [vmem:[#allocation3 + $0x160] sm:$0x3] %vm4368, 0.0
  %4412 = vst.msk [vmem:[#allocation3 + $0x168] sm:$0xff] %vm2551, 0.0
  %4413 = vst.msk [vmem:[#allocation3 + $0x170] sm:$0xff] %vm2551, 0.0
  %4414 = vst.msk [vmem:[#allocation3 + $0x178] sm:$0x3] %vm4368, 0.0
  %4415 = vst.msk [vmem:[#allocation3 + $0x180] sm:$0xff] %vm2551, 0.0
  %4416 = vst.msk [vmem:[#allocation3 + $0x188] sm:$0xff] %vm2551, 0.0
  %4417 = vst.msk [vmem:[#allocation3 + $0x190] sm:$0x3] %vm4368, 0.0
  %4418 = vst.msk [vmem:[#allocation3 + $0x198] sm:$0xff] %vm2551, 0.0
  %4419 = vst.msk [vmem:[#allocation3 + $0x1a0] sm:$0xff] %vm2551, 0.0
  %4420 = vst.msk [vmem:[#allocation3 + $0x1a8] sm:$0x3] %vm4368, 0.0
  %4421 = vst.msk [vmem:[#allocation3 + $0x1b0] sm:$0xff] %vm2551, 0.0
  %4422 = vst.msk [vmem:[#allocation3 + $0x1b8] sm:$0xff] %vm2551, 0.0
  %4423 = vst.msk [vmem:[#allocation3 + $0x1c0] sm:$0x3] %vm4368, 0.0
  %4424 = vst.msk [vmem:[#allocation3 + $0x1c8] sm:$0xff] %vm2551, 0.0
  %4425 = vst.msk [vmem:[#allocation3 + $0x1d0] sm:$0xff] %vm2551, 0.0
  %4426 = vst.msk [vmem:[#allocation3 + $0x1d8] sm:$0x3] %vm4368, 0.0
  %4427 = vst.msk [vmem:[#allocation3 + $0x1e0] sm:$0xff] %vm2551, 0.0
  %4428 = vst.msk [vmem:[#allocation3 + $0x1e8] sm:$0xff] %vm2551, 0.0
  %4429 = vst.msk [vmem:[#allocation3 + $0x1f0] sm:$0x3] %vm4368, 0.0
  %4430 = vst.msk [vmem:[#allocation3 + $0x1f8] sm:$0xff] %vm2551, 0.0
  %4431 = vst.msk [vmem:[#allocation3 + $0x200] sm:$0xff] %vm2551, 0.0
  %4432 = vst.msk [vmem:[#allocation3 + $0x208] sm:$0x3] %vm4368, 0.0
  %4433 = vst.msk [vmem:[#allocation3 + $0x210] sm:$0xff] %vm2551, 0.0
  %4434 = vst.msk [vmem:[#allocation3 + $0x218] sm:$0xff] %vm2551, 0.0
  %4435 = vst.msk [vmem:[#allocation3 + $0x220] sm:$0x3] %vm4368, 0.0
  %4436 = vst.msk [vmem:[#allocation3 + $0x228] sm:$0xff] %vm2551, 0.0
  %4437 = vst.msk [vmem:[#allocation3 + $0x230] sm:$0xff] %vm2551, 0.0
  %4438 = vst.msk [vmem:[#allocation3 + $0x238] sm:$0x3] %vm4368, 0.0
  %4439 = vst.msk [vmem:[#allocation3 + $0x240] sm:$0xff] %vm2551, 0.0
  %4440 = vst.msk [vmem:[#allocation3 + $0x248] sm:$0xff] %vm2551, 0.0
  %4441 = vst.msk [vmem:[#allocation3 + $0x250] sm:$0x3] %vm4368, 0.0
  %4442 = vst.msk [vmem:[#allocation3 + $0x258] sm:$0xff] %vm2551, 0.0
  %4443 = vst.msk [vmem:[#allocation3 + $0x260] sm:$0xff] %vm2551, 0.0
  %4444 = vst.msk [vmem:[#allocation3 + $0x268] sm:$0x3] %vm4368, 0.0
  %4445 = vst.msk [vmem:[#allocation3 + $0x270] sm:$0xff] %vm2551, 0.0
  %4446 = vst.msk [vmem:[#allocation3 + $0x278] sm:$0xff] %vm2551, 0.0
  %4447 = vst.msk [vmem:[#allocation3 + $0x280] sm:$0x3] %vm4368, 0.0
  %4448 = vst.msk [vmem:[#allocation3 + $0x288] sm:$0xff] %vm2551, 0.0
  %4449 = vst.msk [vmem:[#allocation3 + $0x290] sm:$0xff] %vm2551, 0.0
  %4450 = vst.msk [vmem:[#allocation3 + $0x298] sm:$0x3] %vm4368, 0.0
  %4451 = vst.msk [vmem:[#allocation3 + $0x2a0] sm:$0xff] %vm2551, 0.0
  %4452 = vst.msk [vmem:[#allocation3 + $0x2a8] sm:$0xff] %vm2551, 0.0
  %4453 = vst.msk [vmem:[#allocation3 + $0x2b0] sm:$0x3] %vm4368, 0.0
  %4454 = vst.msk [vmem:[#allocation3 + $0x2b8] sm:$0xff] %vm2551, 0.0
  %4455 = vst.msk [vmem:[#allocation3 + $0x2c0] sm:$0xff] %vm2551, 0.0
  %4456 = vst.msk [vmem:[#allocation3 + $0x2c8] sm:$0x3] %vm4368, 0.0
  %4457 = vst.msk [vmem:[#allocation3 + $0x2d0] sm:$0xff] %vm2551, 0.0
  %4458 = vst.msk [vmem:[#allocation3 + $0x2d8] sm:$0xff] %vm2551, 0.0
  %4459 = vst.msk [vmem:[#allocation3 + $0x2e0] sm:$0x3] %vm4368, 0.0
  %4460 = vst.msk [vmem:[#allocation3 + $0x2e8] sm:$0xff] %vm2551, 0.0
  %4461 = vst.msk [vmem:[#allocation3 + $0x2f0] sm:$0xff] %vm2551, 0.0
  %4462 = vst.msk [vmem:[#allocation3 + $0x2f8] sm:$0x3] %vm4368, 0.0
  %4463 = vst.msk [vmem:[#allocation3 + $0x300] sm:$0xff] %vm2551, 0.0
  %4464 = vst.msk [vmem:[#allocation3 + $0x308] sm:$0xff] %vm2551, 0.0
  %4465 = vst.msk [vmem:[#allocation3 + $0x310] sm:$0x3] %vm4368, 0.0
  %4466 = vst.msk [vmem:[#allocation3 + $0x318] sm:$0xff] %vm2551, 0.0
  %4467 = vst.msk [vmem:[#allocation3 + $0x320] sm:$0xff] %vm2551, 0.0
  %4468 = vst.msk [vmem:[#allocation3 + $0x328] sm:$0x3] %vm4368, 0.0
  %4469 = vst.msk [vmem:[#allocation3 + $0x330] sm:$0xff] %vm2551, 0.0
  %4470 = vst.msk [vmem:[#allocation3 + $0x338] sm:$0xff] %vm2551, 0.0
  %4471 = vst.msk [vmem:[#allocation3 + $0x340] sm:$0x3] %vm4368, 0.0
  %4472 = vst.msk [vmem:[#allocation3 + $0x348] sm:$0xff] %vm2551, 0.0
  %4473 = vst.msk [vmem:[#allocation3 + $0x350] sm:$0xff] %vm2551, 0.0
  %4474 = vst.msk [vmem:[#allocation3 + $0x358] sm:$0x3] %vm4368, 0.0
  %s4475 = scalar_lea.vmem [#allocation3], 24
  %4476 = vst.msk [vmem:[%s4475 + $0x1] sm:$0xff] %vm2551, %v4302
  %4477 = vst.msk [vmem:[%s4475 + $0x9] sm:$0xff] %vm2551, %v4303
  %4478 = vst.msk [vmem:[%s4475 + $0x19] sm:$0xff] %vm2551, %v4304
  %4479 = vst.msk [vmem:[%s4475 + $0x21] sm:$0xff] %vm2551, %v4305
  %4480 = vst.msk [vmem:[%s4475 + $0x31] sm:$0xff] %vm2551, %v4306
  %4481 = vst.msk [vmem:[%s4475 + $0x39] sm:$0xff] %vm2551, %v4307
  %4482 = vst.msk [vmem:[%s4475 + $0x49] sm:$0xff] %vm2551, %v4308
  %4483 = vst.msk [vmem:[%s4475 + $0x51] sm:$0xff] %vm2551, %v4309
  %4484 = vst.msk [vmem:[%s4475 + $0x61] sm:$0xff] %vm2551, %v4310
  %4485 = vst.msk [vmem:[%s4475 + $0x69] sm:$0xff] %vm2551, %v4311
  %4486 = vst.msk [vmem:[%s4475 + $0x79] sm:$0xff] %vm2551, %v4312
  %4487 = vst.msk [vmem:[%s4475 + $0x81] sm:$0xff] %vm2551, %v4313
  %4488 = vst.msk [vmem:[%s4475 + $0x91] sm:$0xff] %vm2551, %v4314
  %4489 = vst.msk [vmem:[%s4475 + $0x99] sm:$0xff] %vm2551, %v4315
  %4490 = vst.msk [vmem:[%s4475 + $0xa9] sm:$0xff] %vm2551, %v4316
  %4491 = vst.msk [vmem:[%s4475 + $0xb1] sm:$0xff] %vm2551, %v4317
  %4492 = vst.msk [vmem:[%s4475 + $0xc1] sm:$0xff] %vm2551, %v4318
  %4493 = vst.msk [vmem:[%s4475 + $0xc9] sm:$0xff] %vm2551, %v4319
  %4494 = vst.msk [vmem:[%s4475 + $0xd9] sm:$0xff] %vm2551, %v4320
  %4495 = vst.msk [vmem:[%s4475 + $0xe1] sm:$0xff] %vm2551, %v4321
  %4496 = vst.msk [vmem:[%s4475 + $0xf1] sm:$0xff] %vm2551, %v4322
  %4497 = vst.msk [vmem:[%s4475 + $0xf9] sm:$0xff] %vm2551, %v4323
  %4498 = vst.msk [vmem:[%s4475 + $0x109] sm:$0xff] %vm2551, %v4324
  %4499 = vst.msk [vmem:[%s4475 + $0x111] sm:$0xff] %vm2551, %v4325
  %4500 = vst.msk [vmem:[%s4475 + $0x121] sm:$0xff] %vm2551, %v4326
  %4501 = vst.msk [vmem:[%s4475 + $0x129] sm:$0xff] %vm2551, %v4327
  %4502 = vst.msk [vmem:[%s4475 + $0x139] sm:$0xff] %vm2551, %v4328
  %4503 = vst.msk [vmem:[%s4475 + $0x141] sm:$0xff] %vm2551, %v4329
  %4504 = vst.msk [vmem:[%s4475 + $0x151] sm:$0xff] %vm2551, %v4330
  %4505 = vst.msk [vmem:[%s4475 + $0x159] sm:$0xff] %vm2551, %v4331
  %4506 = vst.msk [vmem:[%s4475 + $0x169] sm:$0xff] %vm2551, %v4332
  %4507 = vst.msk [vmem:[%s4475 + $0x171] sm:$0xff] %vm2551, %v4333
  %4508 = vst.msk [vmem:[%s4475 + $0x1b1] sm:$0xff] %vm2551, %v4334
  %4509 = vst.msk [vmem:[%s4475 + $0x1b9] sm:$0xff] %vm2551, %v4335
  %4510 = vst.msk [vmem:[%s4475 + $0x1c9] sm:$0xff] %vm2551, %v4336
  %4511 = vst.msk [vmem:[%s4475 + $0x1d1] sm:$0xff] %vm2551, %v4337
  %4512 = vst.msk [vmem:[%s4475 + $0x1e1] sm:$0xff] %vm2551, %v4338
  %4513 = vst.msk [vmem:[%s4475 + $0x1e9] sm:$0xff] %vm2551, %v4339
  %4514 = vst.msk [vmem:[%s4475 + $0x1f9] sm:$0xff] %vm2551, %v4340
  %4515 = vst.msk [vmem:[%s4475 + $0x201] sm:$0xff] %vm2551, %v4341
  %4516 = vst.msk [vmem:[%s4475 + $0x211] sm:$0xff] %vm2551, %v4342
  %4517 = vst.msk [vmem:[%s4475 + $0x219] sm:$0xff] %vm2551, %v4343
  %4518 = vst.msk [vmem:[%s4475 + $0x229] sm:$0xff] %vm2551, %v4344
  %4519 = vst.msk [vmem:[%s4475 + $0x231] sm:$0xff] %vm2551, %v4345
  %4520 = vst.msk [vmem:[%s4475 + $0x241] sm:$0xff] %vm2551, %v4346
  %4521 = vst.msk [vmem:[%s4475 + $0x249] sm:$0xff] %vm2551, %v4347
  %4522 = vst.msk [vmem:[%s4475 + $0x259] sm:$0xff] %vm2551, %v4348
  %4523 = vst.msk [vmem:[%s4475 + $0x261] sm:$0xff] %vm2551, %v4349
  %4524 = vst.msk [vmem:[%s4475 + $0x271] sm:$0xff] %vm2551, %v4350
  %4525 = vst.msk [vmem:[%s4475 + $0x279] sm:$0xff] %vm2551, %v4351
  %4526 = vst.msk [vmem:[%s4475 + $0x289] sm:$0xff] %vm2551, %v4352
  %4527 = vst.msk [vmem:[%s4475 + $0x291] sm:$0xff] %vm2551, %v4353
  %4528 = vst.msk [vmem:[%s4475 + $0x2a1] sm:$0xff] %vm2551, %v4354
  %4529 = vst.msk [vmem:[%s4475 + $0x2a9] sm:$0xff] %vm2551, %v4355
  %4530 = vst.msk [vmem:[%s4475 + $0x2b9] sm:$0xff] %vm2551, %v4356
  %4531 = vst.msk [vmem:[%s4475 + $0x2c1] sm:$0xff] %vm2551, %v4357
  %4532 = vst.msk [vmem:[%s4475 + $0x2d1] sm:$0xff] %vm2551, %v4358
  %4533 = vst.msk [vmem:[%s4475 + $0x2d9] sm:$0xff] %vm2551, %v4359
  %4534 = vst.msk [vmem:[%s4475 + $0x2e9] sm:$0xff] %vm2551, %v4360
  %4535 = vst.msk [vmem:[%s4475 + $0x2f1] sm:$0xff] %vm2551, %v4361
  %4536 = vst.msk [vmem:[%s4475 + $0x301] sm:$0xff] %vm2551, %v4362
  %4537 = vst.msk [vmem:[%s4475 + $0x309] sm:$0xff] %vm2551, %v4363
  %4538 = vst.msk [vmem:[%s4475 + $0x319] sm:$0xff] %vm2551, %v4364
  %4539 = vst.msk [vmem:[%s4475 + $0x321] sm:$0xff] %vm2551, %v4365
  %v4540 = vld [vmem:[#allocation3] sm:$0xff]
  %v4541 = vld [vmem:[#allocation3 + $0x8] sm:$0xff]
  %v4542 = vld [vmem:[#allocation3 + $0x10] sm:$0x3]
  %v4543 = vld [vmem:[#allocation3 + $0x18] sm:$0xff]
  %v4544 = vld [vmem:[#allocation3 + $0x20] sm:$0xff]
  %v4545 = vld [vmem:[#allocation3 + $0x28] sm:$0x3]
  %v4546 = vld [vmem:[#allocation3 + $0x30] sm:$0xff]
  %v4547 = vld [vmem:[#allocation3 + $0x38] sm:$0xff]
  %v4548 = vld [vmem:[#allocation3 + $0x40] sm:$0x3]
  %v4549 = vld [vmem:[#allocation3 + $0x48] sm:$0xff]
  %v4550 = vld [vmem:[#allocation3 + $0x50] sm:$0xff]
  %v4551 = vld [vmem:[#allocation3 + $0x58] sm:$0x3]
  %v4552 = vld [vmem:[#allocation3 + $0x60] sm:$0xff]
  %v4553 = vld [vmem:[#allocation3 + $0x68] sm:$0xff]
  %v4554 = vld [vmem:[#allocation3 + $0x70] sm:$0x3]
  %v4555 = vld [vmem:[#allocation3 + $0x78] sm:$0xff]
  %v4556 = vld [vmem:[#allocation3 + $0x80] sm:$0xff]
  %v4557 = vld [vmem:[#allocation3 + $0x88] sm:$0x3]
  %v4558 = vld [vmem:[#allocation3 + $0x90] sm:$0xff]
  %v4559 = vld [vmem:[#allocation3 + $0x98] sm:$0xff]
  %v4560 = vld [vmem:[#allocation3 + $0xa0] sm:$0x3]
  %v4561 = vld [vmem:[#allocation3 + $0xa8] sm:$0xff]
  %v4562 = vld [vmem:[#allocation3 + $0xb0] sm:$0xff]
  %v4563 = vld [vmem:[#allocation3 + $0xb8] sm:$0x3]
  %v4564 = vld [vmem:[#allocation3 + $0xc0] sm:$0xff]
  %v4565 = vld [vmem:[#allocation3 + $0xc8] sm:$0xff]
  %v4566 = vld [vmem:[#allocation3 + $0xd0] sm:$0x3]
  %v4567 = vld [vmem:[#allocation3 + $0xd8] sm:$0xff]
  %v4568 = vld [vmem:[#allocation3 + $0xe0] sm:$0xff]
  %v4569 = vld [vmem:[#allocation3 + $0xe8] sm:$0x3]
  %v4570 = vld [vmem:[#allocation3 + $0xf0] sm:$0xff]
  %v4571 = vld [vmem:[#allocation3 + $0xf8] sm:$0xff]
  %v4572 = vld [vmem:[#allocation3 + $0x100] sm:$0x3]
  %v4573 = vld [vmem:[#allocation3 + $0x108] sm:$0xff]
  %v4574 = vld [vmem:[#allocation3 + $0x110] sm:$0xff]
  %v4575 = vld [vmem:[#allocation3 + $0x118] sm:$0x3]
  %v4576 = vld [vmem:[#allocation3 + $0x120] sm:$0xff]
  %v4577 = vld [vmem:[#allocation3 + $0x128] sm:$0xff]
  %v4578 = vld [vmem:[#allocation3 + $0x130] sm:$0x3]
  %v4579 = vld [vmem:[#allocation3 + $0x138] sm:$0xff]
  %v4580 = vld [vmem:[#allocation3 + $0x140] sm:$0xff]
  %v4581 = vld [vmem:[#allocation3 + $0x148] sm:$0x3]
  %v4582 = vld [vmem:[#allocation3 + $0x150] sm:$0xff]
  %v4583 = vld [vmem:[#allocation3 + $0x158] sm:$0xff]
  %v4584 = vld [vmem:[#allocation3 + $0x160] sm:$0x3]
  %v4585 = vld [vmem:[#allocation3 + $0x168] sm:$0xff]
  %v4586 = vld [vmem:[#allocation3 + $0x170] sm:$0xff]
  %v4587 = vld [vmem:[#allocation3 + $0x178] sm:$0x3]
  %v4588 = vld [vmem:[#allocation3 + $0x180] sm:$0xff]
  %v4589 = vld [vmem:[#allocation3 + $0x188] sm:$0xff]
  %v4590 = vld [vmem:[#allocation3 + $0x190] sm:$0x3]
  %v4591 = vld [vmem:[#allocation3 + $0x198] sm:$0xff]
  %v4592 = vld [vmem:[#allocation3 + $0x1a0] sm:$0xff]
  %v4593 = vld [vmem:[#allocation3 + $0x1a8] sm:$0x3]
  %v4594 = vld [vmem:[#allocation3 + $0x1b0] sm:$0xff]
  %v4595 = vld [vmem:[#allocation3 + $0x1b8] sm:$0xff]
  %v4596 = vld [vmem:[#allocation3 + $0x1c0] sm:$0x3]
  %v4597 = vld [vmem:[#allocation3 + $0x1c8] sm:$0xff]
  %v4598 = vld [vmem:[#allocation3 + $0x1d0] sm:$0xff]
  %v4599 = vld [vmem:[#allocation3 + $0x1d8] sm:$0x3]
  %v4600 = vld [vmem:[#allocation3 + $0x1e0] sm:$0xff]
  %v4601 = vld [vmem:[#allocation3 + $0x1e8] sm:$0xff]
  %v4602 = vld [vmem:[#allocation3 + $0x1f0] sm:$0x3]
  %v4603 = vld [vmem:[#allocation3 + $0x1f8] sm:$0xff]
  %v4604 = vld [vmem:[#allocation3 + $0x200] sm:$0xff]
  %v4605 = vld [vmem:[#allocation3 + $0x208] sm:$0x3]
  %v4606 = vld [vmem:[#allocation3 + $0x210] sm:$0xff]
  %v4607 = vld [vmem:[#allocation3 + $0x218] sm:$0xff]
  %v4608 = vld [vmem:[#allocation3 + $0x220] sm:$0x3]
  %v4609 = vld [vmem:[#allocation3 + $0x228] sm:$0xff]
  %v4610 = vld [vmem:[#allocation3 + $0x230] sm:$0xff]
  %v4611 = vld [vmem:[#allocation3 + $0x238] sm:$0x3]
  %v4612 = vld [vmem:[#allocation3 + $0x240] sm:$0xff]
  %v4613 = vld [vmem:[#allocation3 + $0x248] sm:$0xff]
  %v4614 = vld [vmem:[#allocation3 + $0x250] sm:$0x3]
  %v4615 = vld [vmem:[#allocation3 + $0x258] sm:$0xff]
  %v4616 = vld [vmem:[#allocation3 + $0x260] sm:$0xff]
  %v4617 = vld [vmem:[#allocation3 + $0x268] sm:$0x3]
  %v4618 = vld [vmem:[#allocation3 + $0x270] sm:$0xff]
  %v4619 = vld [vmem:[#allocation3 + $0x278] sm:$0xff]
  %v4620 = vld [vmem:[#allocation3 + $0x280] sm:$0x3]
  %v4621 = vld [vmem:[#allocation3 + $0x288] sm:$0xff]
  %v4622 = vld [vmem:[#allocation3 + $0x290] sm:$0xff]
  %v4623 = vld [vmem:[#allocation3 + $0x298] sm:$0x3]
  %v4624 = vld [vmem:[#allocation3 + $0x2a0] sm:$0xff]
  %v4625 = vld [vmem:[#allocation3 + $0x2a8] sm:$0xff]
  %v4626 = vld [vmem:[#allocation3 + $0x2b0] sm:$0x3]
  %v4627 = vld [vmem:[#allocation3 + $0x2b8] sm:$0xff]
  %v4628 = vld [vmem:[#allocation3 + $0x2c0] sm:$0xff]
  %v4629 = vld [vmem:[#allocation3 + $0x2c8] sm:$0x3]
  %v4630 = vld [vmem:[#allocation3 + $0x2d0] sm:$0xff]
  %v4631 = vld [vmem:[#allocation3 + $0x2d8] sm:$0xff]
  %v4632 = vld [vmem:[#allocation3 + $0x2e0] sm:$0x3]
  %v4633 = vld [vmem:[#allocation3 + $0x2e8] sm:$0xff]
  %v4634 = vld [vmem:[#allocation3 + $0x2f0] sm:$0xff]
  %v4635 = vld [vmem:[#allocation3 + $0x2f8] sm:$0x3]
  %v4636 = vld [vmem:[#allocation3 + $0x300] sm:$0xff]
  %v4637 = vld [vmem:[#allocation3 + $0x308] sm:$0xff]
  %v4638 = vld [vmem:[#allocation3 + $0x310] sm:$0x3]
  %v4639 = vld [vmem:[#allocation3 + $0x318] sm:$0xff]
  %v4640 = vld [vmem:[#allocation3 + $0x320] sm:$0xff]
  %v4641 = vld [vmem:[#allocation3 + $0x328] sm:$0x3]
  %v4642 = vld [vmem:[#allocation3 + $0x330] sm:$0xff]
  %v4643 = vld [vmem:[#allocation3 + $0x338] sm:$0xff]
  %v4644 = vld [vmem:[#allocation3 + $0x340] sm:$0x3]
  %v4645 = vld [vmem:[#allocation3 + $0x348] sm:$0xff]
  %v4646 = vld [vmem:[#allocation3 + $0x350] sm:$0xff]
  %v4647 = vld [vmem:[#allocation3 + $0x358] sm:$0x3]
  %v4744 = vrot.slane %v4540, 1
  %v4745 = vrot.slane %v4541, 1
  %v4746 = vsel %vm577, %v4744, %v4745
  %v4747 = vrot.slane %v4542, 1
  %v4748 = vsel %vm577, %v4745, %v4747
  %v4749 = vrot.slane %v4543, 1
  %v4750 = vrot.slane %v4544, 1
  %v4751 = vsel %vm577, %v4749, %v4750
  %v4752 = vrot.slane %v4545, 1
  %v4753 = vsel %vm577, %v4750, %v4752
  %v4754 = vrot.slane %v4546, 1
  %v4755 = vrot.slane %v4547, 1
  %v4756 = vsel %vm577, %v4754, %v4755
  %v4757 = vrot.slane %v4548, 1
  %v4758 = vsel %vm577, %v4755, %v4757
  %v4759 = vrot.slane %v4549, 1
  %v4760 = vrot.slane %v4550, 1
  %v4761 = vsel %vm577, %v4759, %v4760
  %v4762 = vrot.slane %v4551, 1
  %v4763 = vsel %vm577, %v4760, %v4762
  %v4764 = vrot.slane %v4552, 1
  %v4765 = vrot.slane %v4553, 1
  %v4766 = vsel %vm577, %v4764, %v4765
  %v4767 = vrot.slane %v4554, 1
  %v4768 = vsel %vm577, %v4765, %v4767
  %v4769 = vrot.slane %v4555, 1
  %v4770 = vrot.slane %v4556, 1
  %v4771 = vsel %vm577, %v4769, %v4770
  %v4772 = vrot.slane %v4557, 1
  %v4773 = vsel %vm577, %v4770, %v4772
  %v4774 = vrot.slane %v4558, 1
  %v4775 = vrot.slane %v4559, 1
  %v4776 = vsel %vm577, %v4774, %v4775
  %v4777 = vrot.slane %v4560, 1
  %v4778 = vsel %vm577, %v4775, %v4777
  %v4779 = vrot.slane %v4561, 1
  %v4780 = vrot.slane %v4562, 1
  %v4781 = vsel %vm577, %v4779, %v4780
  %v4782 = vrot.slane %v4563, 1
  %v4783 = vsel %vm577, %v4780, %v4782
  %v4784 = vrot.slane %v4564, 1
  %v4785 = vrot.slane %v4565, 1
  %v4786 = vsel %vm577, %v4784, %v4785
  %v4787 = vrot.slane %v4566, 1
  %v4788 = vsel %vm577, %v4785, %v4787
  %v4789 = vrot.slane %v4567, 1
  %v4790 = vrot.slane %v4568, 1
  %v4791 = vsel %vm577, %v4789, %v4790
  %v4792 = vrot.slane %v4569, 1
  %v4793 = vsel %vm577, %v4790, %v4792
  %v4794 = vrot.slane %v4570, 1
  %v4795 = vrot.slane %v4571, 1
  %v4796 = vsel %vm577, %v4794, %v4795
  %v4797 = vrot.slane %v4572, 1
  %v4798 = vsel %vm577, %v4795, %v4797
  %v4799 = vrot.slane %v4573, 1
  %v4800 = vrot.slane %v4574, 1
  %v4801 = vsel %vm577, %v4799, %v4800
  %v4802 = vrot.slane %v4575, 1
  %v4803 = vsel %vm577, %v4800, %v4802
  %v4804 = vrot.slane %v4576, 1
  %v4805 = vrot.slane %v4577, 1
  %v4806 = vsel %vm577, %v4804, %v4805
  %v4807 = vrot.slane %v4578, 1
  %v4808 = vsel %vm577, %v4805, %v4807
  %v4809 = vrot.slane %v4579, 1
  %v4810 = vrot.slane %v4580, 1
  %v4811 = vsel %vm577, %v4809, %v4810
  %v4812 = vrot.slane %v4581, 1
  %v4813 = vsel %vm577, %v4810, %v4812
  %v4814 = vrot.slane %v4582, 1
  %v4815 = vrot.slane %v4583, 1
  %v4816 = vsel %vm577, %v4814, %v4815
  %v4817 = vrot.slane %v4584, 1
  %v4818 = vsel %vm577, %v4815, %v4817
  %v4819 = vrot.slane %v4585, 1
  %v4820 = vrot.slane %v4586, 1
  %v4821 = vsel %vm577, %v4819, %v4820
  %v4822 = vrot.slane %v4587, 1
  %v4823 = vsel %vm577, %v4820, %v4822
  %v4824 = vrot.slane %v4594, 1
  %v4825 = vrot.slane %v4595, 1
  %v4826 = vsel %vm577, %v4824, %v4825
  %v4827 = vrot.slane %v4596, 1
  %v4828 = vsel %vm577, %v4825, %v4827
  %v4829 = vrot.slane %v4597, 1
  %v4830 = vrot.slane %v4598, 1
  %v4831 = vsel %vm577, %v4829, %v4830
  %v4832 = vrot.slane %v4599, 1
  %v4833 = vsel %vm577, %v4830, %v4832
  %v4834 = vrot.slane %v4600, 1
  %v4835 = vrot.slane %v4601, 1
  %v4836 = vsel %vm577, %v4834, %v4835
  %v4837 = vrot.slane %v4602, 1
  %v4838 = vsel %vm577, %v4835, %v4837
  %v4839 = vrot.slane %v4603, 1
  %v4840 = vrot.slane %v4604, 1
  %v4841 = vsel %vm577, %v4839, %v4840
  %v4842 = vrot.slane %v4605, 1
  %v4843 = vsel %vm577, %v4840, %v4842
  %v4844 = vrot.slane %v4606, 1
  %v4845 = vrot.slane %v4607, 1
  %v4846 = vsel %vm577, %v4844, %v4845
  %v4847 = vrot.slane %v4608, 1
  %v4848 = vsel %vm577, %v4845, %v4847
  %v4849 = vrot.slane %v4609, 1
  %v4850 = vrot.slane %v4610, 1
  %v4851 = vsel %vm577, %v4849, %v4850
  %v4852 = vrot.slane %v4611, 1
  %v4853 = vsel %vm577, %v4850, %v4852
  %v4854 = vrot.slane %v4612, 1
  %v4855 = vrot.slane %v4613, 1
  %v4856 = vsel %vm577, %v4854, %v4855
  %v4857 = vrot.slane %v4614, 1
  %v4858 = vsel %vm577, %v4855, %v4857
  %v4859 = vrot.slane %v4615, 1
  %v4860 = vrot.slane %v4616, 1
  %v4861 = vsel %vm577, %v4859, %v4860
  %v4862 = vrot.slane %v4617, 1
  %v4863 = vsel %vm577, %v4860, %v4862
  %v4864 = vrot.slane %v4618, 1
  %v4865 = vrot.slane %v4619, 1
  %v4866 = vsel %vm577, %v4864, %v4865
  %v4867 = vrot.slane %v4620, 1
  %v4868 = vsel %vm577, %v4865, %v4867
  %v4869 = vrot.slane %v4621, 1
  %v4870 = vrot.slane %v4622, 1
  %v4871 = vsel %vm577, %v4869, %v4870
  %v4872 = vrot.slane %v4623, 1
  %v4873 = vsel %vm577, %v4870, %v4872
  %v4874 = vrot.slane %v4624, 1
  %v4875 = vrot.slane %v4625, 1
  %v4876 = vsel %vm577, %v4874, %v4875
  %v4877 = vrot.slane %v4626, 1
  %v4878 = vsel %vm577, %v4875, %v4877
  %v4879 = vrot.slane %v4627, 1
  %v4880 = vrot.slane %v4628, 1
  %v4881 = vsel %vm577, %v4879, %v4880
  %v4882 = vrot.slane %v4629, 1
  %v4883 = vsel %vm577, %v4880, %v4882
  %v4884 = vrot.slane %v4630, 1
  %v4885 = vrot.slane %v4631, 1
  %v4886 = vsel %vm577, %v4884, %v4885
  %v4887 = vrot.slane %v4632, 1
  %v4888 = vsel %vm577, %v4885, %v4887
  %v4889 = vrot.slane %v4633, 1
  %v4890 = vrot.slane %v4634, 1
  %v4891 = vsel %vm577, %v4889, %v4890
  %v4892 = vrot.slane %v4635, 1
  %v4893 = vsel %vm577, %v4890, %v4892
  %v4894 = vrot.slane %v4636, 1
  %v4895 = vrot.slane %v4637, 1
  %v4896 = vsel %vm577, %v4894, %v4895
  %v4897 = vrot.slane %v4638, 1
  %v4898 = vsel %vm577, %v4895, %v4897
  %v4899 = vrot.slane %v4639, 1
  %v4900 = vrot.slane %v4640, 1
  %v4901 = vsel %vm577, %v4899, %v4900
  %v4902 = vrot.slane %v4641, 1
  %v4903 = vsel %vm577, %v4900, %v4902
  %v4904 = vrot.slane %v4540, 2
  %v4905 = vrot.slane %v4541, 2
  %v4906 = vsel %vm738, %v4904, %v4905
  %v4907 = vrot.slane %v4542, 2
  %v4908 = vsel %vm738, %v4905, %v4907
  %v4909 = vrot.slane %v4543, 2
  %v4910 = vrot.slane %v4544, 2
  %v4911 = vsel %vm738, %v4909, %v4910
  %v4912 = vrot.slane %v4545, 2
  %v4913 = vsel %vm738, %v4910, %v4912
  %v4914 = vrot.slane %v4546, 2
  %v4915 = vrot.slane %v4547, 2
  %v4916 = vsel %vm738, %v4914, %v4915
  %v4917 = vrot.slane %v4548, 2
  %v4918 = vsel %vm738, %v4915, %v4917
  %v4919 = vrot.slane %v4549, 2
  %v4920 = vrot.slane %v4550, 2
  %v4921 = vsel %vm738, %v4919, %v4920
  %v4922 = vrot.slane %v4551, 2
  %v4923 = vsel %vm738, %v4920, %v4922
  %v4924 = vrot.slane %v4552, 2
  %v4925 = vrot.slane %v4553, 2
  %v4926 = vsel %vm738, %v4924, %v4925
  %v4927 = vrot.slane %v4554, 2
  %v4928 = vsel %vm738, %v4925, %v4927
  %v4929 = vrot.slane %v4555, 2
  %v4930 = vrot.slane %v4556, 2
  %v4931 = vsel %vm738, %v4929, %v4930
  %v4932 = vrot.slane %v4557, 2
  %v4933 = vsel %vm738, %v4930, %v4932
  %v4934 = vrot.slane %v4558, 2
  %v4935 = vrot.slane %v4559, 2
  %v4936 = vsel %vm738, %v4934, %v4935
  %v4937 = vrot.slane %v4560, 2
  %v4938 = vsel %vm738, %v4935, %v4937
  %v4939 = vrot.slane %v4561, 2
  %v4940 = vrot.slane %v4562, 2
  %v4941 = vsel %vm738, %v4939, %v4940
  %v4942 = vrot.slane %v4563, 2
  %v4943 = vsel %vm738, %v4940, %v4942
  %v4944 = vrot.slane %v4564, 2
  %v4945 = vrot.slane %v4565, 2
  %v4946 = vsel %vm738, %v4944, %v4945
  %v4947 = vrot.slane %v4566, 2
  %v4948 = vsel %vm738, %v4945, %v4947
  %v4949 = vrot.slane %v4567, 2
  %v4950 = vrot.slane %v4568, 2
  %v4951 = vsel %vm738, %v4949, %v4950
  %v4952 = vrot.slane %v4569, 2
  %v4953 = vsel %vm738, %v4950, %v4952
  %v4954 = vrot.slane %v4570, 2
  %v4955 = vrot.slane %v4571, 2
  %v4956 = vsel %vm738, %v4954, %v4955
  %v4957 = vrot.slane %v4572, 2
  %v4958 = vsel %vm738, %v4955, %v4957
  %v4959 = vrot.slane %v4573, 2
  %v4960 = vrot.slane %v4574, 2
  %v4961 = vsel %vm738, %v4959, %v4960
  %v4962 = vrot.slane %v4575, 2
  %v4963 = vsel %vm738, %v4960, %v4962
  %v4964 = vrot.slane %v4576, 2
  %v4965 = vrot.slane %v4577, 2
  %v4966 = vsel %vm738, %v4964, %v4965
  %v4967 = vrot.slane %v4578, 2
  %v4968 = vsel %vm738, %v4965, %v4967
  %v4969 = vrot.slane %v4579, 2
  %v4970 = vrot.slane %v4580, 2
  %v4971 = vsel %vm738, %v4969, %v4970
  %v4972 = vrot.slane %v4581, 2
  %v4973 = vsel %vm738, %v4970, %v4972
  %v4974 = vrot.slane %v4582, 2
  %v4975 = vrot.slane %v4583, 2
  %v4976 = vsel %vm738, %v4974, %v4975
  %v4977 = vrot.slane %v4584, 2
  %v4978 = vsel %vm738, %v4975, %v4977
  %v4979 = vrot.slane %v4585, 2
  %v4980 = vrot.slane %v4586, 2
  %v4981 = vsel %vm738, %v4979, %v4980
  %v4982 = vrot.slane %v4587, 2
  %v4983 = vsel %vm738, %v4980, %v4982
  %v4984 = vrot.slane %v4594, 2
  %v4985 = vrot.slane %v4595, 2
  %v4986 = vsel %vm738, %v4984, %v4985
  %v4987 = vrot.slane %v4596, 2
  %v4988 = vsel %vm738, %v4985, %v4987
  %v4989 = vrot.slane %v4597, 2
  %v4990 = vrot.slane %v4598, 2
  %v4991 = vsel %vm738, %v4989, %v4990
  %v4992 = vrot.slane %v4599, 2
  %v4993 = vsel %vm738, %v4990, %v4992
  %v4994 = vrot.slane %v4600, 2
  %v4995 = vrot.slane %v4601, 2
  %v4996 = vsel %vm738, %v4994, %v4995
  %v4997 = vrot.slane %v4602, 2
  %v4998 = vsel %vm738, %v4995, %v4997
  %v4999 = vrot.slane %v4603, 2
  %v5000 = vrot.slane %v4604, 2
  %v5001 = vsel %vm738, %v4999, %v5000
  %v5002 = vrot.slane %v4605, 2
  %v5003 = vsel %vm738, %v5000, %v5002
  %v5004 = vrot.slane %v4606, 2
  %v5005 = vrot.slane %v4607, 2
  %v5006 = vsel %vm738, %v5004, %v5005
  %v5007 = vrot.slane %v4608, 2
  %v5008 = vsel %vm738, %v5005, %v5007
  %v5009 = vrot.slane %v4609, 2
  %v5010 = vrot.slane %v4610, 2
  %v5011 = vsel %vm738, %v5009, %v5010
  %v5012 = vrot.slane %v4611, 2
  %v5013 = vsel %vm738, %v5010, %v5012
  %v5014 = vrot.slane %v4612, 2
  %v5015 = vrot.slane %v4613, 2
  %v5016 = vsel %vm738, %v5014, %v5015
  %v5017 = vrot.slane %v4614, 2
  %v5018 = vsel %vm738, %v5015, %v5017
  %v5019 = vrot.slane %v4615, 2
  %v5020 = vrot.slane %v4616, 2
  %v5021 = vsel %vm738, %v5019, %v5020
  %v5022 = vrot.slane %v4617, 2
  %v5023 = vsel %vm738, %v5020, %v5022
  %v5024 = vrot.slane %v4618, 2
  %v5025 = vrot.slane %v4619, 2
  %v5026 = vsel %vm738, %v5024, %v5025
  %v5027 = vrot.slane %v4620, 2
  %v5028 = vsel %vm738, %v5025, %v5027
  %v5029 = vrot.slane %v4621, 2
  %v5030 = vrot.slane %v4622, 2
  %v5031 = vsel %vm738, %v5029, %v5030
  %v5032 = vrot.slane %v4623, 2
  %v5033 = vsel %vm738, %v5030, %v5032
  %v5034 = vrot.slane %v4624, 2
  %v5035 = vrot.slane %v4625, 2
  %v5036 = vsel %vm738, %v5034, %v5035
  %v5037 = vrot.slane %v4626, 2
  %v5038 = vsel %vm738, %v5035, %v5037
  %v5039 = vrot.slane %v4627, 2
  %v5040 = vrot.slane %v4628, 2
  %v5041 = vsel %vm738, %v5039, %v5040
  %v5042 = vrot.slane %v4629, 2
  %v5043 = vsel %vm738, %v5040, %v5042
  %v5044 = vrot.slane %v4630, 2
  %v5045 = vrot.slane %v4631, 2
  %v5046 = vsel %vm738, %v5044, %v5045
  %v5047 = vrot.slane %v4632, 2
  %v5048 = vsel %vm738, %v5045, %v5047
  %v5049 = vrot.slane %v4633, 2
  %v5050 = vrot.slane %v4634, 2
  %v5051 = vsel %vm738, %v5049, %v5050
  %v5052 = vrot.slane %v4635, 2
  %v5053 = vsel %vm738, %v5050, %v5052
  %v5054 = vrot.slane %v4636, 2
  %v5055 = vrot.slane %v4637, 2
  %v5056 = vsel %vm738, %v5054, %v5055
  %v5057 = vrot.slane %v4638, 2
  %v5058 = vsel %vm738, %v5055, %v5057
  %v5059 = vrot.slane %v4639, 2
  %v5060 = vrot.slane %v4640, 2
  %v5061 = vsel %vm738, %v5059, %v5060
  %v5062 = vrot.slane %v4641, 2
  %v5063 = vsel %vm738, %v5060, %v5062
  %v5070 = vrot.slane %v4588, 1
  %v5071 = vrot.slane %v4589, 1
  %v5072 = vsel %vm577, %v5070, %v5071
  %v5073 = vrot.slane %v4590, 1
  %v5074 = vsel %vm577, %v5071, %v5073
  %v5075 = vrot.slane %v4642, 1
  %v5076 = vrot.slane %v4643, 1
  %v5077 = vsel %vm577, %v5075, %v5076
  %v5078 = vrot.slane %v4644, 1
  %v5079 = vsel %vm577, %v5076, %v5078
  %v5080 = vrot.slane %v4588, 2
  %v5081 = vrot.slane %v4589, 2
  %v5082 = vsel %vm738, %v5080, %v5081
  %v5083 = vrot.slane %v4590, 2
  %v5084 = vsel %vm738, %v5081, %v5083
  %v5085 = vrot.slane %v4642, 2
  %v5086 = vrot.slane %v4643, 2
  %v5087 = vsel %vm738, %v5085, %v5086
  %v5088 = vrot.slane %v4644, 2
  %v5089 = vsel %vm738, %v5086, %v5088
  %v5096 = vrot.slane %v4591, 1
  %v5097 = vrot.slane %v4592, 1
  %v5098 = vsel %vm577, %v5096, %v5097
  %v5099 = vrot.slane %v4593, 1
  %v5100 = vsel %vm577, %v5097, %v5099
  %v5101 = vrot.slane %v4645, 1
  %v5102 = vrot.slane %v4646, 1
  %v5103 = vsel %vm577, %v5101, %v5102
  %v5104 = vrot.slane %v4647, 1
  %v5105 = vsel %vm577, %v5102, %v5104
  %v5106 = vrot.slane %v4591, 2
  %v5107 = vrot.slane %v4592, 2
  %v5108 = vsel %vm738, %v5106, %v5107
  %v5109 = vrot.slane %v4593, 2
  %v5110 = vsel %vm738, %v5107, %v5109
  %v5111 = vrot.slane %v4645, 2
  %v5112 = vrot.slane %v4646, 2
  %v5113 = vsel %vm738, %v5111, %v5112
  %v5114 = vrot.slane %v4647, 2
  %v5115 = vsel %vm738, %v5112, %v5114
  %5116 = vrot.lane.b32.xlu0 %v4746, 8
  %v5117 = vpop.permute.xlu0 %5116
  %5118 = vrot.lane.b32.xlu0 %v4748, 8
  %v5119 = vpop.permute.xlu0 %5118
  %5120 = vrot.lane.b32.xlu0 %v4751, 8
  %v5121 = vpop.permute.xlu0 %5120
  %5122 = vrot.lane.b32.xlu0 %v4753, 8
  %v5123 = vpop.permute.xlu0 %5122
  %5124 = vrot.lane.b32.xlu0 %v4756, 8
  %v5125 = vpop.permute.xlu0 %5124
  %5126 = vrot.lane.b32.xlu0 %v4758, 8
  %v5127 = vpop.permute.xlu0 %5126
  %5128 = vrot.lane.b32.xlu0 %v4761, 8
  %v5129 = vpop.permute.xlu0 %5128
  %5130 = vrot.lane.b32.xlu0 %v4763, 8
  %v5131 = vpop.permute.xlu0 %5130
  %5132 = vrot.lane.b32.xlu0 %v4766, 8
  %v5133 = vpop.permute.xlu0 %5132
  %5134 = vrot.lane.b32.xlu0 %v4768, 8
  %v5135 = vpop.permute.xlu0 %5134
  %5136 = vrot.lane.b32.xlu0 %v4771, 8
  %v5137 = vpop.permute.xlu0 %5136
  %5138 = vrot.lane.b32.xlu0 %v4773, 8
  %v5139 = vpop.permute.xlu0 %5138
  %5140 = vrot.lane.b32.xlu0 %v4776, 8
  %v5141 = vpop.permute.xlu0 %5140
  %5142 = vrot.lane.b32.xlu0 %v4778, 8
  %v5143 = vpop.permute.xlu0 %5142
  %5144 = vrot.lane.b32.xlu0 %v4781, 8
  %v5145 = vpop.permute.xlu0 %5144
  %5146 = vrot.lane.b32.xlu0 %v4783, 8
  %v5147 = vpop.permute.xlu0 %5146
  %5148 = vrot.lane.b32.xlu0 %v4786, 8
  %v5149 = vpop.permute.xlu0 %5148
  %5150 = vrot.lane.b32.xlu0 %v4788, 8
  %v5151 = vpop.permute.xlu0 %5150
  %5152 = vrot.lane.b32.xlu0 %v4791, 8
  %v5153 = vpop.permute.xlu0 %5152
  %5154 = vrot.lane.b32.xlu0 %v4793, 8
  %v5155 = vpop.permute.xlu0 %5154
  %5156 = vrot.lane.b32.xlu0 %v4796, 8
  %v5157 = vpop.permute.xlu0 %5156
  %5158 = vrot.lane.b32.xlu0 %v4798, 8
  %v5159 = vpop.permute.xlu0 %5158
  %5160 = vrot.lane.b32.xlu0 %v4801, 8
  %v5161 = vpop.permute.xlu0 %5160
  %5162 = vrot.lane.b32.xlu0 %v4803, 8
  %v5163 = vpop.permute.xlu0 %5162
  %5164 = vrot.lane.b32.xlu0 %v4806, 8
  %v5165 = vpop.permute.xlu0 %5164
  %5166 = vrot.lane.b32.xlu0 %v4808, 8
  %v5167 = vpop.permute.xlu0 %5166
  %5168 = vrot.lane.b32.xlu0 %v4811, 8
  %v5169 = vpop.permute.xlu0 %5168
  %5170 = vrot.lane.b32.xlu0 %v4813, 8
  %v5171 = vpop.permute.xlu0 %5170
  %5172 = vrot.lane.b32.xlu0 %v4816, 8
  %v5173 = vpop.permute.xlu0 %5172
  %5174 = vrot.lane.b32.xlu0 %v4818, 8
  %v5175 = vpop.permute.xlu0 %5174
  %5176 = vrot.lane.b32.xlu0 %v4821, 8
  %v5177 = vpop.permute.xlu0 %5176
  %5178 = vrot.lane.b32.xlu0 %v4823, 8
  %v5179 = vpop.permute.xlu0 %5178
  %5180 = vrot.lane.b32.xlu0 %v4826, 8
  %v5181 = vpop.permute.xlu0 %5180
  %5182 = vrot.lane.b32.xlu0 %v4828, 8
  %v5183 = vpop.permute.xlu0 %5182
  %5184 = vrot.lane.b32.xlu0 %v4831, 8
  %v5185 = vpop.permute.xlu0 %5184
  %5186 = vrot.lane.b32.xlu0 %v4833, 8
  %v5187 = vpop.permute.xlu0 %5186
  %5188 = vrot.lane.b32.xlu0 %v4836, 8
  %v5189 = vpop.permute.xlu0 %5188
  %5190 = vrot.lane.b32.xlu0 %v4838, 8
  %v5191 = vpop.permute.xlu0 %5190
  %5192 = vrot.lane.b32.xlu0 %v4841, 8
  %v5193 = vpop.permute.xlu0 %5192
  %5194 = vrot.lane.b32.xlu0 %v4843, 8
  %v5195 = vpop.permute.xlu0 %5194
  %5196 = vrot.lane.b32.xlu0 %v4846, 8
  %v5197 = vpop.permute.xlu0 %5196
  %5198 = vrot.lane.b32.xlu0 %v4848, 8
  %v5199 = vpop.permute.xlu0 %5198
  %5200 = vrot.lane.b32.xlu0 %v4851, 8
  %v5201 = vpop.permute.xlu0 %5200
  %5202 = vrot.lane.b32.xlu0 %v4853, 8
  %v5203 = vpop.permute.xlu0 %5202
  %5204 = vrot.lane.b32.xlu0 %v4856, 8
  %v5205 = vpop.permute.xlu0 %5204
  %5206 = vrot.lane.b32.xlu0 %v4858, 8
  %v5207 = vpop.permute.xlu0 %5206
  %5208 = vrot.lane.b32.xlu0 %v4861, 8
  %v5209 = vpop.permute.xlu0 %5208
  %5210 = vrot.lane.b32.xlu0 %v4863, 8
  %v5211 = vpop.permute.xlu0 %5210
  %5212 = vrot.lane.b32.xlu0 %v4866, 8
  %v5213 = vpop.permute.xlu0 %5212
  %5214 = vrot.lane.b32.xlu0 %v4868, 8
  %v5215 = vpop.permute.xlu0 %5214
  %5216 = vrot.lane.b32.xlu0 %v4871, 8
  %v5217 = vpop.permute.xlu0 %5216
  %5218 = vrot.lane.b32.xlu0 %v4873, 8
  %v5219 = vpop.permute.xlu0 %5218
  %5220 = vrot.lane.b32.xlu0 %v4876, 8
  %v5221 = vpop.permute.xlu0 %5220
  %5222 = vrot.lane.b32.xlu0 %v4878, 8
  %v5223 = vpop.permute.xlu0 %5222
  %5224 = vrot.lane.b32.xlu0 %v4881, 8
  %v5225 = vpop.permute.xlu0 %5224
  %5226 = vrot.lane.b32.xlu0 %v4883, 8
  %v5227 = vpop.permute.xlu0 %5226
  %5228 = vrot.lane.b32.xlu0 %v4886, 8
  %v5229 = vpop.permute.xlu0 %5228
  %5230 = vrot.lane.b32.xlu0 %v4888, 8
  %v5231 = vpop.permute.xlu0 %5230
  %5232 = vrot.lane.b32.xlu0 %v4891, 8
  %v5233 = vpop.permute.xlu0 %5232
  %5234 = vrot.lane.b32.xlu0 %v4893, 8
  %v5235 = vpop.permute.xlu0 %5234
  %5236 = vrot.lane.b32.xlu0 %v4896, 8
  %v5237 = vpop.permute.xlu0 %5236
  %5238 = vrot.lane.b32.xlu0 %v4898, 8
  %v5239 = vpop.permute.xlu0 %5238
  %5240 = vrot.lane.b32.xlu0 %v4901, 8
  %v5241 = vpop.permute.xlu0 %5240
  %5242 = vrot.lane.b32.xlu0 %v4903, 8
  %v5243 = vpop.permute.xlu0 %5242
  %5308 = vrot.lane.b32.xlu0 %v4906, 16
  %v5309 = vpop.permute.xlu0 %5308
  %5310 = vrot.lane.b32.xlu0 %v4908, 16
  %v5311 = vpop.permute.xlu0 %5310
  %5312 = vrot.lane.b32.xlu0 %v4911, 16
  %v5313 = vpop.permute.xlu0 %5312
  %5314 = vrot.lane.b32.xlu0 %v4913, 16
  %v5315 = vpop.permute.xlu0 %5314
  %5316 = vrot.lane.b32.xlu0 %v4916, 16
  %v5317 = vpop.permute.xlu0 %5316
  %5318 = vrot.lane.b32.xlu0 %v4918, 16
  %v5319 = vpop.permute.xlu0 %5318
  %5320 = vrot.lane.b32.xlu0 %v4921, 16
  %v5321 = vpop.permute.xlu0 %5320
  %5322 = vrot.lane.b32.xlu0 %v4923, 16
  %v5323 = vpop.permute.xlu0 %5322
  %5324 = vrot.lane.b32.xlu0 %v4926, 16
  %v5325 = vpop.permute.xlu0 %5324
  %5326 = vrot.lane.b32.xlu0 %v4928, 16
  %v5327 = vpop.permute.xlu0 %5326
  %5328 = vrot.lane.b32.xlu0 %v4931, 16
  %v5329 = vpop.permute.xlu0 %5328
  %5330 = vrot.lane.b32.xlu0 %v4933, 16
  %v5331 = vpop.permute.xlu0 %5330
  %5332 = vrot.lane.b32.xlu0 %v4936, 16
  %v5333 = vpop.permute.xlu0 %5332
  %5334 = vrot.lane.b32.xlu0 %v4938, 16
  %v5335 = vpop.permute.xlu0 %5334
  %5336 = vrot.lane.b32.xlu0 %v4941, 16
  %v5337 = vpop.permute.xlu0 %5336
  %5338 = vrot.lane.b32.xlu0 %v4943, 16
  %v5339 = vpop.permute.xlu0 %5338
  %5340 = vrot.lane.b32.xlu0 %v4946, 16
  %v5341 = vpop.permute.xlu0 %5340
  %5342 = vrot.lane.b32.xlu0 %v4948, 16
  %v5343 = vpop.permute.xlu0 %5342
  %5344 = vrot.lane.b32.xlu0 %v4951, 16
  %v5345 = vpop.permute.xlu0 %5344
  %5346 = vrot.lane.b32.xlu0 %v4953, 16
  %v5347 = vpop.permute.xlu0 %5346
  %5348 = vrot.lane.b32.xlu0 %v4956, 16
  %v5349 = vpop.permute.xlu0 %5348
  %5350 = vrot.lane.b32.xlu0 %v4958, 16
  %v5351 = vpop.permute.xlu0 %5350
  %5352 = vrot.lane.b32.xlu0 %v4961, 16
  %v5353 = vpop.permute.xlu0 %5352
  %5354 = vrot.lane.b32.xlu0 %v4963, 16
  %v5355 = vpop.permute.xlu0 %5354
  %5356 = vrot.lane.b32.xlu0 %v4966, 16
  %v5357 = vpop.permute.xlu0 %5356
  %5358 = vrot.lane.b32.xlu0 %v4968, 16
  %v5359 = vpop.permute.xlu0 %5358
  %5360 = vrot.lane.b32.xlu0 %v4971, 16
  %v5361 = vpop.permute.xlu0 %5360
  %5362 = vrot.lane.b32.xlu0 %v4973, 16
  %v5363 = vpop.permute.xlu0 %5362
  %5364 = vrot.lane.b32.xlu0 %v4976, 16
  %v5365 = vpop.permute.xlu0 %5364
  %5366 = vrot.lane.b32.xlu0 %v4978, 16
  %v5367 = vpop.permute.xlu0 %5366
  %5368 = vrot.lane.b32.xlu0 %v4981, 16
  %v5369 = vpop.permute.xlu0 %5368
  %5370 = vrot.lane.b32.xlu0 %v4983, 16
  %v5371 = vpop.permute.xlu0 %5370
  %5372 = vrot.lane.b32.xlu0 %v4986, 16
  %v5373 = vpop.permute.xlu0 %5372
  %5374 = vrot.lane.b32.xlu0 %v4988, 16
  %v5375 = vpop.permute.xlu0 %5374
  %5376 = vrot.lane.b32.xlu0 %v4991, 16
  %v5377 = vpop.permute.xlu0 %5376
  %5378 = vrot.lane.b32.xlu0 %v4993, 16
  %v5379 = vpop.permute.xlu0 %5378
  %5380 = vrot.lane.b32.xlu0 %v4996, 16
  %v5381 = vpop.permute.xlu0 %5380
  %5382 = vrot.lane.b32.xlu0 %v4998, 16
  %v5383 = vpop.permute.xlu0 %5382
  %5384 = vrot.lane.b32.xlu0 %v5001, 16
  %v5385 = vpop.permute.xlu0 %5384
  %5386 = vrot.lane.b32.xlu0 %v5003, 16
  %v5387 = vpop.permute.xlu0 %5386
  %5388 = vrot.lane.b32.xlu0 %v5006, 16
  %v5389 = vpop.permute.xlu0 %5388
  %5390 = vrot.lane.b32.xlu0 %v5008, 16
  %v5391 = vpop.permute.xlu0 %5390
  %5392 = vrot.lane.b32.xlu0 %v5011, 16
  %v5393 = vpop.permute.xlu0 %5392
  %5394 = vrot.lane.b32.xlu0 %v5013, 16
  %v5395 = vpop.permute.xlu0 %5394
  %5396 = vrot.lane.b32.xlu0 %v5016, 16
  %v5397 = vpop.permute.xlu0 %5396
  %5398 = vrot.lane.b32.xlu0 %v5018, 16
  %v5399 = vpop.permute.xlu0 %5398
  %5400 = vrot.lane.b32.xlu0 %v5021, 16
  %v5401 = vpop.permute.xlu0 %5400
  %5402 = vrot.lane.b32.xlu0 %v5023, 16
  %v5403 = vpop.permute.xlu0 %5402
  %5404 = vrot.lane.b32.xlu0 %v5026, 16
  %v5405 = vpop.permute.xlu0 %5404
  %5406 = vrot.lane.b32.xlu0 %v5028, 16
  %v5407 = vpop.permute.xlu0 %5406
  %5408 = vrot.lane.b32.xlu0 %v5031, 16
  %v5409 = vpop.permute.xlu0 %5408
  %5410 = vrot.lane.b32.xlu0 %v5033, 16
  %v5411 = vpop.permute.xlu0 %5410
  %5412 = vrot.lane.b32.xlu0 %v5036, 16
  %v5413 = vpop.permute.xlu0 %5412
  %5414 = vrot.lane.b32.xlu0 %v5038, 16
  %v5415 = vpop.permute.xlu0 %5414
  %5416 = vrot.lane.b32.xlu0 %v5041, 16
  %v5417 = vpop.permute.xlu0 %5416
  %5418 = vrot.lane.b32.xlu0 %v5043, 16
  %v5419 = vpop.permute.xlu0 %5418
  %5420 = vrot.lane.b32.xlu0 %v5046, 16
  %v5421 = vpop.permute.xlu0 %5420
  %5422 = vrot.lane.b32.xlu0 %v5048, 16
  %v5423 = vpop.permute.xlu0 %5422
  %5424 = vrot.lane.b32.xlu0 %v5051, 16
  %v5425 = vpop.permute.xlu0 %5424
  %5426 = vrot.lane.b32.xlu0 %v5053, 16
  %v5427 = vpop.permute.xlu0 %5426
  %5428 = vrot.lane.b32.xlu0 %v5056, 16
  %v5429 = vpop.permute.xlu0 %5428
  %5430 = vrot.lane.b32.xlu0 %v5058, 16
  %v5431 = vpop.permute.xlu0 %5430
  %5432 = vrot.lane.b32.xlu0 %v5061, 16
  %v5433 = vpop.permute.xlu0 %5432
  %5434 = vrot.lane.b32.xlu0 %v5063, 16
  %v5435 = vpop.permute.xlu0 %5434
  %5500 = vrot.lane.b32.xlu0 %v4543, 24
  %v5501 = vpop.permute.xlu0 %5500
  %5502 = vrot.lane.b32.xlu0 %v4544, 24
  %v5503 = vpop.permute.xlu0 %5502
  %5504 = vrot.lane.b32.xlu0 %v4546, 24
  %v5505 = vpop.permute.xlu0 %5504
  %5506 = vrot.lane.b32.xlu0 %v4547, 24
  %v5507 = vpop.permute.xlu0 %5506
  %5508 = vrot.lane.b32.xlu0 %v4549, 24
  %v5509 = vpop.permute.xlu0 %5508
  %5510 = vrot.lane.b32.xlu0 %v4550, 24
  %v5511 = vpop.permute.xlu0 %5510
  %5512 = vrot.lane.b32.xlu0 %v4552, 24
  %v5513 = vpop.permute.xlu0 %5512
  %5514 = vrot.lane.b32.xlu0 %v4553, 24
  %v5515 = vpop.permute.xlu0 %5514
  %5516 = vrot.lane.b32.xlu0 %v4555, 24
  %v5517 = vpop.permute.xlu0 %5516
  %5518 = vrot.lane.b32.xlu0 %v4556, 24
  %v5519 = vpop.permute.xlu0 %5518
  %5520 = vrot.lane.b32.xlu0 %v4558, 24
  %v5521 = vpop.permute.xlu0 %5520
  %5522 = vrot.lane.b32.xlu0 %v4559, 24
  %v5523 = vpop.permute.xlu0 %5522
  %5524 = vrot.lane.b32.xlu0 %v4561, 24
  %v5525 = vpop.permute.xlu0 %5524
  %5526 = vrot.lane.b32.xlu0 %v4562, 24
  %v5527 = vpop.permute.xlu0 %5526
  %5528 = vrot.lane.b32.xlu0 %v4564, 24
  %v5529 = vpop.permute.xlu0 %5528
  %5530 = vrot.lane.b32.xlu0 %v4565, 24
  %v5531 = vpop.permute.xlu0 %5530
  %5532 = vrot.lane.b32.xlu0 %v4567, 24
  %v5533 = vpop.permute.xlu0 %5532
  %5534 = vrot.lane.b32.xlu0 %v4568, 24
  %v5535 = vpop.permute.xlu0 %5534
  %5536 = vrot.lane.b32.xlu0 %v4570, 24
  %v5537 = vpop.permute.xlu0 %5536
  %5538 = vrot.lane.b32.xlu0 %v4571, 24
  %v5539 = vpop.permute.xlu0 %5538
  %5540 = vrot.lane.b32.xlu0 %v4573, 24
  %v5541 = vpop.permute.xlu0 %5540
  %5542 = vrot.lane.b32.xlu0 %v4574, 24
  %v5543 = vpop.permute.xlu0 %5542
  %5544 = vrot.lane.b32.xlu0 %v4576, 24
  %v5545 = vpop.permute.xlu0 %5544
  %5546 = vrot.lane.b32.xlu0 %v4577, 24
  %v5547 = vpop.permute.xlu0 %5546
  %5548 = vrot.lane.b32.xlu0 %v4579, 24
  %v5549 = vpop.permute.xlu0 %5548
  %5550 = vrot.lane.b32.xlu0 %v4580, 24
  %v5551 = vpop.permute.xlu0 %5550
  %5552 = vrot.lane.b32.xlu0 %v4582, 24
  %v5553 = vpop.permute.xlu0 %5552
  %5554 = vrot.lane.b32.xlu0 %v4583, 24
  %v5555 = vpop.permute.xlu0 %5554
  %5556 = vrot.lane.b32.xlu0 %v4585, 24
  %v5557 = vpop.permute.xlu0 %5556
  %5558 = vrot.lane.b32.xlu0 %v4586, 24
  %v5559 = vpop.permute.xlu0 %5558
  %5560 = vrot.lane.b32.xlu0 %v4588, 24
  %v5561 = vpop.permute.xlu0 %5560
  %5562 = vrot.lane.b32.xlu0 %v4589, 24
  %v5563 = vpop.permute.xlu0 %5562
  %5564 = vrot.lane.b32.xlu0 %v4597, 24
  %v5565 = vpop.permute.xlu0 %5564
  %5566 = vrot.lane.b32.xlu0 %v4598, 24
  %v5567 = vpop.permute.xlu0 %5566
  %5568 = vrot.lane.b32.xlu0 %v4600, 24
  %v5569 = vpop.permute.xlu0 %5568
  %5570 = vrot.lane.b32.xlu0 %v4601, 24
  %v5571 = vpop.permute.xlu0 %5570
  %5572 = vrot.lane.b32.xlu0 %v4603, 24
  %v5573 = vpop.permute.xlu0 %5572
  %5574 = vrot.lane.b32.xlu0 %v4604, 24
  %v5575 = vpop.permute.xlu0 %5574
  %5576 = vrot.lane.b32.xlu0 %v4606, 24
  %v5577 = vpop.permute.xlu0 %5576
  %5578 = vrot.lane.b32.xlu0 %v4607, 24
  %v5579 = vpop.permute.xlu0 %5578
  %5580 = vrot.lane.b32.xlu0 %v4609, 24
  %v5581 = vpop.permute.xlu0 %5580
  %5582 = vrot.lane.b32.xlu0 %v4610, 24
  %v5583 = vpop.permute.xlu0 %5582
  %5584 = vrot.lane.b32.xlu0 %v4612, 24
  %v5585 = vpop.permute.xlu0 %5584
  %5586 = vrot.lane.b32.xlu0 %v4613, 24
  %v5587 = vpop.permute.xlu0 %5586
  %5588 = vrot.lane.b32.xlu0 %v4615, 24
  %v5589 = vpop.permute.xlu0 %5588
  %5590 = vrot.lane.b32.xlu0 %v4616, 24
  %v5591 = vpop.permute.xlu0 %5590
  %5592 = vrot.lane.b32.xlu0 %v4618, 24
  %v5593 = vpop.permute.xlu0 %5592
  %5594 = vrot.lane.b32.xlu0 %v4619, 24
  %v5595 = vpop.permute.xlu0 %5594
  %5596 = vrot.lane.b32.xlu0 %v4621, 24
  %v5597 = vpop.permute.xlu0 %5596
  %5598 = vrot.lane.b32.xlu0 %v4622, 24
  %v5599 = vpop.permute.xlu0 %5598
  %5600 = vrot.lane.b32.xlu0 %v4624, 24
  %v5601 = vpop.permute.xlu0 %5600
  %5602 = vrot.lane.b32.xlu0 %v4625, 24
  %v5603 = vpop.permute.xlu0 %5602
  %5604 = vrot.lane.b32.xlu0 %v4627, 24
  %v5605 = vpop.permute.xlu0 %5604
  %5606 = vrot.lane.b32.xlu0 %v4628, 24
  %v5607 = vpop.permute.xlu0 %5606
  %5608 = vrot.lane.b32.xlu0 %v4630, 24
  %v5609 = vpop.permute.xlu0 %5608
  %5610 = vrot.lane.b32.xlu0 %v4631, 24
  %v5611 = vpop.permute.xlu0 %5610
  %5612 = vrot.lane.b32.xlu0 %v4633, 24
  %v5613 = vpop.permute.xlu0 %5612
  %5614 = vrot.lane.b32.xlu0 %v4634, 24
  %v5615 = vpop.permute.xlu0 %5614
  %5616 = vrot.lane.b32.xlu0 %v4636, 24
  %v5617 = vpop.permute.xlu0 %5616
  %5618 = vrot.lane.b32.xlu0 %v4637, 24
  %v5619 = vpop.permute.xlu0 %5618
  %5620 = vrot.lane.b32.xlu0 %v4639, 24
  %v5621 = vpop.permute.xlu0 %5620
  %5622 = vrot.lane.b32.xlu0 %v4640, 24
  %v5623 = vpop.permute.xlu0 %5622
  %5624 = vrot.lane.b32.xlu0 %v4642, 24
  %v5625 = vpop.permute.xlu0 %5624
  %5626 = vrot.lane.b32.xlu0 %v4643, 24
  %v5627 = vpop.permute.xlu0 %5626
  %5692 = vrot.lane.b32.xlu0 %v4751, 32
  %v5693 = vpop.permute.xlu0 %5692
  %5694 = vrot.lane.b32.xlu0 %v4753, 32
  %v5695 = vpop.permute.xlu0 %5694
  %5696 = vrot.lane.b32.xlu0 %v4756, 32
  %v5697 = vpop.permute.xlu0 %5696
  %5698 = vrot.lane.b32.xlu0 %v4758, 32
  %v5699 = vpop.permute.xlu0 %5698
  %5700 = vrot.lane.b32.xlu0 %v4761, 32
  %v5701 = vpop.permute.xlu0 %5700
  %5702 = vrot.lane.b32.xlu0 %v4763, 32
  %v5703 = vpop.permute.xlu0 %5702
  %5704 = vrot.lane.b32.xlu0 %v4766, 32
  %v5705 = vpop.permute.xlu0 %5704
  %5706 = vrot.lane.b32.xlu0 %v4768, 32
  %v5707 = vpop.permute.xlu0 %5706
  %5708 = vrot.lane.b32.xlu0 %v4771, 32
  %v5709 = vpop.permute.xlu0 %5708
  %5710 = vrot.lane.b32.xlu0 %v4773, 32
  %v5711 = vpop.permute.xlu0 %5710
  %5712 = vrot.lane.b32.xlu0 %v4776, 32
  %v5713 = vpop.permute.xlu0 %5712
  %5714 = vrot.lane.b32.xlu0 %v4778, 32
  %v5715 = vpop.permute.xlu0 %5714
  %5716 = vrot.lane.b32.xlu0 %v4781, 32
  %v5717 = vpop.permute.xlu0 %5716
  %5718 = vrot.lane.b32.xlu0 %v4783, 32
  %v5719 = vpop.permute.xlu0 %5718
  %5720 = vrot.lane.b32.xlu0 %v4786, 32
  %v5721 = vpop.permute.xlu0 %5720
  %5722 = vrot.lane.b32.xlu0 %v4788, 32
  %v5723 = vpop.permute.xlu0 %5722
  %5724 = vrot.lane.b32.xlu0 %v4791, 32
  %v5725 = vpop.permute.xlu0 %5724
  %5726 = vrot.lane.b32.xlu0 %v4793, 32
  %v5727 = vpop.permute.xlu0 %5726
  %5728 = vrot.lane.b32.xlu0 %v4796, 32
  %v5729 = vpop.permute.xlu0 %5728
  %5730 = vrot.lane.b32.xlu0 %v4798, 32
  %v5731 = vpop.permute.xlu0 %5730
  %5732 = vrot.lane.b32.xlu0 %v4801, 32
  %v5733 = vpop.permute.xlu0 %5732
  %5734 = vrot.lane.b32.xlu0 %v4803, 32
  %v5735 = vpop.permute.xlu0 %5734
  %5736 = vrot.lane.b32.xlu0 %v4806, 32
  %v5737 = vpop.permute.xlu0 %5736
  %5738 = vrot.lane.b32.xlu0 %v4808, 32
  %v5739 = vpop.permute.xlu0 %5738
  %5740 = vrot.lane.b32.xlu0 %v4811, 32
  %v5741 = vpop.permute.xlu0 %5740
  %5742 = vrot.lane.b32.xlu0 %v4813, 32
  %v5743 = vpop.permute.xlu0 %5742
  %5744 = vrot.lane.b32.xlu0 %v4816, 32
  %v5745 = vpop.permute.xlu0 %5744
  %5746 = vrot.lane.b32.xlu0 %v4818, 32
  %v5747 = vpop.permute.xlu0 %5746
  %5748 = vrot.lane.b32.xlu0 %v4821, 32
  %v5749 = vpop.permute.xlu0 %5748
  %5750 = vrot.lane.b32.xlu0 %v4823, 32
  %v5751 = vpop.permute.xlu0 %5750
  %5752 = vrot.lane.b32.xlu0 %v5072, 32
  %v5753 = vpop.permute.xlu0 %5752
  %5754 = vrot.lane.b32.xlu0 %v5074, 32
  %v5755 = vpop.permute.xlu0 %5754
  %5756 = vrot.lane.b32.xlu0 %v4831, 32
  %v5757 = vpop.permute.xlu0 %5756
  %5758 = vrot.lane.b32.xlu0 %v4833, 32
  %v5759 = vpop.permute.xlu0 %5758
  %5760 = vrot.lane.b32.xlu0 %v4836, 32
  %v5761 = vpop.permute.xlu0 %5760
  %5762 = vrot.lane.b32.xlu0 %v4838, 32
  %v5763 = vpop.permute.xlu0 %5762
  %5764 = vrot.lane.b32.xlu0 %v4841, 32
  %v5765 = vpop.permute.xlu0 %5764
  %5766 = vrot.lane.b32.xlu0 %v4843, 32
  %v5767 = vpop.permute.xlu0 %5766
  %5768 = vrot.lane.b32.xlu0 %v4846, 32
  %v5769 = vpop.permute.xlu0 %5768
  %5770 = vrot.lane.b32.xlu0 %v4848, 32
  %v5771 = vpop.permute.xlu0 %5770
  %5772 = vrot.lane.b32.xlu0 %v4851, 32
  %v5773 = vpop.permute.xlu0 %5772
  %5774 = vrot.lane.b32.xlu0 %v4853, 32
  %v5775 = vpop.permute.xlu0 %5774
  %5776 = vrot.lane.b32.xlu0 %v4856, 32
  %v5777 = vpop.permute.xlu0 %5776
  %5778 = vrot.lane.b32.xlu0 %v4858, 32
  %v5779 = vpop.permute.xlu0 %5778
  %5780 = vrot.lane.b32.xlu0 %v4861, 32
  %v5781 = vpop.permute.xlu0 %5780
  %5782 = vrot.lane.b32.xlu0 %v4863, 32
  %v5783 = vpop.permute.xlu0 %5782
  %5784 = vrot.lane.b32.xlu0 %v4866, 32
  %v5785 = vpop.permute.xlu0 %5784
  %5786 = vrot.lane.b32.xlu0 %v4868, 32
  %v5787 = vpop.permute.xlu0 %5786
  %5788 = vrot.lane.b32.xlu0 %v4871, 32
  %v5789 = vpop.permute.xlu0 %5788
  %5790 = vrot.lane.b32.xlu0 %v4873, 32
  %v5791 = vpop.permute.xlu0 %5790
  %5792 = vrot.lane.b32.xlu0 %v4876, 32
  %v5793 = vpop.permute.xlu0 %5792
  %5794 = vrot.lane.b32.xlu0 %v4878, 32
  %v5795 = vpop.permute.xlu0 %5794
  %5796 = vrot.lane.b32.xlu0 %v4881, 32
  %v5797 = vpop.permute.xlu0 %5796
  %5798 = vrot.lane.b32.xlu0 %v4883, 32
  %v5799 = vpop.permute.xlu0 %5798
  %5800 = vrot.lane.b32.xlu0 %v4886, 32
  %v5801 = vpop.permute.xlu0 %5800
  %5802 = vrot.lane.b32.xlu0 %v4888, 32
  %v5803 = vpop.permute.xlu0 %5802
  %5804 = vrot.lane.b32.xlu0 %v4891, 32
  %v5805 = vpop.permute.xlu0 %5804
  %5806 = vrot.lane.b32.xlu0 %v4893, 32
  %v5807 = vpop.permute.xlu0 %5806
  %5808 = vrot.lane.b32.xlu0 %v4896, 32
  %v5809 = vpop.permute.xlu0 %5808
  %5810 = vrot.lane.b32.xlu0 %v4898, 32
  %v5811 = vpop.permute.xlu0 %5810
  %5812 = vrot.lane.b32.xlu0 %v4901, 32
  %v5813 = vpop.permute.xlu0 %5812
  %5814 = vrot.lane.b32.xlu0 %v4903, 32
  %v5815 = vpop.permute.xlu0 %5814
  %5816 = vrot.lane.b32.xlu0 %v5077, 32
  %v5817 = vpop.permute.xlu0 %5816
  %5818 = vrot.lane.b32.xlu0 %v5079, 32
  %v5819 = vpop.permute.xlu0 %5818
  %5884 = vrot.lane.b32.xlu0 %v4911, 40
  %v5885 = vpop.permute.xlu0 %5884
  %5886 = vrot.lane.b32.xlu0 %v4913, 40
  %v5887 = vpop.permute.xlu0 %5886
  %5888 = vrot.lane.b32.xlu0 %v4916, 40
  %v5889 = vpop.permute.xlu0 %5888
  %5890 = vrot.lane.b32.xlu0 %v4918, 40
  %v5891 = vpop.permute.xlu0 %5890
  %5892 = vrot.lane.b32.xlu0 %v4921, 40
  %v5893 = vpop.permute.xlu0 %5892
  %5894 = vrot.lane.b32.xlu0 %v4923, 40
  %v5895 = vpop.permute.xlu0 %5894
  %5896 = vrot.lane.b32.xlu0 %v4926, 40
  %v5897 = vpop.permute.xlu0 %5896
  %5898 = vrot.lane.b32.xlu0 %v4928, 40
  %v5899 = vpop.permute.xlu0 %5898
  %5900 = vrot.lane.b32.xlu0 %v4931, 40
  %v5901 = vpop.permute.xlu0 %5900
  %5902 = vrot.lane.b32.xlu0 %v4933, 40
  %v5903 = vpop.permute.xlu0 %5902
  %5904 = vrot.lane.b32.xlu0 %v4936, 40
  %v5905 = vpop.permute.xlu0 %5904
  %5906 = vrot.lane.b32.xlu0 %v4938, 40
  %v5907 = vpop.permute.xlu0 %5906
  %5908 = vrot.lane.b32.xlu0 %v4941, 40
  %v5909 = vpop.permute.xlu0 %5908
  %5910 = vrot.lane.b32.xlu0 %v4943, 40
  %v5911 = vpop.permute.xlu0 %5910
  %5912 = vrot.lane.b32.xlu0 %v4946, 40
  %v5913 = vpop.permute.xlu0 %5912
  %5914 = vrot.lane.b32.xlu0 %v4948, 40
  %v5915 = vpop.permute.xlu0 %5914
  %5916 = vrot.lane.b32.xlu0 %v4951, 40
  %v5917 = vpop.permute.xlu0 %5916
  %5918 = vrot.lane.b32.xlu0 %v4953, 40
  %v5919 = vpop.permute.xlu0 %5918
  %5920 = vrot.lane.b32.xlu0 %v4956, 40
  %v5921 = vpop.permute.xlu0 %5920
  %5922 = vrot.lane.b32.xlu0 %v4958, 40
  %v5923 = vpop.permute.xlu0 %5922
  %5924 = vrot.lane.b32.xlu0 %v4961, 40
  %v5925 = vpop.permute.xlu0 %5924
  %5926 = vrot.lane.b32.xlu0 %v4963, 40
  %v5927 = vpop.permute.xlu0 %5926
  %5928 = vrot.lane.b32.xlu0 %v4966, 40
  %v5929 = vpop.permute.xlu0 %5928
  %5930 = vrot.lane.b32.xlu0 %v4968, 40
  %v5931 = vpop.permute.xlu0 %5930
  %5932 = vrot.lane.b32.xlu0 %v4971, 40
  %v5933 = vpop.permute.xlu0 %5932
  %5934 = vrot.lane.b32.xlu0 %v4973, 40
  %v5935 = vpop.permute.xlu0 %5934
  %5936 = vrot.lane.b32.xlu0 %v4976, 40
  %v5937 = vpop.permute.xlu0 %5936
  %5938 = vrot.lane.b32.xlu0 %v4978, 40
  %v5939 = vpop.permute.xlu0 %5938
  %5940 = vrot.lane.b32.xlu0 %v4981, 40
  %v5941 = vpop.permute.xlu0 %5940
  %5942 = vrot.lane.b32.xlu0 %v4983, 40
  %v5943 = vpop.permute.xlu0 %5942
  %5944 = vrot.lane.b32.xlu0 %v5082, 40
  %v5945 = vpop.permute.xlu0 %5944
  %5946 = vrot.lane.b32.xlu0 %v5084, 40
  %v5947 = vpop.permute.xlu0 %5946
  %5948 = vrot.lane.b32.xlu0 %v4991, 40
  %v5949 = vpop.permute.xlu0 %5948
  %5950 = vrot.lane.b32.xlu0 %v4993, 40
  %v5951 = vpop.permute.xlu0 %5950
  %5952 = vrot.lane.b32.xlu0 %v4996, 40
  %v5953 = vpop.permute.xlu0 %5952
  %5954 = vrot.lane.b32.xlu0 %v4998, 40
  %v5955 = vpop.permute.xlu0 %5954
  %5956 = vrot.lane.b32.xlu0 %v5001, 40
  %v5957 = vpop.permute.xlu0 %5956
  %5958 = vrot.lane.b32.xlu0 %v5003, 40
  %v5959 = vpop.permute.xlu0 %5958
  %5960 = vrot.lane.b32.xlu0 %v5006, 40
  %v5961 = vpop.permute.xlu0 %5960
  %5962 = vrot.lane.b32.xlu0 %v5008, 40
  %v5963 = vpop.permute.xlu0 %5962
  %5964 = vrot.lane.b32.xlu0 %v5011, 40
  %v5965 = vpop.permute.xlu0 %5964
  %5966 = vrot.lane.b32.xlu0 %v5013, 40
  %v5967 = vpop.permute.xlu0 %5966
  %5968 = vrot.lane.b32.xlu0 %v5016, 40
  %v5969 = vpop.permute.xlu0 %5968
  %5970 = vrot.lane.b32.xlu0 %v5018, 40
  %v5971 = vpop.permute.xlu0 %5970
  %5972 = vrot.lane.b32.xlu0 %v5021, 40
  %v5973 = vpop.permute.xlu0 %5972
  %5974 = vrot.lane.b32.xlu0 %v5023, 40
  %v5975 = vpop.permute.xlu0 %5974
  %5976 = vrot.lane.b32.xlu0 %v5026, 40
  %v5977 = vpop.permute.xlu0 %5976
  %5978 = vrot.lane.b32.xlu0 %v5028, 40
  %v5979 = vpop.permute.xlu0 %5978
  %5980 = vrot.lane.b32.xlu0 %v5031, 40
  %v5981 = vpop.permute.xlu0 %5980
  %5982 = vrot.lane.b32.xlu0 %v5033, 40
  %v5983 = vpop.permute.xlu0 %5982
  %5984 = vrot.lane.b32.xlu0 %v5036, 40
  %v5985 = vpop.permute.xlu0 %5984
  %5986 = vrot.lane.b32.xlu0 %v5038, 40
  %v5987 = vpop.permute.xlu0 %5986
  %5988 = vrot.lane.b32.xlu0 %v5041, 40
  %v5989 = vpop.permute.xlu0 %5988
  %5990 = vrot.lane.b32.xlu0 %v5043, 40
  %v5991 = vpop.permute.xlu0 %5990
  %5992 = vrot.lane.b32.xlu0 %v5046, 40
  %v5993 = vpop.permute.xlu0 %5992
  %5994 = vrot.lane.b32.xlu0 %v5048, 40
  %v5995 = vpop.permute.xlu0 %5994
  %5996 = vrot.lane.b32.xlu0 %v5051, 40
  %v5997 = vpop.permute.xlu0 %5996
  %5998 = vrot.lane.b32.xlu0 %v5053, 40
  %v5999 = vpop.permute.xlu0 %5998
  %6000 = vrot.lane.b32.xlu0 %v5056, 40
  %v6001 = vpop.permute.xlu0 %6000
  %6002 = vrot.lane.b32.xlu0 %v5058, 40
  %v6003 = vpop.permute.xlu0 %6002
  %6004 = vrot.lane.b32.xlu0 %v5061, 40
  %v6005 = vpop.permute.xlu0 %6004
  %6006 = vrot.lane.b32.xlu0 %v5063, 40
  %v6007 = vpop.permute.xlu0 %6006
  %6008 = vrot.lane.b32.xlu0 %v5087, 40
  %v6009 = vpop.permute.xlu0 %6008
  %6010 = vrot.lane.b32.xlu0 %v5089, 40
  %v6011 = vpop.permute.xlu0 %6010
  %6076 = vrot.lane.b32.xlu0 %v4546, 48
  %v6077 = vpop.permute.xlu0 %6076
  %6078 = vrot.lane.b32.xlu0 %v4547, 48
  %v6079 = vpop.permute.xlu0 %6078
  %6080 = vrot.lane.b32.xlu0 %v4549, 48
  %v6081 = vpop.permute.xlu0 %6080
  %6082 = vrot.lane.b32.xlu0 %v4550, 48
  %v6083 = vpop.permute.xlu0 %6082
  %6084 = vrot.lane.b32.xlu0 %v4552, 48
  %v6085 = vpop.permute.xlu0 %6084
  %6086 = vrot.lane.b32.xlu0 %v4553, 48
  %v6087 = vpop.permute.xlu0 %6086
  %6088 = vrot.lane.b32.xlu0 %v4555, 48
  %v6089 = vpop.permute.xlu0 %6088
  %6090 = vrot.lane.b32.xlu0 %v4556, 48
  %v6091 = vpop.permute.xlu0 %6090
  %6092 = vrot.lane.b32.xlu0 %v4558, 48
  %v6093 = vpop.permute.xlu0 %6092
  %6094 = vrot.lane.b32.xlu0 %v4559, 48
  %v6095 = vpop.permute.xlu0 %6094
  %6096 = vrot.lane.b32.xlu0 %v4561, 48
  %v6097 = vpop.permute.xlu0 %6096
  %6098 = vrot.lane.b32.xlu0 %v4562, 48
  %v6099 = vpop.permute.xlu0 %6098
  %6100 = vrot.lane.b32.xlu0 %v4564, 48
  %v6101 = vpop.permute.xlu0 %6100
  %6102 = vrot.lane.b32.xlu0 %v4565, 48
  %v6103 = vpop.permute.xlu0 %6102
  %6104 = vrot.lane.b32.xlu0 %v4567, 48
  %v6105 = vpop.permute.xlu0 %6104
  %6106 = vrot.lane.b32.xlu0 %v4568, 48
  %v6107 = vpop.permute.xlu0 %6106
  %6108 = vrot.lane.b32.xlu0 %v4570, 48
  %v6109 = vpop.permute.xlu0 %6108
  %6110 = vrot.lane.b32.xlu0 %v4571, 48
  %v6111 = vpop.permute.xlu0 %6110
  %6112 = vrot.lane.b32.xlu0 %v4573, 48
  %v6113 = vpop.permute.xlu0 %6112
  %6114 = vrot.lane.b32.xlu0 %v4574, 48
  %v6115 = vpop.permute.xlu0 %6114
  %6116 = vrot.lane.b32.xlu0 %v4576, 48
  %v6117 = vpop.permute.xlu0 %6116
  %6118 = vrot.lane.b32.xlu0 %v4577, 48
  %v6119 = vpop.permute.xlu0 %6118
  %6120 = vrot.lane.b32.xlu0 %v4579, 48
  %v6121 = vpop.permute.xlu0 %6120
  %6122 = vrot.lane.b32.xlu0 %v4580, 48
  %v6123 = vpop.permute.xlu0 %6122
  %6124 = vrot.lane.b32.xlu0 %v4582, 48
  %v6125 = vpop.permute.xlu0 %6124
  %6126 = vrot.lane.b32.xlu0 %v4583, 48
  %v6127 = vpop.permute.xlu0 %6126
  %6128 = vrot.lane.b32.xlu0 %v4585, 48
  %v6129 = vpop.permute.xlu0 %6128
  %6130 = vrot.lane.b32.xlu0 %v4586, 48
  %v6131 = vpop.permute.xlu0 %6130
  %6132 = vrot.lane.b32.xlu0 %v4588, 48
  %v6133 = vpop.permute.xlu0 %6132
  %6134 = vrot.lane.b32.xlu0 %v4589, 48
  %v6135 = vpop.permute.xlu0 %6134
  %6136 = vrot.lane.b32.xlu0 %v4591, 48
  %v6137 = vpop.permute.xlu0 %6136
  %6138 = vrot.lane.b32.xlu0 %v4592, 48
  %v6139 = vpop.permute.xlu0 %6138
  %6140 = vrot.lane.b32.xlu0 %v4600, 48
  %v6141 = vpop.permute.xlu0 %6140
  %6142 = vrot.lane.b32.xlu0 %v4601, 48
  %v6143 = vpop.permute.xlu0 %6142
  %6144 = vrot.lane.b32.xlu0 %v4603, 48
  %v6145 = vpop.permute.xlu0 %6144
  %6146 = vrot.lane.b32.xlu0 %v4604, 48
  %v6147 = vpop.permute.xlu0 %6146
  %6148 = vrot.lane.b32.xlu0 %v4606, 48
  %v6149 = vpop.permute.xlu0 %6148
  %6150 = vrot.lane.b32.xlu0 %v4607, 48
  %v6151 = vpop.permute.xlu0 %6150
  %6152 = vrot.lane.b32.xlu0 %v4609, 48
  %v6153 = vpop.permute.xlu0 %6152
  %6154 = vrot.lane.b32.xlu0 %v4610, 48
  %v6155 = vpop.permute.xlu0 %6154
  %6156 = vrot.lane.b32.xlu0 %v4612, 48
  %v6157 = vpop.permute.xlu0 %6156
  %6158 = vrot.lane.b32.xlu0 %v4613, 48
  %v6159 = vpop.permute.xlu0 %6158
  %6160 = vrot.lane.b32.xlu0 %v4615, 48
  %v6161 = vpop.permute.xlu0 %6160
  %6162 = vrot.lane.b32.xlu0 %v4616, 48
  %v6163 = vpop.permute.xlu0 %6162
  %6164 = vrot.lane.b32.xlu0 %v4618, 48
  %v6165 = vpop.permute.xlu0 %6164
  %6166 = vrot.lane.b32.xlu0 %v4619, 48
  %v6167 = vpop.permute.xlu0 %6166
  %6168 = vrot.lane.b32.xlu0 %v4621, 48
  %v6169 = vpop.permute.xlu0 %6168
  %6170 = vrot.lane.b32.xlu0 %v4622, 48
  %v6171 = vpop.permute.xlu0 %6170
  %6172 = vrot.lane.b32.xlu0 %v4624, 48
  %v6173 = vpop.permute.xlu0 %6172
  %6174 = vrot.lane.b32.xlu0 %v4625, 48
  %v6175 = vpop.permute.xlu0 %6174
  %6176 = vrot.lane.b32.xlu0 %v4627, 48
  %v6177 = vpop.permute.xlu0 %6176
  %6178 = vrot.lane.b32.xlu0 %v4628, 48
  %v6179 = vpop.permute.xlu0 %6178
  %6180 = vrot.lane.b32.xlu0 %v4630, 48
  %v6181 = vpop.permute.xlu0 %6180
  %6182 = vrot.lane.b32.xlu0 %v4631, 48
  %v6183 = vpop.permute.xlu0 %6182
  %6184 = vrot.lane.b32.xlu0 %v4633, 48
  %v6185 = vpop.permute.xlu0 %6184
  %6186 = vrot.lane.b32.xlu0 %v4634, 48
  %v6187 = vpop.permute.xlu0 %6186
  %6188 = vrot.lane.b32.xlu0 %v4636, 48
  %v6189 = vpop.permute.xlu0 %6188
  %6190 = vrot.lane.b32.xlu0 %v4637, 48
  %v6191 = vpop.permute.xlu0 %6190
  %6192 = vrot.lane.b32.xlu0 %v4639, 48
  %v6193 = vpop.permute.xlu0 %6192
  %6194 = vrot.lane.b32.xlu0 %v4640, 48
  %v6195 = vpop.permute.xlu0 %6194
  %6196 = vrot.lane.b32.xlu0 %v4642, 48
  %v6197 = vpop.permute.xlu0 %6196
  %6198 = vrot.lane.b32.xlu0 %v4643, 48
  %v6199 = vpop.permute.xlu0 %6198
  %6200 = vrot.lane.b32.xlu0 %v4645, 48
  %v6201 = vpop.permute.xlu0 %6200
  %6202 = vrot.lane.b32.xlu0 %v4646, 48
  %v6203 = vpop.permute.xlu0 %6202
  %6268 = vrot.lane.b32.xlu0 %v4756, 56
  %v6269 = vpop.permute.xlu0 %6268
  %6270 = vrot.lane.b32.xlu0 %v4758, 56
  %v6271 = vpop.permute.xlu0 %6270
  %6272 = vrot.lane.b32.xlu0 %v4761, 56
  %v6273 = vpop.permute.xlu0 %6272
  %6274 = vrot.lane.b32.xlu0 %v4763, 56
  %v6275 = vpop.permute.xlu0 %6274
  %6276 = vrot.lane.b32.xlu0 %v4766, 56
  %v6277 = vpop.permute.xlu0 %6276
  %6278 = vrot.lane.b32.xlu0 %v4768, 56
  %v6279 = vpop.permute.xlu0 %6278
  %6280 = vrot.lane.b32.xlu0 %v4771, 56
  %v6281 = vpop.permute.xlu0 %6280
  %6282 = vrot.lane.b32.xlu0 %v4773, 56
  %v6283 = vpop.permute.xlu0 %6282
  %6284 = vrot.lane.b32.xlu0 %v4776, 56
  %v6285 = vpop.permute.xlu0 %6284
  %6286 = vrot.lane.b32.xlu0 %v4778, 56
  %v6287 = vpop.permute.xlu0 %6286
  %6288 = vrot.lane.b32.xlu0 %v4781, 56
  %v6289 = vpop.permute.xlu0 %6288
  %6290 = vrot.lane.b32.xlu0 %v4783, 56
  %v6291 = vpop.permute.xlu0 %6290
  %6292 = vrot.lane.b32.xlu0 %v4786, 56
  %v6293 = vpop.permute.xlu0 %6292
  %6294 = vrot.lane.b32.xlu0 %v4788, 56
  %v6295 = vpop.permute.xlu0 %6294
  %6296 = vrot.lane.b32.xlu0 %v4791, 56
  %v6297 = vpop.permute.xlu0 %6296
  %6298 = vrot.lane.b32.xlu0 %v4793, 56
  %v6299 = vpop.permute.xlu0 %6298
  %6300 = vrot.lane.b32.xlu0 %v4796, 56
  %v6301 = vpop.permute.xlu0 %6300
  %6302 = vrot.lane.b32.xlu0 %v4798, 56
  %v6303 = vpop.permute.xlu0 %6302
  %6304 = vrot.lane.b32.xlu0 %v4801, 56
  %v6305 = vpop.permute.xlu0 %6304
  %6306 = vrot.lane.b32.xlu0 %v4803, 56
  %v6307 = vpop.permute.xlu0 %6306
  %6308 = vrot.lane.b32.xlu0 %v4806, 56
  %v6309 = vpop.permute.xlu0 %6308
  %6310 = vrot.lane.b32.xlu0 %v4808, 56
  %v6311 = vpop.permute.xlu0 %6310
  %6312 = vrot.lane.b32.xlu0 %v4811, 56
  %v6313 = vpop.permute.xlu0 %6312
  %6314 = vrot.lane.b32.xlu0 %v4813, 56
  %v6315 = vpop.permute.xlu0 %6314
  %6316 = vrot.lane.b32.xlu0 %v4816, 56
  %v6317 = vpop.permute.xlu0 %6316
  %6318 = vrot.lane.b32.xlu0 %v4818, 56
  %v6319 = vpop.permute.xlu0 %6318
  %6320 = vrot.lane.b32.xlu0 %v4821, 56
  %v6321 = vpop.permute.xlu0 %6320
  %6322 = vrot.lane.b32.xlu0 %v4823, 56
  %v6323 = vpop.permute.xlu0 %6322
  %6324 = vrot.lane.b32.xlu0 %v5072, 56
  %v6325 = vpop.permute.xlu0 %6324
  %6326 = vrot.lane.b32.xlu0 %v5074, 56
  %v6327 = vpop.permute.xlu0 %6326
  %6328 = vrot.lane.b32.xlu0 %v5098, 56
  %v6329 = vpop.permute.xlu0 %6328
  %6330 = vrot.lane.b32.xlu0 %v5100, 56
  %v6331 = vpop.permute.xlu0 %6330
  %6332 = vrot.lane.b32.xlu0 %v4836, 56
  %v6333 = vpop.permute.xlu0 %6332
  %6334 = vrot.lane.b32.xlu0 %v4838, 56
  %v6335 = vpop.permute.xlu0 %6334
  %6336 = vrot.lane.b32.xlu0 %v4841, 56
  %v6337 = vpop.permute.xlu0 %6336
  %6338 = vrot.lane.b32.xlu0 %v4843, 56
  %v6339 = vpop.permute.xlu0 %6338
  %6340 = vrot.lane.b32.xlu0 %v4846, 56
  %v6341 = vpop.permute.xlu0 %6340
  %6342 = vrot.lane.b32.xlu0 %v4848, 56
  %v6343 = vpop.permute.xlu0 %6342
  %6344 = vrot.lane.b32.xlu0 %v4851, 56
  %v6345 = vpop.permute.xlu0 %6344
  %6346 = vrot.lane.b32.xlu0 %v4853, 56
  %v6347 = vpop.permute.xlu0 %6346
  %6348 = vrot.lane.b32.xlu0 %v4856, 56
  %v6349 = vpop.permute.xlu0 %6348
  %6350 = vrot.lane.b32.xlu0 %v4858, 56
  %v6351 = vpop.permute.xlu0 %6350
  %6352 = vrot.lane.b32.xlu0 %v4861, 56
  %v6353 = vpop.permute.xlu0 %6352
  %6354 = vrot.lane.b32.xlu0 %v4863, 56
  %v6355 = vpop.permute.xlu0 %6354
  %6356 = vrot.lane.b32.xlu0 %v4866, 56
  %v6357 = vpop.permute.xlu0 %6356
  %6358 = vrot.lane.b32.xlu0 %v4868, 56
  %v6359 = vpop.permute.xlu0 %6358
  %6360 = vrot.lane.b32.xlu0 %v4871, 56
  %v6361 = vpop.permute.xlu0 %6360
  %6362 = vrot.lane.b32.xlu0 %v4873, 56
  %v6363 = vpop.permute.xlu0 %6362
  %6364 = vrot.lane.b32.xlu0 %v4876, 56
  %v6365 = vpop.permute.xlu0 %6364
  %6366 = vrot.lane.b32.xlu0 %v4878, 56
  %v6367 = vpop.permute.xlu0 %6366
  %6368 = vrot.lane.b32.xlu0 %v4881, 56
  %v6369 = vpop.permute.xlu0 %6368
  %6370 = vrot.lane.b32.xlu0 %v4883, 56
  %v6371 = vpop.permute.xlu0 %6370
  %6372 = vrot.lane.b32.xlu0 %v4886, 56
  %v6373 = vpop.permute.xlu0 %6372
  %6374 = vrot.lane.b32.xlu0 %v4888, 56
  %v6375 = vpop.permute.xlu0 %6374
  %6376 = vrot.lane.b32.xlu0 %v4891, 56
  %v6377 = vpop.permute.xlu0 %6376
  %6378 = vrot.lane.b32.xlu0 %v4893, 56
  %v6379 = vpop.permute.xlu0 %6378
  %6380 = vrot.lane.b32.xlu0 %v4896, 56
  %v6381 = vpop.permute.xlu0 %6380
  %6382 = vrot.lane.b32.xlu0 %v4898, 56
  %v6383 = vpop.permute.xlu0 %6382
  %6384 = vrot.lane.b32.xlu0 %v4901, 56
  %v6385 = vpop.permute.xlu0 %6384
  %6386 = vrot.lane.b32.xlu0 %v4903, 56
  %v6387 = vpop.permute.xlu0 %6386
  %6388 = vrot.lane.b32.xlu0 %v5077, 56
  %v6389 = vpop.permute.xlu0 %6388
  %6390 = vrot.lane.b32.xlu0 %v5079, 56
  %v6391 = vpop.permute.xlu0 %6390
  %6392 = vrot.lane.b32.xlu0 %v5103, 56
  %v6393 = vpop.permute.xlu0 %6392
  %6394 = vrot.lane.b32.xlu0 %v5105, 56
  %v6395 = vpop.permute.xlu0 %6394
  %6460 = vrot.lane.b32.xlu0 %v4916, 64
  %v6461 = vpop.permute.xlu0 %6460
  %6462 = vrot.lane.b32.xlu0 %v4918, 64
  %v6463 = vpop.permute.xlu0 %6462
  %6464 = vrot.lane.b32.xlu0 %v4921, 64
  %v6465 = vpop.permute.xlu0 %6464
  %6466 = vrot.lane.b32.xlu0 %v4923, 64
  %v6467 = vpop.permute.xlu0 %6466
  %6468 = vrot.lane.b32.xlu0 %v4926, 64
  %v6469 = vpop.permute.xlu0 %6468
  %6470 = vrot.lane.b32.xlu0 %v4928, 64
  %v6471 = vpop.permute.xlu0 %6470
  %6472 = vrot.lane.b32.xlu0 %v4931, 64
  %v6473 = vpop.permute.xlu0 %6472
  %6474 = vrot.lane.b32.xlu0 %v4933, 64
  %v6475 = vpop.permute.xlu0 %6474
  %6476 = vrot.lane.b32.xlu0 %v4936, 64
  %v6477 = vpop.permute.xlu0 %6476
  %6478 = vrot.lane.b32.xlu0 %v4938, 64
  %v6479 = vpop.permute.xlu0 %6478
  %6480 = vrot.lane.b32.xlu0 %v4941, 64
  %v6481 = vpop.permute.xlu0 %6480
  %6482 = vrot.lane.b32.xlu0 %v4943, 64
  %v6483 = vpop.permute.xlu0 %6482
  %6484 = vrot.lane.b32.xlu0 %v4946, 64
  %v6485 = vpop.permute.xlu0 %6484
  %6486 = vrot.lane.b32.xlu0 %v4948, 64
  %v6487 = vpop.permute.xlu0 %6486
  %6488 = vrot.lane.b32.xlu0 %v4951, 64
  %v6489 = vpop.permute.xlu0 %6488
  %6490 = vrot.lane.b32.xlu0 %v4953, 64
  %v6491 = vpop.permute.xlu0 %6490
  %6492 = vrot.lane.b32.xlu0 %v4956, 64
  %v6493 = vpop.permute.xlu0 %6492
  %6494 = vrot.lane.b32.xlu0 %v4958, 64
  %v6495 = vpop.permute.xlu0 %6494
  %6496 = vrot.lane.b32.xlu0 %v4961, 64
  %v6497 = vpop.permute.xlu0 %6496
  %6498 = vrot.lane.b32.xlu0 %v4963, 64
  %v6499 = vpop.permute.xlu0 %6498
  %6500 = vrot.lane.b32.xlu0 %v4966, 64
  %v6501 = vpop.permute.xlu0 %6500
  %6502 = vrot.lane.b32.xlu0 %v4968, 64
  %v6503 = vpop.permute.xlu0 %6502
  %6504 = vrot.lane.b32.xlu0 %v4971, 64
  %v6505 = vpop.permute.xlu0 %6504
  %6506 = vrot.lane.b32.xlu0 %v4973, 64
  %v6507 = vpop.permute.xlu0 %6506
  %6508 = vrot.lane.b32.xlu0 %v4976, 64
  %v6509 = vpop.permute.xlu0 %6508
  %6510 = vrot.lane.b32.xlu0 %v4978, 64
  %v6511 = vpop.permute.xlu0 %6510
  %6512 = vrot.lane.b32.xlu0 %v4981, 64
  %v6513 = vpop.permute.xlu0 %6512
  %6514 = vrot.lane.b32.xlu0 %v4983, 64
  %v6515 = vpop.permute.xlu0 %6514
  %6516 = vrot.lane.b32.xlu0 %v5082, 64
  %v6517 = vpop.permute.xlu0 %6516
  %6518 = vrot.lane.b32.xlu0 %v5084, 64
  %v6519 = vpop.permute.xlu0 %6518
  %6520 = vrot.lane.b32.xlu0 %v5108, 64
  %v6521 = vpop.permute.xlu0 %6520
  %6522 = vrot.lane.b32.xlu0 %v5110, 64
  %v6523 = vpop.permute.xlu0 %6522
  %6524 = vrot.lane.b32.xlu0 %v4996, 64
  %v6525 = vpop.permute.xlu0 %6524
  %6526 = vrot.lane.b32.xlu0 %v4998, 64
  %v6527 = vpop.permute.xlu0 %6526
  %6528 = vrot.lane.b32.xlu0 %v5001, 64
  %v6529 = vpop.permute.xlu0 %6528
  %6530 = vrot.lane.b32.xlu0 %v5003, 64
  %v6531 = vpop.permute.xlu0 %6530
  %6532 = vrot.lane.b32.xlu0 %v5006, 64
  %v6533 = vpop.permute.xlu0 %6532
  %6534 = vrot.lane.b32.xlu0 %v5008, 64
  %v6535 = vpop.permute.xlu0 %6534
  %6536 = vrot.lane.b32.xlu0 %v5011, 64
  %v6537 = vpop.permute.xlu0 %6536
  %6538 = vrot.lane.b32.xlu0 %v5013, 64
  %v6539 = vpop.permute.xlu0 %6538
  %6540 = vrot.lane.b32.xlu0 %v5016, 64
  %v6541 = vpop.permute.xlu0 %6540
  %6542 = vrot.lane.b32.xlu0 %v5018, 64
  %v6543 = vpop.permute.xlu0 %6542
  %6544 = vrot.lane.b32.xlu0 %v5021, 64
  %v6545 = vpop.permute.xlu0 %6544
  %6546 = vrot.lane.b32.xlu0 %v5023, 64
  %v6547 = vpop.permute.xlu0 %6546
  %6548 = vrot.lane.b32.xlu0 %v5026, 64
  %v6549 = vpop.permute.xlu0 %6548
  %6550 = vrot.lane.b32.xlu0 %v5028, 64
  %v6551 = vpop.permute.xlu0 %6550
  %6552 = vrot.lane.b32.xlu0 %v5031, 64
  %v6553 = vpop.permute.xlu0 %6552
  %6554 = vrot.lane.b32.xlu0 %v5033, 64
  %v6555 = vpop.permute.xlu0 %6554
  %6556 = vrot.lane.b32.xlu0 %v5036, 64
  %v6557 = vpop.permute.xlu0 %6556
  %6558 = vrot.lane.b32.xlu0 %v5038, 64
  %v6559 = vpop.permute.xlu0 %6558
  %6560 = vrot.lane.b32.xlu0 %v5041, 64
  %v6561 = vpop.permute.xlu0 %6560
  %6562 = vrot.lane.b32.xlu0 %v5043, 64
  %v6563 = vpop.permute.xlu0 %6562
  %6564 = vrot.lane.b32.xlu0 %v5046, 64
  %v6565 = vpop.permute.xlu0 %6564
  %6566 = vrot.lane.b32.xlu0 %v5048, 64
  %v6567 = vpop.permute.xlu0 %6566
  %6568 = vrot.lane.b32.xlu0 %v5051, 64
  %v6569 = vpop.permute.xlu0 %6568
  %6570 = vrot.lane.b32.xlu0 %v5053, 64
  %v6571 = vpop.permute.xlu0 %6570
  %6572 = vrot.lane.b32.xlu0 %v5056, 64
  %v6573 = vpop.permute.xlu0 %6572
  %6574 = vrot.lane.b32.xlu0 %v5058, 64
  %v6575 = vpop.permute.xlu0 %6574
  %6576 = vrot.lane.b32.xlu0 %v5061, 64
  %v6577 = vpop.permute.xlu0 %6576
  %6578 = vrot.lane.b32.xlu0 %v5063, 64
  %v6579 = vpop.permute.xlu0 %6578
  %6580 = vrot.lane.b32.xlu0 %v5087, 64
  %v6581 = vpop.permute.xlu0 %6580
  %6582 = vrot.lane.b32.xlu0 %v5089, 64
  %v6583 = vpop.permute.xlu0 %6582
  %6584 = vrot.lane.b32.xlu0 %v5113, 64
  %v6585 = vpop.permute.xlu0 %6584
  %6586 = vrot.lane.b32.xlu0 %v5115, 64
  %v6587 = vpop.permute.xlu0 %6586
  %v6652 = vsel %vm2551, %v4540, %v5117
  %v6653 = vsel %vm2551, %v4541, %v5119
  %v6654 = vsel %vm2551, %v4543, %v5121
  %v6655 = vsel %vm2551, %v4544, %v5123
  %v6656 = vsel %vm2551, %v4546, %v5125
  %v6657 = vsel %vm2551, %v4547, %v5127
  %v6658 = vsel %vm2551, %v4549, %v5129
  %v6659 = vsel %vm2551, %v4550, %v5131
  %v6660 = vsel %vm2551, %v4552, %v5133
  %v6661 = vsel %vm2551, %v4553, %v5135
  %v6662 = vsel %vm2551, %v4555, %v5137
  %v6663 = vsel %vm2551, %v4556, %v5139
  %v6664 = vsel %vm2551, %v4558, %v5141
  %v6665 = vsel %vm2551, %v4559, %v5143
  %v6666 = vsel %vm2551, %v4561, %v5145
  %v6667 = vsel %vm2551, %v4562, %v5147
  %v6668 = vsel %vm2551, %v4564, %v5149
  %v6669 = vsel %vm2551, %v4565, %v5151
  %v6670 = vsel %vm2551, %v4567, %v5153
  %v6671 = vsel %vm2551, %v4568, %v5155
  %v6672 = vsel %vm2551, %v4570, %v5157
  %v6673 = vsel %vm2551, %v4571, %v5159
  %v6674 = vsel %vm2551, %v4573, %v5161
  %v6675 = vsel %vm2551, %v4574, %v5163
  %v6676 = vsel %vm2551, %v4576, %v5165
  %v6677 = vsel %vm2551, %v4577, %v5167
  %v6678 = vsel %vm2551, %v4579, %v5169
  %v6679 = vsel %vm2551, %v4580, %v5171
  %v6680 = vsel %vm2551, %v4582, %v5173
  %v6681 = vsel %vm2551, %v4583, %v5175
  %v6682 = vsel %vm2551, %v4585, %v5177
  %v6683 = vsel %vm2551, %v4586, %v5179
  %v6684 = vsel %vm2551, %v4594, %v5181
  %v6685 = vsel %vm2551, %v4595, %v5183
  %v6686 = vsel %vm2551, %v4597, %v5185
  %v6687 = vsel %vm2551, %v4598, %v5187
  %v6688 = vsel %vm2551, %v4600, %v5189
  %v6689 = vsel %vm2551, %v4601, %v5191
  %v6690 = vsel %vm2551, %v4603, %v5193
  %v6691 = vsel %vm2551, %v4604, %v5195
  %v6692 = vsel %vm2551, %v4606, %v5197
  %v6693 = vsel %vm2551, %v4607, %v5199
  %v6694 = vsel %vm2551, %v4609, %v5201
  %v6695 = vsel %vm2551, %v4610, %v5203
  %v6696 = vsel %vm2551, %v4612, %v5205
  %v6697 = vsel %vm2551, %v4613, %v5207
  %v6698 = vsel %vm2551, %v4615, %v5209
  %v6699 = vsel %vm2551, %v4616, %v5211
  %v6700 = vsel %vm2551, %v4618, %v5213
  %v6701 = vsel %vm2551, %v4619, %v5215
  %v6702 = vsel %vm2551, %v4621, %v5217
  %v6703 = vsel %vm2551, %v4622, %v5219
  %v6704 = vsel %vm2551, %v4624, %v5221
  %v6705 = vsel %vm2551, %v4625, %v5223
  %v6706 = vsel %vm2551, %v4627, %v5225
  %v6707 = vsel %vm2551, %v4628, %v5227
  %v6708 = vsel %vm2551, %v4630, %v5229
  %v6709 = vsel %vm2551, %v4631, %v5231
  %v6710 = vsel %vm2551, %v4633, %v5233
  %v6711 = vsel %vm2551, %v4634, %v5235
  %v6712 = vsel %vm2551, %v4636, %v5237
  %v6713 = vsel %vm2551, %v4637, %v5239
  %v6714 = vsel %vm2551, %v4639, %v5241
  %v6715 = vsel %vm2551, %v4640, %v5243
  %v6716 = vsel %vm2681, %v6652, %v5309
  %v6717 = vsel %vm2681, %v6653, %v5311
  %v6718 = vsel %vm2681, %v6654, %v5313
  %v6719 = vsel %vm2681, %v6655, %v5315
  %v6720 = vsel %vm2681, %v6656, %v5317
  %v6721 = vsel %vm2681, %v6657, %v5319
  %v6722 = vsel %vm2681, %v6658, %v5321
  %v6723 = vsel %vm2681, %v6659, %v5323
  %v6724 = vsel %vm2681, %v6660, %v5325
  %v6725 = vsel %vm2681, %v6661, %v5327
  %v6726 = vsel %vm2681, %v6662, %v5329
  %v6727 = vsel %vm2681, %v6663, %v5331
  %v6728 = vsel %vm2681, %v6664, %v5333
  %v6729 = vsel %vm2681, %v6665, %v5335
  %v6730 = vsel %vm2681, %v6666, %v5337
  %v6731 = vsel %vm2681, %v6667, %v5339
  %v6732 = vsel %vm2681, %v6668, %v5341
  %v6733 = vsel %vm2681, %v6669, %v5343
  %v6734 = vsel %vm2681, %v6670, %v5345
  %v6735 = vsel %vm2681, %v6671, %v5347
  %v6736 = vsel %vm2681, %v6672, %v5349
  %v6737 = vsel %vm2681, %v6673, %v5351
  %v6738 = vsel %vm2681, %v6674, %v5353
  %v6739 = vsel %vm2681, %v6675, %v5355
  %v6740 = vsel %vm2681, %v6676, %v5357
  %v6741 = vsel %vm2681, %v6677, %v5359
  %v6742 = vsel %vm2681, %v6678, %v5361
  %v6743 = vsel %vm2681, %v6679, %v5363
  %v6744 = vsel %vm2681, %v6680, %v5365
  %v6745 = vsel %vm2681, %v6681, %v5367
  %v6746 = vsel %vm2681, %v6682, %v5369
  %v6747 = vsel %vm2681, %v6683, %v5371
  %v6748 = vsel %vm2681, %v6684, %v5373
  %v6749 = vsel %vm2681, %v6685, %v5375
  %v6750 = vsel %vm2681, %v6686, %v5377
  %v6751 = vsel %vm2681, %v6687, %v5379
  %v6752 = vsel %vm2681, %v6688, %v5381
  %v6753 = vsel %vm2681, %v6689, %v5383
  %v6754 = vsel %vm2681, %v6690, %v5385
  %v6755 = vsel %vm2681, %v6691, %v5387
  %v6756 = vsel %vm2681, %v6692, %v5389
  %v6757 = vsel %vm2681, %v6693, %v5391
  %v6758 = vsel %vm2681, %v6694, %v5393
  %v6759 = vsel %vm2681, %v6695, %v5395
  %v6760 = vsel %vm2681, %v6696, %v5397
  %v6761 = vsel %vm2681, %v6697, %v5399
  %v6762 = vsel %vm2681, %v6698, %v5401
  %v6763 = vsel %vm2681, %v6699, %v5403
  %v6764 = vsel %vm2681, %v6700, %v5405
  %v6765 = vsel %vm2681, %v6701, %v5407
  %v6766 = vsel %vm2681, %v6702, %v5409
  %v6767 = vsel %vm2681, %v6703, %v5411
  %v6768 = vsel %vm2681, %v6704, %v5413
  %v6769 = vsel %vm2681, %v6705, %v5415
  %v6770 = vsel %vm2681, %v6706, %v5417
  %v6771 = vsel %vm2681, %v6707, %v5419
  %v6772 = vsel %vm2681, %v6708, %v5421
  %v6773 = vsel %vm2681, %v6709, %v5423
  %v6774 = vsel %vm2681, %v6710, %v5425
  %v6775 = vsel %vm2681, %v6711, %v5427
  %v6776 = vsel %vm2681, %v6712, %v5429
  %v6777 = vsel %vm2681, %v6713, %v5431
  %v6778 = vsel %vm2681, %v6714, %v5433
  %v6779 = vsel %vm2681, %v6715, %v5435
  %v6780 = vsel %vm2811, %v6716, %v5501
  %v6781 = vsel %vm2811, %v6717, %v5503
  %v6782 = vsel %vm2811, %v6718, %v5505
  %v6783 = vsel %vm2811, %v6719, %v5507
  %v6784 = vsel %vm2811, %v6720, %v5509
  %v6785 = vsel %vm2811, %v6721, %v5511
  %v6786 = vsel %vm2811, %v6722, %v5513
  %v6787 = vsel %vm2811, %v6723, %v5515
  %v6788 = vsel %vm2811, %v6724, %v5517
  %v6789 = vsel %vm2811, %v6725, %v5519
  %v6790 = vsel %vm2811, %v6726, %v5521
  %v6791 = vsel %vm2811, %v6727, %v5523
  %v6792 = vsel %vm2811, %v6728, %v5525
  %v6793 = vsel %vm2811, %v6729, %v5527
  %v6794 = vsel %vm2811, %v6730, %v5529
  %v6795 = vsel %vm2811, %v6731, %v5531
  %v6796 = vsel %vm2811, %v6732, %v5533
  %v6797 = vsel %vm2811, %v6733, %v5535
  %v6798 = vsel %vm2811, %v6734, %v5537
  %v6799 = vsel %vm2811, %v6735, %v5539
  %v6800 = vsel %vm2811, %v6736, %v5541
  %v6801 = vsel %vm2811, %v6737, %v5543
  %v6802 = vsel %vm2811, %v6738, %v5545
  %v6803 = vsel %vm2811, %v6739, %v5547
  %v6804 = vsel %vm2811, %v6740, %v5549
  %v6805 = vsel %vm2811, %v6741, %v5551
  %v6806 = vsel %vm2811, %v6742, %v5553
  %v6807 = vsel %vm2811, %v6743, %v5555
  %v6808 = vsel %vm2811, %v6744, %v5557
  %v6809 = vsel %vm2811, %v6745, %v5559
  %v6810 = vsel %vm2811, %v6746, %v5561
  %v6811 = vsel %vm2811, %v6747, %v5563
  %v6812 = vsel %vm2811, %v6748, %v5565
  %v6813 = vsel %vm2811, %v6749, %v5567
  %v6814 = vsel %vm2811, %v6750, %v5569
  %v6815 = vsel %vm2811, %v6751, %v5571
  %v6816 = vsel %vm2811, %v6752, %v5573
  %v6817 = vsel %vm2811, %v6753, %v5575
  %v6818 = vsel %vm2811, %v6754, %v5577
  %v6819 = vsel %vm2811, %v6755, %v5579
  %v6820 = vsel %vm2811, %v6756, %v5581
  %v6821 = vsel %vm2811, %v6757, %v5583
  %v6822 = vsel %vm2811, %v6758, %v5585
  %v6823 = vsel %vm2811, %v6759, %v5587
  %v6824 = vsel %vm2811, %v6760, %v5589
  %v6825 = vsel %vm2811, %v6761, %v5591
  %v6826 = vsel %vm2811, %v6762, %v5593
  %v6827 = vsel %vm2811, %v6763, %v5595
  %v6828 = vsel %vm2811, %v6764, %v5597
  %v6829 = vsel %vm2811, %v6765, %v5599
  %v6830 = vsel %vm2811, %v6766, %v5601
  %v6831 = vsel %vm2811, %v6767, %v5603
  %v6832 = vsel %vm2811, %v6768, %v5605
  %v6833 = vsel %vm2811, %v6769, %v5607
  %v6834 = vsel %vm2811, %v6770, %v5609
  %v6835 = vsel %vm2811, %v6771, %v5611
  %v6836 = vsel %vm2811, %v6772, %v5613
  %v6837 = vsel %vm2811, %v6773, %v5615
  %v6838 = vsel %vm2811, %v6774, %v5617
  %v6839 = vsel %vm2811, %v6775, %v5619
  %v6840 = vsel %vm2811, %v6776, %v5621
  %v6841 = vsel %vm2811, %v6777, %v5623
  %v6842 = vsel %vm2811, %v6778, %v5625
  %v6843 = vsel %vm2811, %v6779, %v5627
  %v6844 = vsel %vm59, %v6780, %v5693
  %v6845 = vsel %vm59, %v6781, %v5695
  %v6846 = vsel %vm59, %v6782, %v5697
  %v6847 = vsel %vm59, %v6783, %v5699
  %v6848 = vsel %vm59, %v6784, %v5701
  %v6849 = vsel %vm59, %v6785, %v5703
  %v6850 = vsel %vm59, %v6786, %v5705
  %v6851 = vsel %vm59, %v6787, %v5707
  %v6852 = vsel %vm59, %v6788, %v5709
  %v6853 = vsel %vm59, %v6789, %v5711
  %v6854 = vsel %vm59, %v6790, %v5713
  %v6855 = vsel %vm59, %v6791, %v5715
  %v6856 = vsel %vm59, %v6792, %v5717
  %v6857 = vsel %vm59, %v6793, %v5719
  %v6858 = vsel %vm59, %v6794, %v5721
  %v6859 = vsel %vm59, %v6795, %v5723
  %v6860 = vsel %vm59, %v6796, %v5725
  %v6861 = vsel %vm59, %v6797, %v5727
  %v6862 = vsel %vm59, %v6798, %v5729
  %v6863 = vsel %vm59, %v6799, %v5731
  %v6864 = vsel %vm59, %v6800, %v5733
  %v6865 = vsel %vm59, %v6801, %v5735
  %v6866 = vsel %vm59, %v6802, %v5737
  %v6867 = vsel %vm59, %v6803, %v5739
  %v6868 = vsel %vm59, %v6804, %v5741
  %v6869 = vsel %vm59, %v6805, %v5743
  %v6870 = vsel %vm59, %v6806, %v5745
  %v6871 = vsel %vm59, %v6807, %v5747
  %v6872 = vsel %vm59, %v6808, %v5749
  %v6873 = vsel %vm59, %v6809, %v5751
  %v6874 = vsel %vm59, %v6810, %v5753
  %v6875 = vsel %vm59, %v6811, %v5755
  %v6876 = vsel %vm59, %v6812, %v5757
  %v6877 = vsel %vm59, %v6813, %v5759
  %v6878 = vsel %vm59, %v6814, %v5761
  %v6879 = vsel %vm59, %v6815, %v5763
  %v6880 = vsel %vm59, %v6816, %v5765
  %v6881 = vsel %vm59, %v6817, %v5767
  %v6882 = vsel %vm59, %v6818, %v5769
  %v6883 = vsel %vm59, %v6819, %v5771
  %v6884 = vsel %vm59, %v6820, %v5773
  %v6885 = vsel %vm59, %v6821, %v5775
  %v6886 = vsel %vm59, %v6822, %v5777
  %v6887 = vsel %vm59, %v6823, %v5779
  %v6888 = vsel %vm59, %v6824, %v5781
  %v6889 = vsel %vm59, %v6825, %v5783
  %v6890 = vsel %vm59, %v6826, %v5785
  %v6891 = vsel %vm59, %v6827, %v5787
  %v6892 = vsel %vm59, %v6828, %v5789
  %v6893 = vsel %vm59, %v6829, %v5791
  %v6894 = vsel %vm59, %v6830, %v5793
  %v6895 = vsel %vm59, %v6831, %v5795
  %v6896 = vsel %vm59, %v6832, %v5797
  %v6897 = vsel %vm59, %v6833, %v5799
  %v6898 = vsel %vm59, %v6834, %v5801
  %v6899 = vsel %vm59, %v6835, %v5803
  %v6900 = vsel %vm59, %v6836, %v5805
  %v6901 = vsel %vm59, %v6837, %v5807
  %v6902 = vsel %vm59, %v6838, %v5809
  %v6903 = vsel %vm59, %v6839, %v5811
  %v6904 = vsel %vm59, %v6840, %v5813
  %v6905 = vsel %vm59, %v6841, %v5815
  %v6906 = vsel %vm59, %v6842, %v5817
  %v6907 = vsel %vm59, %v6843, %v5819
  %vm6908 = vcmask 326656
  %v6909 = vsel %vm6908, %v6844, %v5885
  %v6910 = vsel %vm6908, %v6845, %v5887
  %v6911 = vsel %vm6908, %v6846, %v5889
  %v6912 = vsel %vm6908, %v6847, %v5891
  %v6913 = vsel %vm6908, %v6848, %v5893
  %v6914 = vsel %vm6908, %v6849, %v5895
  %v6915 = vsel %vm6908, %v6850, %v5897
  %v6916 = vsel %vm6908, %v6851, %v5899
  %v6917 = vsel %vm6908, %v6852, %v5901
  %v6918 = vsel %vm6908, %v6853, %v5903
  %v6919 = vsel %vm6908, %v6854, %v5905
  %v6920 = vsel %vm6908, %v6855, %v5907
  %v6921 = vsel %vm6908, %v6856, %v5909
  %v6922 = vsel %vm6908, %v6857, %v5911
  %v6923 = vsel %vm6908, %v6858, %v5913
  %v6924 = vsel %vm6908, %v6859, %v5915
  %v6925 = vsel %vm6908, %v6860, %v5917
  %v6926 = vsel %vm6908, %v6861, %v5919
  %v6927 = vsel %vm6908, %v6862, %v5921
  %v6928 = vsel %vm6908, %v6863, %v5923
  %v6929 = vsel %vm6908, %v6864, %v5925
  %v6930 = vsel %vm6908, %v6865, %v5927
  %v6931 = vsel %vm6908, %v6866, %v5929
  %v6932 = vsel %vm6908, %v6867, %v5931
  %v6933 = vsel %vm6908, %v6868, %v5933
  %v6934 = vsel %vm6908, %v6869, %v5935
  %v6935 = vsel %vm6908, %v6870, %v5937
  %v6936 = vsel %vm6908, %v6871, %v5939
  %v6937 = vsel %vm6908, %v6872, %v5941
  %v6938 = vsel %vm6908, %v6873, %v5943
  %v6939 = vsel %vm6908, %v6874, %v5945
  %v6940 = vsel %vm6908, %v6875, %v5947
  %v6941 = vsel %vm6908, %v6876, %v5949
  %v6942 = vsel %vm6908, %v6877, %v5951
  %v6943 = vsel %vm6908, %v6878, %v5953
  %v6944 = vsel %vm6908, %v6879, %v5955
  %v6945 = vsel %vm6908, %v6880, %v5957
  %v6946 = vsel %vm6908, %v6881, %v5959
  %v6947 = vsel %vm6908, %v6882, %v5961
  %v6948 = vsel %vm6908, %v6883, %v5963
  %v6949 = vsel %vm6908, %v6884, %v5965
  %v6950 = vsel %vm6908, %v6885, %v5967
  %v6951 = vsel %vm6908, %v6886, %v5969
  %v6952 = vsel %vm6908, %v6887, %v5971
  %v6953 = vsel %vm6908, %v6888, %v5973
  %v6954 = vsel %vm6908, %v6889, %v5975
  %v6955 = vsel %vm6908, %v6890, %v5977
  %v6956 = vsel %vm6908, %v6891, %v5979
  %v6957 = vsel %vm6908, %v6892, %v5981
  %v6958 = vsel %vm6908, %v6893, %v5983
  %v6959 = vsel %vm6908, %v6894, %v5985
  %v6960 = vsel %vm6908, %v6895, %v5987
  %v6961 = vsel %vm6908, %v6896, %v5989
  %v6962 = vsel %vm6908, %v6897, %v5991
  %v6963 = vsel %vm6908, %v6898, %v5993
  %v6964 = vsel %vm6908, %v6899, %v5995
  %v6965 = vsel %vm6908, %v6900, %v5997
  %v6966 = vsel %vm6908, %v6901, %v5999
  %v6967 = vsel %vm6908, %v6902, %v6001
  %v6968 = vsel %vm6908, %v6903, %v6003
  %v6969 = vsel %vm6908, %v6904, %v6005
  %v6970 = vsel %vm6908, %v6905, %v6007
  %v6971 = vsel %vm6908, %v6906, %v6009
  %v6972 = vsel %vm6908, %v6907, %v6011
  %vm6973 = vcmask 392192
  %v6974 = vsel %vm6973, %v6909, %v6077
  %v6975 = vsel %vm6973, %v6910, %v6079
  %v6976 = vsel %vm6973, %v6911, %v6081
  %v6977 = vsel %vm6973, %v6912, %v6083
  %v6978 = vsel %vm6973, %v6913, %v6085
  %v6979 = vsel %vm6973, %v6914, %v6087
  %v6980 = vsel %vm6973, %v6915, %v6089
  %v6981 = vsel %vm6973, %v6916, %v6091
  %v6982 = vsel %vm6973, %v6917, %v6093
  %v6983 = vsel %vm6973, %v6918, %v6095
  %v6984 = vsel %vm6973, %v6919, %v6097
  %v6985 = vsel %vm6973, %v6920, %v6099
  %v6986 = vsel %vm6973, %v6921, %v6101
  %v6987 = vsel %vm6973, %v6922, %v6103
  %v6988 = vsel %vm6973, %v6923, %v6105
  %v6989 = vsel %vm6973, %v6924, %v6107
  %v6990 = vsel %vm6973, %v6925, %v6109
  %v6991 = vsel %vm6973, %v6926, %v6111
  %v6992 = vsel %vm6973, %v6927, %v6113
  %v6993 = vsel %vm6973, %v6928, %v6115
  %v6994 = vsel %vm6973, %v6929, %v6117
  %v6995 = vsel %vm6973, %v6930, %v6119
  %v6996 = vsel %vm6973, %v6931, %v6121
  %v6997 = vsel %vm6973, %v6932, %v6123
  %v6998 = vsel %vm6973, %v6933, %v6125
  %v6999 = vsel %vm6973, %v6934, %v6127
  %v7000 = vsel %vm6973, %v6935, %v6129
  %v7001 = vsel %vm6973, %v6936, %v6131
  %v7002 = vsel %vm6973, %v6937, %v6133
  %v7003 = vsel %vm6973, %v6938, %v6135
  %v7004 = vsel %vm6973, %v6939, %v6137
  %v7005 = vsel %vm6973, %v6940, %v6139
  %v7006 = vsel %vm6973, %v6941, %v6141
  %v7007 = vsel %vm6973, %v6942, %v6143
  %v7008 = vsel %vm6973, %v6943, %v6145
  %v7009 = vsel %vm6973, %v6944, %v6147
  %v7010 = vsel %vm6973, %v6945, %v6149
  %v7011 = vsel %vm6973, %v6946, %v6151
  %v7012 = vsel %vm6973, %v6947, %v6153
  %v7013 = vsel %vm6973, %v6948, %v6155
  %v7014 = vsel %vm6973, %v6949, %v6157
  %v7015 = vsel %vm6973, %v6950, %v6159
  %v7016 = vsel %vm6973, %v6951, %v6161
  %v7017 = vsel %vm6973, %v6952, %v6163
  %v7018 = vsel %vm6973, %v6953, %v6165
  %v7019 = vsel %vm6973, %v6954, %v6167
  %v7020 = vsel %vm6973, %v6955, %v6169
  %v7021 = vsel %vm6973, %v6956, %v6171
  %v7022 = vsel %vm6973, %v6957, %v6173
  %v7023 = vsel %vm6973, %v6958, %v6175
  %v7024 = vsel %vm6973, %v6959, %v6177
  %v7025 = vsel %vm6973, %v6960, %v6179
  %v7026 = vsel %vm6973, %v6961, %v6181
  %v7027 = vsel %vm6973, %v6962, %v6183
  %v7028 = vsel %vm6973, %v6963, %v6185
  %v7029 = vsel %vm6973, %v6964, %v6187
  %v7030 = vsel %vm6973, %v6965, %v6189
  %v7031 = vsel %vm6973, %v6966, %v6191
  %v7032 = vsel %vm6973, %v6967, %v6193
  %v7033 = vsel %vm6973, %v6968, %v6195
  %v7034 = vsel %vm6973, %v6969, %v6197
  %v7035 = vsel %vm6973, %v6970, %v6199
  %v7036 = vsel %vm6973, %v6971, %v6201
  %v7037 = vsel %vm6973, %v6972, %v6203
  %vm7038 = vcmask 457728
  %v7039 = vsel %vm7038, %v6974, %v6269
  %v7040 = vsel %vm7038, %v6975, %v6271
  %v7041 = vsel %vm7038, %v6976, %v6273
  %v7042 = vsel %vm7038, %v6977, %v6275
  %v7043 = vsel %vm7038, %v6978, %v6277
  %v7044 = vsel %vm7038, %v6979, %v6279
  %v7045 = vsel %vm7038, %v6980, %v6281
  %v7046 = vsel %vm7038, %v6981, %v6283
  %v7047 = vsel %vm7038, %v6982, %v6285
  %v7048 = vsel %vm7038, %v6983, %v6287
  %v7049 = vsel %vm7038, %v6984, %v6289
  %v7050 = vsel %vm7038, %v6985, %v6291
  %v7051 = vsel %vm7038, %v6986, %v6293
  %v7052 = vsel %vm7038, %v6987, %v6295
  %v7053 = vsel %vm7038, %v6988, %v6297
  %v7054 = vsel %vm7038, %v6989, %v6299
  %v7055 = vsel %vm7038, %v6990, %v6301
  %v7056 = vsel %vm7038, %v6991, %v6303
  %v7057 = vsel %vm7038, %v6992, %v6305
  %v7058 = vsel %vm7038, %v6993, %v6307
  %v7059 = vsel %vm7038, %v6994, %v6309
  %v7060 = vsel %vm7038, %v6995, %v6311
  %v7061 = vsel %vm7038, %v6996, %v6313
  %v7062 = vsel %vm7038, %v6997, %v6315
  %v7063 = vsel %vm7038, %v6998, %v6317
  %v7064 = vsel %vm7038, %v6999, %v6319
  %v7065 = vsel %vm7038, %v7000, %v6321
  %v7066 = vsel %vm7038, %v7001, %v6323
  %v7067 = vsel %vm7038, %v7002, %v6325
  %v7068 = vsel %vm7038, %v7003, %v6327
  %v7069 = vsel %vm7038, %v7004, %v6329
  %v7070 = vsel %vm7038, %v7005, %v6331
  %v7071 = vsel %vm7038, %v7006, %v6333
  %v7072 = vsel %vm7038, %v7007, %v6335
  %v7073 = vsel %vm7038, %v7008, %v6337
  %v7074 = vsel %vm7038, %v7009, %v6339
  %v7075 = vsel %vm7038, %v7010, %v6341
  %v7076 = vsel %vm7038, %v7011, %v6343
  %v7077 = vsel %vm7038, %v7012, %v6345
  %v7078 = vsel %vm7038, %v7013, %v6347
  %v7079 = vsel %vm7038, %v7014, %v6349
  %v7080 = vsel %vm7038, %v7015, %v6351
  %v7081 = vsel %vm7038, %v7016, %v6353
  %v7082 = vsel %vm7038, %v7017, %v6355
  %v7083 = vsel %vm7038, %v7018, %v6357
  %v7084 = vsel %vm7038, %v7019, %v6359
  %v7085 = vsel %vm7038, %v7020, %v6361
  %v7086 = vsel %vm7038, %v7021, %v6363
  %v7087 = vsel %vm7038, %v7022, %v6365
  %v7088 = vsel %vm7038, %v7023, %v6367
  %v7089 = vsel %vm7038, %v7024, %v6369
  %v7090 = vsel %vm7038, %v7025, %v6371
  %v7091 = vsel %vm7038, %v7026, %v6373
  %v7092 = vsel %vm7038, %v7027, %v6375
  %v7093 = vsel %vm7038, %v7028, %v6377
  %v7094 = vsel %vm7038, %v7029, %v6379
  %v7095 = vsel %vm7038, %v7030, %v6381
  %v7096 = vsel %vm7038, %v7031, %v6383
  %v7097 = vsel %vm7038, %v7032, %v6385
  %v7098 = vsel %vm7038, %v7033, %v6387
  %v7099 = vsel %vm7038, %v7034, %v6389
  %v7100 = vsel %vm7038, %v7035, %v6391
  %v7101 = vsel %vm7038, %v7036, %v6393
  %v7102 = vsel %vm7038, %v7037, %v6395
  %vm7103 = vcmask 523264
  %v7104 = vsel %vm7103, %v7039, %v6461
  %v7105 = vsel %vm7103, %v7040, %v6463
  %v7106 = vsel %vm7103, %v7041, %v6465
  %v7107 = vsel %vm7103, %v7042, %v6467
  %v7108 = vsel %vm7103, %v7043, %v6469
  %v7109 = vsel %vm7103, %v7044, %v6471
  %v7110 = vsel %vm7103, %v7045, %v6473
  %v7111 = vsel %vm7103, %v7046, %v6475
  %v7112 = vsel %vm7103, %v7047, %v6477
  %v7113 = vsel %vm7103, %v7048, %v6479
  %v7114 = vsel %vm7103, %v7049, %v6481
  %v7115 = vsel %vm7103, %v7050, %v6483
  %v7116 = vsel %vm7103, %v7051, %v6485
  %v7117 = vsel %vm7103, %v7052, %v6487
  %v7118 = vsel %vm7103, %v7053, %v6489
  %v7119 = vsel %vm7103, %v7054, %v6491
  %v7120 = vsel %vm7103, %v7055, %v6493
  %v7121 = vsel %vm7103, %v7056, %v6495
  %v7122 = vsel %vm7103, %v7057, %v6497
  %v7123 = vsel %vm7103, %v7058, %v6499
  %v7124 = vsel %vm7103, %v7059, %v6501
  %v7125 = vsel %vm7103, %v7060, %v6503
  %v7126 = vsel %vm7103, %v7061, %v6505
  %v7127 = vsel %vm7103, %v7062, %v6507
  %v7128 = vsel %vm7103, %v7063, %v6509
  %v7129 = vsel %vm7103, %v7064, %v6511
  %v7130 = vsel %vm7103, %v7065, %v6513
  %v7131 = vsel %vm7103, %v7066, %v6515
  %v7132 = vsel %vm7103, %v7067, %v6517
  %v7133 = vsel %vm7103, %v7068, %v6519
  %v7134 = vsel %vm7103, %v7069, %v6521
  %v7135 = vsel %vm7103, %v7070, %v6523
  %v7136 = vsel %vm7103, %v7071, %v6525
  %v7137 = vsel %vm7103, %v7072, %v6527
  %v7138 = vsel %vm7103, %v7073, %v6529
  %v7139 = vsel %vm7103, %v7074, %v6531
  %v7140 = vsel %vm7103, %v7075, %v6533
  %v7141 = vsel %vm7103, %v7076, %v6535
  %v7142 = vsel %vm7103, %v7077, %v6537
  %v7143 = vsel %vm7103, %v7078, %v6539
  %v7144 = vsel %vm7103, %v7079, %v6541
  %v7145 = vsel %vm7103, %v7080, %v6543
  %v7146 = vsel %vm7103, %v7081, %v6545
  %v7147 = vsel %vm7103, %v7082, %v6547
  %v7148 = vsel %vm7103, %v7083, %v6549
  %v7149 = vsel %vm7103, %v7084, %v6551
  %v7150 = vsel %vm7103, %v7085, %v6553
  %v7151 = vsel %vm7103, %v7086, %v6555
  %v7152 = vsel %vm7103, %v7087, %v6557
  %v7153 = vsel %vm7103, %v7088, %v6559
  %v7154 = vsel %vm7103, %v7089, %v6561
  %v7155 = vsel %vm7103, %v7090, %v6563
  %v7156 = vsel %vm7103, %v7091, %v6565
  %v7157 = vsel %vm7103, %v7092, %v6567
  %v7158 = vsel %vm7103, %v7093, %v6569
  %v7159 = vsel %vm7103, %v7094, %v6571
  %v7160 = vsel %vm7103, %v7095, %v6573
  %v7161 = vsel %vm7103, %v7096, %v6575
  %v7162 = vsel %vm7103, %v7097, %v6577
  %v7163 = vsel %vm7103, %v7098, %v6579
  %v7164 = vsel %vm7103, %v7099, %v6581
  %v7165 = vsel %vm7103, %v7100, %v6583
  %v7166 = vsel %vm7103, %v7101, %v6585
  %v7167 = vsel %vm7103, %v7102, %v6587
  %v7168 = vld [vmem:[%s8] sm:$0xff]
  %v7169 = vld [vmem:[%s8 + $0x8] sm:$0xff]
  %v7170 = vld [vmem:[%s8 + $0x10] sm:$0xff]
  %v7171 = vld [vmem:[%s8 + $0x18] sm:$0xff]
  %v7172 = vld [vmem:[%s8 + $0x20] sm:$0xff]
  %v7173 = vld [vmem:[%s8 + $0x28] sm:$0xff]
  %v7174 = vld [vmem:[%s8 + $0x30] sm:$0xff]
  %v7175 = vld [vmem:[%s8 + $0x38] sm:$0xff]
  %v7176 = vld [vmem:[%s8 + $0x40] sm:$0xff]
  %v7177 = vld [vmem:[%s9] sm:$0x1]
  %v7179 = vlaneseq
  %v7180 = vshrl.u32 %v7179, 7
  %v7181 = vsub.s32 0, %v7180
  %v7182 = vrot.slane %v7177, %v7181
  %vm7184 = vcmask 588800
  %v7186 = vsel %vm7184, %v7104, 0
  %v7189 = vsel %vm7184, %v7105, 0
  %v7192 = vsel %vm7184, %v7106, 0
  %v7195 = vsel %vm7184, %v7107, 0
  %v7198 = vsel %vm7184, %v7108, 0
  %v7201 = vsel %vm7184, %v7109, 0
  %v7204 = vsel %vm7184, %v7110, 0
  %v7207 = vsel %vm7184, %v7111, 0
  %v7210 = vsel %vm7184, %v7112, 0
  %v7213 = vsel %vm7184, %v7113, 0
  %v7216 = vsel %vm7184, %v7114, 0
  %v7219 = vsel %vm7184, %v7115, 0
  %v7222 = vsel %vm7184, %v7116, 0
  %v7225 = vsel %vm7184, %v7117, 0
  %v7228 = vsel %vm7184, %v7118, 0
  %v7231 = vsel %vm7184, %v7119, 0
  %v7234 = vsel %vm7184, %v7120, 0
  %v7237 = vsel %vm7184, %v7121, 0
  %v7240 = vsel %vm7184, %v7122, 0
  %v7243 = vsel %vm7184, %v7123, 0
  %v7246 = vsel %vm7184, %v7124, 0
  %v7249 = vsel %vm7184, %v7125, 0
  %v7252 = vsel %vm7184, %v7126, 0
  %v7255 = vsel %vm7184, %v7127, 0
  %v7258 = vsel %vm7184, %v7128, 0
  %v7261 = vsel %vm7184, %v7129, 0
  %v7264 = vsel %vm7184, %v7130, 0
  %v7267 = vsel %vm7184, %v7131, 0
  %v7270 = vsel %vm7184, %v7132, 0
  %v7273 = vsel %vm7184, %v7133, 0
  %v7276 = vsel %vm7184, %v7134, 0
  %v7279 = vsel %vm7184, %v7135, 0
  %v7282 = vsel %vm7184, %v7136, 0
  %v7285 = vsel %vm7184, %v7137, 0
  %v7288 = vsel %vm7184, %v7138, 0
  %v7291 = vsel %vm7184, %v7139, 0
  %v7294 = vsel %vm7184, %v7140, 0
  %v7297 = vsel %vm7184, %v7141, 0
  %v7300 = vsel %vm7184, %v7142, 0
  %v7303 = vsel %vm7184, %v7143, 0
  %v7306 = vsel %vm7184, %v7144, 0
  %v7309 = vsel %vm7184, %v7145, 0
  %v7312 = vsel %vm7184, %v7146, 0
  %v7315 = vsel %vm7184, %v7147, 0
  %v7318 = vsel %vm7184, %v7148, 0
  %v7321 = vsel %vm7184, %v7149, 0
  %v7324 = vsel %vm7184, %v7150, 0
  %v7327 = vsel %vm7184, %v7151, 0
  %v7330 = vsel %vm7184, %v7152, 0
  %v7333 = vsel %vm7184, %v7153, 0
  %v7336 = vsel %vm7184, %v7154, 0
  %v7339 = vsel %vm7184, %v7155, 0
  %v7342 = vsel %vm7184, %v7156, 0
  %v7345 = vsel %vm7184, %v7157, 0
  %v7348 = vsel %vm7184, %v7158, 0
  %v7351 = vsel %vm7184, %v7159, 0
  %v7354 = vsel %vm7184, %v7160, 0
  %v7357 = vsel %vm7184, %v7161, 0
  %v7360 = vsel %vm7184, %v7162, 0
  %v7363 = vsel %vm7184, %v7163, 0
  %v7366 = vsel %vm7184, %v7164, 0
  %v7369 = vsel %vm7184, %v7165, 0
  %v7372 = vsel %vm7184, %v7166, 0
  %v7375 = vsel %vm7184, %v7167, 0
  %7377 = vmatprep.subr.mxu0 0.0
  %7378 = vmatpush1.msra.mxu0 %v7168
  %7379 = vmatprep.subr.mxu0 0.0
  %7380 = vmatpush1.msra.mxu0 %v7169
  %7381 = vmatprep.subr.mxu0 0.0
  %7382 = vmatpush1.msra.mxu0 %v7170
  %7383 = vmatprep.subr.mxu0 0.0
  %7384 = vmatpush1.msra.mxu0 %v7171
  %7385 = vmatprep.subr.mxu0 0.0
  %7386 = vmatpush1.msra.mxu0 %v7172
  %7387 = vmatprep.subr.mxu0 0.0
  %7388 = vmatpush1.msra.mxu0 %v7173
  %7389 = vmatprep.subr.mxu0 0.0
  %7390 = vmatpush1.msra.mxu0 %v7174
  %7391 = vmatprep.subr.mxu0 0.0
  %7392 = vmatpush1.msra.mxu0 %v7175
  %7393 = vmatprep.subr.mxu0 0.0
  %7394 = vmatpush1.msra.mxu0 %v7176
  %7395 = vmatprep.subr.mxu0 0.0
  %7396 = vmatpush1.msra.mxu0 0.0
  %7397 = vmatprep.subr.mxu0 0.0
  %7398 = vmatpush1.msra.mxu0 0.0
  %7399 = vmatprep.subr.mxu0 0.0
  %7400 = vmatpush1.msra.mxu0 0.0
  %7401 = vmatprep.subr.mxu0 0.0
  %7402 = vmatpush1.msra.mxu0 0.0
  %7403 = vmatprep.subr.mxu0 0.0
  %7404 = vmatpush1.msra.mxu0 0.0
  %7405 = vmatprep.subr.mxu0 0.0
  %7406 = vmatpush1.msra.mxu0 0.0
  %7407 = vmatprep.subr.mxu0 0.0
  %7408 = vmatpush1.msra.mxu0 0.0
  %7409 = vmatprep.subr.mxu0 0.0
  %7410 = vmatpush1.msra.mxu0 0.0
  %7411 = vmatprep.subr.mxu0 0.0
  %7412 = vmatpush1.msra.mxu0 0.0
  %7413 = vmatprep.subr.mxu0 0.0
  %7414 = vmatpush1.msra.mxu0 0.0
  %7415 = vmatprep.subr.mxu0 0.0
  %7416 = vmatpush1.msra.mxu0 0.0
  %7417 = vmatprep.subr.mxu0 0.0
  %7418 = vmatpush1.msra.mxu0 0.0
  %7419 = vmatprep.subr.mxu0 0.0
  %7420 = vmatpush1.msra.mxu0 0.0
  %7421 = vmatprep.subr.mxu0 0.0
  %7422 = vmatpush1.msra.mxu0 0.0
  %7423 = vmatprep.subr.mxu0 0.0
  %7424 = vmatpush1.msra.mxu0 0.0
  %7425 = vmatprep.subr.mxu0 0.0
  %7426 = vmatpush1.msra.mxu0 0.0
  %7427 = vmatprep.subr.mxu0 0.0
  %7428 = vmatpush1.msra.mxu0 0.0
  %7429 = vmatprep.subr.mxu0 0.0
  %7430 = vmatpush1.msra.mxu0 0.0
  %7431 = vmatprep.subr.mxu0 0.0
  %7432 = vmatpush1.msra.mxu0 0.0
  %7433 = vmatprep.subr.mxu0 0.0
  %7434 = vmatpush1.msra.mxu0 0.0
  %7435 = vmatprep.subr.mxu0 0.0
  %7436 = vmatpush1.msra.mxu0 0.0
  %7437 = vmatprep.subr.mxu0 0.0
  %7438 = vmatpush1.msra.mxu0 0.0
  %7439 = vmatprep.subr.mxu0 0.0
  %7440 = vmatpush1.msra.mxu0 0.0
  %7441 = vmatprep.mubr.f32.mxu0 0.0
  %7442 = vmatmul.mubr.f32.gmra.mrb[0].mxu0 %v7186
  %v7443 = vpop.f32.mrb[0].mxu0
  %v7444 = vadd.f32 %v7182, %v7443
  %v7445 = vpop.f32.mrb[0].mxu0
  %7446 = vmatprep.mubr.f32.mxu0 0.0
  %7447 = vmatmul.mubr.f32.gmra.mrb[0].mxu0 %v7189
  %v7448 = vpop.f32.mrb[0].mxu0
  %v7449 = vadd.f32 %v7182, %v7448
  %v7450 = vpop.f32.mrb[0].mxu0
  %7451 = vmatprep.mubr.f32.mxu0 0.0
  %7452 = vmatmul.mubr.f32.gmra.mrb[0].mxu0 %v7192
  %v7453 = vpop.f32.mrb[0].mxu0
  %v7454 = vadd.f32 %v7182, %v7453
  %v7455 = vpop.f32.mrb[0].mxu0
  %7456 = vmatprep.mubr.f32.mxu0 0.0
  %7457 = vmatmul.mubr.f32.gmra.mrb[0].mxu0 %v7195
  %v7458 = vpop.f32.mrb[0].mxu0
  %v7459 = vadd.f32 %v7182, %v7458
  %v7460 = vpop.f32.mrb[0].mxu0
  %7461 = vmatprep.mubr.f32.mxu0 0.0
  %7462 = vmatmul.mubr.f32.gmra.mrb[0].mxu0 %v7198
  %v7463 = vpop.f32.mrb[0].mxu0
  %v7464 = vadd.f32 %v7182, %v7463
  %v7465 = vpop.f32.mrb[0].mxu0
  %7466 = vmatprep.mubr.f32.mxu0 0.0
  %7467 = vmatmul.mubr.f32.gmra.mrb[0].mxu0 %v7201
  %v7468 = vpop.f32.mrb[0].mxu0
  %v7469 = vadd.f32 %v7182, %v7468
  %v7470 = vpop.f32.mrb[0].mxu0
  %7471 = vmatprep.mubr.f32.mxu0 0.0
  %7472 = vmatmul.mubr.f32.gmra.mrb[0].mxu0 %v7204
  %v7473 = vpop.f32.mrb[0].mxu0
  %v7474 = vadd.f32 %v7182, %v7473
  %v7475 = vpop.f32.mrb[0].mxu0
  %7476 = vmatprep.mubr.f32.mxu0 0.0
  %7477 = vmatmul.mubr.f32.gmra.mrb[0].mxu0 %v7207
  %v7478 = vpop.f32.mrb[0].mxu0
  %v7479 = vadd.f32 %v7182, %v7478
  %v7480 = vpop.f32.mrb[0].mxu0
  %7481 = vmatprep.mubr.f32.mxu0 0.0
  %7482 = vmatmul.mubr.f32.gmra.mrb[0].mxu0 %v7210
  %v7483 = vpop.f32.mrb[0].mxu0
  %v7484 = vadd.f32 %v7182, %v7483
  %v7485 = vpop.f32.mrb[0].mxu0
  %7486 = vmatprep.mubr.f32.mxu0 0.0
  %7487 = vmatmul.mubr.f32.gmra.mrb[0].mxu0 %v7213
  %v7488 = vpop.f32.mrb[0].mxu0
  %v7489 = vadd.f32 %v7182, %v7488
  %v7490 = vpop.f32.mrb[0].mxu0
  %7491 = vmatprep.mubr.f32.mxu0 0.0
  %7492 = vmatmul.mubr.f32.gmra.mrb[0].mxu0 %v7216
  %v7493 = vpop.f32.mrb[0].mxu0
  %v7494 = vadd.f32 %v7182, %v7493
  %v7495 = vpop.f32.mrb[0].mxu0
  %7496 = vmatprep.mubr.f32.mxu0 0.0
  %7497 = vmatmul.mubr.f32.gmra.mrb[0].mxu0 %v7219
  %v7498 = vpop.f32.mrb[0].mxu0
  %v7499 = vadd.f32 %v7182, %v7498
  %v7500 = vpop.f32.mrb[0].mxu0
  %7501 = vmatprep.mubr.f32.mxu0 0.0
  %7502 = vmatmul.mubr.f32.gmra.mrb[0].mxu0 %v7222
  %v7503 = vpop.f32.mrb[0].mxu0
  %v7504 = vadd.f32 %v7182, %v7503
  %v7505 = vpop.f32.mrb[0].mxu0
  %7506 = vmatprep.mubr.f32.mxu0 0.0
  %7507 = vmatmul.mubr.f32.gmra.mrb[0].mxu0 %v7225
  %v7508 = vpop.f32.mrb[0].mxu0
  %v7509 = vadd.f32 %v7182, %v7508
  %v7510 = vpop.f32.mrb[0].mxu0
  %7511 = vmatprep.mubr.f32.mxu0 0.0
  %7512 = vmatmul.mubr.f32.gmra.mrb[0].mxu0 %v7228
  %v7513 = vpop.f32.mrb[0].mxu0
  %v7514 = vadd.f32 %v7182, %v7513
  %v7515 = vpop.f32.mrb[0].mxu0
  %7516 = vmatprep.mubr.f32.mxu0 0.0
  %7517 = vmatmul.mubr.f32.gmra.mrb[0].mxu0 %v7231
  %v7518 = vpop.f32.mrb[0].mxu0
  %v7519 = vadd.f32 %v7182, %v7518
  %v7520 = vpop.f32.mrb[0].mxu0
  %7521 = vmatprep.mubr.f32.mxu0 0.0
  %7522 = vmatmul.mubr.f32.gmra.mrb[0].mxu0 %v7234
  %v7523 = vpop.f32.mrb[0].mxu0
  %v7524 = vadd.f32 %v7182, %v7523
  %v7525 = vpop.f32.mrb[0].mxu0
  %7526 = vmatprep.mubr.f32.mxu0 0.0
  %7527 = vmatmul.mubr.f32.gmra.mrb[0].mxu0 %v7237
  %v7528 = vpop.f32.mrb[0].mxu0
  %v7529 = vadd.f32 %v7182, %v7528
  %v7530 = vpop.f32.mrb[0].mxu0
  %7531 = vmatprep.mubr.f32.mxu0 0.0
  %7532 = vmatmul.mubr.f32.gmra.mrb[0].mxu0 %v7240
  %v7533 = vpop.f32.mrb[0].mxu0
  %v7534 = vadd.f32 %v7182, %v7533
  %v7535 = vpop.f32.mrb[0].mxu0
  %7536 = vmatprep.mubr.f32.mxu0 0.0
  %7537 = vmatmul.mubr.f32.gmra.mrb[0].mxu0 %v7243
  %v7538 = vpop.f32.mrb[0].mxu0
  %v7539 = vadd.f32 %v7182, %v7538
  %v7540 = vpop.f32.mrb[0].mxu0
  %7541 = vmatprep.mubr.f32.mxu0 0.0
  %7542 = vmatmul.mubr.f32.gmra.mrb[0].mxu0 %v7246
  %v7543 = vpop.f32.mrb[0].mxu0
  %v7544 = vadd.f32 %v7182, %v7543
  %v7545 = vpop.f32.mrb[0].mxu0
  %7546 = vmatprep.mubr.f32.mxu0 0.0
  %7547 = vmatmul.mubr.f32.gmra.mrb[0].mxu0 %v7249
  %v7548 = vpop.f32.mrb[0].mxu0
  %v7549 = vadd.f32 %v7182, %v7548
  %v7550 = vpop.f32.mrb[0].mxu0
  %7551 = vmatprep.mubr.f32.mxu0 0.0
  %7552 = vmatmul.mubr.f32.gmra.mrb[0].mxu0 %v7252
  %v7553 = vpop.f32.mrb[0].mxu0
  %v7554 = vadd.f32 %v7182, %v7553
  %v7555 = vpop.f32.mrb[0].mxu0
  %7556 = vmatprep.mubr.f32.mxu0 0.0
  %7557 = vmatmul.mubr.f32.gmra.mrb[0].mxu0 %v7255
  %v7558 = vpop.f32.mrb[0].mxu0
  %v7559 = vadd.f32 %v7182, %v7558
  %v7560 = vpop.f32.mrb[0].mxu0
  %7561 = vmatprep.mubr.f32.mxu0 0.0
  %7562 = vmatmul.mubr.f32.gmra.mrb[0].mxu0 %v7258
  %v7563 = vpop.f32.mrb[0].mxu0
  %v7564 = vadd.f32 %v7182, %v7563
  %v7565 = vpop.f32.mrb[0].mxu0
  %7566 = vmatprep.mubr.f32.mxu0 0.0
  %7567 = vmatmul.mubr.f32.gmra.mrb[0].mxu0 %v7261
  %v7568 = vpop.f32.mrb[0].mxu0
  %v7569 = vadd.f32 %v7182, %v7568
  %v7570 = vpop.f32.mrb[0].mxu0
  %7571 = vmatprep.mubr.f32.mxu0 0.0
  %7572 = vmatmul.mubr.f32.gmra.mrb[0].mxu0 %v7264
  %v7573 = vpop.f32.mrb[0].mxu0
  %v7574 = vadd.f32 %v7182, %v7573
  %v7575 = vpop.f32.mrb[0].mxu0
  %7576 = vmatprep.mubr.f32.mxu0 0.0
  %7577 = vmatmul.mubr.f32.gmra.mrb[0].mxu0 %v7267
  %v7578 = vpop.f32.mrb[0].mxu0
  %v7579 = vadd.f32 %v7182, %v7578
  %v7580 = vpop.f32.mrb[0].mxu0
  %7581 = vmatprep.mubr.f32.mxu0 0.0
  %7582 = vmatmul.mubr.f32.gmra.mrb[0].mxu0 %v7270
  %v7583 = vpop.f32.mrb[0].mxu0
  %v7584 = vadd.f32 %v7182, %v7583
  %v7585 = vpop.f32.mrb[0].mxu0
  %7586 = vmatprep.mubr.f32.mxu0 0.0
  %7587 = vmatmul.mubr.f32.gmra.mrb[0].mxu0 %v7273
  %v7588 = vpop.f32.mrb[0].mxu0
  %v7589 = vadd.f32 %v7182, %v7588
  %v7590 = vpop.f32.mrb[0].mxu0
  %7591 = vmatprep.mubr.f32.mxu0 0.0
  %7592 = vmatmul.mubr.f32.gmra.mrb[0].mxu0 %v7276
  %v7593 = vpop.f32.mrb[0].mxu0
  %v7594 = vadd.f32 %v7182, %v7593
  %v7595 = vpop.f32.mrb[0].mxu0
  %7596 = vmatprep.mubr.f32.mxu0 0.0
  %7597 = vmatmul.mubr.f32.gmra.mrb[0].mxu0 %v7279
  %v7598 = vpop.f32.mrb[0].mxu0
  %v7599 = vadd.f32 %v7182, %v7598
  %v7600 = vpop.f32.mrb[0].mxu0
  %7601 = vmatprep.mubr.f32.mxu0 0.0
  %7602 = vmatmul.mubr.f32.gmra.mrb[0].mxu0 %v7282
  %v7603 = vpop.f32.mrb[0].mxu0
  %v7604 = vadd.f32 %v7182, %v7603
  %v7605 = vpop.f32.mrb[0].mxu0
  %7606 = vmatprep.mubr.f32.mxu0 0.0
  %7607 = vmatmul.mubr.f32.gmra.mrb[0].mxu0 %v7285
  %v7608 = vpop.f32.mrb[0].mxu0
  %v7609 = vadd.f32 %v7182, %v7608
  %v7610 = vpop.f32.mrb[0].mxu0
  %7611 = vmatprep.mubr.f32.mxu0 0.0
  %7612 = vmatmul.mubr.f32.gmra.mrb[0].mxu0 %v7288
  %v7613 = vpop.f32.mrb[0].mxu0
  %v7614 = vadd.f32 %v7182, %v7613
  %v7615 = vpop.f32.mrb[0].mxu0
  %7616 = vmatprep.mubr.f32.mxu0 0.0
  %7617 = vmatmul.mubr.f32.gmra.mrb[0].mxu0 %v7291
  %v7618 = vpop.f32.mrb[0].mxu0
  %v7619 = vadd.f32 %v7182, %v7618
  %v7620 = vpop.f32.mrb[0].mxu0
  %7621 = vmatprep.mubr.f32.mxu0 0.0
  %7622 = vmatmul.mubr.f32.gmra.mrb[0].mxu0 %v7294
  %v7623 = vpop.f32.mrb[0].mxu0
  %v7624 = vadd.f32 %v7182, %v7623
  %v7625 = vpop.f32.mrb[0].mxu0
  %7626 = vmatprep.mubr.f32.mxu0 0.0
  %7627 = vmatmul.mubr.f32.gmra.mrb[0].mxu0 %v7297
  %v7628 = vpop.f32.mrb[0].mxu0
  %v7629 = vadd.f32 %v7182, %v7628
  %v7630 = vpop.f32.mrb[0].mxu0
  %7631 = vmatprep.mubr.f32.mxu0 0.0
  %7632 = vmatmul.mubr.f32.gmra.mrb[0].mxu0 %v7300
  %v7633 = vpop.f32.mrb[0].mxu0
  %v7634 = vadd.f32 %v7182, %v7633
  %v7635 = vpop.f32.mrb[0].mxu0
  %7636 = vmatprep.mubr.f32.mxu0 0.0
  %7637 = vmatmul.mubr.f32.gmra.mrb[0].mxu0 %v7303
  %v7638 = vpop.f32.mrb[0].mxu0
  %v7639 = vadd.f32 %v7182, %v7638
  %v7640 = vpop.f32.mrb[0].mxu0
  %7641 = vmatprep.mubr.f32.mxu0 0.0
  %7642 = vmatmul.mubr.f32.gmra.mrb[0].mxu0 %v7306
  %v7643 = vpop.f32.mrb[0].mxu0
  %v7644 = vadd.f32 %v7182, %v7643
  %v7645 = vpop.f32.mrb[0].mxu0
  %7646 = vmatprep.mubr.f32.mxu0 0.0
  %7647 = vmatmul.mubr.f32.gmra.mrb[0].mxu0 %v7309
  %v7648 = vpop.f32.mrb[0].mxu0
  %v7649 = vadd.f32 %v7182, %v7648
  %v7650 = vpop.f32.mrb[0].mxu0
  %7651 = vmatprep.mubr.f32.mxu0 0.0
  %7652 = vmatmul.mubr.f32.gmra.mrb[0].mxu0 %v7312
  %v7653 = vpop.f32.mrb[0].mxu0
  %v7654 = vadd.f32 %v7182, %v7653
  %v7655 = vpop.f32.mrb[0].mxu0
  %7656 = vmatprep.mubr.f32.mxu0 0.0
  %7657 = vmatmul.mubr.f32.gmra.mrb[0].mxu0 %v7315
  %v7658 = vpop.f32.mrb[0].mxu0
  %v7659 = vadd.f32 %v7182, %v7658
  %v7660 = vpop.f32.mrb[0].mxu0
  %7661 = vmatprep.mubr.f32.mxu0 0.0
  %7662 = vmatmul.mubr.f32.gmra.mrb[0].mxu0 %v7318
  %v7663 = vpop.f32.mrb[0].mxu0
  %v7664 = vadd.f32 %v7182, %v7663
  %v7665 = vpop.f32.mrb[0].mxu0
  %7666 = vmatprep.mubr.f32.mxu0 0.0
  %7667 = vmatmul.mubr.f32.gmra.mrb[0].mxu0 %v7321
  %v7668 = vpop.f32.mrb[0].mxu0
  %v7669 = vadd.f32 %v7182, %v7668
  %v7670 = vpop.f32.mrb[0].mxu0
  %7671 = vmatprep.mubr.f32.mxu0 0.0
  %7672 = vmatmul.mubr.f32.gmra.mrb[0].mxu0 %v7324
  %v7673 = vpop.f32.mrb[0].mxu0
  %v7674 = vadd.f32 %v7182, %v7673
  %v7675 = vpop.f32.mrb[0].mxu0
  %7676 = vmatprep.mubr.f32.mxu0 0.0
  %7677 = vmatmul.mubr.f32.gmra.mrb[0].mxu0 %v7327
  %v7678 = vpop.f32.mrb[0].mxu0
  %v7679 = vadd.f32 %v7182, %v7678
  %v7680 = vpop.f32.mrb[0].mxu0
  %7681 = vmatprep.mubr.f32.mxu0 0.0
  %7682 = vmatmul.mubr.f32.gmra.mrb[0].mxu0 %v7330
  %v7683 = vpop.f32.mrb[0].mxu0
  %v7684 = vadd.f32 %v7182, %v7683
  %v7685 = vpop.f32.mrb[0].mxu0
  %7686 = vmatprep.mubr.f32.mxu0 0.0
  %7687 = vmatmul.mubr.f32.gmra.mrb[0].mxu0 %v7333
  %v7688 = vpop.f32.mrb[0].mxu0
  %v7689 = vadd.f32 %v7182, %v7688
  %v7690 = vpop.f32.mrb[0].mxu0
  %7691 = vmatprep.mubr.f32.mxu0 0.0
  %7692 = vmatmul.mubr.f32.gmra.mrb[0].mxu0 %v7336
  %v7693 = vpop.f32.mrb[0].mxu0
  %v7694 = vadd.f32 %v7182, %v7693
  %v7695 = vpop.f32.mrb[0].mxu0
  %7696 = vmatprep.mubr.f32.mxu0 0.0
  %7697 = vmatmul.mubr.f32.gmra.mrb[0].mxu0 %v7339
  %v7698 = vpop.f32.mrb[0].mxu0
  %v7699 = vadd.f32 %v7182, %v7698
  %v7700 = vpop.f32.mrb[0].mxu0
  %7701 = vmatprep.mubr.f32.mxu0 0.0
  %7702 = vmatmul.mubr.f32.gmra.mrb[0].mxu0 %v7342
  %v7703 = vpop.f32.mrb[0].mxu0
  %v7704 = vadd.f32 %v7182, %v7703
  %v7705 = vpop.f32.mrb[0].mxu0
  %7706 = vmatprep.mubr.f32.mxu0 0.0
  %7707 = vmatmul.mubr.f32.gmra.mrb[0].mxu0 %v7345
  %v7708 = vpop.f32.mrb[0].mxu0
  %v7709 = vadd.f32 %v7182, %v7708
  %v7710 = vpop.f32.mrb[0].mxu0
  %7711 = vmatprep.mubr.f32.mxu0 0.0
  %7712 = vmatmul.mubr.f32.gmra.mrb[0].mxu0 %v7348
  %v7713 = vpop.f32.mrb[0].mxu0
  %v7714 = vadd.f32 %v7182, %v7713
  %v7715 = vpop.f32.mrb[0].mxu0
  %7716 = vmatprep.mubr.f32.mxu0 0.0
  %7717 = vmatmul.mubr.f32.gmra.mrb[0].mxu0 %v7351
  %v7718 = vpop.f32.mrb[0].mxu0
  %v7719 = vadd.f32 %v7182, %v7718
  %v7720 = vpop.f32.mrb[0].mxu0
  %7721 = vmatprep.mubr.f32.mxu0 0.0
  %7722 = vmatmul.mubr.f32.gmra.mrb[0].mxu0 %v7354
  %v7723 = vpop.f32.mrb[0].mxu0
  %v7724 = vadd.f32 %v7182, %v7723
  %v7725 = vpop.f32.mrb[0].mxu0
  %7726 = vmatprep.mubr.f32.mxu0 0.0
  %7727 = vmatmul.mubr.f32.gmra.mrb[0].mxu0 %v7357
  %v7728 = vpop.f32.mrb[0].mxu0
  %v7729 = vadd.f32 %v7182, %v7728
  %v7730 = vpop.f32.mrb[0].mxu0
  %7731 = vmatprep.mubr.f32.mxu0 0.0
  %7732 = vmatmul.mubr.f32.gmra.mrb[0].mxu0 %v7360
  %v7733 = vpop.f32.mrb[0].mxu0
  %v7734 = vadd.f32 %v7182, %v7733
  %v7735 = vpop.f32.mrb[0].mxu0
  %7736 = vmatprep.mubr.f32.mxu0 0.0
  %7737 = vmatmul.mubr.f32.gmra.mrb[0].mxu0 %v7363
  %v7738 = vpop.f32.mrb[0].mxu0
  %v7739 = vadd.f32 %v7182, %v7738
  %v7740 = vpop.f32.mrb[0].mxu0
  %7741 = vmatprep.mubr.f32.mxu0 0.0
  %7742 = vmatmul.mubr.f32.gmra.mrb[0].mxu0 %v7366
  %v7743 = vpop.f32.mrb[0].mxu0
  %v7744 = vadd.f32 %v7182, %v7743
  %v7745 = vpop.f32.mrb[0].mxu0
  %7746 = vmatprep.mubr.f32.mxu0 0.0
  %7747 = vmatmul.mubr.f32.gmra.mrb[0].mxu0 %v7369
  %v7748 = vpop.f32.mrb[0].mxu0
  %v7749 = vadd.f32 %v7182, %v7748
  %v7750 = vpop.f32.mrb[0].mxu0
  %7751 = vmatprep.mubr.f32.mxu0 0.0
  %7752 = vmatmul.mubr.f32.gmra.mrb[0].mxu0 %v7372
  %v7753 = vpop.f32.mrb[0].mxu0
  %v7754 = vadd.f32 %v7182, %v7753
  %v7755 = vpop.f32.mrb[0].mxu0
  %7756 = vmatprep.mubr.f32.mxu0 0.0
  %7757 = vmatmul.mubr.f32.gmra.mrb[0].mxu0 %v7375
  %v7758 = vpop.f32.mrb[0].mxu0
  %v7759 = vadd.f32 %v7182, %v7758
  %v7760 = vpop.f32.mrb[0].mxu0
  %7761 = vdwg.mxu0
  %v7762 = vmax.f32 %v7444, 0.0
  %v7763 = vmax.f32 %v7449, 0.0
  %v7764 = vmax.f32 %v7454, 0.0
  %v7765 = vmax.f32 %v7459, 0.0
  %v7766 = vmax.f32 %v7464, 0.0
  %v7767 = vmax.f32 %v7469, 0.0
  %v7768 = vmax.f32 %v7474, 0.0
  %v7769 = vmax.f32 %v7479, 0.0
  %v7770 = vmax.f32 %v7484, 0.0
  %v7771 = vmax.f32 %v7489, 0.0
  %v7772 = vmax.f32 %v7494, 0.0
  %v7773 = vmax.f32 %v7499, 0.0
  %v7774 = vmax.f32 %v7504, 0.0
  %v7775 = vmax.f32 %v7509, 0.0
  %v7776 = vmax.f32 %v7514, 0.0
  %v7777 = vmax.f32 %v7519, 0.0
  %v7778 = vmax.f32 %v7524, 0.0
  %v7779 = vmax.f32 %v7529, 0.0
  %v7780 = vmax.f32 %v7534, 0.0
  %v7781 = vmax.f32 %v7539, 0.0
  %v7782 = vmax.f32 %v7544, 0.0
  %v7783 = vmax.f32 %v7549, 0.0
  %v7784 = vmax.f32 %v7554, 0.0
  %v7785 = vmax.f32 %v7559, 0.0
  %v7786 = vmax.f32 %v7564, 0.0
  %v7787 = vmax.f32 %v7569, 0.0
  %v7788 = vmax.f32 %v7574, 0.0
  %v7789 = vmax.f32 %v7579, 0.0
  %v7790 = vmax.f32 %v7584, 0.0
  %v7791 = vmax.f32 %v7589, 0.0
  %v7792 = vmax.f32 %v7594, 0.0
  %v7793 = vmax.f32 %v7599, 0.0
  %v7794 = vmax.f32 %v7604, 0.0
  %v7795 = vmax.f32 %v7609, 0.0
  %v7796 = vmax.f32 %v7614, 0.0
  %v7797 = vmax.f32 %v7619, 0.0
  %v7798 = vmax.f32 %v7624, 0.0
  %v7799 = vmax.f32 %v7629, 0.0
  %v7800 = vmax.f32 %v7634, 0.0
  %v7801 = vmax.f32 %v7639, 0.0
  %v7802 = vmax.f32 %v7644, 0.0
  %v7803 = vmax.f32 %v7649, 0.0
  %v7804 = vmax.f32 %v7654, 0.0
  %v7805 = vmax.f32 %v7659, 0.0
  %v7806 = vmax.f32 %v7664, 0.0
  %v7807 = vmax.f32 %v7669, 0.0
  %v7808 = vmax.f32 %v7674, 0.0
  %v7809 = vmax.f32 %v7679, 0.0
  %v7810 = vmax.f32 %v7684, 0.0
  %v7811 = vmax.f32 %v7689, 0.0
  %v7812 = vmax.f32 %v7694, 0.0
  %v7813 = vmax.f32 %v7699, 0.0
  %v7814 = vmax.f32 %v7704, 0.0
  %v7815 = vmax.f32 %v7709, 0.0
  %v7816 = vmax.f32 %v7714, 0.0
  %v7817 = vmax.f32 %v7719, 0.0
  %v7818 = vmax.f32 %v7724, 0.0
  %v7819 = vmax.f32 %v7729, 0.0
  %v7820 = vmax.f32 %v7734, 0.0
  %v7821 = vmax.f32 %v7739, 0.0
  %v7822 = vmax.f32 %v7744, 0.0
  %v7823 = vmax.f32 %v7749, 0.0
  %v7824 = vmax.f32 %v7754, 0.0
  %v7825 = vmax.f32 %v7759, 0.0
  %v7826 = vsel %vm2551, %v7762, 0.0
  %v7827 = vsel %vm2551, %v7763, 0.0
  %v7828 = vadd.f32 %v7826, %v7827
  %v7829 = vsel %vm2551, %v7764, 0.0
  %v7830 = vadd.f32 %v7828, %v7829
  %v7831 = vsel %vm2551, %v7765, 0.0
  %v7832 = vadd.f32 %v7830, %v7831
  %v7833 = vsel %vm2551, %v7766, 0.0
  %v7834 = vadd.f32 %v7832, %v7833
  %v7835 = vsel %vm2551, %v7767, 0.0
  %v7836 = vadd.f32 %v7834, %v7835
  %v7837 = vsel %vm2551, %v7768, 0.0
  %v7838 = vadd.f32 %v7836, %v7837
  %v7839 = vsel %vm2551, %v7769, 0.0
  %v7840 = vadd.f32 %v7838, %v7839
  %v7841 = vsel %vm2551, %v7770, 0.0
  %v7842 = vadd.f32 %v7840, %v7841
  %v7843 = vsel %vm2551, %v7771, 0.0
  %v7844 = vadd.f32 %v7842, %v7843
  %v7845 = vsel %vm2551, %v7772, 0.0
  %v7846 = vadd.f32 %v7844, %v7845
  %v7847 = vsel %vm2551, %v7773, 0.0
  %v7848 = vadd.f32 %v7846, %v7847
  %v7849 = vsel %vm2551, %v7774, 0.0
  %v7850 = vadd.f32 %v7848, %v7849
  %v7851 = vsel %vm2551, %v7775, 0.0
  %v7852 = vadd.f32 %v7850, %v7851
  %v7853 = vsel %vm2551, %v7776, 0.0
  %v7854 = vadd.f32 %v7852, %v7853
  %v7855 = vsel %vm2551, %v7777, 0.0
  %v7856 = vadd.f32 %v7854, %v7855
  %v7857 = vsel %vm2551, %v7778, 0.0
  %v7858 = vadd.f32 %v7856, %v7857
  %v7859 = vsel %vm2551, %v7779, 0.0
  %v7860 = vadd.f32 %v7858, %v7859
  %v7861 = vsel %vm2551, %v7780, 0.0
  %v7862 = vadd.f32 %v7860, %v7861
  %v7863 = vsel %vm2551, %v7781, 0.0
  %v7864 = vadd.f32 %v7862, %v7863
  %v7865 = vsel %vm2551, %v7782, 0.0
  %v7866 = vadd.f32 %v7864, %v7865
  %v7867 = vsel %vm2551, %v7783, 0.0
  %v7868 = vadd.f32 %v7866, %v7867
  %v7869 = vsel %vm2551, %v7784, 0.0
  %v7870 = vadd.f32 %v7868, %v7869
  %v7871 = vsel %vm2551, %v7785, 0.0
  %v7872 = vadd.f32 %v7870, %v7871
  %v7873 = vsel %vm2551, %v7786, 0.0
  %v7874 = vadd.f32 %v7872, %v7873
  %v7875 = vsel %vm2551, %v7787, 0.0
  %v7876 = vadd.f32 %v7874, %v7875
  %v7877 = vsel %vm2551, %v7788, 0.0
  %v7878 = vadd.f32 %v7876, %v7877
  %v7879 = vsel %vm2551, %v7789, 0.0
  %v7880 = vadd.f32 %v7878, %v7879
  %v7881 = vsel %vm2551, %v7790, 0.0
  %v7882 = vadd.f32 %v7880, %v7881
  %v7883 = vsel %vm2551, %v7791, 0.0
  %v7884 = vadd.f32 %v7882, %v7883
  %v7885 = vsel %vm2551, %v7792, 0.0
  %v7886 = vadd.f32 %v7884, %v7885
  %v7887 = vsel %vm2551, %v7793, 0.0
  %v7888 = vadd.f32 %v7886, %v7887
  %v7889 = vsel %vm2551, %v7794, 0.0
  %v7890 = vadd.f32 %v7888, %v7889
  %v7891 = vsel %vm2551, %v7795, 0.0
  %v7892 = vadd.f32 %v7890, %v7891
  %v7893 = vsel %vm2551, %v7796, 0.0
  %v7894 = vadd.f32 %v7892, %v7893
  %v7895 = vsel %vm2551, %v7797, 0.0
  %v7896 = vadd.f32 %v7894, %v7895
  %v7897 = vsel %vm2551, %v7798, 0.0
  %v7898 = vadd.f32 %v7896, %v7897
  %v7899 = vsel %vm2551, %v7799, 0.0
  %v7900 = vadd.f32 %v7898, %v7899
  %v7901 = vsel %vm2551, %v7800, 0.0
  %v7902 = vadd.f32 %v7900, %v7901
  %v7903 = vsel %vm2551, %v7801, 0.0
  %v7904 = vadd.f32 %v7902, %v7903
  %v7905 = vsel %vm2551, %v7802, 0.0
  %v7906 = vadd.f32 %v7904, %v7905
  %v7907 = vsel %vm2551, %v7803, 0.0
  %v7908 = vadd.f32 %v7906, %v7907
  %v7909 = vsel %vm2551, %v7804, 0.0
  %v7910 = vadd.f32 %v7908, %v7909
  %v7911 = vsel %vm2551, %v7805, 0.0
  %v7912 = vadd.f32 %v7910, %v7911
  %v7913 = vsel %vm2551, %v7806, 0.0
  %v7914 = vadd.f32 %v7912, %v7913
  %v7915 = vsel %vm2551, %v7807, 0.0
  %v7916 = vadd.f32 %v7914, %v7915
  %v7917 = vsel %vm2551, %v7808, 0.0
  %v7918 = vadd.f32 %v7916, %v7917
  %v7919 = vsel %vm2551, %v7809, 0.0
  %v7920 = vadd.f32 %v7918, %v7919
  %v7921 = vsel %vm2551, %v7810, 0.0
  %v7922 = vadd.f32 %v7920, %v7921
  %v7923 = vsel %vm2551, %v7811, 0.0
  %v7924 = vadd.f32 %v7922, %v7923
  %v7925 = vsel %vm2551, %v7812, 0.0
  %v7926 = vadd.f32 %v7924, %v7925
  %v7927 = vsel %vm2551, %v7813, 0.0
  %v7928 = vadd.f32 %v7926, %v7927
  %v7929 = vsel %vm2551, %v7814, 0.0
  %v7930 = vadd.f32 %v7928, %v7929
  %v7931 = vsel %vm2551, %v7815, 0.0
  %v7932 = vadd.f32 %v7930, %v7931
  %v7933 = vsel %vm2551, %v7816, 0.0
  %v7934 = vadd.f32 %v7932, %v7933
  %v7935 = vsel %vm2551, %v7817, 0.0
  %v7936 = vadd.f32 %v7934, %v7935
  %v7937 = vsel %vm2551, %v7818, 0.0
  %v7938 = vadd.f32 %v7936, %v7937
  %v7939 = vsel %vm2551, %v7819, 0.0
  %v7940 = vadd.f32 %v7938, %v7939
  %v7941 = vsel %vm2551, %v7820, 0.0
  %v7942 = vadd.f32 %v7940, %v7941
  %v7943 = vsel %vm2551, %v7821, 0.0
  %v7944 = vadd.f32 %v7942, %v7943
  %v7945 = vsel %vm2551, %v7822, 0.0
  %v7946 = vadd.f32 %v7944, %v7945
  %v7947 = vsel %vm2551, %v7823, 0.0
  %v7948 = vadd.f32 %v7946, %v7947
  %v7949 = vsel %vm2551, %v7824, 0.0
  %v7950 = vadd.f32 %v7948, %v7949
  %v7951 = vsel %vm2551, %v7825, 0.0
  %v7952 = vadd.f32 %v7950, %v7951
  %v7953 = vrot.slane %v7952, 4
  %v7954 = vadd.f32 %v7952, %v7953
  %v7955 = vrot.slane %v7954, 2
  %v7956 = vadd.f32 %v7954, %v7955
  %v7957 = vrot.slane %v7956, 1
  %v7958 = vadd.f32 %v7956, %v7957
  %v7959 = vmul.f32 %v7762, %v7762
  %v7960 = vmul.f32 %v7763, %v7763
  %v7961 = vmul.f32 %v7764, %v7764
  %v7962 = vmul.f32 %v7765, %v7765
  %v7963 = vmul.f32 %v7766, %v7766
  %v7964 = vmul.f32 %v7767, %v7767
  %v7965 = vmul.f32 %v7768, %v7768
  %v7966 = vmul.f32 %v7769, %v7769
  %v7967 = vmul.f32 %v7770, %v7770
  %v7968 = vmul.f32 %v7771, %v7771
  %v7969 = vmul.f32 %v7772, %v7772
  %v7970 = vmul.f32 %v7773, %v7773
  %v7971 = vmul.f32 %v7774, %v7774
  %v7972 = vmul.f32 %v7775, %v7775
  %v7973 = vmul.f32 %v7776, %v7776
  %v7974 = vmul.f32 %v7777, %v7777
  %v7975 = vmul.f32 %v7778, %v7778
  %v7976 = vmul.f32 %v7779, %v7779
  %v7977 = vmul.f32 %v7780, %v7780
  %v7978 = vmul.f32 %v7781, %v7781
  %v7979 = vmul.f32 %v7782, %v7782
  %v7980 = vmul.f32 %v7783, %v7783
  %v7981 = vmul.f32 %v7784, %v7784
  %v7982 = vmul.f32 %v7785, %v7785
  %v7983 = vmul.f32 %v7786, %v7786
  %v7984 = vmul.f32 %v7787, %v7787
  %v7985 = vmul.f32 %v7788, %v7788
  %v7986 = vmul.f32 %v7789, %v7789
  %v7987 = vmul.f32 %v7790, %v7790
  %v7988 = vmul.f32 %v7791, %v7791
  %v7989 = vmul.f32 %v7792, %v7792
  %v7990 = vmul.f32 %v7793, %v7793
  %v7991 = vmul.f32 %v7794, %v7794
  %v7992 = vmul.f32 %v7795, %v7795
  %v7993 = vmul.f32 %v7796, %v7796
  %v7994 = vmul.f32 %v7797, %v7797
  %v7995 = vmul.f32 %v7798, %v7798
  %v7996 = vmul.f32 %v7799, %v7799
  %v7997 = vmul.f32 %v7800, %v7800
  %v7998 = vmul.f32 %v7801, %v7801
  %v7999 = vmul.f32 %v7802, %v7802
  %v8000 = vmul.f32 %v7803, %v7803
  %v8001 = vmul.f32 %v7804, %v7804
  %v8002 = vmul.f32 %v7805, %v7805
  %v8003 = vmul.f32 %v7806, %v7806
  %v8004 = vmul.f32 %v7807, %v7807
  %v8005 = vmul.f32 %v7808, %v7808
  %v8006 = vmul.f32 %v7809, %v7809
  %v8007 = vmul.f32 %v7810, %v7810
  %v8008 = vmul.f32 %v7811, %v7811
  %v8009 = vmul.f32 %v7812, %v7812
  %v8010 = vmul.f32 %v7813, %v7813
  %v8011 = vmul.f32 %v7814, %v7814
  %v8012 = vmul.f32 %v7815, %v7815
  %v8013 = vmul.f32 %v7816, %v7816
  %v8014 = vmul.f32 %v7817, %v7817
  %v8015 = vmul.f32 %v7818, %v7818
  %v8016 = vmul.f32 %v7819, %v7819
  %v8017 = vmul.f32 %v7820, %v7820
  %v8018 = vmul.f32 %v7821, %v7821
  %v8019 = vmul.f32 %v7822, %v7822
  %v8020 = vmul.f32 %v7823, %v7823
  %v8021 = vmul.f32 %v7824, %v7824
  %v8022 = vmul.f32 %v7825, %v7825
  %v8023 = vsel %vm2551, %v7959, 0.0
  %v8024 = vsel %vm2551, %v7960, 0.0
  %v8025 = vadd.f32 %v8023, %v8024
  %v8026 = vsel %vm2551, %v7961, 0.0
  %v8027 = vadd.f32 %v8025, %v8026
  %v8028 = vsel %vm2551, %v7962, 0.0
  %v8029 = vadd.f32 %v8027, %v8028
  %v8030 = vsel %vm2551, %v7963, 0.0
  %v8031 = vadd.f32 %v8029, %v8030
  %v8032 = vsel %vm2551, %v7964, 0.0
  %v8033 = vadd.f32 %v8031, %v8032
  %v8034 = vsel %vm2551, %v7965, 0.0
  %v8035 = vadd.f32 %v8033, %v8034
  %v8036 = vsel %vm2551, %v7966, 0.0
  %v8037 = vadd.f32 %v8035, %v8036
  %v8038 = vsel %vm2551, %v7967, 0.0
  %v8039 = vadd.f32 %v8037, %v8038
  %v8040 = vsel %vm2551, %v7968, 0.0
  %v8041 = vadd.f32 %v8039, %v8040
  %v8042 = vsel %vm2551, %v7969, 0.0
  %v8043 = vadd.f32 %v8041, %v8042
  %v8044 = vsel %vm2551, %v7970, 0.0
  %v8045 = vadd.f32 %v8043, %v8044
  %v8046 = vsel %vm2551, %v7971, 0.0
  %v8047 = vadd.f32 %v8045, %v8046
  %v8048 = vsel %vm2551, %v7972, 0.0
  %v8049 = vadd.f32 %v8047, %v8048
  %v8050 = vsel %vm2551, %v7973, 0.0
  %v8051 = vadd.f32 %v8049, %v8050
  %v8052 = vsel %vm2551, %v7974, 0.0
  %v8053 = vadd.f32 %v8051, %v8052
  %v8054 = vsel %vm2551, %v7975, 0.0
  %v8055 = vadd.f32 %v8053, %v8054
  %v8056 = vsel %vm2551, %v7976, 0.0
  %v8057 = vadd.f32 %v8055, %v8056
  %v8058 = vsel %vm2551, %v7977, 0.0
  %v8059 = vadd.f32 %v8057, %v8058
  %v8060 = vsel %vm2551, %v7978, 0.0
  %v8061 = vadd.f32 %v8059, %v8060
  %v8062 = vsel %vm2551, %v7979, 0.0
  %v8063 = vadd.f32 %v8061, %v8062
  %v8064 = vsel %vm2551, %v7980, 0.0
  %v8065 = vadd.f32 %v8063, %v8064
  %v8066 = vsel %vm2551, %v7981, 0.0
  %v8067 = vadd.f32 %v8065, %v8066
  %v8068 = vsel %vm2551, %v7982, 0.0
  %v8069 = vadd.f32 %v8067, %v8068
  %v8070 = vsel %vm2551, %v7983, 0.0
  %v8071 = vadd.f32 %v8069, %v8070
  %v8072 = vsel %vm2551, %v7984, 0.0
  %v8073 = vadd.f32 %v8071, %v8072
  %v8074 = vsel %vm2551, %v7985, 0.0
  %v8075 = vadd.f32 %v8073, %v8074
  %v8076 = vsel %vm2551, %v7986, 0.0
  %v8077 = vadd.f32 %v8075, %v8076
  %v8078 = vsel %vm2551, %v7987, 0.0
  %v8079 = vadd.f32 %v8077, %v8078
  %v8080 = vsel %vm2551, %v7988, 0.0
  %v8081 = vadd.f32 %v8079, %v8080
  %v8082 = vsel %vm2551, %v7989, 0.0
  %v8083 = vadd.f32 %v8081, %v8082
  %v8084 = vsel %vm2551, %v7990, 0.0
  %v8085 = vadd.f32 %v8083, %v8084
  %v8086 = vsel %vm2551, %v7991, 0.0
  %v8087 = vadd.f32 %v8085, %v8086
  %v8088 = vsel %vm2551, %v7992, 0.0
  %v8089 = vadd.f32 %v8087, %v8088
  %v8090 = vsel %vm2551, %v7993, 0.0
  %v8091 = vadd.f32 %v8089, %v8090
  %v8092 = vsel %vm2551, %v7994, 0.0
  %v8093 = vadd.f32 %v8091, %v8092
  %v8094 = vsel %vm2551, %v7995, 0.0
  %v8095 = vadd.f32 %v8093, %v8094
  %v8096 = vsel %vm2551, %v7996, 0.0
  %v8097 = vadd.f32 %v8095, %v8096
  %v8098 = vsel %vm2551, %v7997, 0.0
  %v8099 = vadd.f32 %v8097, %v8098
  %v8100 = vsel %vm2551, %v7998, 0.0
  %v8101 = vadd.f32 %v8099, %v8100
  %v8102 = vsel %vm2551, %v7999, 0.0
  %v8103 = vadd.f32 %v8101, %v8102
  %v8104 = vsel %vm2551, %v8000, 0.0
  %v8105 = vadd.f32 %v8103, %v8104
  %v8106 = vsel %vm2551, %v8001, 0.0
  %v8107 = vadd.f32 %v8105, %v8106
  %v8108 = vsel %vm2551, %v8002, 0.0
  %v8109 = vadd.f32 %v8107, %v8108
  %v8110 = vsel %vm2551, %v8003, 0.0
  %v8111 = vadd.f32 %v8109, %v8110
  %v8112 = vsel %vm2551, %v8004, 0.0
  %v8113 = vadd.f32 %v8111, %v8112
  %v8114 = vsel %vm2551, %v8005, 0.0
  %v8115 = vadd.f32 %v8113, %v8114
  %v8116 = vsel %vm2551, %v8006, 0.0
  %v8117 = vadd.f32 %v8115, %v8116
  %v8118 = vsel %vm2551, %v8007, 0.0
  %v8119 = vadd.f32 %v8117, %v8118
  %v8120 = vsel %vm2551, %v8008, 0.0
  %v8121 = vadd.f32 %v8119, %v8120
  %v8122 = vsel %vm2551, %v8009, 0.0
  %v8123 = vadd.f32 %v8121, %v8122
  %v8124 = vsel %vm2551, %v8010, 0.0
  %v8125 = vadd.f32 %v8123, %v8124
  %v8126 = vsel %vm2551, %v8011, 0.0
  %v8127 = vadd.f32 %v8125, %v8126
  %v8128 = vsel %vm2551, %v8012, 0.0
  %v8129 = vadd.f32 %v8127, %v8128
  %v8130 = vsel %vm2551, %v8013, 0.0
  %v8131 = vadd.f32 %v8129, %v8130
  %v8132 = vsel %vm2551, %v8014, 0.0
  %v8133 = vadd.f32 %v8131, %v8132
  %v8134 = vsel %vm2551, %v8015, 0.0
  %v8135 = vadd.f32 %v8133, %v8134
  %v8136 = vsel %vm2551, %v8016, 0.0
  %v8137 = vadd.f32 %v8135, %v8136
  %v8138 = vsel %vm2551, %v8017, 0.0
  %v8139 = vadd.f32 %v8137, %v8138
  %v8140 = vsel %vm2551, %v8018, 0.0
  %v8141 = vadd.f32 %v8139, %v8140
  %v8142 = vsel %vm2551, %v8019, 0.0
  %v8143 = vadd.f32 %v8141, %v8142
  %v8144 = vsel %vm2551, %v8020, 0.0
  %v8145 = vadd.f32 %v8143, %v8144
  %v8146 = vsel %vm2551, %v8021, 0.0
  %v8147 = vadd.f32 %v8145, %v8146
  %v8148 = vsel %vm2551, %v8022, 0.0
  %v8149 = vadd.f32 %v8147, %v8148
  %v8150 = vrot.slane %v8149, 4
  %v8151 = vadd.f32 %v8149, %v8150
  %v8152 = vrot.slane %v8151, 2
  %v8153 = vadd.f32 %v8151, %v8152
  %v8154 = vrot.slane %v8153, 1
  %v8155 = vadd.f32 %v8153, %v8154
  %v8156 = vmul.f32 %v7958, 0.001953125
  %v8157 = vmul.f32 %v8155, 0.001953125
  %v8158 = vmul.f32 %v8156, %v8156
  %v8159 = vsub.f32 %v8157, %v8158
  %v8160 = vsub.f32 %v7762, %v8156
  %v8161 = vsub.f32 %v7763, %v8156
  %v8162 = vsub.f32 %v7764, %v8156
  %v8163 = vsub.f32 %v7765, %v8156
  %v8164 = vsub.f32 %v7766, %v8156
  %v8165 = vsub.f32 %v7767, %v8156
  %v8166 = vsub.f32 %v7768, %v8156
  %v8167 = vsub.f32 %v7769, %v8156
  %v8168 = vsub.f32 %v7770, %v8156
  %v8169 = vsub.f32 %v7771, %v8156
  %v8170 = vsub.f32 %v7772, %v8156
  %v8171 = vsub.f32 %v7773, %v8156
  %v8172 = vsub.f32 %v7774, %v8156
  %v8173 = vsub.f32 %v7775, %v8156
  %v8174 = vsub.f32 %v7776, %v8156
  %v8175 = vsub.f32 %v7777, %v8156
  %v8176 = vsub.f32 %v7778, %v8156
  %v8177 = vsub.f32 %v7779, %v8156
  %v8178 = vsub.f32 %v7780, %v8156
  %v8179 = vsub.f32 %v7781, %v8156
  %v8180 = vsub.f32 %v7782, %v8156
  %v8181 = vsub.f32 %v7783, %v8156
  %v8182 = vsub.f32 %v7784, %v8156
  %v8183 = vsub.f32 %v7785, %v8156
  %v8184 = vsub.f32 %v7786, %v8156
  %v8185 = vsub.f32 %v7787, %v8156
  %v8186 = vsub.f32 %v7788, %v8156
  %v8187 = vsub.f32 %v7789, %v8156
  %v8188 = vsub.f32 %v7790, %v8156
  %v8189 = vsub.f32 %v7791, %v8156
  %v8190 = vsub.f32 %v7792, %v8156
  %v8191 = vsub.f32 %v7793, %v8156
  %v8192 = vsub.f32 %v7794, %v8156
  %v8193 = vsub.f32 %v7795, %v8156
  %v8194 = vsub.f32 %v7796, %v8156
  %v8195 = vsub.f32 %v7797, %v8156
  %v8196 = vsub.f32 %v7798, %v8156
  %v8197 = vsub.f32 %v7799, %v8156
  %v8198 = vsub.f32 %v7800, %v8156
  %v8199 = vsub.f32 %v7801, %v8156
  %v8200 = vsub.f32 %v7802, %v8156
  %v8201 = vsub.f32 %v7803, %v8156
  %v8202 = vsub.f32 %v7804, %v8156
  %v8203 = vsub.f32 %v7805, %v8156
  %v8204 = vsub.f32 %v7806, %v8156
  %v8205 = vsub.f32 %v7807, %v8156
  %v8206 = vsub.f32 %v7808, %v8156
  %v8207 = vsub.f32 %v7809, %v8156
  %v8208 = vsub.f32 %v7810, %v8156
  %v8209 = vsub.f32 %v7811, %v8156
  %v8210 = vsub.f32 %v7812, %v8156
  %v8211 = vsub.f32 %v7813, %v8156
  %v8212 = vsub.f32 %v7814, %v8156
  %v8213 = vsub.f32 %v7815, %v8156
  %v8214 = vsub.f32 %v7816, %v8156
  %v8215 = vsub.f32 %v7817, %v8156
  %v8216 = vsub.f32 %v7818, %v8156
  %v8217 = vsub.f32 %v7819, %v8156
  %v8218 = vsub.f32 %v7820, %v8156
  %v8219 = vsub.f32 %v7821, %v8156
  %v8220 = vsub.f32 %v7822, %v8156
  %v8221 = vsub.f32 %v7823, %v8156
  %v8222 = vsub.f32 %v7824, %v8156
  %v8223 = vsub.f32 %v7825, %v8156
  %v8224 = vadd.f32 %v8159, 1e-05
  %v8225 = vrsqrt.pop %v8224
  %v8226 = vmul.f32 %v8160, %v8225
  %v8227 = vmul.f32 %v8161, %v8225
  %v8228 = vmul.f32 %v8162, %v8225
  %v8229 = vmul.f32 %v8163, %v8225
  %v8230 = vmul.f32 %v8164, %v8225
  %v8231 = vmul.f32 %v8165, %v8225
  %v8232 = vmul.f32 %v8166, %v8225
  %v8233 = vmul.f32 %v8167, %v8225
  %v8234 = vmul.f32 %v8168, %v8225
  %v8235 = vmul.f32 %v8169, %v8225
  %v8236 = vmul.f32 %v8170, %v8225
  %v8237 = vmul.f32 %v8171, %v8225
  %v8238 = vmul.f32 %v8172, %v8225
  %v8239 = vmul.f32 %v8173, %v8225
  %v8240 = vmul.f32 %v8174, %v8225
  %v8241 = vmul.f32 %v8175, %v8225
  %v8242 = vmul.f32 %v8176, %v8225
  %v8243 = vmul.f32 %v8177, %v8225
  %v8244 = vmul.f32 %v8178, %v8225
  %v8245 = vmul.f32 %v8179, %v8225
  %v8246 = vmul.f32 %v8180, %v8225
  %v8247 = vmul.f32 %v8181, %v8225
  %v8248 = vmul.f32 %v8182, %v8225
  %v8249 = vmul.f32 %v8183, %v8225
  %v8250 = vmul.f32 %v8184, %v8225
  %v8251 = vmul.f32 %v8185, %v8225
  %v8252 = vmul.f32 %v8186, %v8225
  %v8253 = vmul.f32 %v8187, %v8225
  %v8254 = vmul.f32 %v8188, %v8225
  %v8255 = vmul.f32 %v8189, %v8225
  %v8256 = vmul.f32 %v8190, %v8225
  %v8257 = vmul.f32 %v8191, %v8225
  %v8258 = vmul.f32 %v8192, %v8225
  %v8259 = vmul.f32 %v8193, %v8225
  %v8260 = vmul.f32 %v8194, %v8225
  %v8261 = vmul.f32 %v8195, %v8225
  %v8262 = vmul.f32 %v8196, %v8225
  %v8263 = vmul.f32 %v8197, %v8225
  %v8264 = vmul.f32 %v8198, %v8225
  %v8265 = vmul.f32 %v8199, %v8225
  %v8266 = vmul.f32 %v8200, %v8225
  %v8267 = vmul.f32 %v8201, %v8225
  %v8268 = vmul.f32 %v8202, %v8225
  %v8269 = vmul.f32 %v8203, %v8225
  %v8270 = vmul.f32 %v8204, %v8225
  %v8271 = vmul.f32 %v8205, %v8225
  %v8272 = vmul.f32 %v8206, %v8225
  %v8273 = vmul.f32 %v8207, %v8225
  %v8274 = vmul.f32 %v8208, %v8225
  %v8275 = vmul.f32 %v8209, %v8225
  %v8276 = vmul.f32 %v8210, %v8225
  %v8277 = vmul.f32 %v8211, %v8225
  %v8278 = vmul.f32 %v8212, %v8225
  %v8279 = vmul.f32 %v8213, %v8225
  %v8280 = vmul.f32 %v8214, %v8225
  %v8281 = vmul.f32 %v8215, %v8225
  %v8282 = vmul.f32 %v8216, %v8225
  %v8283 = vmul.f32 %v8217, %v8225
  %v8284 = vmul.f32 %v8218, %v8225
  %v8285 = vmul.f32 %v8219, %v8225
  %v8286 = vmul.f32 %v8220, %v8225
  %v8287 = vmul.f32 %v8221, %v8225
  %v8288 = vmul.f32 %v8222, %v8225
  %v8289 = vmul.f32 %v8223, %v8225
  %v8290 = vld [vmem:[%s10] sm:$0x1]
  %v8292 = vlaneseq
  %v8293 = vshrl.u32 %v8292, 7
  %v8294 = vsub.s32 0, %v8293
  %v8295 = vrot.slane %v8290, %v8294
  %v8297 = vmul.f32 %v8226, %v8295
  %v8298 = vmul.f32 %v8227, %v8295
  %v8299 = vmul.f32 %v8228, %v8295
  %v8300 = vmul.f32 %v8229, %v8295
  %v8301 = vmul.f32 %v8230, %v8295
  %v8302 = vmul.f32 %v8231, %v8295
  %v8303 = vmul.f32 %v8232, %v8295
  %v8304 = vmul.f32 %v8233, %v8295
  %v8305 = vmul.f32 %v8234, %v8295
  %v8306 = vmul.f32 %v8235, %v8295
  %v8307 = vmul.f32 %v8236, %v8295
  %v8308 = vmul.f32 %v8237, %v8295
  %v8309 = vmul.f32 %v8238, %v8295
  %v8310 = vmul.f32 %v8239, %v8295
  %v8311 = vmul.f32 %v8240, %v8295
  %v8312 = vmul.f32 %v8241, %v8295
  %v8313 = vmul.f32 %v8242, %v8295
  %v8314 = vmul.f32 %v8243, %v8295
  %v8315 = vmul.f32 %v8244, %v8295
  %v8316 = vmul.f32 %v8245, %v8295
  %v8317 = vmul.f32 %v8246, %v8295
  %v8318 = vmul.f32 %v8247, %v8295
  %v8319 = vmul.f32 %v8248, %v8295
  %v8320 = vmul.f32 %v8249, %v8295
  %v8321 = vmul.f32 %v8250, %v8295
  %v8322 = vmul.f32 %v8251, %v8295
  %v8323 = vmul.f32 %v8252, %v8295
  %v8324 = vmul.f32 %v8253, %v8295
  %v8325 = vmul.f32 %v8254, %v8295
  %v8326 = vmul.f32 %v8255, %v8295
  %v8327 = vmul.f32 %v8256, %v8295
  %v8328 = vmul.f32 %v8257, %v8295
  %v8329 = vmul.f32 %v8258, %v8295
  %v8330 = vmul.f32 %v8259, %v8295
  %v8331 = vmul.f32 %v8260, %v8295
  %v8332 = vmul.f32 %v8261, %v8295
  %v8333 = vmul.f32 %v8262, %v8295
  %v8334 = vmul.f32 %v8263, %v8295
  %v8335 = vmul.f32 %v8264, %v8295
  %v8336 = vmul.f32 %v8265, %v8295
  %v8337 = vmul.f32 %v8266, %v8295
  %v8338 = vmul.f32 %v8267, %v8295
  %v8339 = vmul.f32 %v8268, %v8295
  %v8340 = vmul.f32 %v8269, %v8295
  %v8341 = vmul.f32 %v8270, %v8295
  %v8342 = vmul.f32 %v8271, %v8295
  %v8343 = vmul.f32 %v8272, %v8295
  %v8344 = vmul.f32 %v8273, %v8295
  %v8345 = vmul.f32 %v8274, %v8295
  %v8346 = vmul.f32 %v8275, %v8295
  %v8347 = vmul.f32 %v8276, %v8295
  %v8348 = vmul.f32 %v8277, %v8295
  %v8349 = vmul.f32 %v8278, %v8295
  %v8350 = vmul.f32 %v8279, %v8295
  %v8351 = vmul.f32 %v8280, %v8295
  %v8352 = vmul.f32 %v8281, %v8295
  %v8353 = vmul.f32 %v8282, %v8295
  %v8354 = vmul.f32 %v8283, %v8295
  %v8355 = vmul.f32 %v8284, %v8295
  %v8356 = vmul.f32 %v8285, %v8295
  %v8357 = vmul.f32 %v8286, %v8295
  %v8358 = vmul.f32 %v8287, %v8295
  %v8359 = vmul.f32 %v8288, %v8295
  %v8360 = vmul.f32 %v8289, %v8295
  %v8361 = vld [vmem:[%s11] sm:$0x1]
  %v8363 = vlaneseq
  %v8364 = vshrl.u32 %v8363, 7
  %v8365 = vsub.s32 0, %v8364
  %v8366 = vrot.slane %v8361, %v8365
  %v8368 = vadd.f32 %v8297, %v8366
  %v8369 = vadd.f32 %v8298, %v8366
  %v8370 = vadd.f32 %v8299, %v8366
  %v8371 = vadd.f32 %v8300, %v8366
  %v8372 = vadd.f32 %v8301, %v8366
  %v8373 = vadd.f32 %v8302, %v8366
  %v8374 = vadd.f32 %v8303, %v8366
  %v8375 = vadd.f32 %v8304, %v8366
  %v8376 = vadd.f32 %v8305, %v8366
  %v8377 = vadd.f32 %v8306, %v8366
  %v8378 = vadd.f32 %v8307, %v8366
  %v8379 = vadd.f32 %v8308, %v8366
  %v8380 = vadd.f32 %v8309, %v8366
  %v8381 = vadd.f32 %v8310, %v8366
  %v8382 = vadd.f32 %v8311, %v8366
  %v8383 = vadd.f32 %v8312, %v8366
  %v8384 = vadd.f32 %v8313, %v8366
  %v8385 = vadd.f32 %v8314, %v8366
  %v8386 = vadd.f32 %v8315, %v8366
  %v8387 = vadd.f32 %v8316, %v8366
  %v8388 = vadd.f32 %v8317, %v8366
  %v8389 = vadd.f32 %v8318, %v8366
  %v8390 = vadd.f32 %v8319, %v8366
  %v8391 = vadd.f32 %v8320, %v8366
  %v8392 = vadd.f32 %v8321, %v8366
  %v8393 = vadd.f32 %v8322, %v8366
  %v8394 = vadd.f32 %v8323, %v8366
  %v8395 = vadd.f32 %v8324, %v8366
  %v8396 = vadd.f32 %v8325, %v8366
  %v8397 = vadd.f32 %v8326, %v8366
  %v8398 = vadd.f32 %v8327, %v8366
  %v8399 = vadd.f32 %v8328, %v8366
  %v8400 = vadd.f32 %v8329, %v8366
  %v8401 = vadd.f32 %v8330, %v8366
  %v8402 = vadd.f32 %v8331, %v8366
  %v8403 = vadd.f32 %v8332, %v8366
  %v8404 = vadd.f32 %v8333, %v8366
  %v8405 = vadd.f32 %v8334, %v8366
  %v8406 = vadd.f32 %v8335, %v8366
  %v8407 = vadd.f32 %v8336, %v8366
  %v8408 = vadd.f32 %v8337, %v8366
  %v8409 = vadd.f32 %v8338, %v8366
  %v8410 = vadd.f32 %v8339, %v8366
  %v8411 = vadd.f32 %v8340, %v8366
  %v8412 = vadd.f32 %v8341, %v8366
  %v8413 = vadd.f32 %v8342, %v8366
  %v8414 = vadd.f32 %v8343, %v8366
  %v8415 = vadd.f32 %v8344, %v8366
  %v8416 = vadd.f32 %v8345, %v8366
  %v8417 = vadd.f32 %v8346, %v8366
  %v8418 = vadd.f32 %v8347, %v8366
  %v8419 = vadd.f32 %v8348, %v8366
  %v8420 = vadd.f32 %v8349, %v8366
  %v8421 = vadd.f32 %v8350, %v8366
  %v8422 = vadd.f32 %v8351, %v8366
  %v8423 = vadd.f32 %v8352, %v8366
  %v8424 = vadd.f32 %v8353, %v8366
  %v8425 = vadd.f32 %v8354, %v8366
  %v8426 = vadd.f32 %v8355, %v8366
  %v8427 = vadd.f32 %v8356, %v8366
  %v8428 = vadd.f32 %v8357, %v8366
  %v8429 = vadd.f32 %v8358, %v8366
  %v8430 = vadd.f32 %v8359, %v8366
  %v8431 = vadd.f32 %v8360, %v8366
  %8432 = vst.msk [vmem:[%s4475 + $0x1] sm:$0xff] %vm2551, %v8368
  %8433 = vst.msk [vmem:[%s4475 + $0x9] sm:$0xff] %vm2551, %v8369
  %8434 = vst.msk [vmem:[%s4475 + $0x19] sm:$0xff] %vm2551, %v8370
  %8435 = vst.msk [vmem:[%s4475 + $0x21] sm:$0xff] %vm2551, %v8371
  %8436 = vst.msk [vmem:[%s4475 + $0x31] sm:$0xff] %vm2551, %v8372
  %8437 = vst.msk [vmem:[%s4475 + $0x39] sm:$0xff] %vm2551, %v8373
  %8438 = vst.msk [vmem:[%s4475 + $0x49] sm:$0xff] %vm2551, %v8374
  %8439 = vst.msk [vmem:[%s4475 + $0x51] sm:$0xff] %vm2551, %v8375
  %8440 = vst.msk [vmem:[%s4475 + $0x61] sm:$0xff] %vm2551, %v8376
  %8441 = vst.msk [vmem:[%s4475 + $0x69] sm:$0xff] %vm2551, %v8377
  %8442 = vst.msk [vmem:[%s4475 + $0x79] sm:$0xff] %vm2551, %v8378
  %8443 = vst.msk [vmem:[%s4475 + $0x81] sm:$0xff] %vm2551, %v8379
  %8444 = vst.msk [vmem:[%s4475 + $0x91] sm:$0xff] %vm2551, %v8380
  %8445 = vst.msk [vmem:[%s4475 + $0x99] sm:$0xff] %vm2551, %v8381
  %8446 = vst.msk [vmem:[%s4475 + $0xa9] sm:$0xff] %vm2551, %v8382
  %8447 = vst.msk [vmem:[%s4475 + $0xb1] sm:$0xff] %vm2551, %v8383
  %8448 = vst.msk [vmem:[%s4475 + $0xc1] sm:$0xff] %vm2551, %v8384
  %8449 = vst.msk [vmem:[%s4475 + $0xc9] sm:$0xff] %vm2551, %v8385
  %8450 = vst.msk [vmem:[%s4475 + $0xd9] sm:$0xff] %vm2551, %v8386
  %8451 = vst.msk [vmem:[%s4475 + $0xe1] sm:$0xff] %vm2551, %v8387
  %8452 = vst.msk [vmem:[%s4475 + $0xf1] sm:$0xff] %vm2551, %v8388
  %8453 = vst.msk [vmem:[%s4475 + $0xf9] sm:$0xff] %vm2551, %v8389
  %8454 = vst.msk [vmem:[%s4475 + $0x109] sm:$0xff] %vm2551, %v8390
  %8455 = vst.msk [vmem:[%s4475 + $0x111] sm:$0xff] %vm2551, %v8391
  %8456 = vst.msk [vmem:[%s4475 + $0x121] sm:$0xff] %vm2551, %v8392
  %8457 = vst.msk [vmem:[%s4475 + $0x129] sm:$0xff] %vm2551, %v8393
  %8458 = vst.msk [vmem:[%s4475 + $0x139] sm:$0xff] %vm2551, %v8394
  %8459 = vst.msk [vmem:[%s4475 + $0x141] sm:$0xff] %vm2551, %v8395
  %8460 = vst.msk [vmem:[%s4475 + $0x151] sm:$0xff] %vm2551, %v8396
  %8461 = vst.msk [vmem:[%s4475 + $0x159] sm:$0xff] %vm2551, %v8397
  %8462 = vst.msk [vmem:[%s4475 + $0x169] sm:$0xff] %vm2551, %v8398
  %8463 = vst.msk [vmem:[%s4475 + $0x171] sm:$0xff] %vm2551, %v8399
  %8464 = vst.msk [vmem:[%s4475 + $0x1b1] sm:$0xff] %vm2551, %v8400
  %8465 = vst.msk [vmem:[%s4475 + $0x1b9] sm:$0xff] %vm2551, %v8401
  %8466 = vst.msk [vmem:[%s4475 + $0x1c9] sm:$0xff] %vm2551, %v8402
  %8467 = vst.msk [vmem:[%s4475 + $0x1d1] sm:$0xff] %vm2551, %v8403
  %8468 = vst.msk [vmem:[%s4475 + $0x1e1] sm:$0xff] %vm2551, %v8404
  %8469 = vst.msk [vmem:[%s4475 + $0x1e9] sm:$0xff] %vm2551, %v8405
  %8470 = vst.msk [vmem:[%s4475 + $0x1f9] sm:$0xff] %vm2551, %v8406
  %8471 = vst.msk [vmem:[%s4475 + $0x201] sm:$0xff] %vm2551, %v8407
  %8472 = vst.msk [vmem:[%s4475 + $0x211] sm:$0xff] %vm2551, %v8408
  %8473 = vst.msk [vmem:[%s4475 + $0x219] sm:$0xff] %vm2551, %v8409
  %8474 = vst.msk [vmem:[%s4475 + $0x229] sm:$0xff] %vm2551, %v8410
  %8475 = vst.msk [vmem:[%s4475 + $0x231] sm:$0xff] %vm2551, %v8411
  %8476 = vst.msk [vmem:[%s4475 + $0x241] sm:$0xff] %vm2551, %v8412
  %8477 = vst.msk [vmem:[%s4475 + $0x249] sm:$0xff] %vm2551, %v8413
  %8478 = vst.msk [vmem:[%s4475 + $0x259] sm:$0xff] %vm2551, %v8414
  %8479 = vst.msk [vmem:[%s4475 + $0x261] sm:$0xff] %vm2551, %v8415
  %8480 = vst.msk [vmem:[%s4475 + $0x271] sm:$0xff] %vm2551, %v8416
  %8481 = vst.msk [vmem:[%s4475 + $0x279] sm:$0xff] %vm2551, %v8417
  %8482 = vst.msk [vmem:[%s4475 + $0x289] sm:$0xff] %vm2551, %v8418
  %8483 = vst.msk [vmem:[%s4475 + $0x291] sm:$0xff] %vm2551, %v8419
  %8484 = vst.msk [vmem:[%s4475 + $0x2a1] sm:$0xff] %vm2551, %v8420
  %8485 = vst.msk [vmem:[%s4475 + $0x2a9] sm:$0xff] %vm2551, %v8421
  %8486 = vst.msk [vmem:[%s4475 + $0x2b9] sm:$0xff] %vm2551, %v8422
  %8487 = vst.msk [vmem:[%s4475 + $0x2c1] sm:$0xff] %vm2551, %v8423
  %8488 = vst.msk [vmem:[%s4475 + $0x2d1] sm:$0xff] %vm2551, %v8424
  %8489 = vst.msk [vmem:[%s4475 + $0x2d9] sm:$0xff] %vm2551, %v8425
  %8490 = vst.msk [vmem:[%s4475 + $0x2e9] sm:$0xff] %vm2551, %v8426
  %8491 = vst.msk [vmem:[%s4475 + $0x2f1] sm:$0xff] %vm2551, %v8427
  %8492 = vst.msk [vmem:[%s4475 + $0x301] sm:$0xff] %vm2551, %v8428
  %8493 = vst.msk [vmem:[%s4475 + $0x309] sm:$0xff] %vm2551, %v8429
  %8494 = vst.msk [vmem:[%s4475 + $0x319] sm:$0xff] %vm2551, %v8430
  %8495 = vst.msk [vmem:[%s4475 + $0x321] sm:$0xff] %vm2551, %v8431
  %v8496 = vld [vmem:[#allocation3] ss:$2 sm:$0xff]
  %s8497 = scalar_lea.vmem [#allocation3], 48
  %v8498 = vld [vmem:[%s8497] ss:$2 sm:$0xff]
  %s8499 = scalar_lea.vmem [#allocation3], 96
  %v8500 = vld [vmem:[%s8499] ss:$2 sm:$0xff]
  %s8501 = scalar_lea.vmem [#allocation3], 144
  %v8502 = vld [vmem:[%s8501] ss:$2 sm:$0xff]
  %s8503 = scalar_lea.vmem [#allocation3], 192
  %v8504 = vld [vmem:[%s8503] ss:$2 sm:$0xff]
  %s8505 = scalar_lea.vmem [#allocation3], 240
  %v8506 = vld [vmem:[%s8505] ss:$2 sm:$0xff]
  %s8507 = scalar_lea.vmem [#allocation3], 288
  %v8508 = vld [vmem:[%s8507] ss:$2 sm:$0xff]
  %s8509 = scalar_lea.vmem [#allocation3], 336
  %v8510 = vld [vmem:[%s8509] ss:$2 sm:$0xff]
  %s8511 = scalar_lea.vmem [#allocation3], 432
  %v8512 = vld [vmem:[%s8511] ss:$2 sm:$0xff]
  %s8513 = scalar_lea.vmem [#allocation3], 480
  %v8514 = vld [vmem:[%s8513] ss:$2 sm:$0xff]
  %s8515 = scalar_lea.vmem [#allocation3], 528
  %v8516 = vld [vmem:[%s8515] ss:$2 sm:$0xff]
  %s8517 = scalar_lea.vmem [#allocation3], 576
  %v8518 = vld [vmem:[%s8517] ss:$2 sm:$0xff]
  %s8519 = scalar_lea.vmem [#allocation3], 624
  %v8520 = vld [vmem:[%s8519] ss:$2 sm:$0xff]
  %s8521 = scalar_lea.vmem [#allocation3], 672
  %v8522 = vld [vmem:[%s8521] ss:$2 sm:$0xff]
  %s8523 = scalar_lea.vmem [#allocation3], 720
  %v8524 = vld [vmem:[%s8523] ss:$2 sm:$0xff]
  %s8525 = scalar_lea.vmem [#allocation3], 768
  %v8526 = vld [vmem:[%s8525] ss:$2 sm:$0xff]
  %s8527 = scalar_lea.vmem [#allocation3], 1
  %v8528 = vld [vmem:[%s8527] ss:$2 sm:$0xff]
  %s8529 = scalar_lea.vmem [#allocation3], 49
  %v8530 = vld [vmem:[%s8529] ss:$2 sm:$0xff]
  %s8531 = scalar_lea.vmem [#allocation3], 97
  %v8532 = vld [vmem:[%s8531] ss:$2 sm:$0xff]
  %s8533 = scalar_lea.vmem [#allocation3], 145
  %v8534 = vld [vmem:[%s8533] ss:$2 sm:$0xff]
  %s8535 = scalar_lea.vmem [#allocation3], 193
  %v8536 = vld [vmem:[%s8535] ss:$2 sm:$0xff]
  %s8537 = scalar_lea.vmem [#allocation3], 241
  %v8538 = vld [vmem:[%s8537] ss:$2 sm:$0xff]
  %s8539 = scalar_lea.vmem [#allocation3], 289
  %v8540 = vld [vmem:[%s8539] ss:$2 sm:$0xff]
  %s8541 = scalar_lea.vmem [#allocation3], 337
  %v8542 = vld [vmem:[%s8541] ss:$2 sm:$0xff]
  %s8543 = scalar_lea.vmem [#allocation3], 433
  %v8544 = vld [vmem:[%s8543] ss:$2 sm:$0xff]
  %s8545 = scalar_lea.vmem [#allocation3], 481
  %v8546 = vld [vmem:[%s8545] ss:$2 sm:$0xff]
  %s8547 = scalar_lea.vmem [#allocation3], 529
  %v8548 = vld [vmem:[%s8547] ss:$2 sm:$0xff]
  %s8549 = scalar_lea.vmem [#allocation3], 577
  %v8550 = vld [vmem:[%s8549] ss:$2 sm:$0xff]
  %s8551 = scalar_lea.vmem [#allocation3], 625
  %v8552 = vld [vmem:[%s8551] ss:$2 sm:$0xff]
  %s8553 = scalar_lea.vmem [#allocation3], 673
  %v8554 = vld [vmem:[%s8553] ss:$2 sm:$0xff]
  %s8555 = scalar_lea.vmem [#allocation3], 721
  %v8556 = vld [vmem:[%s8555] ss:$2 sm:$0xff]
  %s8557 = scalar_lea.vmem [#allocation3], 769
  %v8558 = vld [vmem:[%s8557] ss:$2 sm:$0xff]
  %s8559 = scalar_lea.vmem [#allocation3], 2
  %v8560 = vld [vmem:[%s8559] ss:$2 sm:$0xff]
  %s8561 = scalar_lea.vmem [#allocation3], 50
  %v8562 = vld [vmem:[%s8561] ss:$2 sm:$0xff]
  %s8563 = scalar_lea.vmem [#allocation3], 98
  %v8564 = vld [vmem:[%s8563] ss:$2 sm:$0xff]
  %s8565 = scalar_lea.vmem [#allocation3], 146
  %v8566 = vld [vmem:[%s8565] ss:$2 sm:$0xff]
  %s8567 = scalar_lea.vmem [#allocation3], 194
  %v8568 = vld [vmem:[%s8567] ss:$2 sm:$0xff]
  %s8569 = scalar_lea.vmem [#allocation3], 242
  %v8570 = vld [vmem:[%s8569] ss:$2 sm:$0xff]
  %s8571 = scalar_lea.vmem [#allocation3], 290
  %v8572 = vld [vmem:[%s8571] ss:$2 sm:$0xff]
  %s8573 = scalar_lea.vmem [#allocation3], 338
  %v8574 = vld [vmem:[%s8573] ss:$2 sm:$0xff]
  %s8575 = scalar_lea.vmem [#allocation3], 434
  %v8576 = vld [vmem:[%s8575] ss:$2 sm:$0xff]
  %s8577 = scalar_lea.vmem [#allocation3], 482
  %v8578 = vld [vmem:[%s8577] ss:$2 sm:$0xff]
  %s8579 = scalar_lea.vmem [#allocation3], 530
  %v8580 = vld [vmem:[%s8579] ss:$2 sm:$0xff]
  %s8581 = scalar_lea.vmem [#allocation3], 578
  %v8582 = vld [vmem:[%s8581] ss:$2 sm:$0xff]
  %s8583 = scalar_lea.vmem [#allocation3], 626
  %v8584 = vld [vmem:[%s8583] ss:$2 sm:$0xff]
  %s8585 = scalar_lea.vmem [#allocation3], 674
  %v8586 = vld [vmem:[%s8585] ss:$2 sm:$0xff]
  %s8587 = scalar_lea.vmem [#allocation3], 722
  %v8588 = vld [vmem:[%s8587] ss:$2 sm:$0xff]
  %s8589 = scalar_lea.vmem [#allocation3], 770
  %v8590 = vld [vmem:[%s8589] ss:$2 sm:$0xff]
  %s8591 = scalar_lea.vmem [#allocation3], 3
  %v8592 = vld [vmem:[%s8591] ss:$2 sm:$0xff]
  %s8593 = scalar_lea.vmem [#allocation3], 51
  %v8594 = vld [vmem:[%s8593] ss:$2 sm:$0xff]
  %s8595 = scalar_lea.vmem [#allocation3], 99
  %v8596 = vld [vmem:[%s8595] ss:$2 sm:$0xff]
  %s8597 = scalar_lea.vmem [#allocation3], 147
  %v8598 = vld [vmem:[%s8597] ss:$2 sm:$0xff]
  %s8599 = scalar_lea.vmem [#allocation3], 195
  %v8600 = vld [vmem:[%s8599] ss:$2 sm:$0xff]
  %s8601 = scalar_lea.vmem [#allocation3], 243
  %v8602 = vld [vmem:[%s8601] ss:$2 sm:$0xff]
  %s8603 = scalar_lea.vmem [#allocation3], 291
  %v8604 = vld [vmem:[%s8603] ss:$2 sm:$0xff]
  %s8605 = scalar_lea.vmem [#allocation3], 339
  %v8606 = vld [vmem:[%s8605] ss:$2 sm:$0xff]
  %s8607 = scalar_lea.vmem [#allocation3], 435
  %v8608 = vld [vmem:[%s8607] ss:$2 sm:$0xff]
  %s8609 = scalar_lea.vmem [#allocation3], 483
  %v8610 = vld [vmem:[%s8609] ss:$2 sm:$0xff]
  %s8611 = scalar_lea.vmem [#allocation3], 531
  %v8612 = vld [vmem:[%s8611] ss:$2 sm:$0xff]
  %s8613 = scalar_lea.vmem [#allocation3], 579
  %v8614 = vld [vmem:[%s8613] ss:$2 sm:$0xff]
  %s8615 = scalar_lea.vmem [#allocation3], 627
  %v8616 = vld [vmem:[%s8615] ss:$2 sm:$0xff]
  %s8617 = scalar_lea.vmem [#allocation3], 675
  %v8618 = vld [vmem:[%s8617] ss:$2 sm:$0xff]
  %s8619 = scalar_lea.vmem [#allocation3], 723
  %v8620 = vld [vmem:[%s8619] ss:$2 sm:$0xff]
  %s8621 = scalar_lea.vmem [#allocation3], 771
  %v8622 = vld [vmem:[%s8621] ss:$2 sm:$0xff]
  %v8623 = vld [vmem:[%s4475] ss:$2 sm:$0xff]
  %s8624 = scalar_lea.vmem %s4475, 48 [#allocation3]
  %v8625 = vld [vmem:[%s8624] ss:$2 sm:$0xff]
  %s8626 = scalar_lea.vmem %s4475, 96 [#allocation3]
  %v8627 = vld [vmem:[%s8626] ss:$2 sm:$0xff]
  %s8628 = scalar_lea.vmem %s4475, 144 [#allocation3]
  %v8629 = vld [vmem:[%s8628] ss:$2 sm:$0xff]
  %s8630 = scalar_lea.vmem %s4475, 192 [#allocation3]
  %v8631 = vld [vmem:[%s8630] ss:$2 sm:$0xff]
  %s8632 = scalar_lea.vmem %s4475, 240 [#allocation3]
  %v8633 = vld [vmem:[%s8632] ss:$2 sm:$0xff]
  %s8634 = scalar_lea.vmem %s4475, 288 [#allocation3]
  %v8635 = vld [vmem:[%s8634] ss:$2 sm:$0xff]
  %s8636 = scalar_lea.vmem %s4475, 336 [#allocation3]
  %v8637 = vld [vmem:[%s8636] ss:$2 sm:$0xff]
  %s8638 = scalar_lea.vmem %s4475, 432 [#allocation3]
  %v8639 = vld [vmem:[%s8638] ss:$2 sm:$0xff]
  %s8640 = scalar_lea.vmem %s4475, 480 [#allocation3]
  %v8641 = vld [vmem:[%s8640] ss:$2 sm:$0xff]
  %s8642 = scalar_lea.vmem %s4475, 528 [#allocation3]
  %v8643 = vld [vmem:[%s8642] ss:$2 sm:$0xff]
  %s8644 = scalar_lea.vmem %s4475, 576 [#allocation3]
  %v8645 = vld [vmem:[%s8644] ss:$2 sm:$0xff]
  %s8646 = scalar_lea.vmem %s4475, 624 [#allocation3]
  %v8647 = vld [vmem:[%s8646] ss:$2 sm:$0xff]
  %s8648 = scalar_lea.vmem %s4475, 672 [#allocation3]
  %v8649 = vld [vmem:[%s8648] ss:$2 sm:$0xff]
  %s8650 = scalar_lea.vmem %s4475, 720 [#allocation3]
  %v8651 = vld [vmem:[%s8650] ss:$2 sm:$0xff]
  %s8652 = scalar_lea.vmem %s4475, 768 [#allocation3]
  %v8653 = vld [vmem:[%s8652] ss:$2 sm:$0xff]
  %s8654 = scalar_lea.vmem %s4475, 1 [#allocation3]
  %v8655 = vld [vmem:[%s8654] ss:$2 sm:$0xff]
  %s8656 = scalar_lea.vmem %s4475, 49 [#allocation3]
  %v8657 = vld [vmem:[%s8656] ss:$2 sm:$0xff]
  %s8658 = scalar_lea.vmem %s4475, 97 [#allocation3]
  %v8659 = vld [vmem:[%s8658] ss:$2 sm:$0xff]
  %s8660 = scalar_lea.vmem %s4475, 145 [#allocation3]
  %v8661 = vld [vmem:[%s8660] ss:$2 sm:$0xff]
  %s8662 = scalar_lea.vmem %s4475, 193 [#allocation3]
  %v8663 = vld [vmem:[%s8662] ss:$2 sm:$0xff]
  %s8664 = scalar_lea.vmem %s4475, 241 [#allocation3]
  %v8665 = vld [vmem:[%s8664] ss:$2 sm:$0xff]
  %s8666 = scalar_lea.vmem %s4475, 289 [#allocation3]
  %v8667 = vld [vmem:[%s8666] ss:$2 sm:$0xff]
  %s8668 = scalar_lea.vmem %s4475, 337 [#allocation3]
  %v8669 = vld [vmem:[%s8668] ss:$2 sm:$0xff]
  %s8670 = scalar_lea.vmem %s4475, 433 [#allocation3]
  %v8671 = vld [vmem:[%s8670] ss:$2 sm:$0xff]
  %s8672 = scalar_lea.vmem %s4475, 481 [#allocation3]
  %v8673 = vld [vmem:[%s8672] ss:$2 sm:$0xff]
  %s8674 = scalar_lea.vmem %s4475, 529 [#allocation3]
  %v8675 = vld [vmem:[%s8674] ss:$2 sm:$0xff]
  %s8676 = scalar_lea.vmem %s4475, 577 [#allocation3]
  %v8677 = vld [vmem:[%s8676] ss:$2 sm:$0xff]
  %s8678 = scalar_lea.vmem %s4475, 625 [#allocation3]
  %v8679 = vld [vmem:[%s8678] ss:$2 sm:$0xff]
  %s8680 = scalar_lea.vmem %s4475, 673 [#allocation3]
  %v8681 = vld [vmem:[%s8680] ss:$2 sm:$0xff]
  %s8682 = scalar_lea.vmem %s4475, 721 [#allocation3]
  %v8683 = vld [vmem:[%s8682] ss:$2 sm:$0xff]
  %s8684 = scalar_lea.vmem %s4475, 769 [#allocation3]
  %v8685 = vld [vmem:[%s8684] ss:$2 sm:$0xff]
  %s8686 = scalar_lea.vmem %s4475, 2 [#allocation3]
  %v8687 = vld [vmem:[%s8686] ss:$2 sm:$0xff]
  %s8688 = scalar_lea.vmem %s4475, 50 [#allocation3]
  %v8689 = vld [vmem:[%s8688] ss:$2 sm:$0xff]
  %s8690 = scalar_lea.vmem %s4475, 98 [#allocation3]
  %v8691 = vld [vmem:[%s8690] ss:$2 sm:$0xff]
  %s8692 = scalar_lea.vmem %s4475, 146 [#allocation3]
  %v8693 = vld [vmem:[%s8692] ss:$2 sm:$0xff]
  %s8694 = scalar_lea.vmem %s4475, 194 [#allocation3]
  %v8695 = vld [vmem:[%s8694] ss:$2 sm:$0xff]
  %s8696 = scalar_lea.vmem %s4475, 242 [#allocation3]
  %v8697 = vld [vmem:[%s8696] ss:$2 sm:$0xff]
  %s8698 = scalar_lea.vmem %s4475, 290 [#allocation3]
  %v8699 = vld [vmem:[%s8698] ss:$2 sm:$0xff]
  %s8700 = scalar_lea.vmem %s4475, 338 [#allocation3]
  %v8701 = vld [vmem:[%s8700] ss:$2 sm:$0xff]
  %s8702 = scalar_lea.vmem %s4475, 434 [#allocation3]
  %v8703 = vld [vmem:[%s8702] ss:$2 sm:$0xff]
  %s8704 = scalar_lea.vmem %s4475, 482 [#allocation3]
  %v8705 = vld [vmem:[%s8704] ss:$2 sm:$0xff]
  %s8706 = scalar_lea.vmem %s4475, 530 [#allocation3]
  %v8707 = vld [vmem:[%s8706] ss:$2 sm:$0xff]
  %s8708 = scalar_lea.vmem %s4475, 578 [#allocation3]
  %v8709 = vld [vmem:[%s8708] ss:$2 sm:$0xff]
  %s8710 = scalar_lea.vmem %s4475, 626 [#allocation3]
  %v8711 = vld [vmem:[%s8710] ss:$2 sm:$0xff]
  %s8712 = scalar_lea.vmem %s4475, 674 [#allocation3]
  %v8713 = vld [vmem:[%s8712] ss:$2 sm:$0xff]
  %s8714 = scalar_lea.vmem %s4475, 722 [#allocation3]
  %v8715 = vld [vmem:[%s8714] ss:$2 sm:$0xff]
  %s8716 = scalar_lea.vmem %s4475, 770 [#allocation3]
  %v8717 = vld [vmem:[%s8716] ss:$2 sm:$0xff]
  %s8718 = scalar_lea.vmem %s4475, 3 [#allocation3]
  %v8719 = vld [vmem:[%s8718] ss:$2 sm:$0xff]
  %s8720 = scalar_lea.vmem %s4475, 51 [#allocation3]
  %v8721 = vld [vmem:[%s8720] ss:$2 sm:$0xff]
  %s8722 = scalar_lea.vmem %s4475, 99 [#allocation3]
  %v8723 = vld [vmem:[%s8722] ss:$2 sm:$0xff]
  %s8724 = scalar_lea.vmem %s4475, 147 [#allocation3]
  %v8725 = vld [vmem:[%s8724] ss:$2 sm:$0xff]
  %s8726 = scalar_lea.vmem %s4475, 195 [#allocation3]
  %v8727 = vld [vmem:[%s8726] ss:$2 sm:$0xff]
  %s8728 = scalar_lea.vmem %s4475, 243 [#allocation3]
  %v8729 = vld [vmem:[%s8728] ss:$2 sm:$0xff]
  %s8730 = scalar_lea.vmem %s4475, 291 [#allocation3]
  %v8731 = vld [vmem:[%s8730] ss:$2 sm:$0xff]
  %s8732 = scalar_lea.vmem %s4475, 339 [#allocation3]
  %v8733 = vld [vmem:[%s8732] ss:$2 sm:$0xff]
  %s8734 = scalar_lea.vmem %s4475, 435 [#allocation3]
  %v8735 = vld [vmem:[%s8734] ss:$2 sm:$0xff]
  %s8736 = scalar_lea.vmem %s4475, 483 [#allocation3]
  %v8737 = vld [vmem:[%s8736] ss:$2 sm:$0xff]
  %s8738 = scalar_lea.vmem %s4475, 531 [#allocation3]
  %v8739 = vld [vmem:[%s8738] ss:$2 sm:$0xff]
  %s8740 = scalar_lea.vmem %s4475, 579 [#allocation3]
  %v8741 = vld [vmem:[%s8740] ss:$2 sm:$0xff]
  %s8742 = scalar_lea.vmem %s4475, 627 [#allocation3]
  %v8743 = vld [vmem:[%s8742] ss:$2 sm:$0xff]
  %s8744 = scalar_lea.vmem %s4475, 675 [#allocation3]
  %v8745 = vld [vmem:[%s8744] ss:$2 sm:$0xff]
  %s8746 = scalar_lea.vmem %s4475, 723 [#allocation3]
  %v8747 = vld [vmem:[%s8746] ss:$2 sm:$0xff]
  %s8748 = scalar_lea.vmem %s4475, 771 [#allocation3]
  %v8749 = vld [vmem:[%s8748] ss:$2 sm:$0xff]
  %s8750 = scalar_lea.vmem [#allocation3], 48
  %v8751 = vld [vmem:[%s8750] ss:$2 sm:$0xff]
  %s8752 = scalar_lea.vmem %s8750, 48 [#allocation3]
  %v8753 = vld [vmem:[%s8752] ss:$2 sm:$0xff]
  %s8754 = scalar_lea.vmem %s8750, 96 [#allocation3]
  %v8755 = vld [vmem:[%s8754] ss:$2 sm:$0xff]
  %s8756 = scalar_lea.vmem %s8750, 144 [#allocation3]
  %v8757 = vld [vmem:[%s8756] ss:$2 sm:$0xff]
  %s8758 = scalar_lea.vmem %s8750, 192 [#allocation3]
  %v8759 = vld [vmem:[%s8758] ss:$2 sm:$0xff]
  %s8760 = scalar_lea.vmem %s8750, 240 [#allocation3]
  %v8761 = vld [vmem:[%s8760] ss:$2 sm:$0xff]
  %s8762 = scalar_lea.vmem %s8750, 288 [#allocation3]
  %v8763 = vld [vmem:[%s8762] ss:$2 sm:$0xff]
  %s8764 = scalar_lea.vmem %s8750, 336 [#allocation3]
  %v8765 = vld [vmem:[%s8764] ss:$2 sm:$0xff]
  %s8766 = scalar_lea.vmem %s8750, 432 [#allocation3]
  %v8767 = vld [vmem:[%s8766] ss:$2 sm:$0xff]
  %s8768 = scalar_lea.vmem %s8750, 480 [#allocation3]
  %v8769 = vld [vmem:[%s8768] ss:$2 sm:$0xff]
  %s8770 = scalar_lea.vmem %s8750, 528 [#allocation3]
  %v8771 = vld [vmem:[%s8770] ss:$2 sm:$0xff]
  %s8772 = scalar_lea.vmem %s8750, 576 [#allocation3]
  %v8773 = vld [vmem:[%s8772] ss:$2 sm:$0xff]
  %s8774 = scalar_lea.vmem %s8750, 624 [#allocation3]
  %v8775 = vld [vmem:[%s8774] ss:$2 sm:$0xff]
  %s8776 = scalar_lea.vmem %s8750, 672 [#allocation3]
  %v8777 = vld [vmem:[%s8776] ss:$2 sm:$0xff]
  %s8778 = scalar_lea.vmem %s8750, 720 [#allocation3]
  %v8779 = vld [vmem:[%s8778] ss:$2 sm:$0xff]
  %s8780 = scalar_lea.vmem %s8750, 768 [#allocation3]
  %v8781 = vld [vmem:[%s8780] ss:$2 sm:$0xff]
  %s8782 = scalar_lea.vmem %s8750, 1 [#allocation3]
  %v8783 = vld [vmem:[%s8782] ss:$2 sm:$0xff]
  %s8784 = scalar_lea.vmem %s8750, 49 [#allocation3]
  %v8785 = vld [vmem:[%s8784] ss:$2 sm:$0xff]
  %s8786 = scalar_lea.vmem %s8750, 97 [#allocation3]
  %v8787 = vld [vmem:[%s8786] ss:$2 sm:$0xff]
  %s8788 = scalar_lea.vmem %s8750, 145 [#allocation3]
  %v8789 = vld [vmem:[%s8788] ss:$2 sm:$0xff]
  %s8790 = scalar_lea.vmem %s8750, 193 [#allocation3]
  %v8791 = vld [vmem:[%s8790] ss:$2 sm:$0xff]
  %s8792 = scalar_lea.vmem %s8750, 241 [#allocation3]
  %v8793 = vld [vmem:[%s8792] ss:$2 sm:$0xff]
  %s8794 = scalar_lea.vmem %s8750, 289 [#allocation3]
  %v8795 = vld [vmem:[%s8794] ss:$2 sm:$0xff]
  %s8796 = scalar_lea.vmem %s8750, 337 [#allocation3]
  %v8797 = vld [vmem:[%s8796] ss:$2 sm:$0xff]
  %s8798 = scalar_lea.vmem %s8750, 433 [#allocation3]
  %v8799 = vld [vmem:[%s8798] ss:$2 sm:$0xff]
  %s8800 = scalar_lea.vmem %s8750, 481 [#allocation3]
  %v8801 = vld [vmem:[%s8800] ss:$2 sm:$0xff]
  %s8802 = scalar_lea.vmem %s8750, 529 [#allocation3]
  %v8803 = vld [vmem:[%s8802] ss:$2 sm:$0xff]
  %s8804 = scalar_lea.vmem %s8750, 577 [#allocation3]
  %v8805 = vld [vmem:[%s8804] ss:$2 sm:$0xff]
  %s8806 = scalar_lea.vmem %s8750, 625 [#allocation3]
  %v8807 = vld [vmem:[%s8806] ss:$2 sm:$0xff]
  %s8808 = scalar_lea.vmem %s8750, 673 [#allocation3]
  %v8809 = vld [vmem:[%s8808] ss:$2 sm:$0xff]
  %s8810 = scalar_lea.vmem %s8750, 721 [#allocation3]
  %v8811 = vld [vmem:[%s8810] ss:$2 sm:$0xff]
  %s8812 = scalar_lea.vmem %s8750, 769 [#allocation3]
  %v8813 = vld [vmem:[%s8812] ss:$2 sm:$0xff]
  %s8814 = scalar_lea.vmem %s8750, 2 [#allocation3]
  %v8815 = vld [vmem:[%s8814] ss:$2 sm:$0xff]
  %s8816 = scalar_lea.vmem %s8750, 50 [#allocation3]
  %v8817 = vld [vmem:[%s8816] ss:$2 sm:$0xff]
  %s8818 = scalar_lea.vmem %s8750, 98 [#allocation3]
  %v8819 = vld [vmem:[%s8818] ss:$2 sm:$0xff]
  %s8820 = scalar_lea.vmem %s8750, 146 [#allocation3]
  %v8821 = vld [vmem:[%s8820] ss:$2 sm:$0xff]
  %s8822 = scalar_lea.vmem %s8750, 194 [#allocation3]
  %v8823 = vld [vmem:[%s8822] ss:$2 sm:$0xff]
  %s8824 = scalar_lea.vmem %s8750, 242 [#allocation3]
  %v8825 = vld [vmem:[%s8824] ss:$2 sm:$0xff]
  %s8826 = scalar_lea.vmem %s8750, 290 [#allocation3]
  %v8827 = vld [vmem:[%s8826] ss:$2 sm:$0xff]
  %s8828 = scalar_lea.vmem %s8750, 338 [#allocation3]
  %v8829 = vld [vmem:[%s8828] ss:$2 sm:$0xff]
  %s8830 = scalar_lea.vmem %s8750, 434 [#allocation3]
  %v8831 = vld [vmem:[%s8830] ss:$2 sm:$0xff]
  %s8832 = scalar_lea.vmem %s8750, 482 [#allocation3]
  %v8833 = vld [vmem:[%s8832] ss:$2 sm:$0xff]
  %s8834 = scalar_lea.vmem %s8750, 530 [#allocation3]
  %v8835 = vld [vmem:[%s8834] ss:$2 sm:$0xff]
  %s8836 = scalar_lea.vmem %s8750, 578 [#allocation3]
  %v8837 = vld [vmem:[%s8836] ss:$2 sm:$0xff]
  %s8838 = scalar_lea.vmem %s8750, 626 [#allocation3]
  %v8839 = vld [vmem:[%s8838] ss:$2 sm:$0xff]
  %s8840 = scalar_lea.vmem %s8750, 674 [#allocation3]
  %v8841 = vld [vmem:[%s8840] ss:$2 sm:$0xff]
  %s8842 = scalar_lea.vmem %s8750, 722 [#allocation3]
  %v8843 = vld [vmem:[%s8842] ss:$2 sm:$0xff]
  %s8844 = scalar_lea.vmem %s8750, 770 [#allocation3]
  %v8845 = vld [vmem:[%s8844] ss:$2 sm:$0xff]
  %s8846 = scalar_lea.vmem %s8750, 3 [#allocation3]
  %v8847 = vld [vmem:[%s8846] ss:$2 sm:$0xff]
  %s8848 = scalar_lea.vmem %s8750, 51 [#allocation3]
  %v8849 = vld [vmem:[%s8848] ss:$2 sm:$0xff]
  %s8850 = scalar_lea.vmem %s8750, 99 [#allocation3]
  %v8851 = vld [vmem:[%s8850] ss:$2 sm:$0xff]
  %s8852 = scalar_lea.vmem %s8750, 147 [#allocation3]
  %v8853 = vld [vmem:[%s8852] ss:$2 sm:$0xff]
  %s8854 = scalar_lea.vmem %s8750, 195 [#allocation3]
  %v8855 = vld [vmem:[%s8854] ss:$2 sm:$0xff]
  %s8856 = scalar_lea.vmem %s8750, 243 [#allocation3]
  %v8857 = vld [vmem:[%s8856] ss:$2 sm:$0xff]
  %s8858 = scalar_lea.vmem %s8750, 291 [#allocation3]
  %v8859 = vld [vmem:[%s8858] ss:$2 sm:$0xff]
  %s8860 = scalar_lea.vmem %s8750, 339 [#allocation3]
  %v8861 = vld [vmem:[%s8860] ss:$2 sm:$0xff]
  %s8862 = scalar_lea.vmem %s8750, 435 [#allocation3]
  %v8863 = vld [vmem:[%s8862] ss:$2 sm:$0xff]
  %s8864 = scalar_lea.vmem %s8750, 483 [#allocation3]
  %v8865 = vld [vmem:[%s8864] ss:$2 sm:$0xff]
  %s8866 = scalar_lea.vmem %s8750, 531 [#allocation3]
  %v8867 = vld [vmem:[%s8866] ss:$2 sm:$0xff]
  %s8868 = scalar_lea.vmem %s8750, 579 [#allocation3]
  %v8869 = vld [vmem:[%s8868] ss:$2 sm:$0xff]
  %s8870 = scalar_lea.vmem %s8750, 627 [#allocation3]
  %v8871 = vld [vmem:[%s8870] ss:$2 sm:$0xff]
  %s8872 = scalar_lea.vmem %s8750, 675 [#allocation3]
  %v8873 = vld [vmem:[%s8872] ss:$2 sm:$0xff]
  %s8874 = scalar_lea.vmem %s8750, 723 [#allocation3]
  %v8875 = vld [vmem:[%s8874] ss:$2 sm:$0xff]
  %s8876 = scalar_lea.vmem %s8750, 771 [#allocation3]
  %v8877 = vld [vmem:[%s8876] ss:$2 sm:$0xff]
  %s8878 = scalar_lea.vmem [#allocation3], 72
  %v8879 = vld [vmem:[%s8878] ss:$2 sm:$0xff]
  %s8880 = scalar_lea.vmem %s8878, 48 [#allocation3]
  %v8881 = vld [vmem:[%s8880] ss:$2 sm:$0xff]
  %s8882 = scalar_lea.vmem %s8878, 96 [#allocation3]
  %v8883 = vld [vmem:[%s8882] ss:$2 sm:$0xff]
  %s8884 = scalar_lea.vmem %s8878, 144 [#allocation3]
  %v8885 = vld [vmem:[%s8884] ss:$2 sm:$0xff]
  %s8886 = scalar_lea.vmem %s8878, 192 [#allocation3]
  %v8887 = vld [vmem:[%s8886] ss:$2 sm:$0xff]
  %s8888 = scalar_lea.vmem %s8878, 240 [#allocation3]
  %v8889 = vld [vmem:[%s8888] ss:$2 sm:$0xff]
  %s8890 = scalar_lea.vmem %s8878, 288 [#allocation3]
  %v8891 = vld [vmem:[%s8890] ss:$2 sm:$0xff]
  %s8892 = scalar_lea.vmem %s8878, 336 [#allocation3]
  %v8893 = vld [vmem:[%s8892] ss:$2 sm:$0xff]
  %s8894 = scalar_lea.vmem %s8878, 432 [#allocation3]
  %v8895 = vld [vmem:[%s8894] ss:$2 sm:$0xff]
  %s8896 = scalar_lea.vmem %s8878, 480 [#allocation3]
  %v8897 = vld [vmem:[%s8896] ss:$2 sm:$0xff]
  %s8898 = scalar_lea.vmem %s8878, 528 [#allocation3]
  %v8899 = vld [vmem:[%s8898] ss:$2 sm:$0xff]
  %s8900 = scalar_lea.vmem %s8878, 576 [#allocation3]
  %v8901 = vld [vmem:[%s8900] ss:$2 sm:$0xff]
  %s8902 = scalar_lea.vmem %s8878, 624 [#allocation3]
  %v8903 = vld [vmem:[%s8902] ss:$2 sm:$0xff]
  %s8904 = scalar_lea.vmem %s8878, 672 [#allocation3]
  %v8905 = vld [vmem:[%s8904] ss:$2 sm:$0xff]
  %s8906 = scalar_lea.vmem %s8878, 720 [#allocation3]
  %v8907 = vld [vmem:[%s8906] ss:$2 sm:$0xff]
  %s8908 = scalar_lea.vmem %s8878, 768 [#allocation3]
  %v8909 = vld [vmem:[%s8908] ss:$2 sm:$0xff]
  %s8910 = scalar_lea.vmem %s8878, 1 [#allocation3]
  %v8911 = vld [vmem:[%s8910] ss:$2 sm:$0xff]
  %s8912 = scalar_lea.vmem %s8878, 49 [#allocation3]
  %v8913 = vld [vmem:[%s8912] ss:$2 sm:$0xff]
  %s8914 = scalar_lea.vmem %s8878, 97 [#allocation3]
  %v8915 = vld [vmem:[%s8914] ss:$2 sm:$0xff]
  %s8916 = scalar_lea.vmem %s8878, 145 [#allocation3]
  %v8917 = vld [vmem:[%s8916] ss:$2 sm:$0xff]
  %s8918 = scalar_lea.vmem %s8878, 193 [#allocation3]
  %v8919 = vld [vmem:[%s8918] ss:$2 sm:$0xff]
  %s8920 = scalar_lea.vmem %s8878, 241 [#allocation3]
  %v8921 = vld [vmem:[%s8920] ss:$2 sm:$0xff]
  %s8922 = scalar_lea.vmem %s8878, 289 [#allocation3]
  %v8923 = vld [vmem:[%s8922] ss:$2 sm:$0xff]
  %s8924 = scalar_lea.vmem %s8878, 337 [#allocation3]
  %v8925 = vld [vmem:[%s8924] ss:$2 sm:$0xff]
  %s8926 = scalar_lea.vmem %s8878, 433 [#allocation3]
  %v8927 = vld [vmem:[%s8926] ss:$2 sm:$0xff]
  %s8928 = scalar_lea.vmem %s8878, 481 [#allocation3]
  %v8929 = vld [vmem:[%s8928] ss:$2 sm:$0xff]
  %s8930 = scalar_lea.vmem %s8878, 529 [#allocation3]
  %v8931 = vld [vmem:[%s8930] ss:$2 sm:$0xff]
  %s8932 = scalar_lea.vmem %s8878, 577 [#allocation3]
  %v8933 = vld [vmem:[%s8932] ss:$2 sm:$0xff]
  %s8934 = scalar_lea.vmem %s8878, 625 [#allocation3]
  %v8935 = vld [vmem:[%s8934] ss:$2 sm:$0xff]
  %s8936 = scalar_lea.vmem %s8878, 673 [#allocation3]
  %v8937 = vld [vmem:[%s8936] ss:$2 sm:$0xff]
  %s8938 = scalar_lea.vmem %s8878, 721 [#allocation3]
  %v8939 = vld [vmem:[%s8938] ss:$2 sm:$0xff]
  %s8940 = scalar_lea.vmem %s8878, 769 [#allocation3]
  %v8941 = vld [vmem:[%s8940] ss:$2 sm:$0xff]
  %s8942 = scalar_lea.vmem %s8878, 2 [#allocation3]
  %v8943 = vld [vmem:[%s8942] ss:$2 sm:$0xff]
  %s8944 = scalar_lea.vmem %s8878, 50 [#allocation3]
  %v8945 = vld [vmem:[%s8944] ss:$2 sm:$0xff]
  %s8946 = scalar_lea.vmem %s8878, 98 [#allocation3]
  %v8947 = vld [vmem:[%s8946] ss:$2 sm:$0xff]
  %s8948 = scalar_lea.vmem %s8878, 146 [#allocation3]
  %v8949 = vld [vmem:[%s8948] ss:$2 sm:$0xff]
  %s8950 = scalar_lea.vmem %s8878, 194 [#allocation3]
  %v8951 = vld [vmem:[%s8950] ss:$2 sm:$0xff]
  %s8952 = scalar_lea.vmem %s8878, 242 [#allocation3]
  %v8953 = vld [vmem:[%s8952] ss:$2 sm:$0xff]
  %s8954 = scalar_lea.vmem %s8878, 290 [#allocation3]
  %v8955 = vld [vmem:[%s8954] ss:$2 sm:$0xff]
  %s8956 = scalar_lea.vmem %s8878, 338 [#allocation3]
  %v8957 = vld [vmem:[%s8956] ss:$2 sm:$0xff]
  %s8958 = scalar_lea.vmem %s8878, 434 [#allocation3]
  %v8959 = vld [vmem:[%s8958] ss:$2 sm:$0xff]
  %s8960 = scalar_lea.vmem %s8878, 482 [#allocation3]
  %v8961 = vld [vmem:[%s8960] ss:$2 sm:$0xff]
  %s8962 = scalar_lea.vmem %s8878, 530 [#allocation3]
  %v8963 = vld [vmem:[%s8962] ss:$2 sm:$0xff]
  %s8964 = scalar_lea.vmem %s8878, 578 [#allocation3]
  %v8965 = vld [vmem:[%s8964] ss:$2 sm:$0xff]
  %s8966 = scalar_lea.vmem %s8878, 626 [#allocation3]
  %v8967 = vld [vmem:[%s8966] ss:$2 sm:$0xff]
  %s8968 = scalar_lea.vmem %s8878, 674 [#allocation3]
  %v8969 = vld [vmem:[%s8968] ss:$2 sm:$0xff]
  %s8970 = scalar_lea.vmem %s8878, 722 [#allocation3]
  %v8971 = vld [vmem:[%s8970] ss:$2 sm:$0xff]
  %s8972 = scalar_lea.vmem %s8878, 770 [#allocation3]
  %v8973 = vld [vmem:[%s8972] ss:$2 sm:$0xff]
  %s8974 = scalar_lea.vmem %s8878, 3 [#allocation3]
  %v8975 = vld [vmem:[%s8974] ss:$2 sm:$0xff]
  %s8976 = scalar_lea.vmem %s8878, 51 [#allocation3]
  %v8977 = vld [vmem:[%s8976] ss:$2 sm:$0xff]
  %s8978 = scalar_lea.vmem %s8878, 99 [#allocation3]
  %v8979 = vld [vmem:[%s8978] ss:$2 sm:$0xff]
  %s8980 = scalar_lea.vmem %s8878, 147 [#allocation3]
  %v8981 = vld [vmem:[%s8980] ss:$2 sm:$0xff]
  %s8982 = scalar_lea.vmem %s8878, 195 [#allocation3]
  %v8983 = vld [vmem:[%s8982] ss:$2 sm:$0xff]
  %s8984 = scalar_lea.vmem %s8878, 243 [#allocation3]
  %v8985 = vld [vmem:[%s8984] ss:$2 sm:$0xff]
  %s8986 = scalar_lea.vmem %s8878, 291 [#allocation3]
  %v8987 = vld [vmem:[%s8986] ss:$2 sm:$0xff]
  %s8988 = scalar_lea.vmem %s8878, 339 [#allocation3]
  %v8989 = vld [vmem:[%s8988] ss:$2 sm:$0xff]
  %s8990 = scalar_lea.vmem %s8878, 435 [#allocation3]
  %v8991 = vld [vmem:[%s8990] ss:$2 sm:$0xff]
  %s8992 = scalar_lea.vmem %s8878, 483 [#allocation3]
  %v8993 = vld [vmem:[%s8992] ss:$2 sm:$0xff]
  %s8994 = scalar_lea.vmem %s8878, 531 [#allocation3]
  %v8995 = vld [vmem:[%s8994] ss:$2 sm:$0xff]
  %s8996 = scalar_lea.vmem %s8878, 579 [#allocation3]
  %v8997 = vld [vmem:[%s8996] ss:$2 sm:$0xff]
  %s8998 = scalar_lea.vmem %s8878, 627 [#allocation3]
  %v8999 = vld [vmem:[%s8998] ss:$2 sm:$0xff]
  %s9000 = scalar_lea.vmem %s8878, 675 [#allocation3]
  %v9001 = vld [vmem:[%s9000] ss:$2 sm:$0xff]
  %s9002 = scalar_lea.vmem %s8878, 723 [#allocation3]
  %v9003 = vld [vmem:[%s9002] ss:$2 sm:$0xff]
  %s9004 = scalar_lea.vmem %s8878, 771 [#allocation3]
  %v9005 = vld [vmem:[%s9004] ss:$2 sm:$0xff]
  %9022 = vrot.lane.b32.xlu0 %v8528, 8
  %v9023 = vpop.permute.xlu0 %9022
  %9024 = vrot.lane.b32.xlu0 %v8530, 8
  %v9025 = vpop.permute.xlu0 %9024
  %9026 = vrot.lane.b32.xlu0 %v8532, 8
  %v9027 = vpop.permute.xlu0 %9026
  %9028 = vrot.lane.b32.xlu0 %v8534, 8
  %v9029 = vpop.permute.xlu0 %9028
  %9030 = vrot.lane.b32.xlu0 %v8536, 8
  %v9031 = vpop.permute.xlu0 %9030
  %9032 = vrot.lane.b32.xlu0 %v8538, 8
  %v9033 = vpop.permute.xlu0 %9032
  %9034 = vrot.lane.b32.xlu0 %v8540, 8
  %v9035 = vpop.permute.xlu0 %9034
  %9036 = vrot.lane.b32.xlu0 %v8542, 8
  %v9037 = vpop.permute.xlu0 %9036
  %9038 = vrot.lane.b32.xlu0 %v8544, 8
  %v9039 = vpop.permute.xlu0 %9038
  %9040 = vrot.lane.b32.xlu0 %v8546, 8
  %v9041 = vpop.permute.xlu0 %9040
  %9042 = vrot.lane.b32.xlu0 %v8548, 8
  %v9043 = vpop.permute.xlu0 %9042
  %9044 = vrot.lane.b32.xlu0 %v8550, 8
  %v9045 = vpop.permute.xlu0 %9044
  %9046 = vrot.lane.b32.xlu0 %v8552, 8
  %v9047 = vpop.permute.xlu0 %9046
  %9048 = vrot.lane.b32.xlu0 %v8554, 8
  %v9049 = vpop.permute.xlu0 %9048
  %9050 = vrot.lane.b32.xlu0 %v8556, 8
  %v9051 = vpop.permute.xlu0 %9050
  %9052 = vrot.lane.b32.xlu0 %v8558, 8
  %v9053 = vpop.permute.xlu0 %9052
  %9086 = vrot.lane.b32.xlu0 %v8560, 16
  %v9087 = vpop.permute.xlu0 %9086
  %9088 = vrot.lane.b32.xlu0 %v8562, 16
  %v9089 = vpop.permute.xlu0 %9088
  %9090 = vrot.lane.b32.xlu0 %v8564, 16
  %v9091 = vpop.permute.xlu0 %9090
  %9092 = vrot.lane.b32.xlu0 %v8566, 16
  %v9093 = vpop.permute.xlu0 %9092
  %9094 = vrot.lane.b32.xlu0 %v8568, 16
  %v9095 = vpop.permute.xlu0 %9094
  %9096 = vrot.lane.b32.xlu0 %v8570, 16
  %v9097 = vpop.permute.xlu0 %9096
  %9098 = vrot.lane.b32.xlu0 %v8572, 16
  %v9099 = vpop.permute.xlu0 %9098
  %9100 = vrot.lane.b32.xlu0 %v8574, 16
  %v9101 = vpop.permute.xlu0 %9100
  %9102 = vrot.lane.b32.xlu0 %v8576, 16
  %v9103 = vpop.permute.xlu0 %9102
  %9104 = vrot.lane.b32.xlu0 %v8578, 16
  %v9105 = vpop.permute.xlu0 %9104
  %9106 = vrot.lane.b32.xlu0 %v8580, 16
  %v9107 = vpop.permute.xlu0 %9106
  %9108 = vrot.lane.b32.xlu0 %v8582, 16
  %v9109 = vpop.permute.xlu0 %9108
  %9110 = vrot.lane.b32.xlu0 %v8584, 16
  %v9111 = vpop.permute.xlu0 %9110
  %9112 = vrot.lane.b32.xlu0 %v8586, 16
  %v9113 = vpop.permute.xlu0 %9112
  %9114 = vrot.lane.b32.xlu0 %v8588, 16
  %v9115 = vpop.permute.xlu0 %9114
  %9116 = vrot.lane.b32.xlu0 %v8590, 16
  %v9117 = vpop.permute.xlu0 %9116
  %9150 = vrot.lane.b32.xlu0 %v8592, 24
  %v9151 = vpop.permute.xlu0 %9150
  %9152 = vrot.lane.b32.xlu0 %v8594, 24
  %v9153 = vpop.permute.xlu0 %9152
  %9154 = vrot.lane.b32.xlu0 %v8596, 24
  %v9155 = vpop.permute.xlu0 %9154
  %9156 = vrot.lane.b32.xlu0 %v8598, 24
  %v9157 = vpop.permute.xlu0 %9156
  %9158 = vrot.lane.b32.xlu0 %v8600, 24
  %v9159 = vpop.permute.xlu0 %9158
  %9160 = vrot.lane.b32.xlu0 %v8602, 24
  %v9161 = vpop.permute.xlu0 %9160
  %9162 = vrot.lane.b32.xlu0 %v8604, 24
  %v9163 = vpop.permute.xlu0 %9162
  %9164 = vrot.lane.b32.xlu0 %v8606, 24
  %v9165 = vpop.permute.xlu0 %9164
  %9166 = vrot.lane.b32.xlu0 %v8608, 24
  %v9167 = vpop.permute.xlu0 %9166
  %9168 = vrot.lane.b32.xlu0 %v8610, 24
  %v9169 = vpop.permute.xlu0 %9168
  %9170 = vrot.lane.b32.xlu0 %v8612, 24
  %v9171 = vpop.permute.xlu0 %9170
  %9172 = vrot.lane.b32.xlu0 %v8614, 24
  %v9173 = vpop.permute.xlu0 %9172
  %9174 = vrot.lane.b32.xlu0 %v8616, 24
  %v9175 = vpop.permute.xlu0 %9174
  %9176 = vrot.lane.b32.xlu0 %v8618, 24
  %v9177 = vpop.permute.xlu0 %9176
  %9178 = vrot.lane.b32.xlu0 %v8620, 24
  %v9179 = vpop.permute.xlu0 %9178
  %9180 = vrot.lane.b32.xlu0 %v8622, 24
  %v9181 = vpop.permute.xlu0 %9180
  %9214 = vrot.lane.b32.xlu0 %v8623, 32
  %v9215 = vpop.permute.xlu0 %9214
  %9216 = vrot.lane.b32.xlu0 %v8625, 32
  %v9217 = vpop.permute.xlu0 %9216
  %9218 = vrot.lane.b32.xlu0 %v8627, 32
  %v9219 = vpop.permute.xlu0 %9218
  %9220 = vrot.lane.b32.xlu0 %v8629, 32
  %v9221 = vpop.permute.xlu0 %9220
  %9222 = vrot.lane.b32.xlu0 %v8631, 32
  %v9223 = vpop.permute.xlu0 %9222
  %9224 = vrot.lane.b32.xlu0 %v8633, 32
  %v9225 = vpop.permute.xlu0 %9224
  %9226 = vrot.lane.b32.xlu0 %v8635, 32
  %v9227 = vpop.permute.xlu0 %9226
  %9228 = vrot.lane.b32.xlu0 %v8637, 32
  %v9229 = vpop.permute.xlu0 %9228
  %9230 = vrot.lane.b32.xlu0 %v8639, 32
  %v9231 = vpop.permute.xlu0 %9230
  %9232 = vrot.lane.b32.xlu0 %v8641, 32
  %v9233 = vpop.permute.xlu0 %9232
  %9234 = vrot.lane.b32.xlu0 %v8643, 32
  %v9235 = vpop.permute.xlu0 %9234
  %9236 = vrot.lane.b32.xlu0 %v8645, 32
  %v9237 = vpop.permute.xlu0 %9236
  %9238 = vrot.lane.b32.xlu0 %v8647, 32
  %v9239 = vpop.permute.xlu0 %9238
  %9240 = vrot.lane.b32.xlu0 %v8649, 32
  %v9241 = vpop.permute.xlu0 %9240
  %9242 = vrot.lane.b32.xlu0 %v8651, 32
  %v9243 = vpop.permute.xlu0 %9242
  %9244 = vrot.lane.b32.xlu0 %v8653, 32
  %v9245 = vpop.permute.xlu0 %9244
  %9278 = vrot.lane.b32.xlu0 %v8655, 40
  %v9279 = vpop.permute.xlu0 %9278
  %9280 = vrot.lane.b32.xlu0 %v8657, 40
  %v9281 = vpop.permute.xlu0 %9280
  %9282 = vrot.lane.b32.xlu0 %v8659, 40
  %v9283 = vpop.permute.xlu0 %9282
  %9284 = vrot.lane.b32.xlu0 %v8661, 40
  %v9285 = vpop.permute.xlu0 %9284
  %9286 = vrot.lane.b32.xlu0 %v8663, 40
  %v9287 = vpop.permute.xlu0 %9286
  %9288 = vrot.lane.b32.xlu0 %v8665, 40
  %v9289 = vpop.permute.xlu0 %9288
  %9290 = vrot.lane.b32.xlu0 %v8667, 40
  %v9291 = vpop.permute.xlu0 %9290
  %9292 = vrot.lane.b32.xlu0 %v8669, 40
  %v9293 = vpop.permute.xlu0 %9292
  %9294 = vrot.lane.b32.xlu0 %v8671, 40
  %v9295 = vpop.permute.xlu0 %9294
  %9296 = vrot.lane.b32.xlu0 %v8673, 40
  %v9297 = vpop.permute.xlu0 %9296
  %9298 = vrot.lane.b32.xlu0 %v8675, 40
  %v9299 = vpop.permute.xlu0 %9298
  %9300 = vrot.lane.b32.xlu0 %v8677, 40
  %v9301 = vpop.permute.xlu0 %9300
  %9302 = vrot.lane.b32.xlu0 %v8679, 40
  %v9303 = vpop.permute.xlu0 %9302
  %9304 = vrot.lane.b32.xlu0 %v8681, 40
  %v9305 = vpop.permute.xlu0 %9304
  %9306 = vrot.lane.b32.xlu0 %v8683, 40
  %v9307 = vpop.permute.xlu0 %9306
  %9308 = vrot.lane.b32.xlu0 %v8685, 40
  %v9309 = vpop.permute.xlu0 %9308
  %9342 = vrot.lane.b32.xlu0 %v8687, 48
  %v9343 = vpop.permute.xlu0 %9342
  %9344 = vrot.lane.b32.xlu0 %v8689, 48
  %v9345 = vpop.permute.xlu0 %9344
  %9346 = vrot.lane.b32.xlu0 %v8691, 48
  %v9347 = vpop.permute.xlu0 %9346
  %9348 = vrot.lane.b32.xlu0 %v8693, 48
  %v9349 = vpop.permute.xlu0 %9348
  %9350 = vrot.lane.b32.xlu0 %v8695, 48
  %v9351 = vpop.permute.xlu0 %9350
  %9352 = vrot.lane.b32.xlu0 %v8697, 48
  %v9353 = vpop.permute.xlu0 %9352
  %9354 = vrot.lane.b32.xlu0 %v8699, 48
  %v9355 = vpop.permute.xlu0 %9354
  %9356 = vrot.lane.b32.xlu0 %v8701, 48
  %v9357 = vpop.permute.xlu0 %9356
  %9358 = vrot.lane.b32.xlu0 %v8703, 48
  %v9359 = vpop.permute.xlu0 %9358
  %9360 = vrot.lane.b32.xlu0 %v8705, 48
  %v9361 = vpop.permute.xlu0 %9360
  %9362 = vrot.lane.b32.xlu0 %v8707, 48
  %v9363 = vpop.permute.xlu0 %9362
  %9364 = vrot.lane.b32.xlu0 %v8709, 48
  %v9365 = vpop.permute.xlu0 %9364
  %9366 = vrot.lane.b32.xlu0 %v8711, 48
  %v9367 = vpop.permute.xlu0 %9366
  %9368 = vrot.lane.b32.xlu0 %v8713, 48
  %v9369 = vpop.permute.xlu0 %9368
  %9370 = vrot.lane.b32.xlu0 %v8715, 48
  %v9371 = vpop.permute.xlu0 %9370
  %9372 = vrot.lane.b32.xlu0 %v8717, 48
  %v9373 = vpop.permute.xlu0 %9372
  %9406 = vrot.lane.b32.xlu0 %v8719, 56
  %v9407 = vpop.permute.xlu0 %9406
  %9408 = vrot.lane.b32.xlu0 %v8721, 56
  %v9409 = vpop.permute.xlu0 %9408
  %9410 = vrot.lane.b32.xlu0 %v8723, 56
  %v9411 = vpop.permute.xlu0 %9410
  %9412 = vrot.lane.b32.xlu0 %v8725, 56
  %v9413 = vpop.permute.xlu0 %9412
  %9414 = vrot.lane.b32.xlu0 %v8727, 56
  %v9415 = vpop.permute.xlu0 %9414
  %9416 = vrot.lane.b32.xlu0 %v8729, 56
  %v9417 = vpop.permute.xlu0 %9416
  %9418 = vrot.lane.b32.xlu0 %v8731, 56
  %v9419 = vpop.permute.xlu0 %9418
  %9420 = vrot.lane.b32.xlu0 %v8733, 56
  %v9421 = vpop.permute.xlu0 %9420
  %9422 = vrot.lane.b32.xlu0 %v8735, 56
  %v9423 = vpop.permute.xlu0 %9422
  %9424 = vrot.lane.b32.xlu0 %v8737, 56
  %v9425 = vpop.permute.xlu0 %9424
  %9426 = vrot.lane.b32.xlu0 %v8739, 56
  %v9427 = vpop.permute.xlu0 %9426
  %9428 = vrot.lane.b32.xlu0 %v8741, 56
  %v9429 = vpop.permute.xlu0 %9428
  %9430 = vrot.lane.b32.xlu0 %v8743, 56
  %v9431 = vpop.permute.xlu0 %9430
  %9432 = vrot.lane.b32.xlu0 %v8745, 56
  %v9433 = vpop.permute.xlu0 %9432
  %9434 = vrot.lane.b32.xlu0 %v8747, 56
  %v9435 = vpop.permute.xlu0 %9434
  %9436 = vrot.lane.b32.xlu0 %v8749, 56
  %v9437 = vpop.permute.xlu0 %9436
  %9470 = vrot.lane.b32.xlu0 %v8751, 64
  %v9471 = vpop.permute.xlu0 %9470
  %9472 = vrot.lane.b32.xlu0 %v8753, 64
  %v9473 = vpop.permute.xlu0 %9472
  %9474 = vrot.lane.b32.xlu0 %v8755, 64
  %v9475 = vpop.permute.xlu0 %9474
  %9476 = vrot.lane.b32.xlu0 %v8757, 64
  %v9477 = vpop.permute.xlu0 %9476
  %9478 = vrot.lane.b32.xlu0 %v8759, 64
  %v9479 = vpop.permute.xlu0 %9478
  %9480 = vrot.lane.b32.xlu0 %v8761, 64
  %v9481 = vpop.permute.xlu0 %9480
  %9482 = vrot.lane.b32.xlu0 %v8763, 64
  %v9483 = vpop.permute.xlu0 %9482
  %9484 = vrot.lane.b32.xlu0 %v8765, 64
  %v9485 = vpop.permute.xlu0 %9484
  %9486 = vrot.lane.b32.xlu0 %v8767, 64
  %v9487 = vpop.permute.xlu0 %9486
  %9488 = vrot.lane.b32.xlu0 %v8769, 64
  %v9489 = vpop.permute.xlu0 %9488
  %9490 = vrot.lane.b32.xlu0 %v8771, 64
  %v9491 = vpop.permute.xlu0 %9490
  %9492 = vrot.lane.b32.xlu0 %v8773, 64
  %v9493 = vpop.permute.xlu0 %9492
  %9494 = vrot.lane.b32.xlu0 %v8775, 64
  %v9495 = vpop.permute.xlu0 %9494
  %9496 = vrot.lane.b32.xlu0 %v8777, 64
  %v9497 = vpop.permute.xlu0 %9496
  %9498 = vrot.lane.b32.xlu0 %v8779, 64
  %v9499 = vpop.permute.xlu0 %9498
  %9500 = vrot.lane.b32.xlu0 %v8781, 64
  %v9501 = vpop.permute.xlu0 %9500
  %9534 = vrot.lane.b32.xlu0 %v8783, 72
  %v9535 = vpop.permute.xlu0 %9534
  %9536 = vrot.lane.b32.xlu0 %v8785, 72
  %v9537 = vpop.permute.xlu0 %9536
  %9538 = vrot.lane.b32.xlu0 %v8787, 72
  %v9539 = vpop.permute.xlu0 %9538
  %9540 = vrot.lane.b32.xlu0 %v8789, 72
  %v9541 = vpop.permute.xlu0 %9540
  %9542 = vrot.lane.b32.xlu0 %v8791, 72
  %v9543 = vpop.permute.xlu0 %9542
  %9544 = vrot.lane.b32.xlu0 %v8793, 72
  %v9545 = vpop.permute.xlu0 %9544
  %9546 = vrot.lane.b32.xlu0 %v8795, 72
  %v9547 = vpop.permute.xlu0 %9546
  %9548 = vrot.lane.b32.xlu0 %v8797, 72
  %v9549 = vpop.permute.xlu0 %9548
  %9550 = vrot.lane.b32.xlu0 %v8799, 72
  %v9551 = vpop.permute.xlu0 %9550
  %9552 = vrot.lane.b32.xlu0 %v8801, 72
  %v9553 = vpop.permute.xlu0 %9552
  %9554 = vrot.lane.b32.xlu0 %v8803, 72
  %v9555 = vpop.permute.xlu0 %9554
  %9556 = vrot.lane.b32.xlu0 %v8805, 72
  %v9557 = vpop.permute.xlu0 %9556
  %9558 = vrot.lane.b32.xlu0 %v8807, 72
  %v9559 = vpop.permute.xlu0 %9558
  %9560 = vrot.lane.b32.xlu0 %v8809, 72
  %v9561 = vpop.permute.xlu0 %9560
  %9562 = vrot.lane.b32.xlu0 %v8811, 72
  %v9563 = vpop.permute.xlu0 %9562
  %9564 = vrot.lane.b32.xlu0 %v8813, 72
  %v9565 = vpop.permute.xlu0 %9564
  %9598 = vrot.lane.b32.xlu0 %v8815, 80
  %v9599 = vpop.permute.xlu0 %9598
  %9600 = vrot.lane.b32.xlu0 %v8817, 80
  %v9601 = vpop.permute.xlu0 %9600
  %9602 = vrot.lane.b32.xlu0 %v8819, 80
  %v9603 = vpop.permute.xlu0 %9602
  %9604 = vrot.lane.b32.xlu0 %v8821, 80
  %v9605 = vpop.permute.xlu0 %9604
  %9606 = vrot.lane.b32.xlu0 %v8823, 80
  %v9607 = vpop.permute.xlu0 %9606
  %9608 = vrot.lane.b32.xlu0 %v8825, 80
  %v9609 = vpop.permute.xlu0 %9608
  %9610 = vrot.lane.b32.xlu0 %v8827, 80
  %v9611 = vpop.permute.xlu0 %9610
  %9612 = vrot.lane.b32.xlu0 %v8829, 80
  %v9613 = vpop.permute.xlu0 %9612
  %9614 = vrot.lane.b32.xlu0 %v8831, 80
  %v9615 = vpop.permute.xlu0 %9614
  %9616 = vrot.lane.b32.xlu0 %v8833, 80
  %v9617 = vpop.permute.xlu0 %9616
  %9618 = vrot.lane.b32.xlu0 %v8835, 80
  %v9619 = vpop.permute.xlu0 %9618
  %9620 = vrot.lane.b32.xlu0 %v8837, 80
  %v9621 = vpop.permute.xlu0 %9620
  %9622 = vrot.lane.b32.xlu0 %v8839, 80
  %v9623 = vpop.permute.xlu0 %9622
  %9624 = vrot.lane.b32.xlu0 %v8841, 80
  %v9625 = vpop.permute.xlu0 %9624
  %9626 = vrot.lane.b32.xlu0 %v8843, 80
  %v9627 = vpop.permute.xlu0 %9626
  %9628 = vrot.lane.b32.xlu0 %v8845, 80
  %v9629 = vpop.permute.xlu0 %9628
  %9662 = vrot.lane.b32.xlu0 %v8847, 88
  %v9663 = vpop.permute.xlu0 %9662
  %9664 = vrot.lane.b32.xlu0 %v8849, 88
  %v9665 = vpop.permute.xlu0 %9664
  %9666 = vrot.lane.b32.xlu0 %v8851, 88
  %v9667 = vpop.permute.xlu0 %9666
  %9668 = vrot.lane.b32.xlu0 %v8853, 88
  %v9669 = vpop.permute.xlu0 %9668
  %9670 = vrot.lane.b32.xlu0 %v8855, 88
  %v9671 = vpop.permute.xlu0 %9670
  %9672 = vrot.lane.b32.xlu0 %v8857, 88
  %v9673 = vpop.permute.xlu0 %9672
  %9674 = vrot.lane.b32.xlu0 %v8859, 88
  %v9675 = vpop.permute.xlu0 %9674
  %9676 = vrot.lane.b32.xlu0 %v8861, 88
  %v9677 = vpop.permute.xlu0 %9676
  %9678 = vrot.lane.b32.xlu0 %v8863, 88
  %v9679 = vpop.permute.xlu0 %9678
  %9680 = vrot.lane.b32.xlu0 %v8865, 88
  %v9681 = vpop.permute.xlu0 %9680
  %9682 = vrot.lane.b32.xlu0 %v8867, 88
  %v9683 = vpop.permute.xlu0 %9682
  %9684 = vrot.lane.b32.xlu0 %v8869, 88
  %v9685 = vpop.permute.xlu0 %9684
  %9686 = vrot.lane.b32.xlu0 %v8871, 88
  %v9687 = vpop.permute.xlu0 %9686
  %9688 = vrot.lane.b32.xlu0 %v8873, 88
  %v9689 = vpop.permute.xlu0 %9688
  %9690 = vrot.lane.b32.xlu0 %v8875, 88
  %v9691 = vpop.permute.xlu0 %9690
  %9692 = vrot.lane.b32.xlu0 %v8877, 88
  %v9693 = vpop.permute.xlu0 %9692
  %9726 = vrot.lane.b32.xlu0 %v8879, 96
  %v9727 = vpop.permute.xlu0 %9726
  %9728 = vrot.lane.b32.xlu0 %v8881, 96
  %v9729 = vpop.permute.xlu0 %9728
  %9730 = vrot.lane.b32.xlu0 %v8883, 96
  %v9731 = vpop.permute.xlu0 %9730
  %9732 = vrot.lane.b32.xlu0 %v8885, 96
  %v9733 = vpop.permute.xlu0 %9732
  %9734 = vrot.lane.b32.xlu0 %v8887, 96
  %v9735 = vpop.permute.xlu0 %9734
  %9736 = vrot.lane.b32.xlu0 %v8889, 96
  %v9737 = vpop.permute.xlu0 %9736
  %9738 = vrot.lane.b32.xlu0 %v8891, 96
  %v9739 = vpop.permute.xlu0 %9738
  %9740 = vrot.lane.b32.xlu0 %v8893, 96
  %v9741 = vpop.permute.xlu0 %9740
  %9742 = vrot.lane.b32.xlu0 %v8895, 96
  %v9743 = vpop.permute.xlu0 %9742
  %9744 = vrot.lane.b32.xlu0 %v8897, 96
  %v9745 = vpop.permute.xlu0 %9744
  %9746 = vrot.lane.b32.xlu0 %v8899, 96
  %v9747 = vpop.permute.xlu0 %9746
  %9748 = vrot.lane.b32.xlu0 %v8901, 96
  %v9749 = vpop.permute.xlu0 %9748
  %9750 = vrot.lane.b32.xlu0 %v8903, 96
  %v9751 = vpop.permute.xlu0 %9750
  %9752 = vrot.lane.b32.xlu0 %v8905, 96
  %v9753 = vpop.permute.xlu0 %9752
  %9754 = vrot.lane.b32.xlu0 %v8907, 96
  %v9755 = vpop.permute.xlu0 %9754
  %9756 = vrot.lane.b32.xlu0 %v8909, 96
  %v9757 = vpop.permute.xlu0 %9756
  %9790 = vrot.lane.b32.xlu0 %v8911, 104
  %v9791 = vpop.permute.xlu0 %9790
  %9792 = vrot.lane.b32.xlu0 %v8913, 104
  %v9793 = vpop.permute.xlu0 %9792
  %9794 = vrot.lane.b32.xlu0 %v8915, 104
  %v9795 = vpop.permute.xlu0 %9794
  %9796 = vrot.lane.b32.xlu0 %v8917, 104
  %v9797 = vpop.permute.xlu0 %9796
  %9798 = vrot.lane.b32.xlu0 %v8919, 104
  %v9799 = vpop.permute.xlu0 %9798
  %9800 = vrot.lane.b32.xlu0 %v8921, 104
  %v9801 = vpop.permute.xlu0 %9800
  %9802 = vrot.lane.b32.xlu0 %v8923, 104
  %v9803 = vpop.permute.xlu0 %9802
  %9804 = vrot.lane.b32.xlu0 %v8925, 104
  %v9805 = vpop.permute.xlu0 %9804
  %9806 = vrot.lane.b32.xlu0 %v8927, 104
  %v9807 = vpop.permute.xlu0 %9806
  %9808 = vrot.lane.b32.xlu0 %v8929, 104
  %v9809 = vpop.permute.xlu0 %9808
  %9810 = vrot.lane.b32.xlu0 %v8931, 104
  %v9811 = vpop.permute.xlu0 %9810
  %9812 = vrot.lane.b32.xlu0 %v8933, 104
  %v9813 = vpop.permute.xlu0 %9812
  %9814 = vrot.lane.b32.xlu0 %v8935, 104
  %v9815 = vpop.permute.xlu0 %9814
  %9816 = vrot.lane.b32.xlu0 %v8937, 104
  %v9817 = vpop.permute.xlu0 %9816
  %9818 = vrot.lane.b32.xlu0 %v8939, 104
  %v9819 = vpop.permute.xlu0 %9818
  %9820 = vrot.lane.b32.xlu0 %v8941, 104
  %v9821 = vpop.permute.xlu0 %9820
  %9854 = vrot.lane.b32.xlu0 %v8943, 112
  %v9855 = vpop.permute.xlu0 %9854
  %9856 = vrot.lane.b32.xlu0 %v8945, 112
  %v9857 = vpop.permute.xlu0 %9856
  %9858 = vrot.lane.b32.xlu0 %v8947, 112
  %v9859 = vpop.permute.xlu0 %9858
  %9860 = vrot.lane.b32.xlu0 %v8949, 112
  %v9861 = vpop.permute.xlu0 %9860
  %9862 = vrot.lane.b32.xlu0 %v8951, 112
  %v9863 = vpop.permute.xlu0 %9862
  %9864 = vrot.lane.b32.xlu0 %v8953, 112
  %v9865 = vpop.permute.xlu0 %9864
  %9866 = vrot.lane.b32.xlu0 %v8955, 112
  %v9867 = vpop.permute.xlu0 %9866
  %9868 = vrot.lane.b32.xlu0 %v8957, 112
  %v9869 = vpop.permute.xlu0 %9868
  %9870 = vrot.lane.b32.xlu0 %v8959, 112
  %v9871 = vpop.permute.xlu0 %9870
  %9872 = vrot.lane.b32.xlu0 %v8961, 112
  %v9873 = vpop.permute.xlu0 %9872
  %9874 = vrot.lane.b32.xlu0 %v8963, 112
  %v9875 = vpop.permute.xlu0 %9874
  %9876 = vrot.lane.b32.xlu0 %v8965, 112
  %v9877 = vpop.permute.xlu0 %9876
  %9878 = vrot.lane.b32.xlu0 %v8967, 112
  %v9879 = vpop.permute.xlu0 %9878
  %9880 = vrot.lane.b32.xlu0 %v8969, 112
  %v9881 = vpop.permute.xlu0 %9880
  %9882 = vrot.lane.b32.xlu0 %v8971, 112
  %v9883 = vpop.permute.xlu0 %9882
  %9884 = vrot.lane.b32.xlu0 %v8973, 112
  %v9885 = vpop.permute.xlu0 %9884
  %9918 = vrot.lane.b32.xlu0 %v8975, 120
  %v9919 = vpop.permute.xlu0 %9918
  %9920 = vrot.lane.b32.xlu0 %v8977, 120
  %v9921 = vpop.permute.xlu0 %9920
  %9922 = vrot.lane.b32.xlu0 %v8979, 120
  %v9923 = vpop.permute.xlu0 %9922
  %9924 = vrot.lane.b32.xlu0 %v8981, 120
  %v9925 = vpop.permute.xlu0 %9924
  %9926 = vrot.lane.b32.xlu0 %v8983, 120
  %v9927 = vpop.permute.xlu0 %9926
  %9928 = vrot.lane.b32.xlu0 %v8985, 120
  %v9929 = vpop.permute.xlu0 %9928
  %9930 = vrot.lane.b32.xlu0 %v8987, 120
  %v9931 = vpop.permute.xlu0 %9930
  %9932 = vrot.lane.b32.xlu0 %v8989, 120
  %v9933 = vpop.permute.xlu0 %9932
  %9934 = vrot.lane.b32.xlu0 %v8991, 120
  %v9935 = vpop.permute.xlu0 %9934
  %9936 = vrot.lane.b32.xlu0 %v8993, 120
  %v9937 = vpop.permute.xlu0 %9936
  %9938 = vrot.lane.b32.xlu0 %v8995, 120
  %v9939 = vpop.permute.xlu0 %9938
  %9940 = vrot.lane.b32.xlu0 %v8997, 120
  %v9941 = vpop.permute.xlu0 %9940
  %9942 = vrot.lane.b32.xlu0 %v8999, 120
  %v9943 = vpop.permute.xlu0 %9942
  %9944 = vrot.lane.b32.xlu0 %v9001, 120
  %v9945 = vpop.permute.xlu0 %9944
  %9946 = vrot.lane.b32.xlu0 %v9003, 120
  %v9947 = vpop.permute.xlu0 %9946
  %9948 = vrot.lane.b32.xlu0 %v9005, 120
  %v9949 = vpop.permute.xlu0 %9948
  %v9966 = vsel %vm2551, %v8496, %v9023
  %v9967 = vsel %vm2551, %v8498, %v9025
  %v9968 = vsel %vm2551, %v8500, %v9027
  %v9969 = vsel %vm2551, %v8502, %v9029
  %v9970 = vsel %vm2551, %v8504, %v9031
  %v9971 = vsel %vm2551, %v8506, %v9033
  %v9972 = vsel %vm2551, %v8508, %v9035
  %v9973 = vsel %vm2551, %v8510, %v9037
  %v9974 = vsel %vm2551, %v8512, %v9039
  %v9975 = vsel %vm2551, %v8514, %v9041
  %v9976 = vsel %vm2551, %v8516, %v9043
  %v9977 = vsel %vm2551, %v8518, %v9045
  %v9978 = vsel %vm2551, %v8520, %v9047
  %v9979 = vsel %vm2551, %v8522, %v9049
  %v9980 = vsel %vm2551, %v8524, %v9051
  %v9981 = vsel %vm2551, %v8526, %v9053
  %v9982 = vsel %vm2681, %v9966, %v9087
  %v9983 = vsel %vm2681, %v9967, %v9089
  %v9984 = vsel %vm2681, %v9968, %v9091
  %v9985 = vsel %vm2681, %v9969, %v9093
  %v9986 = vsel %vm2681, %v9970, %v9095
  %v9987 = vsel %vm2681, %v9971, %v9097
  %v9988 = vsel %vm2681, %v9972, %v9099
  %v9989 = vsel %vm2681, %v9973, %v9101
  %v9990 = vsel %vm2681, %v9974, %v9103
  %v9991 = vsel %vm2681, %v9975, %v9105
  %v9992 = vsel %vm2681, %v9976, %v9107
  %v9993 = vsel %vm2681, %v9977, %v9109
  %v9994 = vsel %vm2681, %v9978, %v9111
  %v9995 = vsel %vm2681, %v9979, %v9113
  %v9996 = vsel %vm2681, %v9980, %v9115
  %v9997 = vsel %vm2681, %v9981, %v9117
  %v9998 = vsel %vm2811, %v9982, %v9151
  %v9999 = vsel %vm2811, %v9983, %v9153
  %v10000 = vsel %vm2811, %v9984, %v9155
  %v10001 = vsel %vm2811, %v9985, %v9157
  %v10002 = vsel %vm2811, %v9986, %v9159
  %v10003 = vsel %vm2811, %v9987, %v9161
  %v10004 = vsel %vm2811, %v9988, %v9163
  %v10005 = vsel %vm2811, %v9989, %v9165
  %v10006 = vsel %vm2811, %v9990, %v9167
  %v10007 = vsel %vm2811, %v9991, %v9169
  %v10008 = vsel %vm2811, %v9992, %v9171
  %v10009 = vsel %vm2811, %v9993, %v9173
  %v10010 = vsel %vm2811, %v9994, %v9175
  %v10011 = vsel %vm2811, %v9995, %v9177
  %v10012 = vsel %vm2811, %v9996, %v9179
  %v10013 = vsel %vm2811, %v9997, %v9181
  %v10014 = vsel %vm59, %v9998, %v9215
  %v10015 = vsel %vm59, %v9999, %v9217
  %v10016 = vsel %vm59, %v10000, %v9219
  %v10017 = vsel %vm59, %v10001, %v9221
  %v10018 = vsel %vm59, %v10002, %v9223
  %v10019 = vsel %vm59, %v10003, %v9225
  %v10020 = vsel %vm59, %v10004, %v9227
  %v10021 = vsel %vm59, %v10005, %v9229
  %v10022 = vsel %vm59, %v10006, %v9231
  %v10023 = vsel %vm59, %v10007, %v9233
  %v10024 = vsel %vm59, %v10008, %v9235
  %v10025 = vsel %vm59, %v10009, %v9237
  %v10026 = vsel %vm59, %v10010, %v9239
  %v10027 = vsel %vm59, %v10011, %v9241
  %v10028 = vsel %vm59, %v10012, %v9243
  %v10029 = vsel %vm59, %v10013, %v9245
  %v10030 = vsel %vm6908, %v10014, %v9279
  %v10031 = vsel %vm6908, %v10015, %v9281
  %v10032 = vsel %vm6908, %v10016, %v9283
  %v10033 = vsel %vm6908, %v10017, %v9285
  %v10034 = vsel %vm6908, %v10018, %v9287
  %v10035 = vsel %vm6908, %v10019, %v9289
  %v10036 = vsel %vm6908, %v10020, %v9291
  %v10037 = vsel %vm6908, %v10021, %v9293
  %v10038 = vsel %vm6908, %v10022, %v9295
  %v10039 = vsel %vm6908, %v10023, %v9297
  %v10040 = vsel %vm6908, %v10024, %v9299
  %v10041 = vsel %vm6908, %v10025, %v9301
  %v10042 = vsel %vm6908, %v10026, %v9303
  %v10043 = vsel %vm6908, %v10027, %v9305
  %v10044 = vsel %vm6908, %v10028, %v9307
  %v10045 = vsel %vm6908, %v10029, %v9309
  %v10046 = vsel %vm6973, %v10030, %v9343
  %v10047 = vsel %vm6973, %v10031, %v9345
  %v10048 = vsel %vm6973, %v10032, %v9347
  %v10049 = vsel %vm6973, %v10033, %v9349
  %v10050 = vsel %vm6973, %v10034, %v9351
  %v10051 = vsel %vm6973, %v10035, %v9353
  %v10052 = vsel %vm6973, %v10036, %v9355
  %v10053 = vsel %vm6973, %v10037, %v9357
  %v10054 = vsel %vm6973, %v10038, %v9359
  %v10055 = vsel %vm6973, %v10039, %v9361
  %v10056 = vsel %vm6973, %v10040, %v9363
  %v10057 = vsel %vm6973, %v10041, %v9365
  %v10058 = vsel %vm6973, %v10042, %v9367
  %v10059 = vsel %vm6973, %v10043, %v9369
  %v10060 = vsel %vm6973, %v10044, %v9371
  %v10061 = vsel %vm6973, %v10045, %v9373
  %v10062 = vsel %vm7038, %v10046, %v9407
  %v10063 = vsel %vm7038, %v10047, %v9409
  %v10064 = vsel %vm7038, %v10048, %v9411
  %v10065 = vsel %vm7038, %v10049, %v9413
  %v10066 = vsel %vm7038, %v10050, %v9415
  %v10067 = vsel %vm7038, %v10051, %v9417
  %v10068 = vsel %vm7038, %v10052, %v9419
  %v10069 = vsel %vm7038, %v10053, %v9421
  %v10070 = vsel %vm7038, %v10054, %v9423
  %v10071 = vsel %vm7038, %v10055, %v9425
  %v10072 = vsel %vm7038, %v10056, %v9427
  %v10073 = vsel %vm7038, %v10057, %v9429
  %v10074 = vsel %vm7038, %v10058, %v9431
  %v10075 = vsel %vm7038, %v10059, %v9433
  %v10076 = vsel %vm7038, %v10060, %v9435
  %v10077 = vsel %vm7038, %v10061, %v9437
  %v10078 = vsel %vm7103, %v10062, %v9471
  %v10079 = vsel %vm7103, %v10063, %v9473
  %v10080 = vsel %vm7103, %v10064, %v9475
  %v10081 = vsel %vm7103, %v10065, %v9477
  %v10082 = vsel %vm7103, %v10066, %v9479
  %v10083 = vsel %vm7103, %v10067, %v9481
  %v10084 = vsel %vm7103, %v10068, %v9483
  %v10085 = vsel %vm7103, %v10069, %v9485
  %v10086 = vsel %vm7103, %v10070, %v9487
  %v10087 = vsel %vm7103, %v10071, %v9489
  %v10088 = vsel %vm7103, %v10072, %v9491
  %v10089 = vsel %vm7103, %v10073, %v9493
  %v10090 = vsel %vm7103, %v10074, %v9495
  %v10091 = vsel %vm7103, %v10075, %v9497
  %v10092 = vsel %vm7103, %v10076, %v9499
  %v10093 = vsel %vm7103, %v10077, %v9501
  %v10094 = vsel %vm7184, %v10078, %v9535
  %v10095 = vsel %vm7184, %v10079, %v9537
  %v10096 = vsel %vm7184, %v10080, %v9539
  %v10097 = vsel %vm7184, %v10081, %v9541
  %v10098 = vsel %vm7184, %v10082, %v9543
  %v10099 = vsel %vm7184, %v10083, %v9545
  %v10100 = vsel %vm7184, %v10084, %v9547
  %v10101 = vsel %vm7184, %v10085, %v9549
  %v10102 = vsel %vm7184, %v10086, %v9551
  %v10103 = vsel %vm7184, %v10087, %v9553
  %v10104 = vsel %vm7184, %v10088, %v9555
  %v10105 = vsel %vm7184, %v10089, %v9557
  %v10106 = vsel %vm7184, %v10090, %v9559
  %v10107 = vsel %vm7184, %v10091, %v9561
  %v10108 = vsel %vm7184, %v10092, %v9563
  %v10109 = vsel %vm7184, %v10093, %v9565
  %vm10110 = vcmask 654336
  %v10111 = vsel %vm10110, %v10094, %v9599
  %v10112 = vsel %vm10110, %v10095, %v9601
  %v10113 = vsel %vm10110, %v10096, %v9603
  %v10114 = vsel %vm10110, %v10097, %v9605
  %v10115 = vsel %vm10110, %v10098, %v9607
  %v10116 = vsel %vm10110, %v10099, %v9609
  %v10117 = vsel %vm10110, %v10100, %v9611
  %v10118 = vsel %vm10110, %v10101, %v9613
  %v10119 = vsel %vm10110, %v10102, %v9615
  %v10120 = vsel %vm10110, %v10103, %v9617
  %v10121 = vsel %vm10110, %v10104, %v9619
  %v10122 = vsel %vm10110, %v10105, %v9621
  %v10123 = vsel %vm10110, %v10106, %v9623
  %v10124 = vsel %vm10110, %v10107, %v9625
  %v10125 = vsel %vm10110, %v10108, %v9627
  %v10126 = vsel %vm10110, %v10109, %v9629
  %vm10127 = vcmask 719872
  %v10128 = vsel %vm10127, %v10111, %v9663
  %v10129 = vsel %vm10127, %v10112, %v9665
  %v10130 = vsel %vm10127, %v10113, %v9667
  %v10131 = vsel %vm10127, %v10114, %v9669
  %v10132 = vsel %vm10127, %v10115, %v9671
  %v10133 = vsel %vm10127, %v10116, %v9673
  %v10134 = vsel %vm10127, %v10117, %v9675
  %v10135 = vsel %vm10127, %v10118, %v9677
  %v10136 = vsel %vm10127, %v10119, %v9679
  %v10137 = vsel %vm10127, %v10120, %v9681
  %v10138 = vsel %vm10127, %v10121, %v9683
  %v10139 = vsel %vm10127, %v10122, %v9685
  %v10140 = vsel %vm10127, %v10123, %v9687
  %v10141 = vsel %vm10127, %v10124, %v9689
  %v10142 = vsel %vm10127, %v10125, %v9691
  %v10143 = vsel %vm10127, %v10126, %v9693
  %vm10144 = vcmask 785408
  %v10145 = vsel %vm10144, %v10128, %v9727
  %v10146 = vsel %vm10144, %v10129, %v9729
  %v10147 = vsel %vm10144, %v10130, %v9731
  %v10148 = vsel %vm10144, %v10131, %v9733
  %v10149 = vsel %vm10144, %v10132, %v9735
  %v10150 = vsel %vm10144, %v10133, %v9737
  %v10151 = vsel %vm10144, %v10134, %v9739
  %v10152 = vsel %vm10144, %v10135, %v9741
  %v10153 = vsel %vm10144, %v10136, %v9743
  %v10154 = vsel %vm10144, %v10137, %v9745
  %v10155 = vsel %vm10144, %v10138, %v9747
  %v10156 = vsel %vm10144, %v10139, %v9749
  %v10157 = vsel %vm10144, %v10140, %v9751
  %v10158 = vsel %vm10144, %v10141, %v9753
  %v10159 = vsel %vm10144, %v10142, %v9755
  %v10160 = vsel %vm10144, %v10143, %v9757
  %vm10161 = vcmask 850944
  %v10162 = vsel %vm10161, %v10145, %v9791
  %v10163 = vsel %vm10161, %v10146, %v9793
  %v10164 = vsel %vm10161, %v10147, %v9795
  %v10165 = vsel %vm10161, %v10148, %v9797
  %v10166 = vsel %vm10161, %v10149, %v9799
  %v10167 = vsel %vm10161, %v10150, %v9801
  %v10168 = vsel %vm10161, %v10151, %v9803
  %v10169 = vsel %vm10161, %v10152, %v9805
  %v10170 = vsel %vm10161, %v10153, %v9807
  %v10171 = vsel %vm10161, %v10154, %v9809
  %v10172 = vsel %vm10161, %v10155, %v9811
  %v10173 = vsel %vm10161, %v10156, %v9813
  %v10174 = vsel %vm10161, %v10157, %v9815
  %v10175 = vsel %vm10161, %v10158, %v9817
  %v10176 = vsel %vm10161, %v10159, %v9819
  %v10177 = vsel %vm10161, %v10160, %v9821
  %vm10178 = vcmask 916480
  %v10179 = vsel %vm10178, %v10162, %v9855
  %v10180 = vsel %vm10178, %v10163, %v9857
  %v10181 = vsel %vm10178, %v10164, %v9859
  %v10182 = vsel %vm10178, %v10165, %v9861
  %v10183 = vsel %vm10178, %v10166, %v9863
  %v10184 = vsel %vm10178, %v10167, %v9865
  %v10185 = vsel %vm10178, %v10168, %v9867
  %v10186 = vsel %vm10178, %v10169, %v9869
  %v10187 = vsel %vm10178, %v10170, %v9871
  %v10188 = vsel %vm10178, %v10171, %v9873
  %v10189 = vsel %vm10178, %v10172, %v9875
  %v10190 = vsel %vm10178, %v10173, %v9877
  %v10191 = vsel %vm10178, %v10174, %v9879
  %v10192 = vsel %vm10178, %v10175, %v9881
  %v10193 = vsel %vm10178, %v10176, %v9883
  %v10194 = vsel %vm10178, %v10177, %v9885
  %vm10195 = vcmask 982016
  %v10196 = vsel %vm10195, %v10179, %v9919
  %v10197 = vsel %vm10195, %v10180, %v9921
  %v10198 = vsel %vm10195, %v10181, %v9923
  %v10199 = vsel %vm10195, %v10182, %v9925
  %v10200 = vsel %vm10195, %v10183, %v9927
  %v10201 = vsel %vm10195, %v10184, %v9929
  %v10202 = vsel %vm10195, %v10185, %v9931
  %v10203 = vsel %vm10195, %v10186, %v9933
  %v10204 = vsel %vm10195, %v10187, %v9935
  %v10205 = vsel %vm10195, %v10188, %v9937
  %v10206 = vsel %vm10195, %v10189, %v9939
  %v10207 = vsel %vm10195, %v10190, %v9941
  %v10208 = vsel %vm10195, %v10191, %v9943
  %v10209 = vsel %vm10195, %v10192, %v9945
  %v10210 = vsel %vm10195, %v10193, %v9947
  %v10211 = vsel %vm10195, %v10194, %v9949
  %v10212 = vld [vmem:[%s12] sm:$0xff]
  %v10213 = vld [vmem:[%s12 + $0x8] sm:$0xff]
  %v10214 = vld [vmem:[%s12 + $0x10] sm:$0xff]
  %v10215 = vld [vmem:[%s12 + $0x18] sm:$0xff]
  %v10216 = vld [vmem:[%s12 + $0x20] sm:$0xff]
  %v10217 = vld [vmem:[%s12 + $0x28] sm:$0xff]
  %v10218 = vld [vmem:[%s12 + $0x30] sm:$0xff]
  %v10219 = vld [vmem:[%s12 + $0x38] sm:$0xff]
  %v10220 = vld [vmem:[%s12 + $0x40] sm:$0xff]
  %v10221 = vld [vmem:[%s12 + $0x48] sm:$0xff]
  %v10222 = vld [vmem:[%s12 + $0x50] sm:$0xff]
  %v10223 = vld [vmem:[%s12 + $0x58] sm:$0xff]
  %v10224 = vld [vmem:[%s12 + $0x60] sm:$0xff]
  %v10225 = vld [vmem:[%s12 + $0x68] sm:$0xff]
  %v10226 = vld [vmem:[%s12 + $0x70] sm:$0xff]
  %v10227 = vld [vmem:[%s12 + $0x78] sm:$0xff]
  %v10228 = vld [vmem:[%s13] sm:$0x1]
  %v10230 = vlaneseq
  %v10231 = vshrl.u32 %v10230, 7
  %v10232 = vsub.s32 0, %v10231
  %v10233 = vrot.slane %v10228, %v10232
  %10235 = vmatprep.subr.mxu0 0.0
  %10236 = vmatpush1.msra.mxu0 %v10212
  %10237 = vmatprep.subr.mxu0 0.0
  %10238 = vmatpush1.msra.mxu0 %v10213
  %10239 = vmatprep.subr.mxu0 0.0
  %10240 = vmatpush1.msra.mxu0 %v10214
  %10241 = vmatprep.subr.mxu0 0.0
  %10242 = vmatpush1.msra.mxu0 %v10215
  %10243 = vmatprep.subr.mxu0 0.0
  %10244 = vmatpush1.msra.mxu0 %v10216
  %10245 = vmatprep.subr.mxu0 0.0
  %10246 = vmatpush1.msra.mxu0 %v10217
  %10247 = vmatprep.subr.mxu0 0.0
  %10248 = vmatpush1.msra.mxu0 %v10218
  %10249 = vmatprep.subr.mxu0 0.0
  %10250 = vmatpush1.msra.mxu0 %v10219
  %10251 = vmatprep.subr.mxu0 0.0
  %10252 = vmatpush1.msra.mxu0 %v10220
  %10253 = vmatprep.subr.mxu0 0.0
  %10254 = vmatpush1.msra.mxu0 %v10221
  %10255 = vmatprep.subr.mxu0 0.0
  %10256 = vmatpush1.msra.mxu0 %v10222
  %10257 = vmatprep.subr.mxu0 0.0
  %10258 = vmatpush1.msra.mxu0 %v10223
  %10259 = vmatprep.subr.mxu0 0.0
  %10260 = vmatpush1.msra.mxu0 %v10224
  %10261 = vmatprep.subr.mxu0 0.0
  %10262 = vmatpush1.msra.mxu0 %v10225
  %10263 = vmatprep.subr.mxu0 0.0
  %10264 = vmatpush1.msra.mxu0 %v10226
  %10265 = vmatprep.subr.mxu0 0.0
  %10266 = vmatpush1.msra.mxu0 %v10227
  %10267 = vmatprep.subr.mxu0 0.0
  %10268 = vmatpush1.msra.mxu0 0.0
  %10269 = vmatprep.subr.mxu0 0.0
  %10270 = vmatpush1.msra.mxu0 0.0
  %10271 = vmatprep.subr.mxu0 0.0
  %10272 = vmatpush1.msra.mxu0 0.0
  %10273 = vmatprep.subr.mxu0 0.0
  %10274 = vmatpush1.msra.mxu0 0.0
  %10275 = vmatprep.subr.mxu0 0.0
  %10276 = vmatpush1.msra.mxu0 0.0
  %10277 = vmatprep.subr.mxu0 0.0
  %10278 = vmatpush1.msra.mxu0 0.0
  %10279 = vmatprep.subr.mxu0 0.0
  %10280 = vmatpush1.msra.mxu0 0.0
  %10281 = vmatprep.subr.mxu0 0.0
  %10282 = vmatpush1.msra.mxu0 0.0
  %10283 = vmatprep.subr.mxu0 0.0
  %10284 = vmatpush1.msra.mxu0 0.0
  %10285 = vmatprep.subr.mxu0 0.0
  %10286 = vmatpush1.msra.mxu0 0.0
  %10287 = vmatprep.subr.mxu0 0.0
  %10288 = vmatpush1.msra.mxu0 0.0
  %10289 = vmatprep.subr.mxu0 0.0
  %10290 = vmatpush1.msra.mxu0 0.0
  %10291 = vmatprep.subr.mxu0 0.0
  %10292 = vmatpush1.msra.mxu0 0.0
  %10293 = vmatprep.subr.mxu0 0.0
  %10294 = vmatpush1.msra.mxu0 0.0
  %10295 = vmatprep.subr.mxu0 0.0
  %10296 = vmatpush1.msra.mxu0 0.0
  %10297 = vmatprep.subr.mxu0 0.0
  %10298 = vmatpush1.msra.mxu0 0.0
  %10299 = vmatprep.mubr.f32.mxu0 0.0
  %10300 = vmatmul.mubr.f32.gmra.mrb[0].mxu0 %v10196
  %v10301 = vpop.f32.mrb[0].mxu0
  %v10302 = vadd.f32 %v10233, %v10301
  %v10303 = vpop.f32.mrb[0].mxu0
  %10304 = vmatprep.mubr.f32.mxu0 0.0
  %10305 = vmatmul.mubr.f32.gmra.mrb[0].mxu0 %v10197
  %v10306 = vpop.f32.mrb[0].mxu0
  %v10307 = vadd.f32 %v10233, %v10306
  %v10308 = vpop.f32.mrb[0].mxu0
  %10309 = vmatprep.mubr.f32.mxu0 0.0
  %10310 = vmatmul.mubr.f32.gmra.mrb[0].mxu0 %v10198
  %v10311 = vpop.f32.mrb[0].mxu0
  %v10312 = vadd.f32 %v10233, %v10311
  %v10313 = vpop.f32.mrb[0].mxu0
  %10314 = vmatprep.mubr.f32.mxu0 0.0
  %10315 = vmatmul.mubr.f32.gmra.mrb[0].mxu0 %v10199
  %v10316 = vpop.f32.mrb[0].mxu0
  %v10317 = vadd.f32 %v10233, %v10316
  %v10318 = vpop.f32.mrb[0].mxu0
  %10319 = vmatprep.mubr.f32.mxu0 0.0
  %10320 = vmatmul.mubr.f32.gmra.mrb[0].mxu0 %v10200
  %v10321 = vpop.f32.mrb[0].mxu0
  %v10322 = vadd.f32 %v10233, %v10321
  %v10323 = vpop.f32.mrb[0].mxu0
  %10324 = vmatprep.mubr.f32.mxu0 0.0
  %10325 = vmatmul.mubr.f32.gmra.mrb[0].mxu0 %v10201
  %v10326 = vpop.f32.mrb[0].mxu0
  %v10327 = vadd.f32 %v10233, %v10326
  %v10328 = vpop.f32.mrb[0].mxu0
  %10329 = vmatprep.mubr.f32.mxu0 0.0
  %10330 = vmatmul.mubr.f32.gmra.mrb[0].mxu0 %v10202
  %v10331 = vpop.f32.mrb[0].mxu0
  %v10332 = vadd.f32 %v10233, %v10331
  %v10333 = vpop.f32.mrb[0].mxu0
  %10334 = vmatprep.mubr.f32.mxu0 0.0
  %10335 = vmatmul.mubr.f32.gmra.mrb[0].mxu0 %v10203
  %v10336 = vpop.f32.mrb[0].mxu0
  %v10337 = vadd.f32 %v10233, %v10336
  %v10338 = vpop.f32.mrb[0].mxu0
  %10339 = vmatprep.mubr.f32.mxu0 0.0
  %10340 = vmatmul.mubr.f32.gmra.mrb[0].mxu0 %v10204
  %v10341 = vpop.f32.mrb[0].mxu0
  %v10342 = vadd.f32 %v10233, %v10341
  %v10343 = vpop.f32.mrb[0].mxu0
  %10344 = vmatprep.mubr.f32.mxu0 0.0
  %10345 = vmatmul.mubr.f32.gmra.mrb[0].mxu0 %v10205
  %v10346 = vpop.f32.mrb[0].mxu0
  %v10347 = vadd.f32 %v10233, %v10346
  %v10348 = vpop.f32.mrb[0].mxu0
  %10349 = vmatprep.mubr.f32.mxu0 0.0
  %10350 = vmatmul.mubr.f32.gmra.mrb[0].mxu0 %v10206
  %v10351 = vpop.f32.mrb[0].mxu0
  %v10352 = vadd.f32 %v10233, %v10351
  %v10353 = vpop.f32.mrb[0].mxu0
  %10354 = vmatprep.mubr.f32.mxu0 0.0
  %10355 = vmatmul.mubr.f32.gmra.mrb[0].mxu0 %v10207
  %v10356 = vpop.f32.mrb[0].mxu0
  %v10357 = vadd.f32 %v10233, %v10356
  %v10358 = vpop.f32.mrb[0].mxu0
  %10359 = vmatprep.mubr.f32.mxu0 0.0
  %10360 = vmatmul.mubr.f32.gmra.mrb[0].mxu0 %v10208
  %v10361 = vpop.f32.mrb[0].mxu0
  %v10362 = vadd.f32 %v10233, %v10361
  %v10363 = vpop.f32.mrb[0].mxu0
  %10364 = vmatprep.mubr.f32.mxu0 0.0
  %10365 = vmatmul.mubr.f32.gmra.mrb[0].mxu0 %v10209
  %v10366 = vpop.f32.mrb[0].mxu0
  %v10367 = vadd.f32 %v10233, %v10366
  %v10368 = vpop.f32.mrb[0].mxu0
  %10369 = vmatprep.mubr.f32.mxu0 0.0
  %10370 = vmatmul.mubr.f32.gmra.mrb[0].mxu0 %v10210
  %v10371 = vpop.f32.mrb[0].mxu0
  %v10372 = vadd.f32 %v10233, %v10371
  %v10373 = vpop.f32.mrb[0].mxu0
  %10374 = vmatprep.mubr.f32.mxu0 0.0
  %10375 = vmatmul.mubr.f32.gmra.mrb[0].mxu0 %v10211
  %v10376 = vpop.f32.mrb[0].mxu0
  %v10377 = vadd.f32 %v10233, %v10376
  %v10378 = vpop.f32.mrb[0].mxu0
  %10379 = vdwg.mxu0
  %10380 = vst.msk [vmem:[%s14] sm:$0xff] %vm2551, %v10302
  %10381 = vst.msk [vmem:[%s14 + $0x8] sm:$0xff] %vm2551, %v10307
  %10382 = vst.msk [vmem:[%s14 + $0x10] sm:$0xff] %vm2551, %v10312
  %10383 = vst.msk [vmem:[%s14 + $0x18] sm:$0xff] %vm2551, %v10317
  %10384 = vst.msk [vmem:[%s14 + $0x20] sm:$0xff] %vm2551, %v10322
  %10385 = vst.msk [vmem:[%s14 + $0x28] sm:$0xff] %vm2551, %v10327
  %10386 = vst.msk [vmem:[%s14 + $0x30] sm:$0xff] %vm2551, %v10332
  %10387 = vst.msk [vmem:[%s14 + $0x38] sm:$0xff] %vm2551, %v10337
  %10388 = vst.msk [vmem:[%s14 + $0x40] sm:$0xff] %vm2551, %v10342
  %10389 = vst.msk [vmem:[%s14 + $0x48] sm:$0xff] %vm2551, %v10347
  %10390 = vst.msk [vmem:[%s14 + $0x50] sm:$0xff] %vm2551, %v10352
  %10391 = vst.msk [vmem:[%s14 + $0x58] sm:$0xff] %vm2551, %v10357
  %10392 = vst.msk [vmem:[%s14 + $0x60] sm:$0xff] %vm2551, %v10362
  %10393 = vst.msk [vmem:[%s14 + $0x68] sm:$0xff] %vm2551, %v10367
  %10394 = vst.msk [vmem:[%s14 + $0x70] sm:$0xff] %vm2551, %v10372
  %10395 = vst.msk [vmem:[%s14 + $0x78] sm:$0xff] %vm2551, %v10377
  // Predicated region
  $region58: #{block_forward.1} parent=0 // pred_check
    _
  $region59: #{block_forward.1} parent=0 // pred_check_branch
    %10397 = sbr.rel (0) target = $region61
  $region60: #{block_forward.1} parent=0 // pred_region
    _
  $region61: #{block_forward.1} parent=0 // pred_fallthru
    _
  // Predicated region
  $region62: #{block_forward.1} parent=0 // pred_check
    _
  $region63: #{block_forward.1} parent=0 // pred_check_branch
    %10399 = sbr.rel (0) target = $region65
  $region64: #{block_forward.1} parent=0 // pred_region
    _
  $region65: #{block_forward.1} parent=0 // pred_fallthru
    _

</llo_original>
